<compile_context>
chip_gen: v7x
topology: tpu7x:2x2x1
jax: 0.10.0
libtpu: 0.0.40
codegen_flags: <defaults>
</compile_context>

<pallas_src>
import jax
import jax.numpy as jnp
from jax.experimental import pallas as pl
from jax.experimental.pallas import tpu as pltpu

EPS = 1e-5


# ----------------------------- Pallas kernels ------------------------------

def _conv_bn_relu_kernel(p_ref, w_ref, g_ref, beta_ref, o_ref):
    """Conv (as matmul) + train-mode BatchNorm + ReLU.

    p_ref: (R, K) bf16 im2col patches (R = N*Ho*Wo)
    w_ref: (K, C) bf16 weight matrix
    g_ref/beta_ref: (1, C) f32 BN gamma / beta
    o_ref: (R, C) bf16 activations for the next layer
    Conv bias is omitted: it is exactly cancelled by the batch-mean
    subtraction of train-mode BatchNorm.
    """
    y = jnp.dot(p_ref[...], w_ref[...], preferred_element_type=jnp.float32)
    # One-pass batch stats (biased variance, PyTorch train-mode semantics).
    mean = jnp.mean(y, axis=0, keepdims=True)
    var = jnp.maximum(jnp.mean(y * y, axis=0, keepdims=True) - mean * mean, 0.0)
    scale = g_ref[...] * jax.lax.rsqrt(var + EPS)
    shift = beta_ref[...] - mean * scale
    o_ref[...] = jnp.maximum(y * scale + shift, 0.0).astype(o_ref.dtype)


def _head_kernel(p_ref, w_ref, g_ref, beta_ref, w4_ref, sel_ref, b4_ref, o_ref):
    """Fused layer 3 (conv + BN + ReLU) and layer 4 (4x4 valid conv -> 1 ch).

    p_ref  : (R, K)  bf16 layer-3 im2col patches, R = N*16
    w_ref  : (K, C)  bf16 layer-3 weight matrix
    g_ref/beta_ref: (1, C) f32 BN gamma / beta
    w4_ref : (R, C)  f32  final-conv weight tiled over batch; row = spatial pos
    sel_ref: (N, R)  f32  row->batch selector (1 where row r belongs to batch n)
    b4_ref : (1, 1)  f32  final-conv bias
    o_ref  : (N, 1)  f32
    """
    y = jnp.dot(p_ref[...], w_ref[...], preferred_element_type=jnp.float32)
    mean = jnp.mean(y, axis=0, keepdims=True)
    var = jnp.maximum(jnp.mean(y * y, axis=0, keepdims=True) - mean * mean, 0.0)
    scale = g_ref[...] * jax.lax.rsqrt(var + EPS)
    shift = beta_ref[...] - mean * scale
    a = jnp.maximum(y * scale + shift, 0.0)                       # (R, C) f32
    prod = a * w4_ref[...]                                        # (R, C)
    grp = jnp.dot(sel_ref[...], prod,
                  preferred_element_type=jnp.float32)             # (N, C)
    o_ref[...] = jnp.sum(grp, axis=1, keepdims=True) + b4_ref[...]


# ------------------------------- JAX glue ----------------------------------

def _round_up(n, m):
    return ((n + m - 1) // m) * m


def _full_spec(shape):
    n = len(shape)
    return pl.BlockSpec(shape, lambda i, _n=n: (0,) * _n)


def _im2col_nhwc(x, kh, kw, stride, pad):
    """x: (N, H, W, C) -> patches (N*Ho*Wo, kh*kw*C), K-order (kh, kw, C)."""
    N, H, W, C = x.shape
    xp = jnp.pad(x, ((0, 0), (pad, pad), (pad, pad), (0, 0)))
    Ho = (H + 2 * pad - kh) // stride + 1
    Wo = (W + 2 * pad - kw) // stride + 1
    cols = []
    for i in range(kh):
        for j in range(kw):
            cols.append(xp[:, i:i + stride * Ho:stride, j:j + stride * Wo:stride, :])
    cols = jnp.stack(cols, axis=3)                  # (N, Ho, Wo, kh*kw, C)
    return cols.reshape(N * Ho * Wo, kh * kw * C), Ho, Wo


def _conv_bn_relu(x_nhwc, w_mat, g_row, b_row, *, stride, pad):
    """One Conv2d(4x4) + BN(train) + ReLU layer; NHWC in, NHWC (bf16) out."""
    N = x_nhwc.shape[0]
    patches, Ho, Wo = _im2col_nhwc(x_nhwc, 4, 4, stride, pad)
    R, K = patches.shape
    Cout = w_mat.shape[1]
    out = pl.pallas_call(
        _conv_bn_relu_kernel,
        out_shape=jax.ShapeDtypeStruct((R, Cout), jnp.bfloat16),
        grid=(1,),
        in_specs=[_full_spec((R, K)), _full_spec((K, Cout)),
                  _full_spec((1, Cout)), _full_spec((1, Cout))],
        out_specs=_full_spec((R, Cout)),
        compiler_params=pltpu.CompilerParams(
            dimension_semantics=("arbitrary",)),
    )(patches, w_mat, g_row, b_row)
    return out.reshape(N, Ho, Wo, Cout)


def _head(x_nhwc, w3_mat, g3_row, b3_row, w4_mat, b4_row):
    """Fused: conv3(s2,p1)+BN+ReLU then conv4(4x4 valid, 512->1)."""
    N = x_nhwc.shape[0]
    patches, Ho, Wo = _im2col_nhwc(x_nhwc, 4, 4, 2, 1)
    assert (Ho, Wo) == (4, 4), (Ho, Wo)
    R, K = patches.shape
    C = w3_mat.shape[1]
    w4_tiled = jnp.tile(w4_mat, (N, 1))                               # (R, C)
    sel = jnp.repeat(jnp.eye(N, dtype=jnp.float32), Ho * Wo, axis=1)  # (N, R)
    out = pl.pallas_call(
        _head_kernel,
        out_shape=jax.ShapeDtypeStruct((N, 1), jnp.float32),
        grid=(1,),
        in_specs=[_full_spec((R, K)), _full_spec((K, C)),
                  _full_spec((1, C)), _full_spec((1, C)),
                  _full_spec((R, C)), _full_spec((N, R)), _full_spec((1, 1))],
        out_specs=_full_spec((N, 1)),
        compiler_params=pltpu.CompilerParams(
            dimension_semantics=("arbitrary",)),
    )(patches, w3_mat, g3_row, b3_row, w4_tiled, sel, b4_row)
    return out.reshape(N, 1, 1, 1)


# --------------------------- Parameter handling ------------------------------

def init_params(key, input_nums):
    """Deterministic synthetic parameters (PyTorch-like uniform fan-in init)."""
    params = []
    for (ci, co) in [(input_nums, 64), (64, 256), (256, 512)]:
        key, kw_, kb_ = jax.random.split(key, 3)
        bound = 1.0 / float((ci * 4 * 4) ** 0.5)
        w = jax.random.uniform(kw_, (co, ci, 4, 4), jnp.float32, -bound, bound)
        b = jax.random.uniform(kb_, (co,), jnp.float32, -bound, bound)
        gamma = jnp.ones((co,), jnp.float32)   # BN weight init
        beta = jnp.zeros((co,), jnp.float32)   # BN bias init
        params.append((w, b, gamma, beta))
    key, kw_, kb_ = jax.random.split(key, 3)
    bound = 1.0 / float((512 * 4 * 4) ** 0.5)
    w = jax.random.uniform(kw_, (1, 512, 4, 4), jnp.float32, -bound, bound)
    b = jax.random.uniform(kb_, (1,), jnp.float32, -bound, bound)
    params.append((w, b))
    return params


def _conv_w_to_mat(w, cin_pad=None):
    """(Cout, Cin, kh, kw) -> (kh*kw*Cin_pad, Cout) with K-order (kh, kw, Cin)."""
    cout, cin, kh, kw = w.shape
    wt = jnp.transpose(w, (2, 3, 1, 0))          # (kh, kw, Cin, Cout)
    if cin_pad is not None and cin_pad > cin:
        wt = jnp.pad(wt, ((0, 0), (0, 0), (0, cin_pad - cin), (0, 0)))
        cin = cin_pad
    return wt.reshape(kh * kw * cin, cout)


def prepare_params(params, input_nums):
    """One-time transform of PyTorch-layout params into kernel-ready tensors."""
    cin_pad0 = _round_up(input_nums, 8)          # -> K = 16*cin_pad0 % 128 == 0
    convs = []
    for idx, (w, b, gamma, beta) in enumerate(params[:3]):
        cin_pad = cin_pad0 if idx == 0 else None
        w_mat = _conv_w_to_mat(w, cin_pad).astype(jnp.bfloat16)
        # conv bias b is dropped: cancelled exactly by train-mode BN mean sub.
        g_row = gamma.reshape(1, -1).astype(jnp.float32)
        b_row = beta.reshape(1, -1).astype(jnp.float32)
        convs.append((w_mat, g_row, b_row))
    w4, b4 = params[3]
    # (1, 512, 4, 4) -> (16, 512): row = h*4 + w, col = channel (un-padded Cout=1)
    w4_mat = jnp.transpose(w4[0], (1, 2, 0)).reshape(16, 512).astype(jnp.float32)
    b4_row = b4.reshape(1, 1).astype(jnp.float32)
    return {"convs": convs, "head_w4": w4_mat, "head_b4": b4_row}


# -------------------------------- Forward ------------------------------------

def discriminator_wgan_32(x_nchw, prep):
    """x: (N, Cin, 32, 32) NCHW like PyTorch.  Returns (N, 1, 1, 1) f32."""
    (w1, g1, b1), (w2, g2, b2), (w3, g3, b3) = prep["convs"]
    # Single layout change: channels-last once, NHWC end-to-end afterwards.
    x = jnp.transpose(x_nchw, (0, 2, 3, 1)).astype(jnp.bfloat16)
    cin_pad = w1.shape[0] // 16                  # static (array shape)
    cpad = cin_pad - x.shape[-1]
    if cpad > 0:
        x = jnp.pad(x, ((0, 0), (0, 0), (0, 0), (0, cpad)))
    x = _conv_bn_relu(x, w1, g1, b1, stride=2, pad=1)   # (N,16,16,64)  bf16
    x = _conv_bn_relu(x, w2, g2, b2, stride=2, pad=1)   # (N, 8, 8,256) bf16
    out = _head(x, w3, g3, b3, prep["head_w4"], prep["head_b4"])  # (N,1,1,1)
    return out


# --------------------------------- Main --------------------------------------

if __name__ == "__main__":
    key = jax.random.PRNGKey(0)
    k_in, k_par = jax.random.split(key)

    input_nums = 3
    # 32x32 spatial is required by the architecture (final 4x4 valid conv -> 1x1)
    x = jax.random.normal(k_in, (2, input_nums, 32, 32), dtype=jnp.float32)
    params = init_params(k_par, input_nums)
    prep = prepare_params(params, input_nums)    # one-time weight prep

    fwd = jax.jit(discriminator_wgan_32)
    out = jax.block_until_ready(fwd(x, prep))

    assert out.shape == (2, 1, 1, 1), out.shape
    assert out.dtype == jnp.float32
    print("KERNEL_OK")
</pallas_src>

<mosaic_0001>
module attributes {stable_mosaic.version = 11 : i64} {
  func.func @_conv_bn_relu_kernel(%arg0: i32, %arg1: memref<512x128xbf16, #tpu.memory_space<vmem>>, %arg2: memref<128x64xbf16, #tpu.memory_space<vmem>>, %arg3: memref<1x64xf32, #tpu.memory_space<vmem>>, %arg4: memref<1x64xf32, #tpu.memory_space<vmem>>, %arg5: memref<512x64xbf16, #tpu.memory_space<vmem>>) attributes {dimension_semantics = [#tpu.dimension_semantics<arbitrary>], iteration_bounds = array<i64: 1>, scalar_prefetch = 0 : i64, scratch_operands = 0 : i64, tpu.core_type = #tpu.core_type<tc>, window_params = [{pipeline_mode = #tpu.pipeline_mode<synchronous>, transform_indices = @transform_0, window_bounds = array<i64: 512, 128>}, {pipeline_mode = #tpu.pipeline_mode<synchronous>, transform_indices = @transform_1, window_bounds = array<i64: 128, 64>}, {pipeline_mode = #tpu.pipeline_mode<synchronous>, transform_indices = @transform_2, window_bounds = array<i64: 1, 64>}, {pipeline_mode = #tpu.pipeline_mode<synchronous>, transform_indices = @transform_3, window_bounds = array<i64: 1, 64>}, {pipeline_mode = #tpu.pipeline_mode<synchronous>, transform_indices = @transform_4, window_bounds = array<i64: 512, 64>}]} {
    %c0 = arith.constant 0 : index
    %c0_0 = arith.constant 0 : index
    %0 = vector.load %arg1[%c0, %c0_0] : memref<512x128xbf16, #tpu.memory_space<vmem>>, vector<512x128xbf16>
    %c0_1 = arith.constant 0 : index
    %c0_2 = arith.constant 0 : index
    %1 = vector.load %arg2[%c0_1, %c0_2] : memref<128x64xbf16, #tpu.memory_space<vmem>>, vector<128x64xbf16>
    %cst = arith.constant dense<0.000000e+00> : vector<512x64xf32>
    %2 = tpu.matmul %0, %1, %cst {dimension_numbers = #tpu.dot_dimension_numbers<[1], [0], [0], [1], [0, 0, 1, 1], [], []>} : vector<512x128xbf16>, vector<128x64xbf16>, vector<512x64xf32> -> vector<512x64xf32>
    %cst_3 = arith.constant dense<0.000000e+00> : vector<64xf32>
    %3 = vector.multi_reduction <add>, %2, %cst_3 [0] : vector<512x64xf32> to vector<64xf32>
    %4 = vector.shape_cast %3 : vector<64xf32> to vector<1x64xf32>
    %cst_4 = arith.constant 5.120000e+02 : f32
    %5 = vector.broadcast %cst_4 : f32 to vector<1x64xf32>
    %6 = arith.divf %4, %5 : vector<1x64xf32>
    %7 = arith.mulf %2, %2 : vector<512x64xf32>
    %cst_5 = arith.constant dense<0.000000e+00> : vector<64xf32>
    %8 = vector.multi_reduction <add>, %7, %cst_5 [0] : vector<512x64xf32> to vector<64xf32>
    %9 = vector.shape_cast %8 : vector<64xf32> to vector<1x64xf32>
    %cst_6 = arith.constant 5.120000e+02 : f32
    %10 = vector.broadcast %cst_6 : f32 to vector<1x64xf32>
    %11 = arith.divf %9, %10 : vector<1x64xf32>
    %12 = arith.mulf %6, %6 : vector<1x64xf32>
    %13 = arith.subf %11, %12 : vector<1x64xf32>
    %cst_7 = arith.constant 0.000000e+00 : f32
    %14 = vector.broadcast %cst_7 : f32 to vector<1x64xf32>
    %15 = arith.maximumf %13, %14 : vector<1x64xf32>
    %c0_8 = arith.constant 0 : index
    %c0_9 = arith.constant 0 : index
    %16 = vector.load %arg3[%c0_8, %c0_9] : memref<1x64xf32, #tpu.memory_space<vmem>>, vector<1x64xf32>
    %cst_10 = arith.constant 9.99999974E-6 : f32
    %17 = vector.broadcast %cst_10 : f32 to vector<1x64xf32>
    %18 = arith.addf %15, %17 : vector<1x64xf32>
    %19 = math.rsqrt %18 : vector<1x64xf32>
    %20 = arith.mulf %16, %19 : vector<1x64xf32>
    %c0_11 = arith.constant 0 : index
    %c0_12 = arith.constant 0 : index
    %21 = vector.load %arg4[%c0_11, %c0_12] : memref<1x64xf32, #tpu.memory_space<vmem>>, vector<1x64xf32>
    %22 = arith.mulf %6, %20 : vector<1x64xf32>
    %23 = arith.subf %21, %22 : vector<1x64xf32>
    %24 = vector.broadcast %20 : vector<1x64xf32> to vector<512x64xf32>
    %25 = arith.mulf %2, %24 : vector<512x64xf32>
    %26 = vector.broadcast %23 : vector<1x64xf32> to vector<512x64xf32>
    %27 = arith.addf %25, %26 : vector<512x64xf32>
    %cst_13 = arith.constant 0.000000e+00 : f32
    %28 = vector.broadcast %cst_13 : f32 to vector<512x64xf32>
    %29 = arith.maximumf %27, %28 : vector<512x64xf32>
    %30 = arith.truncf %29 : vector<512x64xf32> to vector<512x64xbf16>
    %c0_14 = arith.constant 0 : index
    %c0_15 = arith.constant 0 : index
    %31 = vector.load %arg5[%c0_14, %c0_15] : memref<512x64xbf16, #tpu.memory_space<vmem>>, vector<512x64xbf16>
    tpu.vector_store %arg5[%c0_14, %c0_15], %30 {strides = array<i32>} : memref<512x64xbf16, #tpu.memory_space<vmem>>, vector<512x64xbf16>,
    return
  }
  func.func @transform_0(%arg0: i32) -> (i32, i32) {
    %c0_i32 = arith.constant 0 : i32
    %c0_i32_0 = arith.constant 0 : i32
    %c0_i32_1 = arith.constant 0 : i32
    return %c0_i32, %c0_i32_0 : i32, i32
  }
  func.func @transform_1(%arg0: i32) -> (i32, i32) {
    %c0_i32 = arith.constant 0 : i32
    %c0_i32_0 = arith.constant 0 : i32
    %c0_i32_1 = arith.constant 0 : i32
    return %c0_i32, %c0_i32_0 : i32, i32
  }
  func.func @transform_2(%arg0: i32) -> (i32, i32) {
    %c0_i32 = arith.constant 0 : i32
    %c0_i32_0 = arith.constant 0 : i32
    %c0_i32_1 = arith.constant 0 : i32
    return %c0_i32, %c0_i32_0 : i32, i32
  }
  func.func @transform_3(%arg0: i32) -> (i32, i32) {
    %c0_i32 = arith.constant 0 : i32
    %c0_i32_0 = arith.constant 0 : i32
    %c0_i32_1 = arith.constant 0 : i32
    return %c0_i32, %c0_i32_0 : i32, i32
  }
  func.func @transform_4(%arg0: i32) -> (i32, i32) {
    %c0_i32 = arith.constant 0 : i32
    %c0_i32_0 = arith.constant 0 : i32
    %c0_i32_1 = arith.constant 0 : i32
    return %c0_i32, %c0_i32_0 : i32, i32
  }
}

module attributes {stable_mosaic.version = 11 : i64} {
  func.func @_conv_bn_relu_kernel(%arg0: i32, %arg1: memref<128x1024xbf16, #tpu.memory_space<vmem>>, %arg2: memref<1024x256xbf16, #tpu.memory_space<vmem>>, %arg3: memref<1x256xf32, #tpu.memory_space<vmem>>, %arg4: memref<1x256xf32, #tpu.memory_space<vmem>>, %arg5: memref<128x256xbf16, #tpu.memory_space<vmem>>) attributes {dimension_semantics = [#tpu.dimension_semantics<arbitrary>], iteration_bounds = array<i64: 1>, scalar_prefetch = 0 : i64, scratch_operands = 0 : i64, tpu.core_type = #tpu.core_type<tc>, window_params = [{pipeline_mode = #tpu.pipeline_mode<synchronous>, transform_indices = @transform_0, window_bounds = array<i64: 128, 1024>}, {pipeline_mode = #tpu.pipeline_mode<synchronous>, transform_indices = @transform_1, window_bounds = array<i64: 1024, 256>}, {pipeline_mode = #tpu.pipeline_mode<synchronous>, transform_indices = @transform_2, window_bounds = array<i64: 1, 256>}, {pipeline_mode = #tpu.pipeline_mode<synchronous>, transform_indices = @transform_3, window_bounds = array<i64: 1, 256>}, {pipeline_mode = #tpu.pipeline_mode<synchronous>, transform_indices = @transform_4, window_bounds = array<i64: 128, 256>}]} {
    %c0 = arith.constant 0 : index
    %c0_0 = arith.constant 0 : index
    %0 = vector.load %arg1[%c0, %c0_0] : memref<128x1024xbf16, #tpu.memory_space<vmem>>, vector<128x1024xbf16>
    %c0_1 = arith.constant 0 : index
    %c0_2 = arith.constant 0 : index
    %1 = vector.load %arg2[%c0_1, %c0_2] : memref<1024x256xbf16, #tpu.memory_space<vmem>>, vector<1024x256xbf16>
    %cst = arith.constant dense<0.000000e+00> : vector<128x256xf32>
    %2 = tpu.matmul %0, %1, %cst {dimension_numbers = #tpu.dot_dimension_numbers<[1], [0], [0], [1], [0, 0, 1, 1], [], []>} : vector<128x1024xbf16>, vector<1024x256xbf16>, vector<128x256xf32> -> vector<128x256xf32>
    %cst_3 = arith.constant dense<0.000000e+00> : vector<256xf32>
    %3 = vector.multi_reduction <add>, %2, %cst_3 [0] : vector<128x256xf32> to vector<256xf32>
    %4 = vector.shape_cast %3 : vector<256xf32> to vector<1x256xf32>
    %cst_4 = arith.constant 1.280000e+02 : f32
    %5 = vector.broadcast %cst_4 : f32 to vector<1x256xf32>
    %6 = arith.divf %4, %5 : vector<1x256xf32>
    %7 = arith.mulf %2, %2 : vector<128x256xf32>
    %cst_5 = arith.constant dense<0.000000e+00> : vector<256xf32>
    %8 = vector.multi_reduction <add>, %7, %cst_5 [0] : vector<128x256xf32> to vector<256xf32>
    %9 = vector.shape_cast %8 : vector<256xf32> to vector<1x256xf32>
    %cst_6 = arith.constant 1.280000e+02 : f32
    %10 = vector.broadcast %cst_6 : f32 to vector<1x256xf32>
    %11 = arith.divf %9, %10 : vector<1x256xf32>
    %12 = arith.mulf %6, %6 : vector<1x256xf32>
    %13 = arith.subf %11, %12 : vector<1x256xf32>
    %cst_7 = arith.constant 0.000000e+00 : f32
    %14 = vector.broadcast %cst_7 : f32 to vector<1x256xf32>
    %15 = arith.maximumf %13, %14 : vector<1x256xf32>
    %c0_8 = arith.constant 0 : index
    %c0_9 = arith.constant 0 : index
    %16 = vector.load %arg3[%c0_8, %c0_9] : memref<1x256xf32, #tpu.memory_space<vmem>>, vector<1x256xf32>
    %cst_10 = arith.constant 9.99999974E-6 : f32
    %17 = vector.broadcast %cst_10 : f32 to vector<1x256xf32>
    %18 = arith.addf %15, %17 : vector<1x256xf32>
    %19 = math.rsqrt %18 : vector<1x256xf32>
    %20 = arith.mulf %16, %19 : vector<1x256xf32>
    %c0_11 = arith.constant 0 : index
    %c0_12 = arith.constant 0 : index
    %21 = vector.load %arg4[%c0_11, %c0_12] : memref<1x256xf32, #tpu.memory_space<vmem>>, vector<1x256xf32>
    %22 = arith.mulf %6, %20 : vector<1x256xf32>
    %23 = arith.subf %21, %22 : vector<1x256xf32>
    %24 = vector.broadcast %20 : vector<1x256xf32> to vector<128x256xf32>
    %25 = arith.mulf %2, %24 : vector<128x256xf32>
    %26 = vector.broadcast %23 : vector<1x256xf32> to vector<128x256xf32>
    %27 = arith.addf %25, %26 : vector<128x256xf32>
    %cst_13 = arith.constant 0.000000e+00 : f32
    %28 = vector.broadcast %cst_13 : f32 to vector<128x256xf32>
    %29 = arith.maximumf %27, %28 : vector<128x256xf32>
    %30 = arith.truncf %29 : vector<128x256xf32> to vector<128x256xbf16>
    %c0_14 = arith.constant 0 : index
    %c0_15 = arith.constant 0 : index
    %31 = vector.load %arg5[%c0_14, %c0_15] : memref<128x256xbf16, #tpu.memory_space<vmem>>, vector<128x256xbf16>
    tpu.vector_store %arg5[%c0_14, %c0_15], %30 {strides = array<i32>} : memref<128x256xbf16, #tpu.memory_space<vmem>>, vector<128x256xbf16>,
    return
  }
  func.func @transform_0(%arg0: i32) -> (i32, i32) {
    %c0_i32 = arith.constant 0 : i32
    %c0_i32_0 = arith.constant 0 : i32
    %c0_i32_1 = arith.constant 0 : i32
    return %c0_i32, %c0_i32_0 : i32, i32
  }
  func.func @transform_1(%arg0: i32) -> (i32, i32) {
    %c0_i32 = arith.constant 0 : i32
    %c0_i32_0 = arith.constant 0 : i32
    %c0_i32_1 = arith.constant 0 : i32
    return %c0_i32, %c0_i32_0 : i32, i32
  }
  func.func @transform_2(%arg0: i32) -> (i32, i32) {
    %c0_i32 = arith.constant 0 : i32
    %c0_i32_0 = arith.constant 0 : i32
    %c0_i32_1 = arith.constant 0 : i32
    return %c0_i32, %c0_i32_0 : i32, i32
  }
  func.func @transform_3(%arg0: i32) -> (i32, i32) {
    %c0_i32 = arith.constant 0 : i32
    %c0_i32_0 = arith.constant 0 : i32
    %c0_i32_1 = arith.constant 0 : i32
    return %c0_i32, %c0_i32_0 : i32, i32
  }
  func.func @transform_4(%arg0: i32) -> (i32, i32) {
    %c0_i32 = arith.constant 0 : i32
    %c0_i32_0 = arith.constant 0 : i32
    %c0_i32_1 = arith.constant 0 : i32
    return %c0_i32, %c0_i32_0 : i32, i32
  }
}

module attributes {stable_mosaic.version = 11 : i64} {
  func.func @_head_kernel(%arg0: i32, %arg1: memref<32x4096xbf16, #tpu.memory_space<vmem>>, %arg2: memref<4096x512xbf16, #tpu.memory_space<vmem>>, %arg3: memref<1x512xf32, #tpu.memory_space<vmem>>, %arg4: memref<1x512xf32, #tpu.memory_space<vmem>>, %arg5: memref<32x512xf32, #tpu.memory_space<vmem>>, %arg6: memref<2x32xf32, #tpu.memory_space<vmem>>, %arg7: memref<1x1xf32, #tpu.memory_space<vmem>>, %arg8: memref<2x1xf32, #tpu.memory_space<vmem>>) attributes {dimension_semantics = [#tpu.dimension_semantics<arbitrary>], iteration_bounds = array<i64: 1>, scalar_prefetch = 0 : i64, scratch_operands = 0 : i64, tpu.core_type = #tpu.core_type<tc>, window_params = [{pipeline_mode = #tpu.pipeline_mode<synchronous>, transform_indices = @transform_0, window_bounds = array<i64: 32, 4096>}, {pipeline_mode = #tpu.pipeline_mode<synchronous>, transform_indices = @transform_1, window_bounds = array<i64: 4096, 512>}, {pipeline_mode = #tpu.pipeline_mode<synchronous>, transform_indices = @transform_2, window_bounds = array<i64: 1, 512>}, {pipeline_mode = #tpu.pipeline_mode<synchronous>, transform_indices = @transform_3, window_bounds = array<i64: 1, 512>}, {pipeline_mode = #tpu.pipeline_mode<synchronous>, transform_indices = @transform_4, window_bounds = array<i64: 32, 512>}, {pipeline_mode = #tpu.pipeline_mode<synchronous>, transform_indices = @transform_5, window_bounds = array<i64: 2, 32>}, {pipeline_mode = #tpu.pipeline_mode<synchronous>, transform_indices = @transform_6, window_bounds = array<i64: 1, 1>}, {pipeline_mode = #tpu.pipeline_mode<synchronous>, transform_indices = @transform_7, window_bounds = array<i64: 2, 1>}]} {
    %c0 = arith.constant 0 : index
    %c0_0 = arith.constant 0 : index
    %0 = vector.load %arg1[%c0, %c0_0] : memref<32x4096xbf16, #tpu.memory_space<vmem>>, vector<32x4096xbf16>
    %c0_1 = arith.constant 0 : index
    %c0_2 = arith.constant 0 : index
    %1 = vector.load %arg2[%c0_1, %c0_2] : memref<4096x512xbf16, #tpu.memory_space<vmem>>, vector<4096x512xbf16>
    %cst = arith.constant dense<0.000000e+00> : vector<32x512xf32>
    %2 = tpu.matmul %0, %1, %cst {dimension_numbers = #tpu.dot_dimension_numbers<[1], [0], [0], [1], [0, 0, 1, 1], [], []>} : vector<32x4096xbf16>, vector<4096x512xbf16>, vector<32x512xf32> -> vector<32x512xf32>
    %cst_3 = arith.constant dense<0.000000e+00> : vector<512xf32>
    %3 = vector.multi_reduction <add>, %2, %cst_3 [0] : vector<32x512xf32> to vector<512xf32>
    %4 = vector.shape_cast %3 : vector<512xf32> to vector<1x512xf32>
    %cst_4 = arith.constant 3.200000e+01 : f32
    %5 = vector.broadcast %cst_4 : f32 to vector<1x512xf32>
    %6 = arith.divf %4, %5 : vector<1x512xf32>
    %7 = arith.mulf %2, %2 : vector<32x512xf32>
    %cst_5 = arith.constant dense<0.000000e+00> : vector<512xf32>
    %8 = vector.multi_reduction <add>, %7, %cst_5 [0] : vector<32x512xf32> to vector<512xf32>
    %9 = vector.shape_cast %8 : vector<512xf32> to vector<1x512xf32>
    %cst_6 = arith.constant 3.200000e+01 : f32
    %10 = vector.broadcast %cst_6 : f32 to vector<1x512xf32>
    %11 = arith.divf %9, %10 : vector<1x512xf32>
    %12 = arith.mulf %6, %6 : vector<1x512xf32>
    %13 = arith.subf %11, %12 : vector<1x512xf32>
    %cst_7 = arith.constant 0.000000e+00 : f32
    %14 = vector.broadcast %cst_7 : f32 to vector<1x512xf32>
    %15 = arith.maximumf %13, %14 : vector<1x512xf32>
    %c0_8 = arith.constant 0 : index
    %c0_9 = arith.constant 0 : index
    %16 = vector.load %arg3[%c0_8, %c0_9] : memref<1x512xf32, #tpu.memory_space<vmem>>, vector<1x512xf32>
    %cst_10 = arith.constant 9.99999974E-6 : f32
    %17 = vector.broadcast %cst_10 : f32 to vector<1x512xf32>
    %18 = arith.addf %15, %17 : vector<1x512xf32>
    %19 = math.rsqrt %18 : vector<1x512xf32>
    %20 = arith.mulf %16, %19 : vector<1x512xf32>
    %c0_11 = arith.constant 0 : index
    %c0_12 = arith.constant 0 : index
    %21 = vector.load %arg4[%c0_11, %c0_12] : memref<1x512xf32, #tpu.memory_space<vmem>>, vector<1x512xf32>
    %22 = arith.mulf %6, %20 : vector<1x512xf32>
    %23 = arith.subf %21, %22 : vector<1x512xf32>
    %24 = vector.broadcast %20 : vector<1x512xf32> to vector<32x512xf32>
    %25 = arith.mulf %2, %24 : vector<32x512xf32>
    %26 = vector.broadcast %23 : vector<1x512xf32> to vector<32x512xf32>
    %27 = arith.addf %25, %26 : vector<32x512xf32>
    %cst_13 = arith.constant 0.000000e+00 : f32
    %28 = vector.broadcast %cst_13 : f32 to vector<32x512xf32>
    %29 = arith.maximumf %27, %28 : vector<32x512xf32>
    %c0_14 = arith.constant 0 : index
    %c0_15 = arith.constant 0 : index
    %30 = vector.load %arg5[%c0_14, %c0_15] : memref<32x512xf32, #tpu.memory_space<vmem>>, vector<32x512xf32>
    %31 = arith.mulf %29, %30 : vector<32x512xf32>
    %c0_16 = arith.constant 0 : index
    %c0_17 = arith.constant 0 : index
    %32 = vector.load %arg6[%c0_16, %c0_17] : memref<2x32xf32, #tpu.memory_space<vmem>>, vector<2x32xf32>
    %cst_18 = arith.constant dense<0.000000e+00> : vector<2x512xf32>
    %33 = tpu.matmul %32, %31, %cst_18 {dimension_numbers = #tpu.dot_dimension_numbers<[1], [0], [0], [1], [0, 0, 1, 1], [], []>} : vector<2x32xf32>, vector<32x512xf32>, vector<2x512xf32> -> vector<2x512xf32>
    %cst_19 = arith.constant dense<0.000000e+00> : vector<2xf32>
    %34 = vector.multi_reduction <add>, %33, %cst_19 [1] : vector<2x512xf32> to vector<2xf32>
    %35 = vector.shape_cast %34 : vector<2xf32> to vector<2x1xf32>
    %c0_20 = arith.constant 0 : index
    %c0_21 = arith.constant 0 : index
    %36 = vector.load %arg7[%c0_20, %c0_21] : memref<1x1xf32, #tpu.memory_space<vmem>>, vector<1x1xf32>
    %37 = vector.broadcast %36 : vector<1x1xf32> to vector<2x1xf32>
    %38 = arith.addf %35, %37 : vector<2x1xf32>
    %c0_22 = arith.constant 0 : index
    %c0_23 = arith.constant 0 : index
    %39 = vector.load %arg8[%c0_22, %c0_23] : memref<2x1xf32, #tpu.memory_space<vmem>>, vector<2x1xf32>
    tpu.vector_store %arg8[%c0_22, %c0_23], %38 {strides = array<i32>} : memref<2x1xf32, #tpu.memory_space<vmem>>, vector<2x1xf32>,
    return
  }
  func.func @transform_0(%arg0: i32) -> (i32, i32) {
    %c0_i32 = arith.constant 0 : i32
    %c0_i32_0 = arith.constant 0 : i32
    %c0_i32_1 = arith.constant 0 : i32
    return %c0_i32, %c0_i32_0 : i32, i32
  }
  func.func @transform_1(%arg0: i32) -> (i32, i32) {
    %c0_i32 = arith.constant 0 : i32
    %c0_i32_0 = arith.constant 0 : i32
    %c0_i32_1 = arith.constant 0 : i32
    return %c0_i32, %c0_i32_0 : i32, i32
  }
  func.func @transform_2(%arg0: i32) -> (i32, i32) {
    %c0_i32 = arith.constant 0 : i32
    %c0_i32_0 = arith.constant 0 : i32
    %c0_i32_1 = arith.constant 0 : i32
    return %c0_i32, %c0_i32_0 : i32, i32
  }
  func.func @transform_3(%arg0: i32) -> (i32, i32) {
    %c0_i32 = arith.constant 0 : i32
    %c0_i32_0 = arith.constant 0 : i32
    %c0_i32_1 = arith.constant 0 : i32
    return %c0_i32, %c0_i32_0 : i32, i32
  }
  func.func @transform_4(%arg0: i32) -> (i32, i32) {
    %c0_i32 = arith.constant 0 : i32
    %c0_i32_0 = arith.constant 0 : i32
    %c0_i32_1 = arith.constant 0 : i32
    return %c0_i32, %c0_i32_0 : i32, i32
  }
  func.func @transform_5(%arg0: i32) -> (i32, i32) {
    %c0_i32 = arith.constant 0 : i32
    %c0_i32_0 = arith.constant 0 : i32
    %c0_i32_1 = arith.constant 0 : i32
    return %c0_i32, %c0_i32_0 : i32, i32
  }
  func.func @transform_6(%arg0: i32) -> (i32, i32) {
    %c0_i32 = arith.constant 0 : i32
    %c0_i32_0 = arith.constant 0 : i32
    %c0_i32_1 = arith.constant 0 : i32
    return %c0_i32, %c0_i32_0 : i32, i32
  }
  func.func @transform_7(%arg0: i32) -> (i32, i32) {
    %c0_i32 = arith.constant 0 : i32
    %c0_i32_0 = arith.constant 0 : i32
    %c0_i32_1 = arith.constant 0 : i32
    return %c0_i32, %c0_i32_0 : i32, i32
  }
}

</mosaic_0001>

<llo_original>
// kernel: discriminator_wgan_32.3
$region0: #{discriminator_wgan_32.3}
  #allocation0 [shape = 'u32[]', space=smem, size = 0x4, offset = 0x4, fixed_abs, tag = 'smem constant byte address 0x4 - core index']
  #allocation1 [shape = 'u32[144,128]{1,0:T(1,128)}', space=vmem, size = 0x12000, scoped, tag = 'internal scratch']
  %s0 = inlined_call_operand.vmem [shape: bf16[512,128], index: 0, kind: input, shape index: {}]
  %s1 = inlined_call_operand.vmem [shape: bf16[128,64], index: 1, kind: input, shape index: {}]
  %s2 = inlined_call_operand.vmem [shape: f32[1,64], index: 2, kind: input, shape index: {}]
  %s3 = inlined_call_operand.vmem [shape: f32[1,64], index: 3, kind: input, shape index: {}]
  %s4 = inlined_call_operand.vmem [shape: bf16[512,64], index: 4, kind: output, shape index: {}]
  %s5 = sld [smem:[#allocation0]]
  $region26: #{discriminator_wgan_32.3} parent=0
    _
  %s7 = ssub.s32 1, %s5
  %s8 = scalar_select 0, %s7, %s5
  // Predicated region
  $region2: #{discriminator_wgan_32.3} parent=0 // pred_check
    _
  $region3: #{discriminator_wgan_32.3} parent=0 // pred_check_branch
    %10 = sbr.rel (0) target = $region5
  $region4: #{discriminator_wgan_32.3} parent=0 // pred_region
    _
  $region5: #{discriminator_wgan_32.3} parent=0 // pred_fallthru
    _
  // Predicated region
  $region6: #{discriminator_wgan_32.3} parent=0 // pred_check
    _
  $region7: #{discriminator_wgan_32.3} parent=0 // pred_check_branch
    %12 = sbr.rel (0) target = $region9
  $region8: #{discriminator_wgan_32.3} parent=0 // pred_region
    _
  $region9: #{discriminator_wgan_32.3} parent=0 // pred_fallthru
    _
  // Predicated region
  $region10: #{discriminator_wgan_32.3} parent=0 // pred_check
    _
  $region11: #{discriminator_wgan_32.3} parent=0 // pred_check_branch
    %14 = sbr.rel (0) target = $region13
  $region12: #{discriminator_wgan_32.3} parent=0 // pred_region
    _
  $region13: #{discriminator_wgan_32.3} parent=0 // pred_fallthru
    _
  // Predicated region
  $region14: #{discriminator_wgan_32.3} parent=0 // pred_check
    _
  $region15: #{discriminator_wgan_32.3} parent=0 // pred_check_branch
    %16 = sbr.rel (0) target = $region17
  $region16: #{discriminator_wgan_32.3} parent=0 // pred_region
    _
  $region17: #{discriminator_wgan_32.3} parent=0 // pred_fallthru
    _
  %v18 = vld [vmem:[%s0] sm:$0xf]
  %v19 = vld [vmem:[%s0 + $0x4] sm:$0xf]
  %v20 = vld [vmem:[%s0 + $0x8] sm:$0xf]
  %v21 = vld [vmem:[%s0 + $0xc] sm:$0xf]
  %v22 = vld [vmem:[%s0 + $0x10] sm:$0xf]
  %v23 = vld [vmem:[%s0 + $0x14] sm:$0xf]
  %v24 = vld [vmem:[%s0 + $0x18] sm:$0xf]
  %v25 = vld [vmem:[%s0 + $0x1c] sm:$0xf]
  %v26 = vld [vmem:[%s0 + $0x20] sm:$0xf]
  %v27 = vld [vmem:[%s0 + $0x24] sm:$0xf]
  %v28 = vld [vmem:[%s0 + $0x28] sm:$0xf]
  %v29 = vld [vmem:[%s0 + $0x2c] sm:$0xf]
  %v30 = vld [vmem:[%s0 + $0x30] sm:$0xf]
  %v31 = vld [vmem:[%s0 + $0x34] sm:$0xf]
  %v32 = vld [vmem:[%s0 + $0x38] sm:$0xf]
  %v33 = vld [vmem:[%s0 + $0x3c] sm:$0xf]
  %v34 = vld [vmem:[%s0 + $0x40] sm:$0xf]
  %v35 = vld [vmem:[%s0 + $0x44] sm:$0xf]
  %v36 = vld [vmem:[%s0 + $0x48] sm:$0xf]
  %v37 = vld [vmem:[%s0 + $0x4c] sm:$0xf]
  %v38 = vld [vmem:[%s0 + $0x50] sm:$0xf]
  %v39 = vld [vmem:[%s0 + $0x54] sm:$0xf]
  %v40 = vld [vmem:[%s0 + $0x58] sm:$0xf]
  %v41 = vld [vmem:[%s0 + $0x5c] sm:$0xf]
  %v42 = vld [vmem:[%s0 + $0x60] sm:$0xf]
  %v43 = vld [vmem:[%s0 + $0x64] sm:$0xf]
  %v44 = vld [vmem:[%s0 + $0x68] sm:$0xf]
  %v45 = vld [vmem:[%s0 + $0x6c] sm:$0xf]
  %v46 = vld [vmem:[%s0 + $0x70] sm:$0xf]
  %v47 = vld [vmem:[%s0 + $0x74] sm:$0xf]
  %v48 = vld [vmem:[%s0 + $0x78] sm:$0xf]
  %v49 = vld [vmem:[%s0 + $0x7c] sm:$0xf]
  %v50 = vld [vmem:[%s0 + $0x80] sm:$0xf]
  %v51 = vld [vmem:[%s0 + $0x84] sm:$0xf]
  %v52 = vld [vmem:[%s0 + $0x88] sm:$0xf]
  %v53 = vld [vmem:[%s0 + $0x8c] sm:$0xf]
  %v54 = vld [vmem:[%s0 + $0x90] sm:$0xf]
  %v55 = vld [vmem:[%s0 + $0x94] sm:$0xf]
  %v56 = vld [vmem:[%s0 + $0x98] sm:$0xf]
  %v57 = vld [vmem:[%s0 + $0x9c] sm:$0xf]
  %v58 = vld [vmem:[%s0 + $0xa0] sm:$0xf]
  %v59 = vld [vmem:[%s0 + $0xa4] sm:$0xf]
  %v60 = vld [vmem:[%s0 + $0xa8] sm:$0xf]
  %v61 = vld [vmem:[%s0 + $0xac] sm:$0xf]
  %v62 = vld [vmem:[%s0 + $0xb0] sm:$0xf]
  %v63 = vld [vmem:[%s0 + $0xb4] sm:$0xf]
  %v64 = vld [vmem:[%s0 + $0xb8] sm:$0xf]
  %v65 = vld [vmem:[%s0 + $0xbc] sm:$0xf]
  %v66 = vld [vmem:[%s0 + $0xc0] sm:$0xf]
  %v67 = vld [vmem:[%s0 + $0xc4] sm:$0xf]
  %v68 = vld [vmem:[%s0 + $0xc8] sm:$0xf]
  %v69 = vld [vmem:[%s0 + $0xcc] sm:$0xf]
  %v70 = vld [vmem:[%s0 + $0xd0] sm:$0xf]
  %v71 = vld [vmem:[%s0 + $0xd4] sm:$0xf]
  %v72 = vld [vmem:[%s0 + $0xd8] sm:$0xf]
  %v73 = vld [vmem:[%s0 + $0xdc] sm:$0xf]
  %v74 = vld [vmem:[%s0 + $0xe0] sm:$0xf]
  %v75 = vld [vmem:[%s0 + $0xe4] sm:$0xf]
  %v76 = vld [vmem:[%s0 + $0xe8] sm:$0xf]
  %v77 = vld [vmem:[%s0 + $0xec] sm:$0xf]
  %v78 = vld [vmem:[%s0 + $0xf0] sm:$0xf]
  %v79 = vld [vmem:[%s0 + $0xf4] sm:$0xf]
  %v80 = vld [vmem:[%s0 + $0xf8] sm:$0xf]
  %v81 = vld [vmem:[%s0 + $0xfc] sm:$0xf]
  %v82 = vld [vmem:[%s1] sm:$0xf]
  %v83 = vld [vmem:[%s1 + $0x4] sm:$0xf]
  %v84 = vld [vmem:[%s1 + $0x8] sm:$0xf]
  %v85 = vld [vmem:[%s1 + $0xc] sm:$0xf]
  %v86 = vld [vmem:[%s1 + $0x10] sm:$0xf]
  %v87 = vld [vmem:[%s1 + $0x14] sm:$0xf]
  %v88 = vld [vmem:[%s1 + $0x18] sm:$0xf]
  %v89 = vld [vmem:[%s1 + $0x1c] sm:$0xf]
  %v90 = vld [vmem:[%s1 + $0x20] sm:$0xf]
  %v91 = vld [vmem:[%s1 + $0x24] sm:$0xf]
  %v92 = vld [vmem:[%s1 + $0x28] sm:$0xf]
  %v93 = vld [vmem:[%s1 + $0x2c] sm:$0xf]
  %v94 = vld [vmem:[%s1 + $0x30] sm:$0xf]
  %v95 = vld [vmem:[%s1 + $0x34] sm:$0xf]
  %v96 = vld [vmem:[%s1 + $0x38] sm:$0xf]
  %v97 = vld [vmem:[%s1 + $0x3c] sm:$0xf]
  %v162 = vunpack.c.l.b16 %v18
  %v163 = vunpack.c.l.b16 %v19
  %v164 = vunpack.c.l.b16 %v20
  %v165 = vunpack.c.l.b16 %v21
  %v166 = vunpack.c.l.b16 %v22
  %v167 = vunpack.c.l.b16 %v23
  %v168 = vunpack.c.l.b16 %v24
  %v169 = vunpack.c.l.b16 %v25
  %v170 = vunpack.c.l.b16 %v26
  %v171 = vunpack.c.l.b16 %v27
  %v172 = vunpack.c.l.b16 %v28
  %v173 = vunpack.c.l.b16 %v29
  %v174 = vunpack.c.l.b16 %v30
  %v175 = vunpack.c.l.b16 %v31
  %v176 = vunpack.c.l.b16 %v32
  %v177 = vunpack.c.l.b16 %v33
  %v178 = vunpack.c.l.b16 %v34
  %v179 = vunpack.c.l.b16 %v35
  %v180 = vunpack.c.l.b16 %v36
  %v181 = vunpack.c.l.b16 %v37
  %v182 = vunpack.c.l.b16 %v38
  %v183 = vunpack.c.l.b16 %v39
  %v184 = vunpack.c.l.b16 %v40
  %v185 = vunpack.c.l.b16 %v41
  %v186 = vunpack.c.l.b16 %v42
  %v187 = vunpack.c.l.b16 %v43
  %v188 = vunpack.c.l.b16 %v44
  %v189 = vunpack.c.l.b16 %v45
  %v190 = vunpack.c.l.b16 %v46
  %v191 = vunpack.c.l.b16 %v47
  %v192 = vunpack.c.l.b16 %v48
  %v193 = vunpack.c.l.b16 %v49
  %v194 = vunpack.c.l.b16 %v50
  %v195 = vunpack.c.l.b16 %v51
  %v196 = vunpack.c.l.b16 %v52
  %v197 = vunpack.c.l.b16 %v53
  %v198 = vunpack.c.l.b16 %v54
  %v199 = vunpack.c.l.b16 %v55
  %v200 = vunpack.c.l.b16 %v56
  %v201 = vunpack.c.l.b16 %v57
  %v202 = vunpack.c.l.b16 %v58
  %v203 = vunpack.c.l.b16 %v59
  %v204 = vunpack.c.l.b16 %v60
  %v205 = vunpack.c.l.b16 %v61
  %v206 = vunpack.c.l.b16 %v62
  %v207 = vunpack.c.l.b16 %v63
  %v208 = vunpack.c.l.b16 %v64
  %v209 = vunpack.c.l.b16 %v65
  %v210 = vunpack.c.l.b16 %v66
  %v211 = vunpack.c.l.b16 %v67
  %v212 = vunpack.c.l.b16 %v68
  %v213 = vunpack.c.l.b16 %v69
  %v214 = vunpack.c.l.b16 %v70
  %v215 = vunpack.c.l.b16 %v71
  %v216 = vunpack.c.l.b16 %v72
  %v217 = vunpack.c.l.b16 %v73
  %v218 = vunpack.c.l.b16 %v74
  %v219 = vunpack.c.l.b16 %v75
  %v220 = vunpack.c.l.b16 %v76
  %v221 = vunpack.c.l.b16 %v77
  %v222 = vunpack.c.l.b16 %v78
  %v223 = vunpack.c.l.b16 %v79
  %v224 = vunpack.c.l.b16 %v80
  %v225 = vunpack.c.l.b16 %v81
  %v226 = vpack.c.b16 %v163, %v162
  %v227 = vpack.c.b16 %v165, %v164
  %v228 = vpack.c.b16 %v167, %v166
  %v229 = vpack.c.b16 %v169, %v168
  %v230 = vpack.c.b16 %v171, %v170
  %v231 = vpack.c.b16 %v173, %v172
  %v232 = vpack.c.b16 %v175, %v174
  %v233 = vpack.c.b16 %v177, %v176
  %v234 = vpack.c.b16 %v179, %v178
  %v235 = vpack.c.b16 %v181, %v180
  %v236 = vpack.c.b16 %v183, %v182
  %v237 = vpack.c.b16 %v185, %v184
  %v238 = vpack.c.b16 %v187, %v186
  %v239 = vpack.c.b16 %v189, %v188
  %v240 = vpack.c.b16 %v191, %v190
  %v241 = vpack.c.b16 %v193, %v192
  %v242 = vpack.c.b16 %v195, %v194
  %v243 = vpack.c.b16 %v197, %v196
  %v244 = vpack.c.b16 %v199, %v198
  %v245 = vpack.c.b16 %v201, %v200
  %v246 = vpack.c.b16 %v203, %v202
  %v247 = vpack.c.b16 %v205, %v204
  %v248 = vpack.c.b16 %v207, %v206
  %v249 = vpack.c.b16 %v209, %v208
  %v250 = vpack.c.b16 %v211, %v210
  %v251 = vpack.c.b16 %v213, %v212
  %v252 = vpack.c.b16 %v215, %v214
  %v253 = vpack.c.b16 %v217, %v216
  %v254 = vpack.c.b16 %v219, %v218
  %v255 = vpack.c.b16 %v221, %v220
  %v256 = vpack.c.b16 %v223, %v222
  %v257 = vpack.c.b16 %v225, %v224
  %v306 = vunpack.c.l.b16 %v82
  %v307 = vunpack.c.l.b16 %v83
  %v308 = vunpack.c.l.b16 %v84
  %v309 = vunpack.c.l.b16 %v85
  %v310 = vunpack.c.l.b16 %v86
  %v311 = vunpack.c.l.b16 %v87
  %v312 = vunpack.c.l.b16 %v88
  %v313 = vunpack.c.l.b16 %v89
  %v314 = vunpack.c.l.b16 %v90
  %v315 = vunpack.c.l.b16 %v91
  %v316 = vunpack.c.l.b16 %v92
  %v317 = vunpack.c.l.b16 %v93
  %v318 = vunpack.c.l.b16 %v94
  %v319 = vunpack.c.l.b16 %v95
  %v320 = vunpack.c.l.b16 %v96
  %v321 = vunpack.c.l.b16 %v97
  %v322 = vpack.c.b16 %v307, %v306
  %v323 = vpack.c.b16 %v309, %v308
  %v324 = vpack.c.b16 %v311, %v310
  %v325 = vpack.c.b16 %v313, %v312
  %v326 = vpack.c.b16 %v315, %v314
  %v327 = vpack.c.b16 %v317, %v316
  %v328 = vpack.c.b16 %v319, %v318
  %v329 = vpack.c.b16 %v321, %v320
  %338 = vmatprep.subr.bf16.mxu0 0
  %339 = vmatpush1.bf16.msra.mxu0 %v322
  %340 = vmatprep.subr.bf16.mxu0 0
  %341 = vmatpush1.bf16.msra.mxu0 %v323
  %342 = vmatprep.subr.bf16.mxu0 0
  %343 = vmatpush1.bf16.msra.mxu0 %v324
  %344 = vmatprep.subr.bf16.mxu0 0
  %345 = vmatpush1.bf16.msra.mxu0 %v325
  %346 = vmatprep.subr.bf16.mxu0 0
  %347 = vmatpush1.bf16.msra.mxu0 %v326
  %348 = vmatprep.subr.bf16.mxu0 0
  %349 = vmatpush1.bf16.msra.mxu0 %v327
  %350 = vmatprep.subr.bf16.mxu0 0
  %351 = vmatpush1.bf16.msra.mxu0 %v328
  %352 = vmatprep.subr.bf16.mxu0 0
  %353 = vmatpush1.bf16.msra.mxu0 %v329
  %354 = vmatprep.subr.bf16.mxu0 0
  %355 = vmatpush1.bf16.msra.mxu0 0
  %356 = vmatprep.subr.bf16.mxu0 0
  %357 = vmatpush1.bf16.msra.mxu0 0
  %358 = vmatprep.subr.bf16.mxu0 0
  %359 = vmatpush1.bf16.msra.mxu0 0
  %360 = vmatprep.subr.bf16.mxu0 0
  %361 = vmatpush1.bf16.msra.mxu0 0
  %362 = vmatprep.subr.bf16.mxu0 0
  %363 = vmatpush1.bf16.msra.mxu0 0
  %364 = vmatprep.subr.bf16.mxu0 0
  %365 = vmatpush1.bf16.msra.mxu0 0
  %366 = vmatprep.subr.bf16.mxu0 0
  %367 = vmatpush1.bf16.msra.mxu0 0
  %368 = vmatprep.subr.bf16.mxu0 0
  %369 = vmatpush1.bf16.msra.mxu0 0
  %370 = vmatprep.mubr.bf16.mxu0 0
  %371 = vmatmul.mubr.bf16.gmra.mrb[0].mxu0 %v226
  %v372 = vpop.f32.mrb[0].mxu0
  %v373 = vadd.f32 0.0, %v372
  %v374 = vpop.f32.mrb[0].mxu0
  %v375 = vpop.f32.mrb[0].mxu0
  %v376 = vadd.f32 0.0, %v375
  %v377 = vpop.f32.mrb[0].mxu0
  %378 = vmatprep.mubr.bf16.mxu0 0
  %379 = vmatmul.mubr.bf16.gmra.mrb[0].mxu0 %v227
  %v380 = vpop.f32.mrb[0].mxu0
  %v381 = vadd.f32 0.0, %v380
  %v382 = vpop.f32.mrb[0].mxu0
  %v383 = vpop.f32.mrb[0].mxu0
  %v384 = vadd.f32 0.0, %v383
  %v385 = vpop.f32.mrb[0].mxu0
  %386 = vmatprep.mubr.bf16.mxu0 0
  %387 = vmatmul.mubr.bf16.gmra.mrb[0].mxu0 %v228
  %v388 = vpop.f32.mrb[0].mxu0
  %v389 = vadd.f32 0.0, %v388
  %v390 = vpop.f32.mrb[0].mxu0
  %v391 = vpop.f32.mrb[0].mxu0
  %v392 = vadd.f32 0.0, %v391
  %v393 = vpop.f32.mrb[0].mxu0
  %394 = vmatprep.mubr.bf16.mxu0 0
  %395 = vmatmul.mubr.bf16.gmra.mrb[0].mxu0 %v229
  %v396 = vpop.f32.mrb[0].mxu0
  %v397 = vadd.f32 0.0, %v396
  %v398 = vpop.f32.mrb[0].mxu0
  %v399 = vpop.f32.mrb[0].mxu0
  %v400 = vadd.f32 0.0, %v399
  %v401 = vpop.f32.mrb[0].mxu0
  %402 = vmatprep.mubr.bf16.mxu0 0
  %403 = vmatmul.mubr.bf16.gmra.mrb[0].mxu0 %v230
  %v404 = vpop.f32.mrb[0].mxu0
  %v405 = vadd.f32 0.0, %v404
  %v406 = vpop.f32.mrb[0].mxu0
  %v407 = vpop.f32.mrb[0].mxu0
  %v408 = vadd.f32 0.0, %v407
  %v409 = vpop.f32.mrb[0].mxu0
  %410 = vmatprep.mubr.bf16.mxu0 0
  %411 = vmatmul.mubr.bf16.gmra.mrb[0].mxu0 %v231
  %v412 = vpop.f32.mrb[0].mxu0
  %v413 = vadd.f32 0.0, %v412
  %v414 = vpop.f32.mrb[0].mxu0
  %v415 = vpop.f32.mrb[0].mxu0
  %v416 = vadd.f32 0.0, %v415
  %v417 = vpop.f32.mrb[0].mxu0
  %418 = vmatprep.mubr.bf16.mxu0 0
  %419 = vmatmul.mubr.bf16.gmra.mrb[0].mxu0 %v232
  %v420 = vpop.f32.mrb[0].mxu0
  %v421 = vadd.f32 0.0, %v420
  %v422 = vpop.f32.mrb[0].mxu0
  %v423 = vpop.f32.mrb[0].mxu0
  %v424 = vadd.f32 0.0, %v423
  %v425 = vpop.f32.mrb[0].mxu0
  %426 = vmatprep.mubr.bf16.mxu0 0
  %427 = vmatmul.mubr.bf16.gmra.mrb[0].mxu0 %v233
  %v428 = vpop.f32.mrb[0].mxu0
  %v429 = vadd.f32 0.0, %v428
  %v430 = vpop.f32.mrb[0].mxu0
  %v431 = vpop.f32.mrb[0].mxu0
  %v432 = vadd.f32 0.0, %v431
  %v433 = vpop.f32.mrb[0].mxu0
  %434 = vmatprep.mubr.bf16.mxu0 0
  %435 = vmatmul.mubr.bf16.gmra.mrb[0].mxu0 %v234
  %v436 = vpop.f32.mrb[0].mxu0
  %v437 = vadd.f32 0.0, %v436
  %v438 = vpop.f32.mrb[0].mxu0
  %v439 = vpop.f32.mrb[0].mxu0
  %v440 = vadd.f32 0.0, %v439
  %v441 = vpop.f32.mrb[0].mxu0
  %442 = vmatprep.mubr.bf16.mxu0 0
  %443 = vmatmul.mubr.bf16.gmra.mrb[0].mxu0 %v235
  %v444 = vpop.f32.mrb[0].mxu0
  %v445 = vadd.f32 0.0, %v444
  %v446 = vpop.f32.mrb[0].mxu0
  %v447 = vpop.f32.mrb[0].mxu0
  %v448 = vadd.f32 0.0, %v447
  %v449 = vpop.f32.mrb[0].mxu0
  %450 = vmatprep.mubr.bf16.mxu0 0
  %451 = vmatmul.mubr.bf16.gmra.mrb[0].mxu0 %v236
  %v452 = vpop.f32.mrb[0].mxu0
  %v453 = vadd.f32 0.0, %v452
  %v454 = vpop.f32.mrb[0].mxu0
  %v455 = vpop.f32.mrb[0].mxu0
  %v456 = vadd.f32 0.0, %v455
  %v457 = vpop.f32.mrb[0].mxu0
  %458 = vmatprep.mubr.bf16.mxu0 0
  %459 = vmatmul.mubr.bf16.gmra.mrb[0].mxu0 %v237
  %v460 = vpop.f32.mrb[0].mxu0
  %v461 = vadd.f32 0.0, %v460
  %v462 = vpop.f32.mrb[0].mxu0
  %v463 = vpop.f32.mrb[0].mxu0
  %v464 = vadd.f32 0.0, %v463
  %v465 = vpop.f32.mrb[0].mxu0
  %466 = vmatprep.mubr.bf16.mxu0 0
  %467 = vmatmul.mubr.bf16.gmra.mrb[0].mxu0 %v238
  %v468 = vpop.f32.mrb[0].mxu0
  %v469 = vadd.f32 0.0, %v468
  %v470 = vpop.f32.mrb[0].mxu0
  %v471 = vpop.f32.mrb[0].mxu0
  %v472 = vadd.f32 0.0, %v471
  %v473 = vpop.f32.mrb[0].mxu0
  %474 = vmatprep.mubr.bf16.mxu0 0
  %475 = vmatmul.mubr.bf16.gmra.mrb[0].mxu0 %v239
  %v476 = vpop.f32.mrb[0].mxu0
  %v477 = vadd.f32 0.0, %v476
  %v478 = vpop.f32.mrb[0].mxu0
  %v479 = vpop.f32.mrb[0].mxu0
  %v480 = vadd.f32 0.0, %v479
  %v481 = vpop.f32.mrb[0].mxu0
  %482 = vmatprep.mubr.bf16.mxu0 0
  %483 = vmatmul.mubr.bf16.gmra.mrb[0].mxu0 %v240
  %v484 = vpop.f32.mrb[0].mxu0
  %v485 = vadd.f32 0.0, %v484
  %v486 = vpop.f32.mrb[0].mxu0
  %v487 = vpop.f32.mrb[0].mxu0
  %v488 = vadd.f32 0.0, %v487
  %v489 = vpop.f32.mrb[0].mxu0
  %490 = vmatprep.mubr.bf16.mxu0 0
  %491 = vmatmul.mubr.bf16.gmra.mrb[0].mxu0 %v241
  %v492 = vpop.f32.mrb[0].mxu0
  %v493 = vadd.f32 0.0, %v492
  %v494 = vpop.f32.mrb[0].mxu0
  %v495 = vpop.f32.mrb[0].mxu0
  %v496 = vadd.f32 0.0, %v495
  %v497 = vpop.f32.mrb[0].mxu0
  %498 = vmatprep.mubr.bf16.mxu0 0
  %499 = vmatmul.mubr.bf16.gmra.mrb[0].mxu0 %v242
  %v500 = vpop.f32.mrb[0].mxu0
  %v501 = vadd.f32 0.0, %v500
  %v502 = vpop.f32.mrb[0].mxu0
  %v503 = vpop.f32.mrb[0].mxu0
  %v504 = vadd.f32 0.0, %v503
  %v505 = vpop.f32.mrb[0].mxu0
  %506 = vmatprep.mubr.bf16.mxu0 0
  %507 = vmatmul.mubr.bf16.gmra.mrb[0].mxu0 %v243
  %v508 = vpop.f32.mrb[0].mxu0
  %v509 = vadd.f32 0.0, %v508
  %v510 = vpop.f32.mrb[0].mxu0
  %v511 = vpop.f32.mrb[0].mxu0
  %v512 = vadd.f32 0.0, %v511
  %v513 = vpop.f32.mrb[0].mxu0
  %514 = vmatprep.mubr.bf16.mxu0 0
  %515 = vmatmul.mubr.bf16.gmra.mrb[0].mxu0 %v244
  %v516 = vpop.f32.mrb[0].mxu0
  %v517 = vadd.f32 0.0, %v516
  %v518 = vpop.f32.mrb[0].mxu0
  %v519 = vpop.f32.mrb[0].mxu0
  %v520 = vadd.f32 0.0, %v519
  %v521 = vpop.f32.mrb[0].mxu0
  %522 = vmatprep.mubr.bf16.mxu0 0
  %523 = vmatmul.mubr.bf16.gmra.mrb[0].mxu0 %v245
  %v524 = vpop.f32.mrb[0].mxu0
  %v525 = vadd.f32 0.0, %v524
  %v526 = vpop.f32.mrb[0].mxu0
  %v527 = vpop.f32.mrb[0].mxu0
  %v528 = vadd.f32 0.0, %v527
  %v529 = vpop.f32.mrb[0].mxu0
  %530 = vmatprep.mubr.bf16.mxu0 0
  %531 = vmatmul.mubr.bf16.gmra.mrb[0].mxu0 %v246
  %v532 = vpop.f32.mrb[0].mxu0
  %v533 = vadd.f32 0.0, %v532
  %v534 = vpop.f32.mrb[0].mxu0
  %v535 = vpop.f32.mrb[0].mxu0
  %v536 = vadd.f32 0.0, %v535
  %v537 = vpop.f32.mrb[0].mxu0
  %538 = vmatprep.mubr.bf16.mxu0 0
  %539 = vmatmul.mubr.bf16.gmra.mrb[0].mxu0 %v247
  %v540 = vpop.f32.mrb[0].mxu0
  %v541 = vadd.f32 0.0, %v540
  %v542 = vpop.f32.mrb[0].mxu0
  %v543 = vpop.f32.mrb[0].mxu0
  %v544 = vadd.f32 0.0, %v543
  %v545 = vpop.f32.mrb[0].mxu0
  %546 = vmatprep.mubr.bf16.mxu0 0
  %547 = vmatmul.mubr.bf16.gmra.mrb[0].mxu0 %v248
  %v548 = vpop.f32.mrb[0].mxu0
  %v549 = vadd.f32 0.0, %v548
  %v550 = vpop.f32.mrb[0].mxu0
  %v551 = vpop.f32.mrb[0].mxu0
  %v552 = vadd.f32 0.0, %v551
  %v553 = vpop.f32.mrb[0].mxu0
  %554 = vmatprep.mubr.bf16.mxu0 0
  %555 = vmatmul.mubr.bf16.gmra.mrb[0].mxu0 %v249
  %v556 = vpop.f32.mrb[0].mxu0
  %v557 = vadd.f32 0.0, %v556
  %v558 = vpop.f32.mrb[0].mxu0
  %v559 = vpop.f32.mrb[0].mxu0
  %v560 = vadd.f32 0.0, %v559
  %v561 = vpop.f32.mrb[0].mxu0
  %562 = vmatprep.mubr.bf16.mxu0 0
  %563 = vmatmul.mubr.bf16.gmra.mrb[0].mxu0 %v250
  %v564 = vpop.f32.mrb[0].mxu0
  %v565 = vadd.f32 0.0, %v564
  %v566 = vpop.f32.mrb[0].mxu0
  %v567 = vpop.f32.mrb[0].mxu0
  %v568 = vadd.f32 0.0, %v567
  %v569 = vpop.f32.mrb[0].mxu0
  %570 = vmatprep.mubr.bf16.mxu0 0
  %571 = vmatmul.mubr.bf16.gmra.mrb[0].mxu0 %v251
  %v572 = vpop.f32.mrb[0].mxu0
  %v573 = vadd.f32 0.0, %v572
  %v574 = vpop.f32.mrb[0].mxu0
  %v575 = vpop.f32.mrb[0].mxu0
  %v576 = vadd.f32 0.0, %v575
  %v577 = vpop.f32.mrb[0].mxu0
  %578 = vmatprep.mubr.bf16.mxu0 0
  %579 = vmatmul.mubr.bf16.gmra.mrb[0].mxu0 %v252
  %v580 = vpop.f32.mrb[0].mxu0
  %v581 = vadd.f32 0.0, %v580
  %v582 = vpop.f32.mrb[0].mxu0
  %v583 = vpop.f32.mrb[0].mxu0
  %v584 = vadd.f32 0.0, %v583
  %v585 = vpop.f32.mrb[0].mxu0
  %586 = vmatprep.mubr.bf16.mxu0 0
  %587 = vmatmul.mubr.bf16.gmra.mrb[0].mxu0 %v253
  %v588 = vpop.f32.mrb[0].mxu0
  %v589 = vadd.f32 0.0, %v588
  %v590 = vpop.f32.mrb[0].mxu0
  %v591 = vpop.f32.mrb[0].mxu0
  %v592 = vadd.f32 0.0, %v591
  %v593 = vpop.f32.mrb[0].mxu0
  %594 = vmatprep.mubr.bf16.mxu0 0
  %595 = vmatmul.mubr.bf16.gmra.mrb[0].mxu0 %v254
  %v596 = vpop.f32.mrb[0].mxu0
  %v597 = vadd.f32 0.0, %v596
  %v598 = vpop.f32.mrb[0].mxu0
  %v599 = vpop.f32.mrb[0].mxu0
  %v600 = vadd.f32 0.0, %v599
  %v601 = vpop.f32.mrb[0].mxu0
  %602 = vmatprep.mubr.bf16.mxu0 0
  %603 = vmatmul.mubr.bf16.gmra.mrb[0].mxu0 %v255
  %v604 = vpop.f32.mrb[0].mxu0
  %v605 = vadd.f32 0.0, %v604
  %v606 = vpop.f32.mrb[0].mxu0
  %v607 = vpop.f32.mrb[0].mxu0
  %v608 = vadd.f32 0.0, %v607
  %v609 = vpop.f32.mrb[0].mxu0
  %610 = vmatprep.mubr.bf16.mxu0 0
  %611 = vmatmul.mubr.bf16.gmra.mrb[0].mxu0 %v256
  %v612 = vpop.f32.mrb[0].mxu0
  %v613 = vadd.f32 0.0, %v612
  %v614 = vpop.f32.mrb[0].mxu0
  %v615 = vpop.f32.mrb[0].mxu0
  %v616 = vadd.f32 0.0, %v615
  %v617 = vpop.f32.mrb[0].mxu0
  %618 = vmatprep.mubr.bf16.mxu0 0
  %619 = vmatmul.mubr.bf16.gmra.mrb[0].mxu0 %v257
  %v620 = vpop.f32.mrb[0].mxu0
  %v621 = vadd.f32 0.0, %v620
  %v622 = vpop.f32.mrb[0].mxu0
  %v623 = vpop.f32.mrb[0].mxu0
  %v624 = vadd.f32 0.0, %v623
  %v625 = vpop.f32.mrb[0].mxu0
  %626 = vdwg.mxu0
  %vm627 = vcmask 523264
  %v628 = vsel %vm627, %v373, 0.0
  %v629 = vsel %vm627, %v376, 0.0
  %v630 = vadd.f32 %v628, %v629
  %v631 = vsel %vm627, %v381, 0.0
  %v632 = vadd.f32 %v630, %v631
  %v633 = vsel %vm627, %v384, 0.0
  %v634 = vadd.f32 %v632, %v633
  %v635 = vsel %vm627, %v389, 0.0
  %v636 = vadd.f32 %v634, %v635
  %v637 = vsel %vm627, %v392, 0.0
  %v638 = vadd.f32 %v636, %v637
  %v639 = vsel %vm627, %v397, 0.0
  %v640 = vadd.f32 %v638, %v639
  %v641 = vsel %vm627, %v400, 0.0
  %v642 = vadd.f32 %v640, %v641
  %v643 = vsel %vm627, %v405, 0.0
  %v644 = vadd.f32 %v642, %v643
  %v645 = vsel %vm627, %v408, 0.0
  %v646 = vadd.f32 %v644, %v645
  %v647 = vsel %vm627, %v413, 0.0
  %v648 = vadd.f32 %v646, %v647
  %v649 = vsel %vm627, %v416, 0.0
  %v650 = vadd.f32 %v648, %v649
  %v651 = vsel %vm627, %v421, 0.0
  %v652 = vadd.f32 %v650, %v651
  %v653 = vsel %vm627, %v424, 0.0
  %v654 = vadd.f32 %v652, %v653
  %v655 = vsel %vm627, %v429, 0.0
  %v656 = vadd.f32 %v654, %v655
  %v657 = vsel %vm627, %v432, 0.0
  %v658 = vadd.f32 %v656, %v657
  %v659 = vsel %vm627, %v437, 0.0
  %v660 = vadd.f32 %v658, %v659
  %v661 = vsel %vm627, %v440, 0.0
  %v662 = vadd.f32 %v660, %v661
  %v663 = vsel %vm627, %v445, 0.0
  %v664 = vadd.f32 %v662, %v663
  %v665 = vsel %vm627, %v448, 0.0
  %v666 = vadd.f32 %v664, %v665
  %v667 = vsel %vm627, %v453, 0.0
  %v668 = vadd.f32 %v666, %v667
  %v669 = vsel %vm627, %v456, 0.0
  %v670 = vadd.f32 %v668, %v669
  %v671 = vsel %vm627, %v461, 0.0
  %v672 = vadd.f32 %v670, %v671
  %v673 = vsel %vm627, %v464, 0.0
  %v674 = vadd.f32 %v672, %v673
  %v675 = vsel %vm627, %v469, 0.0
  %v676 = vadd.f32 %v674, %v675
  %v677 = vsel %vm627, %v472, 0.0
  %v678 = vadd.f32 %v676, %v677
  %v679 = vsel %vm627, %v477, 0.0
  %v680 = vadd.f32 %v678, %v679
  %v681 = vsel %vm627, %v480, 0.0
  %v682 = vadd.f32 %v680, %v681
  %v683 = vsel %vm627, %v485, 0.0
  %v684 = vadd.f32 %v682, %v683
  %v685 = vsel %vm627, %v488, 0.0
  %v686 = vadd.f32 %v684, %v685
  %v687 = vsel %vm627, %v493, 0.0
  %v688 = vadd.f32 %v686, %v687
  %v689 = vsel %vm627, %v496, 0.0
  %v690 = vadd.f32 %v688, %v689
  %v691 = vsel %vm627, %v501, 0.0
  %v692 = vadd.f32 %v690, %v691
  %v693 = vsel %vm627, %v504, 0.0
  %v694 = vadd.f32 %v692, %v693
  %v695 = vsel %vm627, %v509, 0.0
  %v696 = vadd.f32 %v694, %v695
  %v697 = vsel %vm627, %v512, 0.0
  %v698 = vadd.f32 %v696, %v697
  %v699 = vsel %vm627, %v517, 0.0
  %v700 = vadd.f32 %v698, %v699
  %v701 = vsel %vm627, %v520, 0.0
  %v702 = vadd.f32 %v700, %v701
  %v703 = vsel %vm627, %v525, 0.0
  %v704 = vadd.f32 %v702, %v703
  %v705 = vsel %vm627, %v528, 0.0
  %v706 = vadd.f32 %v704, %v705
  %v707 = vsel %vm627, %v533, 0.0
  %v708 = vadd.f32 %v706, %v707
  %v709 = vsel %vm627, %v536, 0.0
  %v710 = vadd.f32 %v708, %v709
  %v711 = vsel %vm627, %v541, 0.0
  %v712 = vadd.f32 %v710, %v711
  %v713 = vsel %vm627, %v544, 0.0
  %v714 = vadd.f32 %v712, %v713
  %v715 = vsel %vm627, %v549, 0.0
  %v716 = vadd.f32 %v714, %v715
  %v717 = vsel %vm627, %v552, 0.0
  %v718 = vadd.f32 %v716, %v717
  %v719 = vsel %vm627, %v557, 0.0
  %v720 = vadd.f32 %v718, %v719
  %v721 = vsel %vm627, %v560, 0.0
  %v722 = vadd.f32 %v720, %v721
  %v723 = vsel %vm627, %v565, 0.0
  %v724 = vadd.f32 %v722, %v723
  %v725 = vsel %vm627, %v568, 0.0
  %v726 = vadd.f32 %v724, %v725
  %v727 = vsel %vm627, %v573, 0.0
  %v728 = vadd.f32 %v726, %v727
  %v729 = vsel %vm627, %v576, 0.0
  %v730 = vadd.f32 %v728, %v729
  %v731 = vsel %vm627, %v581, 0.0
  %v732 = vadd.f32 %v730, %v731
  %v733 = vsel %vm627, %v584, 0.0
  %v734 = vadd.f32 %v732, %v733
  %v735 = vsel %vm627, %v589, 0.0
  %v736 = vadd.f32 %v734, %v735
  %v737 = vsel %vm627, %v592, 0.0
  %v738 = vadd.f32 %v736, %v737
  %v739 = vsel %vm627, %v597, 0.0
  %v740 = vadd.f32 %v738, %v739
  %v741 = vsel %vm627, %v600, 0.0
  %v742 = vadd.f32 %v740, %v741
  %v743 = vsel %vm627, %v605, 0.0
  %v744 = vadd.f32 %v742, %v743
  %v745 = vsel %vm627, %v608, 0.0
  %v746 = vadd.f32 %v744, %v745
  %v747 = vsel %vm627, %v613, 0.0
  %v748 = vadd.f32 %v746, %v747
  %v749 = vsel %vm627, %v616, 0.0
  %v750 = vadd.f32 %v748, %v749
  %v751 = vsel %vm627, %v621, 0.0
  %v752 = vadd.f32 %v750, %v751
  %v753 = vsel %vm627, %v624, 0.0
  %v754 = vadd.f32 %v752, %v753
  %v755 = vrot.slane %v754, 4
  %v756 = vadd.f32 %v754, %v755
  %v757 = vrot.slane %v756, 2
  %v758 = vadd.f32 %v756, %v757
  %v759 = vrot.slane %v758, 1
  %v760 = vadd.f32 %v758, %v759
  %v761 = vrcp.pop 512.0
  %v762 = vmul.f32 %v760, %v761
  %v763 = vmul.f32 %v373, %v373
  %v764 = vmul.f32 %v376, %v376
  %v765 = vmul.f32 %v381, %v381
  %v766 = vmul.f32 %v384, %v384
  %v767 = vmul.f32 %v389, %v389
  %v768 = vmul.f32 %v392, %v392
  %v769 = vmul.f32 %v397, %v397
  %v770 = vmul.f32 %v400, %v400
  %v771 = vmul.f32 %v405, %v405
  %v772 = vmul.f32 %v408, %v408
  %v773 = vmul.f32 %v413, %v413
  %v774 = vmul.f32 %v416, %v416
  %v775 = vmul.f32 %v421, %v421
  %v776 = vmul.f32 %v424, %v424
  %v777 = vmul.f32 %v429, %v429
  %v778 = vmul.f32 %v432, %v432
  %v779 = vmul.f32 %v437, %v437
  %v780 = vmul.f32 %v440, %v440
  %v781 = vmul.f32 %v445, %v445
  %v782 = vmul.f32 %v448, %v448
  %v783 = vmul.f32 %v453, %v453
  %v784 = vmul.f32 %v456, %v456
  %v785 = vmul.f32 %v461, %v461
  %v786 = vmul.f32 %v464, %v464
  %v787 = vmul.f32 %v469, %v469
  %v788 = vmul.f32 %v472, %v472
  %v789 = vmul.f32 %v477, %v477
  %v790 = vmul.f32 %v480, %v480
  %v791 = vmul.f32 %v485, %v485
  %v792 = vmul.f32 %v488, %v488
  %v793 = vmul.f32 %v493, %v493
  %v794 = vmul.f32 %v496, %v496
  %v795 = vmul.f32 %v501, %v501
  %v796 = vmul.f32 %v504, %v504
  %v797 = vmul.f32 %v509, %v509
  %v798 = vmul.f32 %v512, %v512
  %v799 = vmul.f32 %v517, %v517
  %v800 = vmul.f32 %v520, %v520
  %v801 = vmul.f32 %v525, %v525
  %v802 = vmul.f32 %v528, %v528
  %v803 = vmul.f32 %v533, %v533
  %v804 = vmul.f32 %v536, %v536
  %v805 = vmul.f32 %v541, %v541
  %v806 = vmul.f32 %v544, %v544
  %v807 = vmul.f32 %v549, %v549
  %v808 = vmul.f32 %v552, %v552
  %v809 = vmul.f32 %v557, %v557
  %v810 = vmul.f32 %v560, %v560
  %v811 = vmul.f32 %v565, %v565
  %v812 = vmul.f32 %v568, %v568
  %v813 = vmul.f32 %v573, %v573
  %v814 = vmul.f32 %v576, %v576
  %v815 = vmul.f32 %v581, %v581
  %v816 = vmul.f32 %v584, %v584
  %v817 = vmul.f32 %v589, %v589
  %v818 = vmul.f32 %v592, %v592
  %v819 = vmul.f32 %v597, %v597
  %v820 = vmul.f32 %v600, %v600
  %v821 = vmul.f32 %v605, %v605
  %v822 = vmul.f32 %v608, %v608
  %v823 = vmul.f32 %v613, %v613
  %v824 = vmul.f32 %v616, %v616
  %v825 = vmul.f32 %v621, %v621
  %v826 = vmul.f32 %v624, %v624
  %v827 = vsel %vm627, %v763, 0.0
  %v828 = vsel %vm627, %v764, 0.0
  %v829 = vadd.f32 %v827, %v828
  %v830 = vsel %vm627, %v765, 0.0
  %v831 = vadd.f32 %v829, %v830
  %v832 = vsel %vm627, %v766, 0.0
  %v833 = vadd.f32 %v831, %v832
  %v834 = vsel %vm627, %v767, 0.0
  %v835 = vadd.f32 %v833, %v834
  %v836 = vsel %vm627, %v768, 0.0
  %v837 = vadd.f32 %v835, %v836
  %v838 = vsel %vm627, %v769, 0.0
  %v839 = vadd.f32 %v837, %v838
  %v840 = vsel %vm627, %v770, 0.0
  %v841 = vadd.f32 %v839, %v840
  %v842 = vsel %vm627, %v771, 0.0
  %v843 = vadd.f32 %v841, %v842
  %v844 = vsel %vm627, %v772, 0.0
  %v845 = vadd.f32 %v843, %v844
  %v846 = vsel %vm627, %v773, 0.0
  %v847 = vadd.f32 %v845, %v846
  %v848 = vsel %vm627, %v774, 0.0
  %v849 = vadd.f32 %v847, %v848
  %v850 = vsel %vm627, %v775, 0.0
  %v851 = vadd.f32 %v849, %v850
  %v852 = vsel %vm627, %v776, 0.0
  %v853 = vadd.f32 %v851, %v852
  %v854 = vsel %vm627, %v777, 0.0
  %v855 = vadd.f32 %v853, %v854
  %v856 = vsel %vm627, %v778, 0.0
  %v857 = vadd.f32 %v855, %v856
  %v858 = vsel %vm627, %v779, 0.0
  %v859 = vadd.f32 %v857, %v858
  %v860 = vsel %vm627, %v780, 0.0
  %v861 = vadd.f32 %v859, %v860
  %v862 = vsel %vm627, %v781, 0.0
  %v863 = vadd.f32 %v861, %v862
  %v864 = vsel %vm627, %v782, 0.0
  %v865 = vadd.f32 %v863, %v864
  %v866 = vsel %vm627, %v783, 0.0
  %v867 = vadd.f32 %v865, %v866
  %v868 = vsel %vm627, %v784, 0.0
  %v869 = vadd.f32 %v867, %v868
  %v870 = vsel %vm627, %v785, 0.0
  %v871 = vadd.f32 %v869, %v870
  %v872 = vsel %vm627, %v786, 0.0
  %v873 = vadd.f32 %v871, %v872
  %v874 = vsel %vm627, %v787, 0.0
  %v875 = vadd.f32 %v873, %v874
  %v876 = vsel %vm627, %v788, 0.0
  %v877 = vadd.f32 %v875, %v876
  %v878 = vsel %vm627, %v789, 0.0
  %v879 = vadd.f32 %v877, %v878
  %v880 = vsel %vm627, %v790, 0.0
  %v881 = vadd.f32 %v879, %v880
  %v882 = vsel %vm627, %v791, 0.0
  %v883 = vadd.f32 %v881, %v882
  %v884 = vsel %vm627, %v792, 0.0
  %v885 = vadd.f32 %v883, %v884
  %v886 = vsel %vm627, %v793, 0.0
  %v887 = vadd.f32 %v885, %v886
  %v888 = vsel %vm627, %v794, 0.0
  %v889 = vadd.f32 %v887, %v888
  %v890 = vsel %vm627, %v795, 0.0
  %v891 = vadd.f32 %v889, %v890
  %v892 = vsel %vm627, %v796, 0.0
  %v893 = vadd.f32 %v891, %v892
  %v894 = vsel %vm627, %v797, 0.0
  %v895 = vadd.f32 %v893, %v894
  %v896 = vsel %vm627, %v798, 0.0
  %v897 = vadd.f32 %v895, %v896
  %v898 = vsel %vm627, %v799, 0.0
  %v899 = vadd.f32 %v897, %v898
  %v900 = vsel %vm627, %v800, 0.0
  %v901 = vadd.f32 %v899, %v900
  %v902 = vsel %vm627, %v801, 0.0
  %v903 = vadd.f32 %v901, %v902
  %v904 = vsel %vm627, %v802, 0.0
  %v905 = vadd.f32 %v903, %v904
  %v906 = vsel %vm627, %v803, 0.0
  %v907 = vadd.f32 %v905, %v906
  %v908 = vsel %vm627, %v804, 0.0
  %v909 = vadd.f32 %v907, %v908
  %v910 = vsel %vm627, %v805, 0.0
  %v911 = vadd.f32 %v909, %v910
  %v912 = vsel %vm627, %v806, 0.0
  %v913 = vadd.f32 %v911, %v912
  %v914 = vsel %vm627, %v807, 0.0
  %v915 = vadd.f32 %v913, %v914
  %v916 = vsel %vm627, %v808, 0.0
  %v917 = vadd.f32 %v915, %v916
  %v918 = vsel %vm627, %v809, 0.0
  %v919 = vadd.f32 %v917, %v918
  %v920 = vsel %vm627, %v810, 0.0
  %v921 = vadd.f32 %v919, %v920
  %v922 = vsel %vm627, %v811, 0.0
  %v923 = vadd.f32 %v921, %v922
  %v924 = vsel %vm627, %v812, 0.0
  %v925 = vadd.f32 %v923, %v924
  %v926 = vsel %vm627, %v813, 0.0
  %v927 = vadd.f32 %v925, %v926
  %v928 = vsel %vm627, %v814, 0.0
  %v929 = vadd.f32 %v927, %v928
  %v930 = vsel %vm627, %v815, 0.0
  %v931 = vadd.f32 %v929, %v930
  %v932 = vsel %vm627, %v816, 0.0
  %v933 = vadd.f32 %v931, %v932
  %v934 = vsel %vm627, %v817, 0.0
  %v935 = vadd.f32 %v933, %v934
  %v936 = vsel %vm627, %v818, 0.0
  %v937 = vadd.f32 %v935, %v936
  %v938 = vsel %vm627, %v819, 0.0
  %v939 = vadd.f32 %v937, %v938
  %v940 = vsel %vm627, %v820, 0.0
  %v941 = vadd.f32 %v939, %v940
  %v942 = vsel %vm627, %v821, 0.0
  %v943 = vadd.f32 %v941, %v942
  %v944 = vsel %vm627, %v822, 0.0
  %v945 = vadd.f32 %v943, %v944
  %v946 = vsel %vm627, %v823, 0.0
  %v947 = vadd.f32 %v945, %v946
  %v948 = vsel %vm627, %v824, 0.0
  %v949 = vadd.f32 %v947, %v948
  %v950 = vsel %vm627, %v825, 0.0
  %v951 = vadd.f32 %v949, %v950
  %v952 = vsel %vm627, %v826, 0.0
  %v953 = vadd.f32 %v951, %v952
  %v954 = vrot.slane %v953, 4
  %v955 = vadd.f32 %v953, %v954
  %v956 = vrot.slane %v955, 2
  %v957 = vadd.f32 %v955, %v956
  %v958 = vrot.slane %v957, 1
  %v959 = vadd.f32 %v957, %v958
  %v960 = vmul.f32 %v959, %v761
  %v961 = vmul.f32 %v762, %v762
  %v962 = vsub.f32 %v960, %v961
  %v963 = vmax.f32 %v962, 0.0
  %v964 = vld [vmem:[%s2] sm:$0x1]
  %v965 = vadd.f32 %v963, 1e-05
  %v966 = vrsqrt.pop %v965
  %v967 = vmul.f32 %v964, %v966
  %v968 = vld [vmem:[%s3] sm:$0x1]
  %v969 = vmul.f32 %v762, %v967
  %v970 = vsub.f32 %v968, %v969
  %v972 = vlaneseq
  %v973 = vshrl.u32 %v972, 7
  %v974 = vsub.s32 0, %v973
  %v975 = vrot.slane %v967, %v974
  %v977 = vmul.f32 %v373, %v975
  %v978 = vmul.f32 %v376, %v975
  %v979 = vmul.f32 %v381, %v975
  %v980 = vmul.f32 %v384, %v975
  %v981 = vmul.f32 %v389, %v975
  %v982 = vmul.f32 %v392, %v975
  %v983 = vmul.f32 %v397, %v975
  %v984 = vmul.f32 %v400, %v975
  %v985 = vmul.f32 %v405, %v975
  %v986 = vmul.f32 %v408, %v975
  %v987 = vmul.f32 %v413, %v975
  %v988 = vmul.f32 %v416, %v975
  %v989 = vmul.f32 %v421, %v975
  %v990 = vmul.f32 %v424, %v975
  %v991 = vmul.f32 %v429, %v975
  %v992 = vmul.f32 %v432, %v975
  %v993 = vmul.f32 %v437, %v975
  %v994 = vmul.f32 %v440, %v975
  %v995 = vmul.f32 %v445, %v975
  %v996 = vmul.f32 %v448, %v975
  %v997 = vmul.f32 %v453, %v975
  %v998 = vmul.f32 %v456, %v975
  %v999 = vmul.f32 %v461, %v975
  %v1000 = vmul.f32 %v464, %v975
  %v1001 = vmul.f32 %v469, %v975
  %v1002 = vmul.f32 %v472, %v975
  %v1003 = vmul.f32 %v477, %v975
  %v1004 = vmul.f32 %v480, %v975
  %v1005 = vmul.f32 %v485, %v975
  %v1006 = vmul.f32 %v488, %v975
  %v1007 = vmul.f32 %v493, %v975
  %v1008 = vmul.f32 %v496, %v975
  %v1009 = vmul.f32 %v501, %v975
  %v1010 = vmul.f32 %v504, %v975
  %v1011 = vmul.f32 %v509, %v975
  %v1012 = vmul.f32 %v512, %v975
  %v1013 = vmul.f32 %v517, %v975
  %v1014 = vmul.f32 %v520, %v975
  %v1015 = vmul.f32 %v525, %v975
  %v1016 = vmul.f32 %v528, %v975
  %v1017 = vmul.f32 %v533, %v975
  %v1018 = vmul.f32 %v536, %v975
  %v1019 = vmul.f32 %v541, %v975
  %v1020 = vmul.f32 %v544, %v975
  %v1021 = vmul.f32 %v549, %v975
  %v1022 = vmul.f32 %v552, %v975
  %v1023 = vmul.f32 %v557, %v975
  %v1024 = vmul.f32 %v560, %v975
  %v1025 = vmul.f32 %v565, %v975
  %v1026 = vmul.f32 %v568, %v975
  %v1027 = vmul.f32 %v573, %v975
  %v1028 = vmul.f32 %v576, %v975
  %v1029 = vmul.f32 %v581, %v975
  %v1030 = vmul.f32 %v584, %v975
  %v1031 = vmul.f32 %v589, %v975
  %v1032 = vmul.f32 %v592, %v975
  %v1033 = vmul.f32 %v597, %v975
  %v1034 = vmul.f32 %v600, %v975
  %v1035 = vmul.f32 %v605, %v975
  %v1036 = vmul.f32 %v608, %v975
  %v1037 = vmul.f32 %v613, %v975
  %v1038 = vmul.f32 %v616, %v975
  %v1039 = vmul.f32 %v621, %v975
  %v1040 = vmul.f32 %v624, %v975
  %v1042 = vlaneseq
  %v1043 = vshrl.u32 %v1042, 7
  %v1044 = vsub.s32 0, %v1043
  %v1045 = vrot.slane %v970, %v1044
  %v1047 = vadd.f32 %v977, %v1045
  %v1048 = vadd.f32 %v978, %v1045
  %v1049 = vadd.f32 %v979, %v1045
  %v1050 = vadd.f32 %v980, %v1045
  %v1051 = vadd.f32 %v981, %v1045
  %v1052 = vadd.f32 %v982, %v1045
  %v1053 = vadd.f32 %v983, %v1045
  %v1054 = vadd.f32 %v984, %v1045
  %v1055 = vadd.f32 %v985, %v1045
  %v1056 = vadd.f32 %v986, %v1045
  %v1057 = vadd.f32 %v987, %v1045
  %v1058 = vadd.f32 %v988, %v1045
  %v1059 = vadd.f32 %v989, %v1045
  %v1060 = vadd.f32 %v990, %v1045
  %v1061 = vadd.f32 %v991, %v1045
  %v1062 = vadd.f32 %v992, %v1045
  %v1063 = vadd.f32 %v993, %v1045
  %v1064 = vadd.f32 %v994, %v1045
  %v1065 = vadd.f32 %v995, %v1045
  %v1066 = vadd.f32 %v996, %v1045
  %v1067 = vadd.f32 %v997, %v1045
  %v1068 = vadd.f32 %v998, %v1045
  %v1069 = vadd.f32 %v999, %v1045
  %v1070 = vadd.f32 %v1000, %v1045
  %v1071 = vadd.f32 %v1001, %v1045
  %v1072 = vadd.f32 %v1002, %v1045
  %v1073 = vadd.f32 %v1003, %v1045
  %v1074 = vadd.f32 %v1004, %v1045
  %v1075 = vadd.f32 %v1005, %v1045
  %v1076 = vadd.f32 %v1006, %v1045
  %v1077 = vadd.f32 %v1007, %v1045
  %v1078 = vadd.f32 %v1008, %v1045
  %v1079 = vadd.f32 %v1009, %v1045
  %v1080 = vadd.f32 %v1010, %v1045
  %v1081 = vadd.f32 %v1011, %v1045
  %v1082 = vadd.f32 %v1012, %v1045
  %v1083 = vadd.f32 %v1013, %v1045
  %v1084 = vadd.f32 %v1014, %v1045
  %v1085 = vadd.f32 %v1015, %v1045
  %v1086 = vadd.f32 %v1016, %v1045
  %v1087 = vadd.f32 %v1017, %v1045
  %v1088 = vadd.f32 %v1018, %v1045
  %v1089 = vadd.f32 %v1019, %v1045
  %v1090 = vadd.f32 %v1020, %v1045
  %v1091 = vadd.f32 %v1021, %v1045
  %v1092 = vadd.f32 %v1022, %v1045
  %v1093 = vadd.f32 %v1023, %v1045
  %v1094 = vadd.f32 %v1024, %v1045
  %v1095 = vadd.f32 %v1025, %v1045
  %v1096 = vadd.f32 %v1026, %v1045
  %v1097 = vadd.f32 %v1027, %v1045
  %v1098 = vadd.f32 %v1028, %v1045
  %v1099 = vadd.f32 %v1029, %v1045
  %v1100 = vadd.f32 %v1030, %v1045
  %v1101 = vadd.f32 %v1031, %v1045
  %v1102 = vadd.f32 %v1032, %v1045
  %v1103 = vadd.f32 %v1033, %v1045
  %v1104 = vadd.f32 %v1034, %v1045
  %v1105 = vadd.f32 %v1035, %v1045
  %v1106 = vadd.f32 %v1036, %v1045
  %v1107 = vadd.f32 %v1037, %v1045
  %v1108 = vadd.f32 %v1038, %v1045
  %v1109 = vadd.f32 %v1039, %v1045
  %v1110 = vadd.f32 %v1040, %v1045
  %v1111 = vmax.f32 %v1047, 0.0
  %v1112 = vmax.f32 %v1048, 0.0
  %v1113 = vmax.f32 %v1049, 0.0
  %v1114 = vmax.f32 %v1050, 0.0
  %v1115 = vmax.f32 %v1051, 0.0
  %v1116 = vmax.f32 %v1052, 0.0
  %v1117 = vmax.f32 %v1053, 0.0
  %v1118 = vmax.f32 %v1054, 0.0
  %v1119 = vmax.f32 %v1055, 0.0
  %v1120 = vmax.f32 %v1056, 0.0
  %v1121 = vmax.f32 %v1057, 0.0
  %v1122 = vmax.f32 %v1058, 0.0
  %v1123 = vmax.f32 %v1059, 0.0
  %v1124 = vmax.f32 %v1060, 0.0
  %v1125 = vmax.f32 %v1061, 0.0
  %v1126 = vmax.f32 %v1062, 0.0
  %v1127 = vmax.f32 %v1063, 0.0
  %v1128 = vmax.f32 %v1064, 0.0
  %v1129 = vmax.f32 %v1065, 0.0
  %v1130 = vmax.f32 %v1066, 0.0
  %v1131 = vmax.f32 %v1067, 0.0
  %v1132 = vmax.f32 %v1068, 0.0
  %v1133 = vmax.f32 %v1069, 0.0
  %v1134 = vmax.f32 %v1070, 0.0
  %v1135 = vmax.f32 %v1071, 0.0
  %v1136 = vmax.f32 %v1072, 0.0
  %v1137 = vmax.f32 %v1073, 0.0
  %v1138 = vmax.f32 %v1074, 0.0
  %v1139 = vmax.f32 %v1075, 0.0
  %v1140 = vmax.f32 %v1076, 0.0
  %v1141 = vmax.f32 %v1077, 0.0
  %v1142 = vmax.f32 %v1078, 0.0
  %v1143 = vmax.f32 %v1079, 0.0
  %v1144 = vmax.f32 %v1080, 0.0
  %v1145 = vmax.f32 %v1081, 0.0
  %v1146 = vmax.f32 %v1082, 0.0
  %v1147 = vmax.f32 %v1083, 0.0
  %v1148 = vmax.f32 %v1084, 0.0
  %v1149 = vmax.f32 %v1085, 0.0
  %v1150 = vmax.f32 %v1086, 0.0
  %v1151 = vmax.f32 %v1087, 0.0
  %v1152 = vmax.f32 %v1088, 0.0
  %v1153 = vmax.f32 %v1089, 0.0
  %v1154 = vmax.f32 %v1090, 0.0
  %v1155 = vmax.f32 %v1091, 0.0
  %v1156 = vmax.f32 %v1092, 0.0
  %v1157 = vmax.f32 %v1093, 0.0
  %v1158 = vmax.f32 %v1094, 0.0
  %v1159 = vmax.f32 %v1095, 0.0
  %v1160 = vmax.f32 %v1096, 0.0
  %v1161 = vmax.f32 %v1097, 0.0
  %v1162 = vmax.f32 %v1098, 0.0
  %v1163 = vmax.f32 %v1099, 0.0
  %v1164 = vmax.f32 %v1100, 0.0
  %v1165 = vmax.f32 %v1101, 0.0
  %v1166 = vmax.f32 %v1102, 0.0
  %v1167 = vmax.f32 %v1103, 0.0
  %v1168 = vmax.f32 %v1104, 0.0
  %v1169 = vmax.f32 %v1105, 0.0
  %v1170 = vmax.f32 %v1106, 0.0
  %v1171 = vmax.f32 %v1107, 0.0
  %v1172 = vmax.f32 %v1108, 0.0
  %v1173 = vmax.f32 %v1109, 0.0
  %v1174 = vmax.f32 %v1110, 0.0
  %v1175 = vpack.c.bf16 %v1112, %v1111
  %v1176 = vpack.c.bf16 %v1114, %v1113
  %v1177 = vpack.c.bf16 %v1116, %v1115
  %v1178 = vpack.c.bf16 %v1118, %v1117
  %v1179 = vpack.c.bf16 %v1120, %v1119
  %v1180 = vpack.c.bf16 %v1122, %v1121
  %v1181 = vpack.c.bf16 %v1124, %v1123
  %v1182 = vpack.c.bf16 %v1126, %v1125
  %v1183 = vpack.c.bf16 %v1128, %v1127
  %v1184 = vpack.c.bf16 %v1130, %v1129
  %v1185 = vpack.c.bf16 %v1132, %v1131
  %v1186 = vpack.c.bf16 %v1134, %v1133
  %v1187 = vpack.c.bf16 %v1136, %v1135
  %v1188 = vpack.c.bf16 %v1138, %v1137
  %v1189 = vpack.c.bf16 %v1140, %v1139
  %v1190 = vpack.c.bf16 %v1142, %v1141
  %v1191 = vpack.c.bf16 %v1144, %v1143
  %v1192 = vpack.c.bf16 %v1146, %v1145
  %v1193 = vpack.c.bf16 %v1148, %v1147
  %v1194 = vpack.c.bf16 %v1150, %v1149
  %v1195 = vpack.c.bf16 %v1152, %v1151
  %v1196 = vpack.c.bf16 %v1154, %v1153
  %v1197 = vpack.c.bf16 %v1156, %v1155
  %v1198 = vpack.c.bf16 %v1158, %v1157
  %v1199 = vpack.c.bf16 %v1160, %v1159
  %v1200 = vpack.c.bf16 %v1162, %v1161
  %v1201 = vpack.c.bf16 %v1164, %v1163
  %v1202 = vpack.c.bf16 %v1166, %v1165
  %v1203 = vpack.c.bf16 %v1168, %v1167
  %v1204 = vpack.c.bf16 %v1170, %v1169
  %v1205 = vpack.c.bf16 %v1172, %v1171
  %v1206 = vpack.c.bf16 %v1174, %v1173
  %v1239 = vunpack.c.l.b16 %v1175
  %v1240 = vunpack.c.h.b16 %v1175
  %v1241 = vunpack.c.l.b16 %v1176
  %v1242 = vunpack.c.h.b16 %v1176
  %v1243 = vunpack.c.l.b16 %v1177
  %v1244 = vunpack.c.h.b16 %v1177
  %v1245 = vunpack.c.l.b16 %v1178
  %v1246 = vunpack.c.h.b16 %v1178
  %v1247 = vunpack.c.l.b16 %v1179
  %v1248 = vunpack.c.h.b16 %v1179
  %v1249 = vunpack.c.l.b16 %v1180
  %v1250 = vunpack.c.h.b16 %v1180
  %v1251 = vunpack.c.l.b16 %v1181
  %v1252 = vunpack.c.h.b16 %v1181
  %v1253 = vunpack.c.l.b16 %v1182
  %v1254 = vunpack.c.h.b16 %v1182
  %v1255 = vunpack.c.l.b16 %v1183
  %v1256 = vunpack.c.h.b16 %v1183
  %v1257 = vunpack.c.l.b16 %v1184
  %v1258 = vunpack.c.h.b16 %v1184
  %v1259 = vunpack.c.l.b16 %v1185
  %v1260 = vunpack.c.h.b16 %v1185
  %v1261 = vunpack.c.l.b16 %v1186
  %v1262 = vunpack.c.h.b16 %v1186
  %v1263 = vunpack.c.l.b16 %v1187
  %v1264 = vunpack.c.h.b16 %v1187
  %v1265 = vunpack.c.l.b16 %v1188
  %v1266 = vunpack.c.h.b16 %v1188
  %v1267 = vunpack.c.l.b16 %v1189
  %v1268 = vunpack.c.h.b16 %v1189
  %v1269 = vunpack.c.l.b16 %v1190
  %v1270 = vunpack.c.h.b16 %v1190
  %v1271 = vunpack.c.l.b16 %v1191
  %v1272 = vunpack.c.h.b16 %v1191
  %v1273 = vunpack.c.l.b16 %v1192
  %v1274 = vunpack.c.h.b16 %v1192
  %v1275 = vunpack.c.l.b16 %v1193
  %v1276 = vunpack.c.h.b16 %v1193
  %v1277 = vunpack.c.l.b16 %v1194
  %v1278 = vunpack.c.h.b16 %v1194
  %v1279 = vunpack.c.l.b16 %v1195
  %v1280 = vunpack.c.h.b16 %v1195
  %v1281 = vunpack.c.l.b16 %v1196
  %v1282 = vunpack.c.h.b16 %v1196
  %v1283 = vunpack.c.l.b16 %v1197
  %v1284 = vunpack.c.h.b16 %v1197
  %v1285 = vunpack.c.l.b16 %v1198
  %v1286 = vunpack.c.h.b16 %v1198
  %v1287 = vunpack.c.l.b16 %v1199
  %v1288 = vunpack.c.h.b16 %v1199
  %v1289 = vunpack.c.l.b16 %v1200
  %v1290 = vunpack.c.h.b16 %v1200
  %v1291 = vunpack.c.l.b16 %v1201
  %v1292 = vunpack.c.h.b16 %v1201
  %v1293 = vunpack.c.l.b16 %v1202
  %v1294 = vunpack.c.h.b16 %v1202
  %v1295 = vunpack.c.l.b16 %v1203
  %v1296 = vunpack.c.h.b16 %v1203
  %v1297 = vunpack.c.l.b16 %v1204
  %v1298 = vunpack.c.h.b16 %v1204
  %v1299 = vunpack.c.l.b16 %v1205
  %v1300 = vunpack.c.h.b16 %v1205
  %v1301 = vunpack.c.l.b16 %v1206
  %v1302 = vunpack.c.h.b16 %v1206
  %v1303 = vpack.c.b16 %v1239, %v1239
  %v1304 = vpack.c.b16 %v1240, %v1240
  %v1305 = vpack.c.b16 %v1241, %v1241
  %v1306 = vpack.c.b16 %v1242, %v1242
  %v1307 = vpack.c.b16 %v1243, %v1243
  %v1308 = vpack.c.b16 %v1244, %v1244
  %v1309 = vpack.c.b16 %v1245, %v1245
  %v1310 = vpack.c.b16 %v1246, %v1246
  %v1311 = vpack.c.b16 %v1247, %v1247
  %v1312 = vpack.c.b16 %v1248, %v1248
  %v1313 = vpack.c.b16 %v1249, %v1249
  %v1314 = vpack.c.b16 %v1250, %v1250
  %v1315 = vpack.c.b16 %v1251, %v1251
  %v1316 = vpack.c.b16 %v1252, %v1252
  %v1317 = vpack.c.b16 %v1253, %v1253
  %v1318 = vpack.c.b16 %v1254, %v1254
  %v1319 = vpack.c.b16 %v1255, %v1255
  %v1320 = vpack.c.b16 %v1256, %v1256
  %v1321 = vpack.c.b16 %v1257, %v1257
  %v1322 = vpack.c.b16 %v1258, %v1258
  %v1323 = vpack.c.b16 %v1259, %v1259
  %v1324 = vpack.c.b16 %v1260, %v1260
  %v1325 = vpack.c.b16 %v1261, %v1261
  %v1326 = vpack.c.b16 %v1262, %v1262
  %v1327 = vpack.c.b16 %v1263, %v1263
  %v1328 = vpack.c.b16 %v1264, %v1264
  %v1329 = vpack.c.b16 %v1265, %v1265
  %v1330 = vpack.c.b16 %v1266, %v1266
  %v1331 = vpack.c.b16 %v1267, %v1267
  %v1332 = vpack.c.b16 %v1268, %v1268
  %v1333 = vpack.c.b16 %v1269, %v1269
  %v1334 = vpack.c.b16 %v1270, %v1270
  %v1335 = vpack.c.b16 %v1271, %v1271
  %v1336 = vpack.c.b16 %v1272, %v1272
  %v1337 = vpack.c.b16 %v1273, %v1273
  %v1338 = vpack.c.b16 %v1274, %v1274
  %v1339 = vpack.c.b16 %v1275, %v1275
  %v1340 = vpack.c.b16 %v1276, %v1276
  %v1341 = vpack.c.b16 %v1277, %v1277
  %v1342 = vpack.c.b16 %v1278, %v1278
  %v1343 = vpack.c.b16 %v1279, %v1279
  %v1344 = vpack.c.b16 %v1280, %v1280
  %v1345 = vpack.c.b16 %v1281, %v1281
  %v1346 = vpack.c.b16 %v1282, %v1282
  %v1347 = vpack.c.b16 %v1283, %v1283
  %v1348 = vpack.c.b16 %v1284, %v1284
  %v1349 = vpack.c.b16 %v1285, %v1285
  %v1350 = vpack.c.b16 %v1286, %v1286
  %v1351 = vpack.c.b16 %v1287, %v1287
  %v1352 = vpack.c.b16 %v1288, %v1288
  %v1353 = vpack.c.b16 %v1289, %v1289
  %v1354 = vpack.c.b16 %v1290, %v1290
  %v1355 = vpack.c.b16 %v1291, %v1291
  %v1356 = vpack.c.b16 %v1292, %v1292
  %v1357 = vpack.c.b16 %v1293, %v1293
  %v1358 = vpack.c.b16 %v1294, %v1294
  %v1359 = vpack.c.b16 %v1295, %v1295
  %v1360 = vpack.c.b16 %v1296, %v1296
  %v1361 = vpack.c.b16 %v1297, %v1297
  %v1362 = vpack.c.b16 %v1298, %v1298
  %v1363 = vpack.c.b16 %v1299, %v1299
  %v1364 = vpack.c.b16 %v1300, %v1300
  %v1365 = vpack.c.b16 %v1301, %v1301
  %v1366 = vpack.c.b16 %v1302, %v1302
  %vm1431 = vcmask 519168
  %1432 = vst.msk [vmem:[%s4] sm:$0xf] %vm1431, %v1303
  %1433 = vst.msk [vmem:[%s4 + $0x4] sm:$0xf] %vm1431, %v1304
  %1434 = vst.msk [vmem:[%s4 + $0x8] sm:$0xf] %vm1431, %v1305
  %1435 = vst.msk [vmem:[%s4 + $0xc] sm:$0xf] %vm1431, %v1306
  %1436 = vst.msk [vmem:[%s4 + $0x10] sm:$0xf] %vm1431, %v1307
  %1437 = vst.msk [vmem:[%s4 + $0x14] sm:$0xf] %vm1431, %v1308
  %1438 = vst.msk [vmem:[%s4 + $0x18] sm:$0xf] %vm1431, %v1309
  %1439 = vst.msk [vmem:[%s4 + $0x1c] sm:$0xf] %vm1431, %v1310
  %1440 = vst.msk [vmem:[%s4 + $0x20] sm:$0xf] %vm1431, %v1311
  %1441 = vst.msk [vmem:[%s4 + $0x24] sm:$0xf] %vm1431, %v1312
  %1442 = vst.msk [vmem:[%s4 + $0x28] sm:$0xf] %vm1431, %v1313
  %1443 = vst.msk [vmem:[%s4 + $0x2c] sm:$0xf] %vm1431, %v1314
  %1444 = vst.msk [vmem:[%s4 + $0x30] sm:$0xf] %vm1431, %v1315
  %1445 = vst.msk [vmem:[%s4 + $0x34] sm:$0xf] %vm1431, %v1316
  %1446 = vst.msk [vmem:[%s4 + $0x38] sm:$0xf] %vm1431, %v1317
  %1447 = vst.msk [vmem:[%s4 + $0x3c] sm:$0xf] %vm1431, %v1318
  %1448 = vst.msk [vmem:[%s4 + $0x40] sm:$0xf] %vm1431, %v1319
  %1449 = vst.msk [vmem:[%s4 + $0x44] sm:$0xf] %vm1431, %v1320
  %1450 = vst.msk [vmem:[%s4 + $0x48] sm:$0xf] %vm1431, %v1321
  %1451 = vst.msk [vmem:[%s4 + $0x4c] sm:$0xf] %vm1431, %v1322
  %1452 = vst.msk [vmem:[%s4 + $0x50] sm:$0xf] %vm1431, %v1323
  %1453 = vst.msk [vmem:[%s4 + $0x54] sm:$0xf] %vm1431, %v1324
  %1454 = vst.msk [vmem:[%s4 + $0x58] sm:$0xf] %vm1431, %v1325
  %1455 = vst.msk [vmem:[%s4 + $0x5c] sm:$0xf] %vm1431, %v1326
  %1456 = vst.msk [vmem:[%s4 + $0x60] sm:$0xf] %vm1431, %v1327
  %1457 = vst.msk [vmem:[%s4 + $0x64] sm:$0xf] %vm1431, %v1328
  %1458 = vst.msk [vmem:[%s4 + $0x68] sm:$0xf] %vm1431, %v1329
  %1459 = vst.msk [vmem:[%s4 + $0x6c] sm:$0xf] %vm1431, %v1330
  %1460 = vst.msk [vmem:[%s4 + $0x70] sm:$0xf] %vm1431, %v1331
  %1461 = vst.msk [vmem:[%s4 + $0x74] sm:$0xf] %vm1431, %v1332
  %1462 = vst.msk [vmem:[%s4 + $0x78] sm:$0xf] %vm1431, %v1333
  %1463 = vst.msk [vmem:[%s4 + $0x7c] sm:$0xf] %vm1431, %v1334
  %1464 = vst.msk [vmem:[%s4 + $0x80] sm:$0xf] %vm1431, %v1335
  %1465 = vst.msk [vmem:[%s4 + $0x84] sm:$0xf] %vm1431, %v1336
  %1466 = vst.msk [vmem:[%s4 + $0x88] sm:$0xf] %vm1431, %v1337
  %1467 = vst.msk [vmem:[%s4 + $0x8c] sm:$0xf] %vm1431, %v1338
  %1468 = vst.msk [vmem:[%s4 + $0x90] sm:$0xf] %vm1431, %v1339
  %1469 = vst.msk [vmem:[%s4 + $0x94] sm:$0xf] %vm1431, %v1340
  %1470 = vst.msk [vmem:[%s4 + $0x98] sm:$0xf] %vm1431, %v1341
  %1471 = vst.msk [vmem:[%s4 + $0x9c] sm:$0xf] %vm1431, %v1342
  %1472 = vst.msk [vmem:[%s4 + $0xa0] sm:$0xf] %vm1431, %v1343
  %1473 = vst.msk [vmem:[%s4 + $0xa4] sm:$0xf] %vm1431, %v1344
  %1474 = vst.msk [vmem:[%s4 + $0xa8] sm:$0xf] %vm1431, %v1345
  %1475 = vst.msk [vmem:[%s4 + $0xac] sm:$0xf] %vm1431, %v1346
  %1476 = vst.msk [vmem:[%s4 + $0xb0] sm:$0xf] %vm1431, %v1347
  %1477 = vst.msk [vmem:[%s4 + $0xb4] sm:$0xf] %vm1431, %v1348
  %1478 = vst.msk [vmem:[%s4 + $0xb8] sm:$0xf] %vm1431, %v1349
  %1479 = vst.msk [vmem:[%s4 + $0xbc] sm:$0xf] %vm1431, %v1350
  %1480 = vst.msk [vmem:[%s4 + $0xc0] sm:$0xf] %vm1431, %v1351
  %1481 = vst.msk [vmem:[%s4 + $0xc4] sm:$0xf] %vm1431, %v1352
  %1482 = vst.msk [vmem:[%s4 + $0xc8] sm:$0xf] %vm1431, %v1353
  %1483 = vst.msk [vmem:[%s4 + $0xcc] sm:$0xf] %vm1431, %v1354
  %1484 = vst.msk [vmem:[%s4 + $0xd0] sm:$0xf] %vm1431, %v1355
  %1485 = vst.msk [vmem:[%s4 + $0xd4] sm:$0xf] %vm1431, %v1356
  %1486 = vst.msk [vmem:[%s4 + $0xd8] sm:$0xf] %vm1431, %v1357
  %1487 = vst.msk [vmem:[%s4 + $0xdc] sm:$0xf] %vm1431, %v1358
  %1488 = vst.msk [vmem:[%s4 + $0xe0] sm:$0xf] %vm1431, %v1359
  %1489 = vst.msk [vmem:[%s4 + $0xe4] sm:$0xf] %vm1431, %v1360
  %1490 = vst.msk [vmem:[%s4 + $0xe8] sm:$0xf] %vm1431, %v1361
  %1491 = vst.msk [vmem:[%s4 + $0xec] sm:$0xf] %vm1431, %v1362
  %1492 = vst.msk [vmem:[%s4 + $0xf0] sm:$0xf] %vm1431, %v1363
  %1493 = vst.msk [vmem:[%s4 + $0xf4] sm:$0xf] %vm1431, %v1364
  %1494 = vst.msk [vmem:[%s4 + $0xf8] sm:$0xf] %vm1431, %v1365
  %1495 = vst.msk [vmem:[%s4 + $0xfc] sm:$0xf] %vm1431, %v1366
  // Predicated region
  $region18: #{discriminator_wgan_32.3} parent=0 // pred_check
    _
  $region19: #{discriminator_wgan_32.3} parent=0 // pred_check_branch
    %1497 = sbr.rel (0) target = $region21
  $region20: #{discriminator_wgan_32.3} parent=0 // pred_region
    _
  $region21: #{discriminator_wgan_32.3} parent=0 // pred_fallthru
    _
  // Predicated region
  $region22: #{discriminator_wgan_32.3} parent=0 // pred_check
    _
  $region23: #{discriminator_wgan_32.3} parent=0 // pred_check_branch
    %1499 = sbr.rel (0) target = $region25
  $region24: #{discriminator_wgan_32.3} parent=0 // pred_region
    _
  $region25: #{discriminator_wgan_32.3} parent=0 // pred_fallthru
    _

// kernel: discriminator_wgan_32.4
$region0: #{discriminator_wgan_32.4}
  #allocation0 [shape = 'u32[]', space=smem, size = 0x4, offset = 0x4, fixed_abs, tag = 'smem constant byte address 0x4 - core index']
  #allocation1 [shape = 'u32[144,128]{1,0:T(1,128)}', space=vmem, size = 0x12000, scoped, tag = 'internal scratch']
  %s0 = inlined_call_operand.vmem [shape: bf16[128,1024], index: 0, kind: input, shape index: {}]
  %s1 = inlined_call_operand.vmem [shape: bf16[1024,256], index: 1, kind: input, shape index: {}]
  %s2 = inlined_call_operand.vmem [shape: f32[1,256], index: 2, kind: input, shape index: {}]
  %s3 = inlined_call_operand.vmem [shape: f32[1,256], index: 3, kind: input, shape index: {}]
  %s4 = inlined_call_operand.vmem [shape: bf16[128,256], index: 4, kind: output, shape index: {}]
  %s5 = sld [smem:[#allocation0]]
  $region26: #{discriminator_wgan_32.4} parent=0
    _
  %s7 = ssub.s32 1, %s5
  %s8 = scalar_select 0, %s7, %s5
  // Predicated region
  $region2: #{discriminator_wgan_32.4} parent=0 // pred_check
    _
  $region3: #{discriminator_wgan_32.4} parent=0 // pred_check_branch
    %10 = sbr.rel (0) target = $region5
  $region4: #{discriminator_wgan_32.4} parent=0 // pred_region
    _
  $region5: #{discriminator_wgan_32.4} parent=0 // pred_fallthru
    _
  // Predicated region
  $region6: #{discriminator_wgan_32.4} parent=0 // pred_check
    _
  $region7: #{discriminator_wgan_32.4} parent=0 // pred_check_branch
    %12 = sbr.rel (0) target = $region9
  $region8: #{discriminator_wgan_32.4} parent=0 // pred_region
    _
  $region9: #{discriminator_wgan_32.4} parent=0 // pred_fallthru
    _
  // Predicated region
  $region10: #{discriminator_wgan_32.4} parent=0 // pred_check
    _
  $region11: #{discriminator_wgan_32.4} parent=0 // pred_check_branch
    %14 = sbr.rel (0) target = $region13
  $region12: #{discriminator_wgan_32.4} parent=0 // pred_region
    _
  $region13: #{discriminator_wgan_32.4} parent=0 // pred_fallthru
    _
  // Predicated region
  $region14: #{discriminator_wgan_32.4} parent=0 // pred_check
    _
  $region15: #{discriminator_wgan_32.4} parent=0 // pred_check_branch
    %16 = sbr.rel (0) target = $region17
  $region16: #{discriminator_wgan_32.4} parent=0 // pred_region
    _
  $region17: #{discriminator_wgan_32.4} parent=0 // pred_fallthru
    _
  %v17 = vld [vmem:[%s0] sm:$0xff]
  %v18 = vld [vmem:[%s0 + $0x8] sm:$0xff]
  %v19 = vld [vmem:[%s0 + $0x10] sm:$0xff]
  %v20 = vld [vmem:[%s0 + $0x18] sm:$0xff]
  %v21 = vld [vmem:[%s0 + $0x20] sm:$0xff]
  %v22 = vld [vmem:[%s0 + $0x28] sm:$0xff]
  %v23 = vld [vmem:[%s0 + $0x30] sm:$0xff]
  %v24 = vld [vmem:[%s0 + $0x38] sm:$0xff]
  %v25 = vld [vmem:[%s0 + $0x40] sm:$0xff]
  %v26 = vld [vmem:[%s0 + $0x48] sm:$0xff]
  %v27 = vld [vmem:[%s0 + $0x50] sm:$0xff]
  %v28 = vld [vmem:[%s0 + $0x58] sm:$0xff]
  %v29 = vld [vmem:[%s0 + $0x60] sm:$0xff]
  %v30 = vld [vmem:[%s0 + $0x68] sm:$0xff]
  %v31 = vld [vmem:[%s0 + $0x70] sm:$0xff]
  %v32 = vld [vmem:[%s0 + $0x78] sm:$0xff]
  %v33 = vld [vmem:[%s0 + $0x80] sm:$0xff]
  %v34 = vld [vmem:[%s0 + $0x88] sm:$0xff]
  %v35 = vld [vmem:[%s0 + $0x90] sm:$0xff]
  %v36 = vld [vmem:[%s0 + $0x98] sm:$0xff]
  %v37 = vld [vmem:[%s0 + $0xa0] sm:$0xff]
  %v38 = vld [vmem:[%s0 + $0xa8] sm:$0xff]
  %v39 = vld [vmem:[%s0 + $0xb0] sm:$0xff]
  %v40 = vld [vmem:[%s0 + $0xb8] sm:$0xff]
  %v41 = vld [vmem:[%s0 + $0xc0] sm:$0xff]
  %v42 = vld [vmem:[%s0 + $0xc8] sm:$0xff]
  %v43 = vld [vmem:[%s0 + $0xd0] sm:$0xff]
  %v44 = vld [vmem:[%s0 + $0xd8] sm:$0xff]
  %v45 = vld [vmem:[%s0 + $0xe0] sm:$0xff]
  %v46 = vld [vmem:[%s0 + $0xe8] sm:$0xff]
  %v47 = vld [vmem:[%s0 + $0xf0] sm:$0xff]
  %v48 = vld [vmem:[%s0 + $0xf8] sm:$0xff]
  %v49 = vld [vmem:[%s0 + $0x100] sm:$0xff]
  %v50 = vld [vmem:[%s0 + $0x108] sm:$0xff]
  %v51 = vld [vmem:[%s0 + $0x110] sm:$0xff]
  %v52 = vld [vmem:[%s0 + $0x118] sm:$0xff]
  %v53 = vld [vmem:[%s0 + $0x120] sm:$0xff]
  %v54 = vld [vmem:[%s0 + $0x128] sm:$0xff]
  %v55 = vld [vmem:[%s0 + $0x130] sm:$0xff]
  %v56 = vld [vmem:[%s0 + $0x138] sm:$0xff]
  %v57 = vld [vmem:[%s0 + $0x140] sm:$0xff]
  %v58 = vld [vmem:[%s0 + $0x148] sm:$0xff]
  %v59 = vld [vmem:[%s0 + $0x150] sm:$0xff]
  %v60 = vld [vmem:[%s0 + $0x158] sm:$0xff]
  %v61 = vld [vmem:[%s0 + $0x160] sm:$0xff]
  %v62 = vld [vmem:[%s0 + $0x168] sm:$0xff]
  %v63 = vld [vmem:[%s0 + $0x170] sm:$0xff]
  %v64 = vld [vmem:[%s0 + $0x178] sm:$0xff]
  %v65 = vld [vmem:[%s0 + $0x180] sm:$0xff]
  %v66 = vld [vmem:[%s0 + $0x188] sm:$0xff]
  %v67 = vld [vmem:[%s0 + $0x190] sm:$0xff]
  %v68 = vld [vmem:[%s0 + $0x198] sm:$0xff]
  %v69 = vld [vmem:[%s0 + $0x1a0] sm:$0xff]
  %v70 = vld [vmem:[%s0 + $0x1a8] sm:$0xff]
  %v71 = vld [vmem:[%s0 + $0x1b0] sm:$0xff]
  %v72 = vld [vmem:[%s0 + $0x1b8] sm:$0xff]
  %v73 = vld [vmem:[%s0 + $0x1c0] sm:$0xff]
  %v74 = vld [vmem:[%s0 + $0x1c8] sm:$0xff]
  %v75 = vld [vmem:[%s0 + $0x1d0] sm:$0xff]
  %v76 = vld [vmem:[%s0 + $0x1d8] sm:$0xff]
  %v77 = vld [vmem:[%s0 + $0x1e0] sm:$0xff]
  %v78 = vld [vmem:[%s0 + $0x1e8] sm:$0xff]
  %v79 = vld [vmem:[%s0 + $0x1f0] sm:$0xff]
  %v80 = vld [vmem:[%s0 + $0x1f8] sm:$0xff]
  %v81 = vld [vmem:[%s1] sm:$0xff]
  %v82 = vld [vmem:[%s1 + $0x8] sm:$0xff]
  %v83 = vld [vmem:[%s1 + $0x10] sm:$0xff]
  %v84 = vld [vmem:[%s1 + $0x18] sm:$0xff]
  %v85 = vld [vmem:[%s1 + $0x20] sm:$0xff]
  %v86 = vld [vmem:[%s1 + $0x28] sm:$0xff]
  %v87 = vld [vmem:[%s1 + $0x30] sm:$0xff]
  %v88 = vld [vmem:[%s1 + $0x38] sm:$0xff]
  %v89 = vld [vmem:[%s1 + $0x40] sm:$0xff]
  %v90 = vld [vmem:[%s1 + $0x48] sm:$0xff]
  %v91 = vld [vmem:[%s1 + $0x50] sm:$0xff]
  %v92 = vld [vmem:[%s1 + $0x58] sm:$0xff]
  %v93 = vld [vmem:[%s1 + $0x60] sm:$0xff]
  %v94 = vld [vmem:[%s1 + $0x68] sm:$0xff]
  %v95 = vld [vmem:[%s1 + $0x70] sm:$0xff]
  %v96 = vld [vmem:[%s1 + $0x78] sm:$0xff]
  %v97 = vld [vmem:[%s1 + $0x80] sm:$0xff]
  %v98 = vld [vmem:[%s1 + $0x88] sm:$0xff]
  %v99 = vld [vmem:[%s1 + $0x90] sm:$0xff]
  %v100 = vld [vmem:[%s1 + $0x98] sm:$0xff]
  %v101 = vld [vmem:[%s1 + $0xa0] sm:$0xff]
  %v102 = vld [vmem:[%s1 + $0xa8] sm:$0xff]
  %v103 = vld [vmem:[%s1 + $0xb0] sm:$0xff]
  %v104 = vld [vmem:[%s1 + $0xb8] sm:$0xff]
  %v105 = vld [vmem:[%s1 + $0xc0] sm:$0xff]
  %v106 = vld [vmem:[%s1 + $0xc8] sm:$0xff]
  %v107 = vld [vmem:[%s1 + $0xd0] sm:$0xff]
  %v108 = vld [vmem:[%s1 + $0xd8] sm:$0xff]
  %v109 = vld [vmem:[%s1 + $0xe0] sm:$0xff]
  %v110 = vld [vmem:[%s1 + $0xe8] sm:$0xff]
  %v111 = vld [vmem:[%s1 + $0xf0] sm:$0xff]
  %v112 = vld [vmem:[%s1 + $0xf8] sm:$0xff]
  %v113 = vld [vmem:[%s1 + $0x100] sm:$0xff]
  %v114 = vld [vmem:[%s1 + $0x108] sm:$0xff]
  %v115 = vld [vmem:[%s1 + $0x110] sm:$0xff]
  %v116 = vld [vmem:[%s1 + $0x118] sm:$0xff]
  %v117 = vld [vmem:[%s1 + $0x120] sm:$0xff]
  %v118 = vld [vmem:[%s1 + $0x128] sm:$0xff]
  %v119 = vld [vmem:[%s1 + $0x130] sm:$0xff]
  %v120 = vld [vmem:[%s1 + $0x138] sm:$0xff]
  %v121 = vld [vmem:[%s1 + $0x140] sm:$0xff]
  %v122 = vld [vmem:[%s1 + $0x148] sm:$0xff]
  %v123 = vld [vmem:[%s1 + $0x150] sm:$0xff]
  %v124 = vld [vmem:[%s1 + $0x158] sm:$0xff]
  %v125 = vld [vmem:[%s1 + $0x160] sm:$0xff]
  %v126 = vld [vmem:[%s1 + $0x168] sm:$0xff]
  %v127 = vld [vmem:[%s1 + $0x170] sm:$0xff]
  %v128 = vld [vmem:[%s1 + $0x178] sm:$0xff]
  %v129 = vld [vmem:[%s1 + $0x180] sm:$0xff]
  %v130 = vld [vmem:[%s1 + $0x188] sm:$0xff]
  %v131 = vld [vmem:[%s1 + $0x190] sm:$0xff]
  %v132 = vld [vmem:[%s1 + $0x198] sm:$0xff]
  %v133 = vld [vmem:[%s1 + $0x1a0] sm:$0xff]
  %v134 = vld [vmem:[%s1 + $0x1a8] sm:$0xff]
  %v135 = vld [vmem:[%s1 + $0x1b0] sm:$0xff]
  %v136 = vld [vmem:[%s1 + $0x1b8] sm:$0xff]
  %v137 = vld [vmem:[%s1 + $0x1c0] sm:$0xff]
  %v138 = vld [vmem:[%s1 + $0x1c8] sm:$0xff]
  %v139 = vld [vmem:[%s1 + $0x1d0] sm:$0xff]
  %v140 = vld [vmem:[%s1 + $0x1d8] sm:$0xff]
  %v141 = vld [vmem:[%s1 + $0x1e0] sm:$0xff]
  %v142 = vld [vmem:[%s1 + $0x1e8] sm:$0xff]
  %v143 = vld [vmem:[%s1 + $0x1f0] sm:$0xff]
  %v144 = vld [vmem:[%s1 + $0x1f8] sm:$0xff]
  %v145 = vld [vmem:[%s1 + $0x200] sm:$0xff]
  %v146 = vld [vmem:[%s1 + $0x208] sm:$0xff]
  %v147 = vld [vmem:[%s1 + $0x210] sm:$0xff]
  %v148 = vld [vmem:[%s1 + $0x218] sm:$0xff]
  %v149 = vld [vmem:[%s1 + $0x220] sm:$0xff]
  %v150 = vld [vmem:[%s1 + $0x228] sm:$0xff]
  %v151 = vld [vmem:[%s1 + $0x230] sm:$0xff]
  %v152 = vld [vmem:[%s1 + $0x238] sm:$0xff]
  %v153 = vld [vmem:[%s1 + $0x240] sm:$0xff]
  %v154 = vld [vmem:[%s1 + $0x248] sm:$0xff]
  %v155 = vld [vmem:[%s1 + $0x250] sm:$0xff]
  %v156 = vld [vmem:[%s1 + $0x258] sm:$0xff]
  %v157 = vld [vmem:[%s1 + $0x260] sm:$0xff]
  %v158 = vld [vmem:[%s1 + $0x268] sm:$0xff]
  %v159 = vld [vmem:[%s1 + $0x270] sm:$0xff]
  %v160 = vld [vmem:[%s1 + $0x278] sm:$0xff]
  %v161 = vld [vmem:[%s1 + $0x280] sm:$0xff]
  %v162 = vld [vmem:[%s1 + $0x288] sm:$0xff]
  %v163 = vld [vmem:[%s1 + $0x290] sm:$0xff]
  %v164 = vld [vmem:[%s1 + $0x298] sm:$0xff]
  %v165 = vld [vmem:[%s1 + $0x2a0] sm:$0xff]
  %v166 = vld [vmem:[%s1 + $0x2a8] sm:$0xff]
  %v167 = vld [vmem:[%s1 + $0x2b0] sm:$0xff]
  %v168 = vld [vmem:[%s1 + $0x2b8] sm:$0xff]
  %v169 = vld [vmem:[%s1 + $0x2c0] sm:$0xff]
  %v170 = vld [vmem:[%s1 + $0x2c8] sm:$0xff]
  %v171 = vld [vmem:[%s1 + $0x2d0] sm:$0xff]
  %v172 = vld [vmem:[%s1 + $0x2d8] sm:$0xff]
  %v173 = vld [vmem:[%s1 + $0x2e0] sm:$0xff]
  %v174 = vld [vmem:[%s1 + $0x2e8] sm:$0xff]
  %v175 = vld [vmem:[%s1 + $0x2f0] sm:$0xff]
  %v176 = vld [vmem:[%s1 + $0x2f8] sm:$0xff]
  %v177 = vld [vmem:[%s1 + $0x300] sm:$0xff]
  %v178 = vld [vmem:[%s1 + $0x308] sm:$0xff]
  %v179 = vld [vmem:[%s1 + $0x310] sm:$0xff]
  %v180 = vld [vmem:[%s1 + $0x318] sm:$0xff]
  %v181 = vld [vmem:[%s1 + $0x320] sm:$0xff]
  %v182 = vld [vmem:[%s1 + $0x328] sm:$0xff]
  %v183 = vld [vmem:[%s1 + $0x330] sm:$0xff]
  %v184 = vld [vmem:[%s1 + $0x338] sm:$0xff]
  %v185 = vld [vmem:[%s1 + $0x340] sm:$0xff]
  %v186 = vld [vmem:[%s1 + $0x348] sm:$0xff]
  %v187 = vld [vmem:[%s1 + $0x350] sm:$0xff]
  %v188 = vld [vmem:[%s1 + $0x358] sm:$0xff]
  %v189 = vld [vmem:[%s1 + $0x360] sm:$0xff]
  %v190 = vld [vmem:[%s1 + $0x368] sm:$0xff]
  %v191 = vld [vmem:[%s1 + $0x370] sm:$0xff]
  %v192 = vld [vmem:[%s1 + $0x378] sm:$0xff]
  %v193 = vld [vmem:[%s1 + $0x380] sm:$0xff]
  %v194 = vld [vmem:[%s1 + $0x388] sm:$0xff]
  %v195 = vld [vmem:[%s1 + $0x390] sm:$0xff]
  %v196 = vld [vmem:[%s1 + $0x398] sm:$0xff]
  %v197 = vld [vmem:[%s1 + $0x3a0] sm:$0xff]
  %v198 = vld [vmem:[%s1 + $0x3a8] sm:$0xff]
  %v199 = vld [vmem:[%s1 + $0x3b0] sm:$0xff]
  %v200 = vld [vmem:[%s1 + $0x3b8] sm:$0xff]
  %v201 = vld [vmem:[%s1 + $0x3c0] sm:$0xff]
  %v202 = vld [vmem:[%s1 + $0x3c8] sm:$0xff]
  %v203 = vld [vmem:[%s1 + $0x3d0] sm:$0xff]
  %v204 = vld [vmem:[%s1 + $0x3d8] sm:$0xff]
  %v205 = vld [vmem:[%s1 + $0x3e0] sm:$0xff]
  %v206 = vld [vmem:[%s1 + $0x3e8] sm:$0xff]
  %v207 = vld [vmem:[%s1 + $0x3f0] sm:$0xff]
  %v208 = vld [vmem:[%s1 + $0x3f8] sm:$0xff]
  %v273 = vunpack.c.l.b16 %v17
  %v274 = vunpack.c.h.b16 %v17
  %v275 = vunpack.c.l.b16 %v18
  %v276 = vunpack.c.h.b16 %v18
  %v277 = vunpack.c.l.b16 %v19
  %v278 = vunpack.c.h.b16 %v19
  %v279 = vunpack.c.l.b16 %v20
  %v280 = vunpack.c.h.b16 %v20
  %v281 = vunpack.c.l.b16 %v21
  %v282 = vunpack.c.h.b16 %v21
  %v283 = vunpack.c.l.b16 %v22
  %v284 = vunpack.c.h.b16 %v22
  %v285 = vunpack.c.l.b16 %v23
  %v286 = vunpack.c.h.b16 %v23
  %v287 = vunpack.c.l.b16 %v24
  %v288 = vunpack.c.h.b16 %v24
  %v289 = vunpack.c.l.b16 %v25
  %v290 = vunpack.c.h.b16 %v25
  %v291 = vunpack.c.l.b16 %v26
  %v292 = vunpack.c.h.b16 %v26
  %v293 = vunpack.c.l.b16 %v27
  %v294 = vunpack.c.h.b16 %v27
  %v295 = vunpack.c.l.b16 %v28
  %v296 = vunpack.c.h.b16 %v28
  %v297 = vunpack.c.l.b16 %v29
  %v298 = vunpack.c.h.b16 %v29
  %v299 = vunpack.c.l.b16 %v30
  %v300 = vunpack.c.h.b16 %v30
  %v301 = vunpack.c.l.b16 %v31
  %v302 = vunpack.c.h.b16 %v31
  %v303 = vunpack.c.l.b16 %v32
  %v304 = vunpack.c.h.b16 %v32
  %v305 = vunpack.c.l.b16 %v33
  %v306 = vunpack.c.h.b16 %v33
  %v307 = vunpack.c.l.b16 %v34
  %v308 = vunpack.c.h.b16 %v34
  %v309 = vunpack.c.l.b16 %v35
  %v310 = vunpack.c.h.b16 %v35
  %v311 = vunpack.c.l.b16 %v36
  %v312 = vunpack.c.h.b16 %v36
  %v313 = vunpack.c.l.b16 %v37
  %v314 = vunpack.c.h.b16 %v37
  %v315 = vunpack.c.l.b16 %v38
  %v316 = vunpack.c.h.b16 %v38
  %v317 = vunpack.c.l.b16 %v39
  %v318 = vunpack.c.h.b16 %v39
  %v319 = vunpack.c.l.b16 %v40
  %v320 = vunpack.c.h.b16 %v40
  %v321 = vunpack.c.l.b16 %v41
  %v322 = vunpack.c.h.b16 %v41
  %v323 = vunpack.c.l.b16 %v42
  %v324 = vunpack.c.h.b16 %v42
  %v325 = vunpack.c.l.b16 %v43
  %v326 = vunpack.c.h.b16 %v43
  %v327 = vunpack.c.l.b16 %v44
  %v328 = vunpack.c.h.b16 %v44
  %v329 = vunpack.c.l.b16 %v45
  %v330 = vunpack.c.h.b16 %v45
  %v331 = vunpack.c.l.b16 %v46
  %v332 = vunpack.c.h.b16 %v46
  %v333 = vunpack.c.l.b16 %v47
  %v334 = vunpack.c.h.b16 %v47
  %v335 = vunpack.c.l.b16 %v48
  %v336 = vunpack.c.h.b16 %v48
  %v337 = vunpack.c.l.b16 %v49
  %v338 = vunpack.c.h.b16 %v49
  %v339 = vunpack.c.l.b16 %v50
  %v340 = vunpack.c.h.b16 %v50
  %v341 = vunpack.c.l.b16 %v51
  %v342 = vunpack.c.h.b16 %v51
  %v343 = vunpack.c.l.b16 %v52
  %v344 = vunpack.c.h.b16 %v52
  %v345 = vunpack.c.l.b16 %v53
  %v346 = vunpack.c.h.b16 %v53
  %v347 = vunpack.c.l.b16 %v54
  %v348 = vunpack.c.h.b16 %v54
  %v349 = vunpack.c.l.b16 %v55
  %v350 = vunpack.c.h.b16 %v55
  %v351 = vunpack.c.l.b16 %v56
  %v352 = vunpack.c.h.b16 %v56
  %v353 = vunpack.c.l.b16 %v57
  %v354 = vunpack.c.h.b16 %v57
  %v355 = vunpack.c.l.b16 %v58
  %v356 = vunpack.c.h.b16 %v58
  %v357 = vunpack.c.l.b16 %v59
  %v358 = vunpack.c.h.b16 %v59
  %v359 = vunpack.c.l.b16 %v60
  %v360 = vunpack.c.h.b16 %v60
  %v361 = vunpack.c.l.b16 %v61
  %v362 = vunpack.c.h.b16 %v61
  %v363 = vunpack.c.l.b16 %v62
  %v364 = vunpack.c.h.b16 %v62
  %v365 = vunpack.c.l.b16 %v63
  %v366 = vunpack.c.h.b16 %v63
  %v367 = vunpack.c.l.b16 %v64
  %v368 = vunpack.c.h.b16 %v64
  %v369 = vunpack.c.l.b16 %v65
  %v370 = vunpack.c.h.b16 %v65
  %v371 = vunpack.c.l.b16 %v66
  %v372 = vunpack.c.h.b16 %v66
  %v373 = vunpack.c.l.b16 %v67
  %v374 = vunpack.c.h.b16 %v67
  %v375 = vunpack.c.l.b16 %v68
  %v376 = vunpack.c.h.b16 %v68
  %v377 = vunpack.c.l.b16 %v69
  %v378 = vunpack.c.h.b16 %v69
  %v379 = vunpack.c.l.b16 %v70
  %v380 = vunpack.c.h.b16 %v70
  %v381 = vunpack.c.l.b16 %v71
  %v382 = vunpack.c.h.b16 %v71
  %v383 = vunpack.c.l.b16 %v72
  %v384 = vunpack.c.h.b16 %v72
  %v385 = vunpack.c.l.b16 %v73
  %v386 = vunpack.c.h.b16 %v73
  %v387 = vunpack.c.l.b16 %v74
  %v388 = vunpack.c.h.b16 %v74
  %v389 = vunpack.c.l.b16 %v75
  %v390 = vunpack.c.h.b16 %v75
  %v391 = vunpack.c.l.b16 %v76
  %v392 = vunpack.c.h.b16 %v76
  %v393 = vunpack.c.l.b16 %v77
  %v394 = vunpack.c.h.b16 %v77
  %v395 = vunpack.c.l.b16 %v78
  %v396 = vunpack.c.h.b16 %v78
  %v397 = vunpack.c.l.b16 %v79
  %v398 = vunpack.c.h.b16 %v79
  %v399 = vunpack.c.l.b16 %v80
  %v400 = vunpack.c.h.b16 %v80
  %v401 = vpack.c.b16 %v281, %v273
  %v402 = vpack.c.b16 %v282, %v274
  %v403 = vpack.c.b16 %v283, %v275
  %v404 = vpack.c.b16 %v284, %v276
  %v405 = vpack.c.b16 %v285, %v277
  %v406 = vpack.c.b16 %v286, %v278
  %v407 = vpack.c.b16 %v287, %v279
  %v408 = vpack.c.b16 %v288, %v280
  %v409 = vpack.c.b16 %v297, %v289
  %v410 = vpack.c.b16 %v298, %v290
  %v411 = vpack.c.b16 %v299, %v291
  %v412 = vpack.c.b16 %v300, %v292
  %v413 = vpack.c.b16 %v301, %v293
  %v414 = vpack.c.b16 %v302, %v294
  %v415 = vpack.c.b16 %v303, %v295
  %v416 = vpack.c.b16 %v304, %v296
  %v417 = vpack.c.b16 %v313, %v305
  %v418 = vpack.c.b16 %v314, %v306
  %v419 = vpack.c.b16 %v315, %v307
  %v420 = vpack.c.b16 %v316, %v308
  %v421 = vpack.c.b16 %v317, %v309
  %v422 = vpack.c.b16 %v318, %v310
  %v423 = vpack.c.b16 %v319, %v311
  %v424 = vpack.c.b16 %v320, %v312
  %v425 = vpack.c.b16 %v329, %v321
  %v426 = vpack.c.b16 %v330, %v322
  %v427 = vpack.c.b16 %v331, %v323
  %v428 = vpack.c.b16 %v332, %v324
  %v429 = vpack.c.b16 %v333, %v325
  %v430 = vpack.c.b16 %v334, %v326
  %v431 = vpack.c.b16 %v335, %v327
  %v432 = vpack.c.b16 %v336, %v328
  %v433 = vpack.c.b16 %v345, %v337
  %v434 = vpack.c.b16 %v346, %v338
  %v435 = vpack.c.b16 %v347, %v339
  %v436 = vpack.c.b16 %v348, %v340
  %v437 = vpack.c.b16 %v349, %v341
  %v438 = vpack.c.b16 %v350, %v342
  %v439 = vpack.c.b16 %v351, %v343
  %v440 = vpack.c.b16 %v352, %v344
  %v441 = vpack.c.b16 %v361, %v353
  %v442 = vpack.c.b16 %v362, %v354
  %v443 = vpack.c.b16 %v363, %v355
  %v444 = vpack.c.b16 %v364, %v356
  %v445 = vpack.c.b16 %v365, %v357
  %v446 = vpack.c.b16 %v366, %v358
  %v447 = vpack.c.b16 %v367, %v359
  %v448 = vpack.c.b16 %v368, %v360
  %v449 = vpack.c.b16 %v377, %v369
  %v450 = vpack.c.b16 %v378, %v370
  %v451 = vpack.c.b16 %v379, %v371
  %v452 = vpack.c.b16 %v380, %v372
  %v453 = vpack.c.b16 %v381, %v373
  %v454 = vpack.c.b16 %v382, %v374
  %v455 = vpack.c.b16 %v383, %v375
  %v456 = vpack.c.b16 %v384, %v376
  %v457 = vpack.c.b16 %v393, %v385
  %v458 = vpack.c.b16 %v394, %v386
  %v459 = vpack.c.b16 %v395, %v387
  %v460 = vpack.c.b16 %v396, %v388
  %v461 = vpack.c.b16 %v397, %v389
  %v462 = vpack.c.b16 %v398, %v390
  %v463 = vpack.c.b16 %v399, %v391
  %v464 = vpack.c.b16 %v400, %v392
  %v657 = vunpack.c.l.b16 %v81
  %v658 = vunpack.c.h.b16 %v81
  %v659 = vunpack.c.l.b16 %v82
  %v660 = vunpack.c.h.b16 %v82
  %v661 = vunpack.c.l.b16 %v83
  %v662 = vunpack.c.h.b16 %v83
  %v663 = vunpack.c.l.b16 %v84
  %v664 = vunpack.c.h.b16 %v84
  %v665 = vunpack.c.l.b16 %v85
  %v666 = vunpack.c.h.b16 %v85
  %v667 = vunpack.c.l.b16 %v86
  %v668 = vunpack.c.h.b16 %v86
  %v669 = vunpack.c.l.b16 %v87
  %v670 = vunpack.c.h.b16 %v87
  %v671 = vunpack.c.l.b16 %v88
  %v672 = vunpack.c.h.b16 %v88
  %v673 = vunpack.c.l.b16 %v89
  %v674 = vunpack.c.h.b16 %v89
  %v675 = vunpack.c.l.b16 %v90
  %v676 = vunpack.c.h.b16 %v90
  %v677 = vunpack.c.l.b16 %v91
  %v678 = vunpack.c.h.b16 %v91
  %v679 = vunpack.c.l.b16 %v92
  %v680 = vunpack.c.h.b16 %v92
  %v681 = vunpack.c.l.b16 %v93
  %v682 = vunpack.c.h.b16 %v93
  %v683 = vunpack.c.l.b16 %v94
  %v684 = vunpack.c.h.b16 %v94
  %v685 = vunpack.c.l.b16 %v95
  %v686 = vunpack.c.h.b16 %v95
  %v687 = vunpack.c.l.b16 %v96
  %v688 = vunpack.c.h.b16 %v96
  %v689 = vunpack.c.l.b16 %v97
  %v690 = vunpack.c.h.b16 %v97
  %v691 = vunpack.c.l.b16 %v98
  %v692 = vunpack.c.h.b16 %v98
  %v693 = vunpack.c.l.b16 %v99
  %v694 = vunpack.c.h.b16 %v99
  %v695 = vunpack.c.l.b16 %v100
  %v696 = vunpack.c.h.b16 %v100
  %v697 = vunpack.c.l.b16 %v101
  %v698 = vunpack.c.h.b16 %v101
  %v699 = vunpack.c.l.b16 %v102
  %v700 = vunpack.c.h.b16 %v102
  %v701 = vunpack.c.l.b16 %v103
  %v702 = vunpack.c.h.b16 %v103
  %v703 = vunpack.c.l.b16 %v104
  %v704 = vunpack.c.h.b16 %v104
  %v705 = vunpack.c.l.b16 %v105
  %v706 = vunpack.c.h.b16 %v105
  %v707 = vunpack.c.l.b16 %v106
  %v708 = vunpack.c.h.b16 %v106
  %v709 = vunpack.c.l.b16 %v107
  %v710 = vunpack.c.h.b16 %v107
  %v711 = vunpack.c.l.b16 %v108
  %v712 = vunpack.c.h.b16 %v108
  %v713 = vunpack.c.l.b16 %v109
  %v714 = vunpack.c.h.b16 %v109
  %v715 = vunpack.c.l.b16 %v110
  %v716 = vunpack.c.h.b16 %v110
  %v717 = vunpack.c.l.b16 %v111
  %v718 = vunpack.c.h.b16 %v111
  %v719 = vunpack.c.l.b16 %v112
  %v720 = vunpack.c.h.b16 %v112
  %v721 = vunpack.c.l.b16 %v113
  %v722 = vunpack.c.h.b16 %v113
  %v723 = vunpack.c.l.b16 %v114
  %v724 = vunpack.c.h.b16 %v114
  %v725 = vunpack.c.l.b16 %v115
  %v726 = vunpack.c.h.b16 %v115
  %v727 = vunpack.c.l.b16 %v116
  %v728 = vunpack.c.h.b16 %v116
  %v729 = vunpack.c.l.b16 %v117
  %v730 = vunpack.c.h.b16 %v117
  %v731 = vunpack.c.l.b16 %v118
  %v732 = vunpack.c.h.b16 %v118
  %v733 = vunpack.c.l.b16 %v119
  %v734 = vunpack.c.h.b16 %v119
  %v735 = vunpack.c.l.b16 %v120
  %v736 = vunpack.c.h.b16 %v120
  %v737 = vunpack.c.l.b16 %v121
  %v738 = vunpack.c.h.b16 %v121
  %v739 = vunpack.c.l.b16 %v122
  %v740 = vunpack.c.h.b16 %v122
  %v741 = vunpack.c.l.b16 %v123
  %v742 = vunpack.c.h.b16 %v123
  %v743 = vunpack.c.l.b16 %v124
  %v744 = vunpack.c.h.b16 %v124
  %v745 = vunpack.c.l.b16 %v125
  %v746 = vunpack.c.h.b16 %v125
  %v747 = vunpack.c.l.b16 %v126
  %v748 = vunpack.c.h.b16 %v126
  %v749 = vunpack.c.l.b16 %v127
  %v750 = vunpack.c.h.b16 %v127
  %v751 = vunpack.c.l.b16 %v128
  %v752 = vunpack.c.h.b16 %v128
  %v753 = vunpack.c.l.b16 %v129
  %v754 = vunpack.c.h.b16 %v129
  %v755 = vunpack.c.l.b16 %v130
  %v756 = vunpack.c.h.b16 %v130
  %v757 = vunpack.c.l.b16 %v131
  %v758 = vunpack.c.h.b16 %v131
  %v759 = vunpack.c.l.b16 %v132
  %v760 = vunpack.c.h.b16 %v132
  %v761 = vunpack.c.l.b16 %v133
  %v762 = vunpack.c.h.b16 %v133
  %v763 = vunpack.c.l.b16 %v134
  %v764 = vunpack.c.h.b16 %v134
  %v765 = vunpack.c.l.b16 %v135
  %v766 = vunpack.c.h.b16 %v135
  %v767 = vunpack.c.l.b16 %v136
  %v768 = vunpack.c.h.b16 %v136
  %v769 = vunpack.c.l.b16 %v137
  %v770 = vunpack.c.h.b16 %v137
  %v771 = vunpack.c.l.b16 %v138
  %v772 = vunpack.c.h.b16 %v138
  %v773 = vunpack.c.l.b16 %v139
  %v774 = vunpack.c.h.b16 %v139
  %v775 = vunpack.c.l.b16 %v140
  %v776 = vunpack.c.h.b16 %v140
  %v777 = vunpack.c.l.b16 %v141
  %v778 = vunpack.c.h.b16 %v141
  %v779 = vunpack.c.l.b16 %v142
  %v780 = vunpack.c.h.b16 %v142
  %v781 = vunpack.c.l.b16 %v143
  %v782 = vunpack.c.h.b16 %v143
  %v783 = vunpack.c.l.b16 %v144
  %v784 = vunpack.c.h.b16 %v144
  %v785 = vunpack.c.l.b16 %v145
  %v786 = vunpack.c.h.b16 %v145
  %v787 = vunpack.c.l.b16 %v146
  %v788 = vunpack.c.h.b16 %v146
  %v789 = vunpack.c.l.b16 %v147
  %v790 = vunpack.c.h.b16 %v147
  %v791 = vunpack.c.l.b16 %v148
  %v792 = vunpack.c.h.b16 %v148
  %v793 = vunpack.c.l.b16 %v149
  %v794 = vunpack.c.h.b16 %v149
  %v795 = vunpack.c.l.b16 %v150
  %v796 = vunpack.c.h.b16 %v150
  %v797 = vunpack.c.l.b16 %v151
  %v798 = vunpack.c.h.b16 %v151
  %v799 = vunpack.c.l.b16 %v152
  %v800 = vunpack.c.h.b16 %v152
  %v801 = vunpack.c.l.b16 %v153
  %v802 = vunpack.c.h.b16 %v153
  %v803 = vunpack.c.l.b16 %v154
  %v804 = vunpack.c.h.b16 %v154
  %v805 = vunpack.c.l.b16 %v155
  %v806 = vunpack.c.h.b16 %v155
  %v807 = vunpack.c.l.b16 %v156
  %v808 = vunpack.c.h.b16 %v156
  %v809 = vunpack.c.l.b16 %v157
  %v810 = vunpack.c.h.b16 %v157
  %v811 = vunpack.c.l.b16 %v158
  %v812 = vunpack.c.h.b16 %v158
  %v813 = vunpack.c.l.b16 %v159
  %v814 = vunpack.c.h.b16 %v159
  %v815 = vunpack.c.l.b16 %v160
  %v816 = vunpack.c.h.b16 %v160
  %v817 = vunpack.c.l.b16 %v161
  %v818 = vunpack.c.h.b16 %v161
  %v819 = vunpack.c.l.b16 %v162
  %v820 = vunpack.c.h.b16 %v162
  %v821 = vunpack.c.l.b16 %v163
  %v822 = vunpack.c.h.b16 %v163
  %v823 = vunpack.c.l.b16 %v164
  %v824 = vunpack.c.h.b16 %v164
  %v825 = vunpack.c.l.b16 %v165
  %v826 = vunpack.c.h.b16 %v165
  %v827 = vunpack.c.l.b16 %v166
  %v828 = vunpack.c.h.b16 %v166
  %v829 = vunpack.c.l.b16 %v167
  %v830 = vunpack.c.h.b16 %v167
  %v831 = vunpack.c.l.b16 %v168
  %v832 = vunpack.c.h.b16 %v168
  %v833 = vunpack.c.l.b16 %v169
  %v834 = vunpack.c.h.b16 %v169
  %v835 = vunpack.c.l.b16 %v170
  %v836 = vunpack.c.h.b16 %v170
  %v837 = vunpack.c.l.b16 %v171
  %v838 = vunpack.c.h.b16 %v171
  %v839 = vunpack.c.l.b16 %v172
  %v840 = vunpack.c.h.b16 %v172
  %v841 = vunpack.c.l.b16 %v173
  %v842 = vunpack.c.h.b16 %v173
  %v843 = vunpack.c.l.b16 %v174
  %v844 = vunpack.c.h.b16 %v174
  %v845 = vunpack.c.l.b16 %v175
  %v846 = vunpack.c.h.b16 %v175
  %v847 = vunpack.c.l.b16 %v176
  %v848 = vunpack.c.h.b16 %v176
  %v849 = vunpack.c.l.b16 %v177
  %v850 = vunpack.c.h.b16 %v177
  %v851 = vunpack.c.l.b16 %v178
  %v852 = vunpack.c.h.b16 %v178
  %v853 = vunpack.c.l.b16 %v179
  %v854 = vunpack.c.h.b16 %v179
  %v855 = vunpack.c.l.b16 %v180
  %v856 = vunpack.c.h.b16 %v180
  %v857 = vunpack.c.l.b16 %v181
  %v858 = vunpack.c.h.b16 %v181
  %v859 = vunpack.c.l.b16 %v182
  %v860 = vunpack.c.h.b16 %v182
  %v861 = vunpack.c.l.b16 %v183
  %v862 = vunpack.c.h.b16 %v183
  %v863 = vunpack.c.l.b16 %v184
  %v864 = vunpack.c.h.b16 %v184
  %v865 = vunpack.c.l.b16 %v185
  %v866 = vunpack.c.h.b16 %v185
  %v867 = vunpack.c.l.b16 %v186
  %v868 = vunpack.c.h.b16 %v186
  %v869 = vunpack.c.l.b16 %v187
  %v870 = vunpack.c.h.b16 %v187
  %v871 = vunpack.c.l.b16 %v188
  %v872 = vunpack.c.h.b16 %v188
  %v873 = vunpack.c.l.b16 %v189
  %v874 = vunpack.c.h.b16 %v189
  %v875 = vunpack.c.l.b16 %v190
  %v876 = vunpack.c.h.b16 %v190
  %v877 = vunpack.c.l.b16 %v191
  %v878 = vunpack.c.h.b16 %v191
  %v879 = vunpack.c.l.b16 %v192
  %v880 = vunpack.c.h.b16 %v192
  %v881 = vunpack.c.l.b16 %v193
  %v882 = vunpack.c.h.b16 %v193
  %v883 = vunpack.c.l.b16 %v194
  %v884 = vunpack.c.h.b16 %v194
  %v885 = vunpack.c.l.b16 %v195
  %v886 = vunpack.c.h.b16 %v195
  %v887 = vunpack.c.l.b16 %v196
  %v888 = vunpack.c.h.b16 %v196
  %v889 = vunpack.c.l.b16 %v197
  %v890 = vunpack.c.h.b16 %v197
  %v891 = vunpack.c.l.b16 %v198
  %v892 = vunpack.c.h.b16 %v198
  %v893 = vunpack.c.l.b16 %v199
  %v894 = vunpack.c.h.b16 %v199
  %v895 = vunpack.c.l.b16 %v200
  %v896 = vunpack.c.h.b16 %v200
  %v897 = vunpack.c.l.b16 %v201
  %v898 = vunpack.c.h.b16 %v201
  %v899 = vunpack.c.l.b16 %v202
  %v900 = vunpack.c.h.b16 %v202
  %v901 = vunpack.c.l.b16 %v203
  %v902 = vunpack.c.h.b16 %v203
  %v903 = vunpack.c.l.b16 %v204
  %v904 = vunpack.c.h.b16 %v204
  %v905 = vunpack.c.l.b16 %v205
  %v906 = vunpack.c.h.b16 %v205
  %v907 = vunpack.c.l.b16 %v206
  %v908 = vunpack.c.h.b16 %v206
  %v909 = vunpack.c.l.b16 %v207
  %v910 = vunpack.c.h.b16 %v207
  %v911 = vunpack.c.l.b16 %v208
  %v912 = vunpack.c.h.b16 %v208
  %v913 = vpack.c.b16 %v659, %v657
  %v914 = vpack.c.b16 %v660, %v658
  %v915 = vpack.c.b16 %v663, %v661
  %v916 = vpack.c.b16 %v664, %v662
  %v917 = vpack.c.b16 %v667, %v665
  %v918 = vpack.c.b16 %v668, %v666
  %v919 = vpack.c.b16 %v671, %v669
  %v920 = vpack.c.b16 %v672, %v670
  %v921 = vpack.c.b16 %v675, %v673
  %v922 = vpack.c.b16 %v676, %v674
  %v923 = vpack.c.b16 %v679, %v677
  %v924 = vpack.c.b16 %v680, %v678
  %v925 = vpack.c.b16 %v683, %v681
  %v926 = vpack.c.b16 %v684, %v682
  %v927 = vpack.c.b16 %v687, %v685
  %v928 = vpack.c.b16 %v688, %v686
  %v929 = vpack.c.b16 %v691, %v689
  %v930 = vpack.c.b16 %v692, %v690
  %v931 = vpack.c.b16 %v695, %v693
  %v932 = vpack.c.b16 %v696, %v694
  %v933 = vpack.c.b16 %v699, %v697
  %v934 = vpack.c.b16 %v700, %v698
  %v935 = vpack.c.b16 %v703, %v701
  %v936 = vpack.c.b16 %v704, %v702
  %v937 = vpack.c.b16 %v707, %v705
  %v938 = vpack.c.b16 %v708, %v706
  %v939 = vpack.c.b16 %v711, %v709
  %v940 = vpack.c.b16 %v712, %v710
  %v941 = vpack.c.b16 %v715, %v713
  %v942 = vpack.c.b16 %v716, %v714
  %v943 = vpack.c.b16 %v719, %v717
  %v944 = vpack.c.b16 %v720, %v718
  %v945 = vpack.c.b16 %v723, %v721
  %v946 = vpack.c.b16 %v724, %v722
  %v947 = vpack.c.b16 %v727, %v725
  %v948 = vpack.c.b16 %v728, %v726
  %v949 = vpack.c.b16 %v731, %v729
  %v950 = vpack.c.b16 %v732, %v730
  %v951 = vpack.c.b16 %v735, %v733
  %v952 = vpack.c.b16 %v736, %v734
  %v953 = vpack.c.b16 %v739, %v737
  %v954 = vpack.c.b16 %v740, %v738
  %v955 = vpack.c.b16 %v743, %v741
  %v956 = vpack.c.b16 %v744, %v742
  %v957 = vpack.c.b16 %v747, %v745
  %v958 = vpack.c.b16 %v748, %v746
  %v959 = vpack.c.b16 %v751, %v749
  %v960 = vpack.c.b16 %v752, %v750
  %v961 = vpack.c.b16 %v755, %v753
  %v962 = vpack.c.b16 %v756, %v754
  %v963 = vpack.c.b16 %v759, %v757
  %v964 = vpack.c.b16 %v760, %v758
  %v965 = vpack.c.b16 %v763, %v761
  %v966 = vpack.c.b16 %v764, %v762
  %v967 = vpack.c.b16 %v767, %v765
  %v968 = vpack.c.b16 %v768, %v766
  %v969 = vpack.c.b16 %v771, %v769
  %v970 = vpack.c.b16 %v772, %v770
  %v971 = vpack.c.b16 %v775, %v773
  %v972 = vpack.c.b16 %v776, %v774
  %v973 = vpack.c.b16 %v779, %v777
  %v974 = vpack.c.b16 %v780, %v778
  %v975 = vpack.c.b16 %v783, %v781
  %v976 = vpack.c.b16 %v784, %v782
  %v977 = vpack.c.b16 %v787, %v785
  %v978 = vpack.c.b16 %v788, %v786
  %v979 = vpack.c.b16 %v791, %v789
  %v980 = vpack.c.b16 %v792, %v790
  %v981 = vpack.c.b16 %v795, %v793
  %v982 = vpack.c.b16 %v796, %v794
  %v983 = vpack.c.b16 %v799, %v797
  %v984 = vpack.c.b16 %v800, %v798
  %v985 = vpack.c.b16 %v803, %v801
  %v986 = vpack.c.b16 %v804, %v802
  %v987 = vpack.c.b16 %v807, %v805
  %v988 = vpack.c.b16 %v808, %v806
  %v989 = vpack.c.b16 %v811, %v809
  %v990 = vpack.c.b16 %v812, %v810
  %v991 = vpack.c.b16 %v815, %v813
  %v992 = vpack.c.b16 %v816, %v814
  %v993 = vpack.c.b16 %v819, %v817
  %v994 = vpack.c.b16 %v820, %v818
  %v995 = vpack.c.b16 %v823, %v821
  %v996 = vpack.c.b16 %v824, %v822
  %v997 = vpack.c.b16 %v827, %v825
  %v998 = vpack.c.b16 %v828, %v826
  %v999 = vpack.c.b16 %v831, %v829
  %v1000 = vpack.c.b16 %v832, %v830
  %v1001 = vpack.c.b16 %v835, %v833
  %v1002 = vpack.c.b16 %v836, %v834
  %v1003 = vpack.c.b16 %v839, %v837
  %v1004 = vpack.c.b16 %v840, %v838
  %v1005 = vpack.c.b16 %v843, %v841
  %v1006 = vpack.c.b16 %v844, %v842
  %v1007 = vpack.c.b16 %v847, %v845
  %v1008 = vpack.c.b16 %v848, %v846
  %v1009 = vpack.c.b16 %v851, %v849
  %v1010 = vpack.c.b16 %v852, %v850
  %v1011 = vpack.c.b16 %v855, %v853
  %v1012 = vpack.c.b16 %v856, %v854
  %v1013 = vpack.c.b16 %v859, %v857
  %v1014 = vpack.c.b16 %v860, %v858
  %v1015 = vpack.c.b16 %v863, %v861
  %v1016 = vpack.c.b16 %v864, %v862
  %v1017 = vpack.c.b16 %v867, %v865
  %v1018 = vpack.c.b16 %v868, %v866
  %v1019 = vpack.c.b16 %v871, %v869
  %v1020 = vpack.c.b16 %v872, %v870
  %v1021 = vpack.c.b16 %v875, %v873
  %v1022 = vpack.c.b16 %v876, %v874
  %v1023 = vpack.c.b16 %v879, %v877
  %v1024 = vpack.c.b16 %v880, %v878
  %v1025 = vpack.c.b16 %v883, %v881
  %v1026 = vpack.c.b16 %v884, %v882
  %v1027 = vpack.c.b16 %v887, %v885
  %v1028 = vpack.c.b16 %v888, %v886
  %v1029 = vpack.c.b16 %v891, %v889
  %v1030 = vpack.c.b16 %v892, %v890
  %v1031 = vpack.c.b16 %v895, %v893
  %v1032 = vpack.c.b16 %v896, %v894
  %v1033 = vpack.c.b16 %v899, %v897
  %v1034 = vpack.c.b16 %v900, %v898
  %v1035 = vpack.c.b16 %v903, %v901
  %v1036 = vpack.c.b16 %v904, %v902
  %v1037 = vpack.c.b16 %v907, %v905
  %v1038 = vpack.c.b16 %v908, %v906
  %v1039 = vpack.c.b16 %v911, %v909
  %v1040 = vpack.c.b16 %v912, %v910
  %1169 = vmatprep.subr.bf16.mxu0 %v914
  %1170 = vmatpush1.bf16.msra.mxu0 %v913
  %1171 = vmatprep.subr.bf16.mxu0 %v916
  %1172 = vmatpush1.bf16.msra.mxu0 %v915
  %1173 = vmatprep.subr.bf16.mxu0 %v918
  %1174 = vmatpush1.bf16.msra.mxu0 %v917
  %1175 = vmatprep.subr.bf16.mxu0 %v920
  %1176 = vmatpush1.bf16.msra.mxu0 %v919
  %1177 = vmatprep.subr.bf16.mxu0 %v922
  %1178 = vmatpush1.bf16.msra.mxu0 %v921
  %1179 = vmatprep.subr.bf16.mxu0 %v924
  %1180 = vmatpush1.bf16.msra.mxu0 %v923
  %1181 = vmatprep.subr.bf16.mxu0 %v926
  %1182 = vmatpush1.bf16.msra.mxu0 %v925
  %1183 = vmatprep.subr.bf16.mxu0 %v928
  %1184 = vmatpush1.bf16.msra.mxu0 %v927
  %1185 = vmatprep.subr.bf16.mxu0 %v930
  %1186 = vmatpush1.bf16.msra.mxu0 %v929
  %1187 = vmatprep.subr.bf16.mxu0 %v932
  %1188 = vmatpush1.bf16.msra.mxu0 %v931
  %1189 = vmatprep.subr.bf16.mxu0 %v934
  %1190 = vmatpush1.bf16.msra.mxu0 %v933
  %1191 = vmatprep.subr.bf16.mxu0 %v936
  %1192 = vmatpush1.bf16.msra.mxu0 %v935
  %1193 = vmatprep.subr.bf16.mxu0 %v938
  %1194 = vmatpush1.bf16.msra.mxu0 %v937
  %1195 = vmatprep.subr.bf16.mxu0 %v940
  %1196 = vmatpush1.bf16.msra.mxu0 %v939
  %1197 = vmatprep.subr.bf16.mxu0 %v942
  %1198 = vmatpush1.bf16.msra.mxu0 %v941
  %1199 = vmatprep.subr.bf16.mxu0 %v944
  %1200 = vmatpush1.bf16.msra.mxu0 %v943
  %1201 = vmatprep.mubr.bf16.mxu0 %v402
  %1202 = vmatmul.mubr.bf16.gmra.mrb[0].mxu0 %v401
  %v1203 = vpop.f32.mrb[0].mxu0
  %v1204 = vadd.f32 0.0, %v1203
  %v1205 = vpop.f32.mrb[0].mxu0
  %v1206 = vadd.f32 0.0, %v1205
  %v1207 = vpop.f32.mrb[0].mxu0
  %v1208 = vadd.f32 0.0, %v1207
  %v1209 = vpop.f32.mrb[0].mxu0
  %v1210 = vadd.f32 0.0, %v1209
  %1211 = vmatprep.mubr.bf16.mxu0 %v410
  %1212 = vmatmul.mubr.bf16.gmra.mrb[0].mxu0 %v409
  %v1213 = vpop.f32.mrb[0].mxu0
  %v1214 = vadd.f32 0.0, %v1213
  %v1215 = vpop.f32.mrb[0].mxu0
  %v1216 = vadd.f32 0.0, %v1215
  %v1217 = vpop.f32.mrb[0].mxu0
  %v1218 = vadd.f32 0.0, %v1217
  %v1219 = vpop.f32.mrb[0].mxu0
  %v1220 = vadd.f32 0.0, %v1219
  %1221 = vmatprep.mubr.bf16.mxu0 %v418
  %1222 = vmatmul.mubr.bf16.gmra.mrb[0].mxu0 %v417
  %v1223 = vpop.f32.mrb[0].mxu0
  %v1224 = vadd.f32 0.0, %v1223
  %v1225 = vpop.f32.mrb[0].mxu0
  %v1226 = vadd.f32 0.0, %v1225
  %v1227 = vpop.f32.mrb[0].mxu0
  %v1228 = vadd.f32 0.0, %v1227
  %v1229 = vpop.f32.mrb[0].mxu0
  %v1230 = vadd.f32 0.0, %v1229
  %1231 = vmatprep.mubr.bf16.mxu0 %v426
  %1232 = vmatmul.mubr.bf16.gmra.mrb[0].mxu0 %v425
  %v1233 = vpop.f32.mrb[0].mxu0
  %v1234 = vadd.f32 0.0, %v1233
  %v1235 = vpop.f32.mrb[0].mxu0
  %v1236 = vadd.f32 0.0, %v1235
  %v1237 = vpop.f32.mrb[0].mxu0
  %v1238 = vadd.f32 0.0, %v1237
  %v1239 = vpop.f32.mrb[0].mxu0
  %v1240 = vadd.f32 0.0, %v1239
  %1241 = vmatprep.mubr.bf16.mxu0 %v434
  %1242 = vmatmul.mubr.bf16.gmra.mrb[0].mxu0 %v433
  %v1243 = vpop.f32.mrb[0].mxu0
  %v1244 = vadd.f32 0.0, %v1243
  %v1245 = vpop.f32.mrb[0].mxu0
  %v1246 = vadd.f32 0.0, %v1245
  %v1247 = vpop.f32.mrb[0].mxu0
  %v1248 = vadd.f32 0.0, %v1247
  %v1249 = vpop.f32.mrb[0].mxu0
  %v1250 = vadd.f32 0.0, %v1249
  %1251 = vmatprep.mubr.bf16.mxu0 %v442
  %1252 = vmatmul.mubr.bf16.gmra.mrb[0].mxu0 %v441
  %v1253 = vpop.f32.mrb[0].mxu0
  %v1254 = vadd.f32 0.0, %v1253
  %v1255 = vpop.f32.mrb[0].mxu0
  %v1256 = vadd.f32 0.0, %v1255
  %v1257 = vpop.f32.mrb[0].mxu0
  %v1258 = vadd.f32 0.0, %v1257
  %v1259 = vpop.f32.mrb[0].mxu0
  %v1260 = vadd.f32 0.0, %v1259
  %1261 = vmatprep.mubr.bf16.mxu0 %v450
  %1262 = vmatmul.mubr.bf16.gmra.mrb[0].mxu0 %v449
  %v1263 = vpop.f32.mrb[0].mxu0
  %v1264 = vadd.f32 0.0, %v1263
  %v1265 = vpop.f32.mrb[0].mxu0
  %v1266 = vadd.f32 0.0, %v1265
  %v1267 = vpop.f32.mrb[0].mxu0
  %v1268 = vadd.f32 0.0, %v1267
  %v1269 = vpop.f32.mrb[0].mxu0
  %v1270 = vadd.f32 0.0, %v1269
  %1271 = vmatprep.mubr.bf16.mxu0 %v458
  %1272 = vmatmul.mubr.bf16.gmra.mrb[0].mxu0 %v457
  %v1273 = vpop.f32.mrb[0].mxu0
  %v1274 = vadd.f32 0.0, %v1273
  %v1275 = vpop.f32.mrb[0].mxu0
  %v1276 = vadd.f32 0.0, %v1275
  %v1277 = vpop.f32.mrb[0].mxu0
  %v1278 = vadd.f32 0.0, %v1277
  %v1279 = vpop.f32.mrb[0].mxu0
  %v1280 = vadd.f32 0.0, %v1279
  %1281 = vdwg.mxu0
  %1282 = vmatprep.subr.bf16.mxu0 %v946
  %1283 = vmatpush1.bf16.msra.mxu0 %v945
  %1284 = vmatprep.subr.bf16.mxu0 %v948
  %1285 = vmatpush1.bf16.msra.mxu0 %v947
  %1286 = vmatprep.subr.bf16.mxu0 %v950
  %1287 = vmatpush1.bf16.msra.mxu0 %v949
  %1288 = vmatprep.subr.bf16.mxu0 %v952
  %1289 = vmatpush1.bf16.msra.mxu0 %v951
  %1290 = vmatprep.subr.bf16.mxu0 %v954
  %1291 = vmatpush1.bf16.msra.mxu0 %v953
  %1292 = vmatprep.subr.bf16.mxu0 %v956
  %1293 = vmatpush1.bf16.msra.mxu0 %v955
  %1294 = vmatprep.subr.bf16.mxu0 %v958
  %1295 = vmatpush1.bf16.msra.mxu0 %v957
  %1296 = vmatprep.subr.bf16.mxu0 %v960
  %1297 = vmatpush1.bf16.msra.mxu0 %v959
  %1298 = vmatprep.subr.bf16.mxu0 %v962
  %1299 = vmatpush1.bf16.msra.mxu0 %v961
  %1300 = vmatprep.subr.bf16.mxu0 %v964
  %1301 = vmatpush1.bf16.msra.mxu0 %v963
  %1302 = vmatprep.subr.bf16.mxu0 %v966
  %1303 = vmatpush1.bf16.msra.mxu0 %v965
  %1304 = vmatprep.subr.bf16.mxu0 %v968
  %1305 = vmatpush1.bf16.msra.mxu0 %v967
  %1306 = vmatprep.subr.bf16.mxu0 %v970
  %1307 = vmatpush1.bf16.msra.mxu0 %v969
  %1308 = vmatprep.subr.bf16.mxu0 %v972
  %1309 = vmatpush1.bf16.msra.mxu0 %v971
  %1310 = vmatprep.subr.bf16.mxu0 %v974
  %1311 = vmatpush1.bf16.msra.mxu0 %v973
  %1312 = vmatprep.subr.bf16.mxu0 %v976
  %1313 = vmatpush1.bf16.msra.mxu0 %v975
  %1314 = vmatprep.mubr.bf16.mxu0 %v404
  %1315 = vmatmul.mubr.bf16.gmra.mrb[0].mxu0 %v403
  %v1316 = vpop.f32.mrb[0].mxu0
  %v1317 = vadd.f32 %v1204, %v1316
  %v1318 = vpop.f32.mrb[0].mxu0
  %v1319 = vadd.f32 %v1206, %v1318
  %v1320 = vpop.f32.mrb[0].mxu0
  %v1321 = vadd.f32 %v1208, %v1320
  %v1322 = vpop.f32.mrb[0].mxu0
  %v1323 = vadd.f32 %v1210, %v1322
  %1324 = vmatprep.mubr.bf16.mxu0 %v412
  %1325 = vmatmul.mubr.bf16.gmra.mrb[0].mxu0 %v411
  %v1326 = vpop.f32.mrb[0].mxu0
  %v1327 = vadd.f32 %v1214, %v1326
  %v1328 = vpop.f32.mrb[0].mxu0
  %v1329 = vadd.f32 %v1216, %v1328
  %v1330 = vpop.f32.mrb[0].mxu0
  %v1331 = vadd.f32 %v1218, %v1330
  %v1332 = vpop.f32.mrb[0].mxu0
  %v1333 = vadd.f32 %v1220, %v1332
  %1334 = vmatprep.mubr.bf16.mxu0 %v420
  %1335 = vmatmul.mubr.bf16.gmra.mrb[0].mxu0 %v419
  %v1336 = vpop.f32.mrb[0].mxu0
  %v1337 = vadd.f32 %v1224, %v1336
  %v1338 = vpop.f32.mrb[0].mxu0
  %v1339 = vadd.f32 %v1226, %v1338
  %v1340 = vpop.f32.mrb[0].mxu0
  %v1341 = vadd.f32 %v1228, %v1340
  %v1342 = vpop.f32.mrb[0].mxu0
  %v1343 = vadd.f32 %v1230, %v1342
  %1344 = vmatprep.mubr.bf16.mxu0 %v428
  %1345 = vmatmul.mubr.bf16.gmra.mrb[0].mxu0 %v427
  %v1346 = vpop.f32.mrb[0].mxu0
  %v1347 = vadd.f32 %v1234, %v1346
  %v1348 = vpop.f32.mrb[0].mxu0
  %v1349 = vadd.f32 %v1236, %v1348
  %v1350 = vpop.f32.mrb[0].mxu0
  %v1351 = vadd.f32 %v1238, %v1350
  %v1352 = vpop.f32.mrb[0].mxu0
  %v1353 = vadd.f32 %v1240, %v1352
  %1354 = vmatprep.mubr.bf16.mxu0 %v436
  %1355 = vmatmul.mubr.bf16.gmra.mrb[0].mxu0 %v435
  %v1356 = vpop.f32.mrb[0].mxu0
  %v1357 = vadd.f32 %v1244, %v1356
  %v1358 = vpop.f32.mrb[0].mxu0
  %v1359 = vadd.f32 %v1246, %v1358
  %v1360 = vpop.f32.mrb[0].mxu0
  %v1361 = vadd.f32 %v1248, %v1360
  %v1362 = vpop.f32.mrb[0].mxu0
  %v1363 = vadd.f32 %v1250, %v1362
  %1364 = vmatprep.mubr.bf16.mxu0 %v444
  %1365 = vmatmul.mubr.bf16.gmra.mrb[0].mxu0 %v443
  %v1366 = vpop.f32.mrb[0].mxu0
  %v1367 = vadd.f32 %v1254, %v1366
  %v1368 = vpop.f32.mrb[0].mxu0
  %v1369 = vadd.f32 %v1256, %v1368
  %v1370 = vpop.f32.mrb[0].mxu0
  %v1371 = vadd.f32 %v1258, %v1370
  %v1372 = vpop.f32.mrb[0].mxu0
  %v1373 = vadd.f32 %v1260, %v1372
  %1374 = vmatprep.mubr.bf16.mxu0 %v452
  %1375 = vmatmul.mubr.bf16.gmra.mrb[0].mxu0 %v451
  %v1376 = vpop.f32.mrb[0].mxu0
  %v1377 = vadd.f32 %v1264, %v1376
  %v1378 = vpop.f32.mrb[0].mxu0
  %v1379 = vadd.f32 %v1266, %v1378
  %v1380 = vpop.f32.mrb[0].mxu0
  %v1381 = vadd.f32 %v1268, %v1380
  %v1382 = vpop.f32.mrb[0].mxu0
  %v1383 = vadd.f32 %v1270, %v1382
  %1384 = vmatprep.mubr.bf16.mxu0 %v460
  %1385 = vmatmul.mubr.bf16.gmra.mrb[0].mxu0 %v459
  %v1386 = vpop.f32.mrb[0].mxu0
  %v1387 = vadd.f32 %v1274, %v1386
  %v1388 = vpop.f32.mrb[0].mxu0
  %v1389 = vadd.f32 %v1276, %v1388
  %v1390 = vpop.f32.mrb[0].mxu0
  %v1391 = vadd.f32 %v1278, %v1390
  %v1392 = vpop.f32.mrb[0].mxu0
  %v1393 = vadd.f32 %v1280, %v1392
  %1394 = vdwg.mxu0
  %1395 = vmatprep.subr.bf16.mxu0 %v978
  %1396 = vmatpush1.bf16.msra.mxu0 %v977
  %1397 = vmatprep.subr.bf16.mxu0 %v980
  %1398 = vmatpush1.bf16.msra.mxu0 %v979
  %1399 = vmatprep.subr.bf16.mxu0 %v982
  %1400 = vmatpush1.bf16.msra.mxu0 %v981
  %1401 = vmatprep.subr.bf16.mxu0 %v984
  %1402 = vmatpush1.bf16.msra.mxu0 %v983
  %1403 = vmatprep.subr.bf16.mxu0 %v986
  %1404 = vmatpush1.bf16.msra.mxu0 %v985
  %1405 = vmatprep.subr.bf16.mxu0 %v988
  %1406 = vmatpush1.bf16.msra.mxu0 %v987
  %1407 = vmatprep.subr.bf16.mxu0 %v990
  %1408 = vmatpush1.bf16.msra.mxu0 %v989
  %1409 = vmatprep.subr.bf16.mxu0 %v992
  %1410 = vmatpush1.bf16.msra.mxu0 %v991
  %1411 = vmatprep.subr.bf16.mxu0 %v994
  %1412 = vmatpush1.bf16.msra.mxu0 %v993
  %1413 = vmatprep.subr.bf16.mxu0 %v996
  %1414 = vmatpush1.bf16.msra.mxu0 %v995
  %1415 = vmatprep.subr.bf16.mxu0 %v998
  %1416 = vmatpush1.bf16.msra.mxu0 %v997
  %1417 = vmatprep.subr.bf16.mxu0 %v1000
  %1418 = vmatpush1.bf16.msra.mxu0 %v999
  %1419 = vmatprep.subr.bf16.mxu0 %v1002
  %1420 = vmatpush1.bf16.msra.mxu0 %v1001
  %1421 = vmatprep.subr.bf16.mxu0 %v1004
  %1422 = vmatpush1.bf16.msra.mxu0 %v1003
  %1423 = vmatprep.subr.bf16.mxu0 %v1006
  %1424 = vmatpush1.bf16.msra.mxu0 %v1005
  %1425 = vmatprep.subr.bf16.mxu0 %v1008
  %1426 = vmatpush1.bf16.msra.mxu0 %v1007
  %1427 = vmatprep.mubr.bf16.mxu0 %v406
  %1428 = vmatmul.mubr.bf16.gmra.mrb[0].mxu0 %v405
  %v1429 = vpop.f32.mrb[0].mxu0
  %v1430 = vadd.f32 %v1317, %v1429
  %v1431 = vpop.f32.mrb[0].mxu0
  %v1432 = vadd.f32 %v1319, %v1431
  %v1433 = vpop.f32.mrb[0].mxu0
  %v1434 = vadd.f32 %v1321, %v1433
  %v1435 = vpop.f32.mrb[0].mxu0
  %v1436 = vadd.f32 %v1323, %v1435
  %1437 = vmatprep.mubr.bf16.mxu0 %v414
  %1438 = vmatmul.mubr.bf16.gmra.mrb[0].mxu0 %v413
  %v1439 = vpop.f32.mrb[0].mxu0
  %v1440 = vadd.f32 %v1327, %v1439
  %v1441 = vpop.f32.mrb[0].mxu0
  %v1442 = vadd.f32 %v1329, %v1441
  %v1443 = vpop.f32.mrb[0].mxu0
  %v1444 = vadd.f32 %v1331, %v1443
  %v1445 = vpop.f32.mrb[0].mxu0
  %v1446 = vadd.f32 %v1333, %v1445
  %1447 = vmatprep.mubr.bf16.mxu0 %v422
  %1448 = vmatmul.mubr.bf16.gmra.mrb[0].mxu0 %v421
  %v1449 = vpop.f32.mrb[0].mxu0
  %v1450 = vadd.f32 %v1337, %v1449
  %v1451 = vpop.f32.mrb[0].mxu0
  %v1452 = vadd.f32 %v1339, %v1451
  %v1453 = vpop.f32.mrb[0].mxu0
  %v1454 = vadd.f32 %v1341, %v1453
  %v1455 = vpop.f32.mrb[0].mxu0
  %v1456 = vadd.f32 %v1343, %v1455
  %1457 = vmatprep.mubr.bf16.mxu0 %v430
  %1458 = vmatmul.mubr.bf16.gmra.mrb[0].mxu0 %v429
  %v1459 = vpop.f32.mrb[0].mxu0
  %v1460 = vadd.f32 %v1347, %v1459
  %v1461 = vpop.f32.mrb[0].mxu0
  %v1462 = vadd.f32 %v1349, %v1461
  %v1463 = vpop.f32.mrb[0].mxu0
  %v1464 = vadd.f32 %v1351, %v1463
  %v1465 = vpop.f32.mrb[0].mxu0
  %v1466 = vadd.f32 %v1353, %v1465
  %1467 = vmatprep.mubr.bf16.mxu0 %v438
  %1468 = vmatmul.mubr.bf16.gmra.mrb[0].mxu0 %v437
  %v1469 = vpop.f32.mrb[0].mxu0
  %v1470 = vadd.f32 %v1357, %v1469
  %v1471 = vpop.f32.mrb[0].mxu0
  %v1472 = vadd.f32 %v1359, %v1471
  %v1473 = vpop.f32.mrb[0].mxu0
  %v1474 = vadd.f32 %v1361, %v1473
  %v1475 = vpop.f32.mrb[0].mxu0
  %v1476 = vadd.f32 %v1363, %v1475
  %1477 = vmatprep.mubr.bf16.mxu0 %v446
  %1478 = vmatmul.mubr.bf16.gmra.mrb[0].mxu0 %v445
  %v1479 = vpop.f32.mrb[0].mxu0
  %v1480 = vadd.f32 %v1367, %v1479
  %v1481 = vpop.f32.mrb[0].mxu0
  %v1482 = vadd.f32 %v1369, %v1481
  %v1483 = vpop.f32.mrb[0].mxu0
  %v1484 = vadd.f32 %v1371, %v1483
  %v1485 = vpop.f32.mrb[0].mxu0
  %v1486 = vadd.f32 %v1373, %v1485
  %1487 = vmatprep.mubr.bf16.mxu0 %v454
  %1488 = vmatmul.mubr.bf16.gmra.mrb[0].mxu0 %v453
  %v1489 = vpop.f32.mrb[0].mxu0
  %v1490 = vadd.f32 %v1377, %v1489
  %v1491 = vpop.f32.mrb[0].mxu0
  %v1492 = vadd.f32 %v1379, %v1491
  %v1493 = vpop.f32.mrb[0].mxu0
  %v1494 = vadd.f32 %v1381, %v1493
  %v1495 = vpop.f32.mrb[0].mxu0
  %v1496 = vadd.f32 %v1383, %v1495
  %1497 = vmatprep.mubr.bf16.mxu0 %v462
  %1498 = vmatmul.mubr.bf16.gmra.mrb[0].mxu0 %v461
  %v1499 = vpop.f32.mrb[0].mxu0
  %v1500 = vadd.f32 %v1387, %v1499
  %v1501 = vpop.f32.mrb[0].mxu0
  %v1502 = vadd.f32 %v1389, %v1501
  %v1503 = vpop.f32.mrb[0].mxu0
  %v1504 = vadd.f32 %v1391, %v1503
  %v1505 = vpop.f32.mrb[0].mxu0
  %v1506 = vadd.f32 %v1393, %v1505
  %1507 = vdwg.mxu0
  %1508 = vmatprep.subr.bf16.mxu0 %v1010
  %1509 = vmatpush1.bf16.msra.mxu0 %v1009
  %1510 = vmatprep.subr.bf16.mxu0 %v1012
  %1511 = vmatpush1.bf16.msra.mxu0 %v1011
  %1512 = vmatprep.subr.bf16.mxu0 %v1014
  %1513 = vmatpush1.bf16.msra.mxu0 %v1013
  %1514 = vmatprep.subr.bf16.mxu0 %v1016
  %1515 = vmatpush1.bf16.msra.mxu0 %v1015
  %1516 = vmatprep.subr.bf16.mxu0 %v1018
  %1517 = vmatpush1.bf16.msra.mxu0 %v1017
  %1518 = vmatprep.subr.bf16.mxu0 %v1020
  %1519 = vmatpush1.bf16.msra.mxu0 %v1019
  %1520 = vmatprep.subr.bf16.mxu0 %v1022
  %1521 = vmatpush1.bf16.msra.mxu0 %v1021
  %1522 = vmatprep.subr.bf16.mxu0 %v1024
  %1523 = vmatpush1.bf16.msra.mxu0 %v1023
  %1524 = vmatprep.subr.bf16.mxu0 %v1026
  %1525 = vmatpush1.bf16.msra.mxu0 %v1025
  %1526 = vmatprep.subr.bf16.mxu0 %v1028
  %1527 = vmatpush1.bf16.msra.mxu0 %v1027
  %1528 = vmatprep.subr.bf16.mxu0 %v1030
  %1529 = vmatpush1.bf16.msra.mxu0 %v1029
  %1530 = vmatprep.subr.bf16.mxu0 %v1032
  %1531 = vmatpush1.bf16.msra.mxu0 %v1031
  %1532 = vmatprep.subr.bf16.mxu0 %v1034
  %1533 = vmatpush1.bf16.msra.mxu0 %v1033
  %1534 = vmatprep.subr.bf16.mxu0 %v1036
  %1535 = vmatpush1.bf16.msra.mxu0 %v1035
  %1536 = vmatprep.subr.bf16.mxu0 %v1038
  %1537 = vmatpush1.bf16.msra.mxu0 %v1037
  %1538 = vmatprep.subr.bf16.mxu0 %v1040
  %1539 = vmatpush1.bf16.msra.mxu0 %v1039
  %1540 = vmatprep.mubr.bf16.mxu0 %v408
  %1541 = vmatmul.mubr.bf16.gmra.mrb[0].mxu0 %v407
  %v1542 = vpop.f32.mrb[0].mxu0
  %v1543 = vadd.f32 %v1430, %v1542
  %v1544 = vpop.f32.mrb[0].mxu0
  %v1545 = vadd.f32 %v1432, %v1544
  %v1546 = vpop.f32.mrb[0].mxu0
  %v1547 = vadd.f32 %v1434, %v1546
  %v1548 = vpop.f32.mrb[0].mxu0
  %v1549 = vadd.f32 %v1436, %v1548
  %1550 = vmatprep.mubr.bf16.mxu0 %v416
  %1551 = vmatmul.mubr.bf16.gmra.mrb[0].mxu0 %v415
  %v1552 = vpop.f32.mrb[0].mxu0
  %v1553 = vadd.f32 %v1440, %v1552
  %v1554 = vpop.f32.mrb[0].mxu0
  %v1555 = vadd.f32 %v1442, %v1554
  %v1556 = vpop.f32.mrb[0].mxu0
  %v1557 = vadd.f32 %v1444, %v1556
  %v1558 = vpop.f32.mrb[0].mxu0
  %v1559 = vadd.f32 %v1446, %v1558
  %1560 = vmatprep.mubr.bf16.mxu0 %v424
  %1561 = vmatmul.mubr.bf16.gmra.mrb[0].mxu0 %v423
  %v1562 = vpop.f32.mrb[0].mxu0
  %v1563 = vadd.f32 %v1450, %v1562
  %v1564 = vpop.f32.mrb[0].mxu0
  %v1565 = vadd.f32 %v1452, %v1564
  %v1566 = vpop.f32.mrb[0].mxu0
  %v1567 = vadd.f32 %v1454, %v1566
  %v1568 = vpop.f32.mrb[0].mxu0
  %v1569 = vadd.f32 %v1456, %v1568
  %1570 = vmatprep.mubr.bf16.mxu0 %v432
  %1571 = vmatmul.mubr.bf16.gmra.mrb[0].mxu0 %v431
  %v1572 = vpop.f32.mrb[0].mxu0
  %v1573 = vadd.f32 %v1460, %v1572
  %v1574 = vpop.f32.mrb[0].mxu0
  %v1575 = vadd.f32 %v1462, %v1574
  %v1576 = vpop.f32.mrb[0].mxu0
  %v1577 = vadd.f32 %v1464, %v1576
  %v1578 = vpop.f32.mrb[0].mxu0
  %v1579 = vadd.f32 %v1466, %v1578
  %1580 = vmatprep.mubr.bf16.mxu0 %v440
  %1581 = vmatmul.mubr.bf16.gmra.mrb[0].mxu0 %v439
  %v1582 = vpop.f32.mrb[0].mxu0
  %v1583 = vadd.f32 %v1470, %v1582
  %v1584 = vpop.f32.mrb[0].mxu0
  %v1585 = vadd.f32 %v1472, %v1584
  %v1586 = vpop.f32.mrb[0].mxu0
  %v1587 = vadd.f32 %v1474, %v1586
  %v1588 = vpop.f32.mrb[0].mxu0
  %v1589 = vadd.f32 %v1476, %v1588
  %1590 = vmatprep.mubr.bf16.mxu0 %v448
  %1591 = vmatmul.mubr.bf16.gmra.mrb[0].mxu0 %v447
  %v1592 = vpop.f32.mrb[0].mxu0
  %v1593 = vadd.f32 %v1480, %v1592
  %v1594 = vpop.f32.mrb[0].mxu0
  %v1595 = vadd.f32 %v1482, %v1594
  %v1596 = vpop.f32.mrb[0].mxu0
  %v1597 = vadd.f32 %v1484, %v1596
  %v1598 = vpop.f32.mrb[0].mxu0
  %v1599 = vadd.f32 %v1486, %v1598
  %1600 = vmatprep.mubr.bf16.mxu0 %v456
  %1601 = vmatmul.mubr.bf16.gmra.mrb[0].mxu0 %v455
  %v1602 = vpop.f32.mrb[0].mxu0
  %v1603 = vadd.f32 %v1490, %v1602
  %v1604 = vpop.f32.mrb[0].mxu0
  %v1605 = vadd.f32 %v1492, %v1604
  %v1606 = vpop.f32.mrb[0].mxu0
  %v1607 = vadd.f32 %v1494, %v1606
  %v1608 = vpop.f32.mrb[0].mxu0
  %v1609 = vadd.f32 %v1496, %v1608
  %1610 = vmatprep.mubr.bf16.mxu0 %v464
  %1611 = vmatmul.mubr.bf16.gmra.mrb[0].mxu0 %v463
  %v1612 = vpop.f32.mrb[0].mxu0
  %v1613 = vadd.f32 %v1500, %v1612
  %v1614 = vpop.f32.mrb[0].mxu0
  %v1615 = vadd.f32 %v1502, %v1614
  %v1616 = vpop.f32.mrb[0].mxu0
  %v1617 = vadd.f32 %v1504, %v1616
  %v1618 = vpop.f32.mrb[0].mxu0
  %v1619 = vadd.f32 %v1506, %v1618
  %1620 = vdwg.mxu0
  %v1621 = vadd.f32 %v1543, %v1547
  %v1622 = vadd.f32 %v1621, %v1553
  %v1623 = vadd.f32 %v1622, %v1557
  %v1624 = vadd.f32 %v1623, %v1563
  %v1625 = vadd.f32 %v1624, %v1567
  %v1626 = vadd.f32 %v1625, %v1573
  %v1627 = vadd.f32 %v1626, %v1577
  %v1628 = vadd.f32 %v1627, %v1583
  %v1629 = vadd.f32 %v1628, %v1587
  %v1630 = vadd.f32 %v1629, %v1593
  %v1631 = vadd.f32 %v1630, %v1597
  %v1632 = vadd.f32 %v1631, %v1603
  %v1633 = vadd.f32 %v1632, %v1607
  %v1634 = vadd.f32 %v1633, %v1613
  %v1635 = vadd.f32 %v1634, %v1617
  %v1636 = vrot.slane %v1635, 4
  %v1637 = vadd.f32 %v1635, %v1636
  %v1638 = vrot.slane %v1637, 2
  %v1639 = vadd.f32 %v1637, %v1638
  %v1640 = vrot.slane %v1639, 1
  %v1641 = vadd.f32 %v1639, %v1640
  %v1642 = vadd.f32 %v1545, %v1549
  %v1643 = vadd.f32 %v1642, %v1555
  %v1644 = vadd.f32 %v1643, %v1559
  %v1645 = vadd.f32 %v1644, %v1565
  %v1646 = vadd.f32 %v1645, %v1569
  %v1647 = vadd.f32 %v1646, %v1575
  %v1648 = vadd.f32 %v1647, %v1579
  %v1649 = vadd.f32 %v1648, %v1585
  %v1650 = vadd.f32 %v1649, %v1589
  %v1651 = vadd.f32 %v1650, %v1595
  %v1652 = vadd.f32 %v1651, %v1599
  %v1653 = vadd.f32 %v1652, %v1605
  %v1654 = vadd.f32 %v1653, %v1609
  %v1655 = vadd.f32 %v1654, %v1615
  %v1656 = vadd.f32 %v1655, %v1619
  %v1657 = vrot.slane %v1656, 4
  %v1658 = vadd.f32 %v1656, %v1657
  %v1659 = vrot.slane %v1658, 2
  %v1660 = vadd.f32 %v1658, %v1659
  %v1661 = vrot.slane %v1660, 1
  %v1662 = vadd.f32 %v1660, %v1661
  %v1663 = vrcp.pop 128.0
  %v1664 = vmul.f32 %v1641, %v1663
  %v1665 = vmul.f32 %v1662, %v1663
  %v1666 = vmul.f32 %v1543, %v1543
  %v1667 = vmul.f32 %v1545, %v1545
  %v1668 = vmul.f32 %v1547, %v1547
  %v1669 = vmul.f32 %v1549, %v1549
  %v1670 = vmul.f32 %v1553, %v1553
  %v1671 = vmul.f32 %v1555, %v1555
  %v1672 = vmul.f32 %v1557, %v1557
  %v1673 = vmul.f32 %v1559, %v1559
  %v1674 = vmul.f32 %v1563, %v1563
  %v1675 = vmul.f32 %v1565, %v1565
  %v1676 = vmul.f32 %v1567, %v1567
  %v1677 = vmul.f32 %v1569, %v1569
  %v1678 = vmul.f32 %v1573, %v1573
  %v1679 = vmul.f32 %v1575, %v1575
  %v1680 = vmul.f32 %v1577, %v1577
  %v1681 = vmul.f32 %v1579, %v1579
  %v1682 = vmul.f32 %v1583, %v1583
  %v1683 = vmul.f32 %v1585, %v1585
  %v1684 = vmul.f32 %v1587, %v1587
  %v1685 = vmul.f32 %v1589, %v1589
  %v1686 = vmul.f32 %v1593, %v1593
  %v1687 = vmul.f32 %v1595, %v1595
  %v1688 = vmul.f32 %v1597, %v1597
  %v1689 = vmul.f32 %v1599, %v1599
  %v1690 = vmul.f32 %v1603, %v1603
  %v1691 = vmul.f32 %v1605, %v1605
  %v1692 = vmul.f32 %v1607, %v1607
  %v1693 = vmul.f32 %v1609, %v1609
  %v1694 = vmul.f32 %v1613, %v1613
  %v1695 = vmul.f32 %v1615, %v1615
  %v1696 = vmul.f32 %v1617, %v1617
  %v1697 = vmul.f32 %v1619, %v1619
  %v1698 = vadd.f32 %v1666, %v1668
  %v1699 = vadd.f32 %v1698, %v1670
  %v1700 = vadd.f32 %v1699, %v1672
  %v1701 = vadd.f32 %v1700, %v1674
  %v1702 = vadd.f32 %v1701, %v1676
  %v1703 = vadd.f32 %v1702, %v1678
  %v1704 = vadd.f32 %v1703, %v1680
  %v1705 = vadd.f32 %v1704, %v1682
  %v1706 = vadd.f32 %v1705, %v1684
  %v1707 = vadd.f32 %v1706, %v1686
  %v1708 = vadd.f32 %v1707, %v1688
  %v1709 = vadd.f32 %v1708, %v1690
  %v1710 = vadd.f32 %v1709, %v1692
  %v1711 = vadd.f32 %v1710, %v1694
  %v1712 = vadd.f32 %v1711, %v1696
  %v1713 = vrot.slane %v1712, 4
  %v1714 = vadd.f32 %v1712, %v1713
  %v1715 = vrot.slane %v1714, 2
  %v1716 = vadd.f32 %v1714, %v1715
  %v1717 = vrot.slane %v1716, 1
  %v1718 = vadd.f32 %v1716, %v1717
  %v1719 = vadd.f32 %v1667, %v1669
  %v1720 = vadd.f32 %v1719, %v1671
  %v1721 = vadd.f32 %v1720, %v1673
  %v1722 = vadd.f32 %v1721, %v1675
  %v1723 = vadd.f32 %v1722, %v1677
  %v1724 = vadd.f32 %v1723, %v1679
  %v1725 = vadd.f32 %v1724, %v1681
  %v1726 = vadd.f32 %v1725, %v1683
  %v1727 = vadd.f32 %v1726, %v1685
  %v1728 = vadd.f32 %v1727, %v1687
  %v1729 = vadd.f32 %v1728, %v1689
  %v1730 = vadd.f32 %v1729, %v1691
  %v1731 = vadd.f32 %v1730, %v1693
  %v1732 = vadd.f32 %v1731, %v1695
  %v1733 = vadd.f32 %v1732, %v1697
  %v1734 = vrot.slane %v1733, 4
  %v1735 = vadd.f32 %v1733, %v1734
  %v1736 = vrot.slane %v1735, 2
  %v1737 = vadd.f32 %v1735, %v1736
  %v1738 = vrot.slane %v1737, 1
  %v1739 = vadd.f32 %v1737, %v1738
  %v1740 = vmul.f32 %v1718, %v1663
  %v1741 = vmul.f32 %v1739, %v1663
  %v1742 = vmul.f32 %v1664, %v1664
  %v1743 = vmul.f32 %v1665, %v1665
  %v1744 = vsub.f32 %v1740, %v1742
  %v1745 = vsub.f32 %v1741, %v1743
  %v1746 = vmax.f32 %v1744, 0.0
  %v1747 = vmax.f32 %v1745, 0.0
  %v1748 = vld [vmem:[%s2] sm:$0x3]
  %v1749 = vadd.f32 %v1746, 1e-05
  %v1750 = vadd.f32 %v1747, 1e-05
  %v1751 = vrsqrt.pop %v1749
  %v1752 = vrsqrt.pop %v1750
  %v1755 = vcombine.low %v1751, %v1752
  %v1757 = vunpack.c.l.s4 1966171168
  %v1758 = vunpack.c.0.s8 %v1757
  %v1759 = vlaneseq
  %v1760 = vshrl.u32 %v1759, 7
  %v1761 = vsub.s32 %v1758, %v1760
  %v1762 = vrot.slane %v1755, %v1761
  %v1764 = vunpack.c.l.s4 1966171168
  %v1765 = vunpack.c.0.s8 %v1764
  %v1766 = vlaneseq
  %v1767 = vshrl.u32 %v1766, 7
  %v1768 = vsub.s32 %v1765, %v1767
  %v1769 = vrot.slane %v1762, %v1768
  %v1771 = vmul.f32 %v1748, %v1769
  %v1772 = vld [vmem:[%s3] sm:$0x3]
  %v1774 = vlaneseq
  %v1775 = vshrl.u32 %v1774, 7
  %v1776 = vsub.s32 0, %v1775
  %v1777 = vrot.slane %v1771, %v1776
  %v1778 = vlaneseq
  %v1779 = vshrl.u32 %v1778, 7
  %v1780 = vsub.s32 1, %v1779
  %v1781 = vrot.slane %v1771, %v1780
  %v1784 = vmul.f32 %v1664, %v1777
  %v1785 = vmul.f32 %v1665, %v1781
  %v1788 = vcombine.low %v1784, %v1785
  %v1790 = vunpack.c.l.s4 1966171168
  %v1791 = vunpack.c.0.s8 %v1790
  %v1792 = vlaneseq
  %v1793 = vshrl.u32 %v1792, 7
  %v1794 = vsub.s32 %v1791, %v1793
  %v1795 = vrot.slane %v1788, %v1794
  %v1797 = vunpack.c.l.s4 1966171168
  %v1798 = vunpack.c.0.s8 %v1797
  %v1799 = vlaneseq
  %v1800 = vshrl.u32 %v1799, 7
  %v1801 = vsub.s32 %v1798, %v1800
  %v1802 = vrot.slane %v1795, %v1801
  %v1804 = vsub.f32 %v1772, %v1802
  %v1805 = vmul.f32 %v1543, %v1777
  %v1806 = vmul.f32 %v1545, %v1781
  %v1807 = vmul.f32 %v1547, %v1777
  %v1808 = vmul.f32 %v1549, %v1781
  %v1809 = vmul.f32 %v1553, %v1777
  %v1810 = vmul.f32 %v1555, %v1781
  %v1811 = vmul.f32 %v1557, %v1777
  %v1812 = vmul.f32 %v1559, %v1781
  %v1813 = vmul.f32 %v1563, %v1777
  %v1814 = vmul.f32 %v1565, %v1781
  %v1815 = vmul.f32 %v1567, %v1777
  %v1816 = vmul.f32 %v1569, %v1781
  %v1817 = vmul.f32 %v1573, %v1777
  %v1818 = vmul.f32 %v1575, %v1781
  %v1819 = vmul.f32 %v1577, %v1777
  %v1820 = vmul.f32 %v1579, %v1781
  %v1821 = vmul.f32 %v1583, %v1777
  %v1822 = vmul.f32 %v1585, %v1781
  %v1823 = vmul.f32 %v1587, %v1777
  %v1824 = vmul.f32 %v1589, %v1781
  %v1825 = vmul.f32 %v1593, %v1777
  %v1826 = vmul.f32 %v1595, %v1781
  %v1827 = vmul.f32 %v1597, %v1777
  %v1828 = vmul.f32 %v1599, %v1781
  %v1829 = vmul.f32 %v1603, %v1777
  %v1830 = vmul.f32 %v1605, %v1781
  %v1831 = vmul.f32 %v1607, %v1777
  %v1832 = vmul.f32 %v1609, %v1781
  %v1833 = vmul.f32 %v1613, %v1777
  %v1834 = vmul.f32 %v1615, %v1781
  %v1835 = vmul.f32 %v1617, %v1777
  %v1836 = vmul.f32 %v1619, %v1781
  %v1838 = vlaneseq
  %v1839 = vshrl.u32 %v1838, 7
  %v1840 = vsub.s32 0, %v1839
  %v1841 = vrot.slane %v1804, %v1840
  %v1842 = vlaneseq
  %v1843 = vshrl.u32 %v1842, 7
  %v1844 = vsub.s32 1, %v1843
  %v1845 = vrot.slane %v1804, %v1844
  %v1848 = vadd.f32 %v1805, %v1841
  %v1849 = vadd.f32 %v1806, %v1845
  %v1850 = vadd.f32 %v1807, %v1841
  %v1851 = vadd.f32 %v1808, %v1845
  %v1852 = vadd.f32 %v1809, %v1841
  %v1853 = vadd.f32 %v1810, %v1845
  %v1854 = vadd.f32 %v1811, %v1841
  %v1855 = vadd.f32 %v1812, %v1845
  %v1856 = vadd.f32 %v1813, %v1841
  %v1857 = vadd.f32 %v1814, %v1845
  %v1858 = vadd.f32 %v1815, %v1841
  %v1859 = vadd.f32 %v1816, %v1845
  %v1860 = vadd.f32 %v1817, %v1841
  %v1861 = vadd.f32 %v1818, %v1845
  %v1862 = vadd.f32 %v1819, %v1841
  %v1863 = vadd.f32 %v1820, %v1845
  %v1864 = vadd.f32 %v1821, %v1841
  %v1865 = vadd.f32 %v1822, %v1845
  %v1866 = vadd.f32 %v1823, %v1841
  %v1867 = vadd.f32 %v1824, %v1845
  %v1868 = vadd.f32 %v1825, %v1841
  %v1869 = vadd.f32 %v1826, %v1845
  %v1870 = vadd.f32 %v1827, %v1841
  %v1871 = vadd.f32 %v1828, %v1845
  %v1872 = vadd.f32 %v1829, %v1841
  %v1873 = vadd.f32 %v1830, %v1845
  %v1874 = vadd.f32 %v1831, %v1841
  %v1875 = vadd.f32 %v1832, %v1845
  %v1876 = vadd.f32 %v1833, %v1841
  %v1877 = vadd.f32 %v1834, %v1845
  %v1878 = vadd.f32 %v1835, %v1841
  %v1879 = vadd.f32 %v1836, %v1845
  %v1880 = vmax.f32 %v1848, 0.0
  %v1881 = vmax.f32 %v1849, 0.0
  %v1882 = vmax.f32 %v1850, 0.0
  %v1883 = vmax.f32 %v1851, 0.0
  %v1884 = vmax.f32 %v1852, 0.0
  %v1885 = vmax.f32 %v1853, 0.0
  %v1886 = vmax.f32 %v1854, 0.0
  %v1887 = vmax.f32 %v1855, 0.0
  %v1888 = vmax.f32 %v1856, 0.0
  %v1889 = vmax.f32 %v1857, 0.0
  %v1890 = vmax.f32 %v1858, 0.0
  %v1891 = vmax.f32 %v1859, 0.0
  %v1892 = vmax.f32 %v1860, 0.0
  %v1893 = vmax.f32 %v1861, 0.0
  %v1894 = vmax.f32 %v1862, 0.0
  %v1895 = vmax.f32 %v1863, 0.0
  %v1896 = vmax.f32 %v1864, 0.0
  %v1897 = vmax.f32 %v1865, 0.0
  %v1898 = vmax.f32 %v1866, 0.0
  %v1899 = vmax.f32 %v1867, 0.0
  %v1900 = vmax.f32 %v1868, 0.0
  %v1901 = vmax.f32 %v1869, 0.0
  %v1902 = vmax.f32 %v1870, 0.0
  %v1903 = vmax.f32 %v1871, 0.0
  %v1904 = vmax.f32 %v1872, 0.0
  %v1905 = vmax.f32 %v1873, 0.0
  %v1906 = vmax.f32 %v1874, 0.0
  %v1907 = vmax.f32 %v1875, 0.0
  %v1908 = vmax.f32 %v1876, 0.0
  %v1909 = vmax.f32 %v1877, 0.0
  %v1910 = vmax.f32 %v1878, 0.0
  %v1911 = vmax.f32 %v1879, 0.0
  %v1912 = vpack.c.bf16 %v1882, %v1880
  %v1913 = vpack.c.bf16 %v1883, %v1881
  %v1914 = vpack.c.bf16 %v1886, %v1884
  %v1915 = vpack.c.bf16 %v1887, %v1885
  %v1916 = vpack.c.bf16 %v1890, %v1888
  %v1917 = vpack.c.bf16 %v1891, %v1889
  %v1918 = vpack.c.bf16 %v1894, %v1892
  %v1919 = vpack.c.bf16 %v1895, %v1893
  %v1920 = vpack.c.bf16 %v1898, %v1896
  %v1921 = vpack.c.bf16 %v1899, %v1897
  %v1922 = vpack.c.bf16 %v1902, %v1900
  %v1923 = vpack.c.bf16 %v1903, %v1901
  %v1924 = vpack.c.bf16 %v1906, %v1904
  %v1925 = vpack.c.bf16 %v1907, %v1905
  %v1926 = vpack.c.bf16 %v1910, %v1908
  %v1927 = vpack.c.bf16 %v1911, %v1909
  %v1944 = vunpack.c.l.b16 %v1912
  %v1945 = vunpack.c.l.b16 %v1913
  %v1946 = vunpack.c.h.b16 %v1912
  %v1947 = vunpack.c.h.b16 %v1913
  %v1948 = vunpack.c.l.b16 %v1914
  %v1949 = vunpack.c.l.b16 %v1915
  %v1950 = vunpack.c.h.b16 %v1914
  %v1951 = vunpack.c.h.b16 %v1915
  %v1952 = vunpack.c.l.b16 %v1916
  %v1953 = vunpack.c.l.b16 %v1917
  %v1954 = vunpack.c.h.b16 %v1916
  %v1955 = vunpack.c.h.b16 %v1917
  %v1956 = vunpack.c.l.b16 %v1918
  %v1957 = vunpack.c.l.b16 %v1919
  %v1958 = vunpack.c.h.b16 %v1918
  %v1959 = vunpack.c.h.b16 %v1919
  %v1960 = vunpack.c.l.b16 %v1920
  %v1961 = vunpack.c.l.b16 %v1921
  %v1962 = vunpack.c.h.b16 %v1920
  %v1963 = vunpack.c.h.b16 %v1921
  %v1964 = vunpack.c.l.b16 %v1922
  %v1965 = vunpack.c.l.b16 %v1923
  %v1966 = vunpack.c.h.b16 %v1922
  %v1967 = vunpack.c.h.b16 %v1923
  %v1968 = vunpack.c.l.b16 %v1924
  %v1969 = vunpack.c.l.b16 %v1925
  %v1970 = vunpack.c.h.b16 %v1924
  %v1971 = vunpack.c.h.b16 %v1925
  %v1972 = vunpack.c.l.b16 %v1926
  %v1973 = vunpack.c.l.b16 %v1927
  %v1974 = vunpack.c.h.b16 %v1926
  %v1975 = vunpack.c.h.b16 %v1927
  %v1976 = vpack.c.b16 %v1945, %v1944
  %v1977 = vpack.c.b16 %v1947, %v1946
  %v1978 = vpack.c.b16 %v1949, %v1948
  %v1979 = vpack.c.b16 %v1951, %v1950
  %v1980 = vpack.c.b16 %v1953, %v1952
  %v1981 = vpack.c.b16 %v1955, %v1954
  %v1982 = vpack.c.b16 %v1957, %v1956
  %v1983 = vpack.c.b16 %v1959, %v1958
  %v1984 = vpack.c.b16 %v1961, %v1960
  %v1985 = vpack.c.b16 %v1963, %v1962
  %v1986 = vpack.c.b16 %v1965, %v1964
  %v1987 = vpack.c.b16 %v1967, %v1966
  %v1988 = vpack.c.b16 %v1969, %v1968
  %v1989 = vpack.c.b16 %v1971, %v1970
  %v1990 = vpack.c.b16 %v1973, %v1972
  %v1991 = vpack.c.b16 %v1975, %v1974
  %2008 = vst [vmem:[%s4] sm:$0xff] %v1976
  %2009 = vst [vmem:[%s4 + $0x8] sm:$0xff] %v1977
  %2010 = vst [vmem:[%s4 + $0x10] sm:$0xff] %v1978
  %2011 = vst [vmem:[%s4 + $0x18] sm:$0xff] %v1979
  %2012 = vst [vmem:[%s4 + $0x20] sm:$0xff] %v1980
  %2013 = vst [vmem:[%s4 + $0x28] sm:$0xff] %v1981
  %2014 = vst [vmem:[%s4 + $0x30] sm:$0xff] %v1982
  %2015 = vst [vmem:[%s4 + $0x38] sm:$0xff] %v1983
  %2016 = vst [vmem:[%s4 + $0x40] sm:$0xff] %v1984
  %2017 = vst [vmem:[%s4 + $0x48] sm:$0xff] %v1985
  %2018 = vst [vmem:[%s4 + $0x50] sm:$0xff] %v1986
  %2019 = vst [vmem:[%s4 + $0x58] sm:$0xff] %v1987
  %2020 = vst [vmem:[%s4 + $0x60] sm:$0xff] %v1988
  %2021 = vst [vmem:[%s4 + $0x68] sm:$0xff] %v1989
  %2022 = vst [vmem:[%s4 + $0x70] sm:$0xff] %v1990
  %2023 = vst [vmem:[%s4 + $0x78] sm:$0xff] %v1991
  // Predicated region
  $region18: #{discriminator_wgan_32.4} parent=0 // pred_check
    _
  $region19: #{discriminator_wgan_32.4} parent=0 // pred_check_branch
    %2025 = sbr.rel (0) target = $region21
  $region20: #{discriminator_wgan_32.4} parent=0 // pred_region
    _
  $region21: #{discriminator_wgan_32.4} parent=0 // pred_fallthru
    _
  // Predicated region
  $region22: #{discriminator_wgan_32.4} parent=0 // pred_check
    _
  $region23: #{discriminator_wgan_32.4} parent=0 // pred_check_branch
    %2027 = sbr.rel (0) target = $region25
  $region24: #{discriminator_wgan_32.4} parent=0 // pred_region
    _
  $region25: #{discriminator_wgan_32.4} parent=0 // pred_fallthru
    _

// kernel: discriminator_wgan_32.5
$region0: #{discriminator_wgan_32.5}
  #allocation0 [shape = 'u32[]', space=smem, size = 0x4, offset = 0x4, fixed_abs, tag = 'smem constant byte address 0x4 - core index']
  #allocation1 [shape = 'u32[144,128]{1,0:T(1,128)}', space=vmem, size = 0x12000, scoped, tag = 'internal scratch']
  #allocation2 [shape = 'f32[1,1]{1,0:T(1,128)S(1)}', space=vmem, size = 0x200, scoped, tag = 'scoped memory for discriminator_wgan_32.5']
  %s0 = inlined_call_operand.vmem [shape: bf16[32,4096], index: 0, kind: input, shape index: {}]
  %s1 = inlined_call_operand.vmem [shape: bf16[4096,512], index: 1, kind: input, shape index: {}]
  %s2 = inlined_call_operand.vmem [shape: f32[1,512], index: 2, kind: input, shape index: {}]
  %s3 = inlined_call_operand.vmem [shape: f32[1,512], index: 3, kind: input, shape index: {}]
  %s4 = inlined_call_operand.vmem [shape: f32[32,512], index: 4, kind: input, shape index: {}]
  %s5 = inlined_call_operand.vmem [shape: f32[2,32], index: 5, kind: input, shape index: {}]
  %s6 = inlined_call_operand.<no memory space> [shape: f32[1,1], index: 6, kind: input, shape index: {}]
  %s7 = inlined_call_operand.vmem [shape: f32[2,1], index: 7, kind: output, shape index: {}]
  %s8 = sld [smem:[#allocation0]]
  $region38: #{discriminator_wgan_32.5} parent=0
    _
  %s10 = ssub.s32 1, %s8
  %s11 = scalar_select 0, %s10, %s8
  %v12 = vstv %s6
  %13 = vst [vmem:[#allocation2] sm:$0x1] %v12
  // Predicated region
  $region2: #{discriminator_wgan_32.5} parent=0 // pred_check
    _
  $region3: #{discriminator_wgan_32.5} parent=0 // pred_check_branch
    %15 = sbr.rel (0) target = $region5
  $region4: #{discriminator_wgan_32.5} parent=0 // pred_region
    _
  $region5: #{discriminator_wgan_32.5} parent=0 // pred_fallthru
    _
  // Predicated region
  $region6: #{discriminator_wgan_32.5} parent=0 // pred_check
    _
  $region7: #{discriminator_wgan_32.5} parent=0 // pred_check_branch
    %17 = sbr.rel (0) target = $region9
  $region8: #{discriminator_wgan_32.5} parent=0 // pred_region
    _
  $region9: #{discriminator_wgan_32.5} parent=0 // pred_fallthru
    _
  // Predicated region
  $region10: #{discriminator_wgan_32.5} parent=0 // pred_check
    _
  $region11: #{discriminator_wgan_32.5} parent=0 // pred_check_branch
    %19 = sbr.rel (0) target = $region13
  $region12: #{discriminator_wgan_32.5} parent=0 // pred_region
    _
  $region13: #{discriminator_wgan_32.5} parent=0 // pred_fallthru
    _
  // Predicated region
  $region14: #{discriminator_wgan_32.5} parent=0 // pred_check
    _
  $region15: #{discriminator_wgan_32.5} parent=0 // pred_check_branch
    %21 = sbr.rel (0) target = $region17
  $region16: #{discriminator_wgan_32.5} parent=0 // pred_region
    _
  $region17: #{discriminator_wgan_32.5} parent=0 // pred_fallthru
    _
  // Predicated region
  $region18: #{discriminator_wgan_32.5} parent=0 // pred_check
    _
  $region19: #{discriminator_wgan_32.5} parent=0 // pred_check_branch
    %23 = sbr.rel (0) target = $region21
  $region20: #{discriminator_wgan_32.5} parent=0 // pred_region
    _
  $region21: #{discriminator_wgan_32.5} parent=0 // pred_fallthru
    _
  // Predicated region
  $region22: #{discriminator_wgan_32.5} parent=0 // pred_check
    _
  $region23: #{discriminator_wgan_32.5} parent=0 // pred_check_branch
    %25 = sbr.rel (0) target = $region25
  $region24: #{discriminator_wgan_32.5} parent=0 // pred_region
    _
  $region25: #{discriminator_wgan_32.5} parent=0 // pred_fallthru
    _
  // Predicated region
  $region26: #{discriminator_wgan_32.5} parent=0 // pred_check
    _
  $region27: #{discriminator_wgan_32.5} parent=0 // pred_check_branch
    %27 = sbr.rel (0) target = $region29
  $region28: #{discriminator_wgan_32.5} parent=0 // pred_region
    _
  $region29: #{discriminator_wgan_32.5} parent=0 // pred_fallthru
    _
  %v28 = vld [vmem:[%s0] sm:$0xff]
  %v29 = vld [vmem:[%s0 + $0x8] sm:$0xff]
  %v30 = vld [vmem:[%s0 + $0x10] sm:$0xff]
  %v31 = vld [vmem:[%s0 + $0x18] sm:$0xff]
  %v32 = vld [vmem:[%s0 + $0x20] sm:$0xff]
  %v33 = vld [vmem:[%s0 + $0x28] sm:$0xff]
  %v34 = vld [vmem:[%s0 + $0x30] sm:$0xff]
  %v35 = vld [vmem:[%s0 + $0x38] sm:$0xff]
  %v36 = vld [vmem:[%s0 + $0x40] sm:$0xff]
  %v37 = vld [vmem:[%s0 + $0x48] sm:$0xff]
  %v38 = vld [vmem:[%s0 + $0x50] sm:$0xff]
  %v39 = vld [vmem:[%s0 + $0x58] sm:$0xff]
  %v40 = vld [vmem:[%s0 + $0x60] sm:$0xff]
  %v41 = vld [vmem:[%s0 + $0x68] sm:$0xff]
  %v42 = vld [vmem:[%s0 + $0x70] sm:$0xff]
  %v43 = vld [vmem:[%s0 + $0x78] sm:$0xff]
  %v44 = vld [vmem:[%s0 + $0x80] sm:$0xff]
  %v45 = vld [vmem:[%s0 + $0x88] sm:$0xff]
  %v46 = vld [vmem:[%s0 + $0x90] sm:$0xff]
  %v47 = vld [vmem:[%s0 + $0x98] sm:$0xff]
  %v48 = vld [vmem:[%s0 + $0xa0] sm:$0xff]
  %v49 = vld [vmem:[%s0 + $0xa8] sm:$0xff]
  %v50 = vld [vmem:[%s0 + $0xb0] sm:$0xff]
  %v51 = vld [vmem:[%s0 + $0xb8] sm:$0xff]
  %v52 = vld [vmem:[%s0 + $0xc0] sm:$0xff]
  %v53 = vld [vmem:[%s0 + $0xc8] sm:$0xff]
  %v54 = vld [vmem:[%s0 + $0xd0] sm:$0xff]
  %v55 = vld [vmem:[%s0 + $0xd8] sm:$0xff]
  %v56 = vld [vmem:[%s0 + $0xe0] sm:$0xff]
  %v57 = vld [vmem:[%s0 + $0xe8] sm:$0xff]
  %v58 = vld [vmem:[%s0 + $0xf0] sm:$0xff]
  %v59 = vld [vmem:[%s0 + $0xf8] sm:$0xff]
  %v60 = vld [vmem:[%s0 + $0x100] sm:$0xff]
  %v61 = vld [vmem:[%s0 + $0x108] sm:$0xff]
  %v62 = vld [vmem:[%s0 + $0x110] sm:$0xff]
  %v63 = vld [vmem:[%s0 + $0x118] sm:$0xff]
  %v64 = vld [vmem:[%s0 + $0x120] sm:$0xff]
  %v65 = vld [vmem:[%s0 + $0x128] sm:$0xff]
  %v66 = vld [vmem:[%s0 + $0x130] sm:$0xff]
  %v67 = vld [vmem:[%s0 + $0x138] sm:$0xff]
  %v68 = vld [vmem:[%s0 + $0x140] sm:$0xff]
  %v69 = vld [vmem:[%s0 + $0x148] sm:$0xff]
  %v70 = vld [vmem:[%s0 + $0x150] sm:$0xff]
  %v71 = vld [vmem:[%s0 + $0x158] sm:$0xff]
  %v72 = vld [vmem:[%s0 + $0x160] sm:$0xff]
  %v73 = vld [vmem:[%s0 + $0x168] sm:$0xff]
  %v74 = vld [vmem:[%s0 + $0x170] sm:$0xff]
  %v75 = vld [vmem:[%s0 + $0x178] sm:$0xff]
  %v76 = vld [vmem:[%s0 + $0x180] sm:$0xff]
  %v77 = vld [vmem:[%s0 + $0x188] sm:$0xff]
  %v78 = vld [vmem:[%s0 + $0x190] sm:$0xff]
  %v79 = vld [vmem:[%s0 + $0x198] sm:$0xff]
  %v80 = vld [vmem:[%s0 + $0x1a0] sm:$0xff]
  %v81 = vld [vmem:[%s0 + $0x1a8] sm:$0xff]
  %v82 = vld [vmem:[%s0 + $0x1b0] sm:$0xff]
  %v83 = vld [vmem:[%s0 + $0x1b8] sm:$0xff]
  %v84 = vld [vmem:[%s0 + $0x1c0] sm:$0xff]
  %v85 = vld [vmem:[%s0 + $0x1c8] sm:$0xff]
  %v86 = vld [vmem:[%s0 + $0x1d0] sm:$0xff]
  %v87 = vld [vmem:[%s0 + $0x1d8] sm:$0xff]
  %v88 = vld [vmem:[%s0 + $0x1e0] sm:$0xff]
  %v89 = vld [vmem:[%s0 + $0x1e8] sm:$0xff]
  %v90 = vld [vmem:[%s0 + $0x1f0] sm:$0xff]
  %v91 = vld [vmem:[%s0 + $0x1f8] sm:$0xff]
  %v92 = vld [vmem:[%s1] sm:$0xff]
  %v93 = vld [vmem:[%s1 + $0x8] sm:$0xff]
  %v94 = vld [vmem:[%s1 + $0x10] sm:$0xff]
  %v95 = vld [vmem:[%s1 + $0x18] sm:$0xff]
  %v96 = vld [vmem:[%s1 + $0x20] sm:$0xff]
  %v97 = vld [vmem:[%s1 + $0x28] sm:$0xff]
  %v98 = vld [vmem:[%s1 + $0x30] sm:$0xff]
  %v99 = vld [vmem:[%s1 + $0x38] sm:$0xff]
  %v100 = vld [vmem:[%s1 + $0x40] sm:$0xff]
  %v101 = vld [vmem:[%s1 + $0x48] sm:$0xff]
  %v102 = vld [vmem:[%s1 + $0x50] sm:$0xff]
  %v103 = vld [vmem:[%s1 + $0x58] sm:$0xff]
  %v104 = vld [vmem:[%s1 + $0x60] sm:$0xff]
  %v105 = vld [vmem:[%s1 + $0x68] sm:$0xff]
  %v106 = vld [vmem:[%s1 + $0x70] sm:$0xff]
  %v107 = vld [vmem:[%s1 + $0x78] sm:$0xff]
  %v108 = vld [vmem:[%s1 + $0x80] sm:$0xff]
  %v109 = vld [vmem:[%s1 + $0x88] sm:$0xff]
  %v110 = vld [vmem:[%s1 + $0x90] sm:$0xff]
  %v111 = vld [vmem:[%s1 + $0x98] sm:$0xff]
  %v112 = vld [vmem:[%s1 + $0xa0] sm:$0xff]
  %v113 = vld [vmem:[%s1 + $0xa8] sm:$0xff]
  %v114 = vld [vmem:[%s1 + $0xb0] sm:$0xff]
  %v115 = vld [vmem:[%s1 + $0xb8] sm:$0xff]
  %v116 = vld [vmem:[%s1 + $0xc0] sm:$0xff]
  %v117 = vld [vmem:[%s1 + $0xc8] sm:$0xff]
  %v118 = vld [vmem:[%s1 + $0xd0] sm:$0xff]
  %v119 = vld [vmem:[%s1 + $0xd8] sm:$0xff]
  %v120 = vld [vmem:[%s1 + $0xe0] sm:$0xff]
  %v121 = vld [vmem:[%s1 + $0xe8] sm:$0xff]
  %v122 = vld [vmem:[%s1 + $0xf0] sm:$0xff]
  %v123 = vld [vmem:[%s1 + $0xf8] sm:$0xff]
  %v124 = vld [vmem:[%s1 + $0x100] sm:$0xff]
  %v125 = vld [vmem:[%s1 + $0x108] sm:$0xff]
  %v126 = vld [vmem:[%s1 + $0x110] sm:$0xff]
  %v127 = vld [vmem:[%s1 + $0x118] sm:$0xff]
  %v128 = vld [vmem:[%s1 + $0x120] sm:$0xff]
  %v129 = vld [vmem:[%s1 + $0x128] sm:$0xff]
  %v130 = vld [vmem:[%s1 + $0x130] sm:$0xff]
  %v131 = vld [vmem:[%s1 + $0x138] sm:$0xff]
  %v132 = vld [vmem:[%s1 + $0x140] sm:$0xff]
  %v133 = vld [vmem:[%s1 + $0x148] sm:$0xff]
  %v134 = vld [vmem:[%s1 + $0x150] sm:$0xff]
  %v135 = vld [vmem:[%s1 + $0x158] sm:$0xff]
  %v136 = vld [vmem:[%s1 + $0x160] sm:$0xff]
  %v137 = vld [vmem:[%s1 + $0x168] sm:$0xff]
  %v138 = vld [vmem:[%s1 + $0x170] sm:$0xff]
  %v139 = vld [vmem:[%s1 + $0x178] sm:$0xff]
  %v140 = vld [vmem:[%s1 + $0x180] sm:$0xff]
  %v141 = vld [vmem:[%s1 + $0x188] sm:$0xff]
  %v142 = vld [vmem:[%s1 + $0x190] sm:$0xff]
  %v143 = vld [vmem:[%s1 + $0x198] sm:$0xff]
  %v144 = vld [vmem:[%s1 + $0x1a0] sm:$0xff]
  %v145 = vld [vmem:[%s1 + $0x1a8] sm:$0xff]
  %v146 = vld [vmem:[%s1 + $0x1b0] sm:$0xff]
  %v147 = vld [vmem:[%s1 + $0x1b8] sm:$0xff]
  %v148 = vld [vmem:[%s1 + $0x1c0] sm:$0xff]
  %v149 = vld [vmem:[%s1 + $0x1c8] sm:$0xff]
  %v150 = vld [vmem:[%s1 + $0x1d0] sm:$0xff]
  %v151 = vld [vmem:[%s1 + $0x1d8] sm:$0xff]
  %v152 = vld [vmem:[%s1 + $0x1e0] sm:$0xff]
  %v153 = vld [vmem:[%s1 + $0x1e8] sm:$0xff]
  %v154 = vld [vmem:[%s1 + $0x1f0] sm:$0xff]
  %v155 = vld [vmem:[%s1 + $0x1f8] sm:$0xff]
  %v156 = vld [vmem:[%s1 + $0x200] sm:$0xff]
  %v157 = vld [vmem:[%s1 + $0x208] sm:$0xff]
  %v158 = vld [vmem:[%s1 + $0x210] sm:$0xff]
  %v159 = vld [vmem:[%s1 + $0x218] sm:$0xff]
  %v160 = vld [vmem:[%s1 + $0x220] sm:$0xff]
  %v161 = vld [vmem:[%s1 + $0x228] sm:$0xff]
  %v162 = vld [vmem:[%s1 + $0x230] sm:$0xff]
  %v163 = vld [vmem:[%s1 + $0x238] sm:$0xff]
  %v164 = vld [vmem:[%s1 + $0x240] sm:$0xff]
  %v165 = vld [vmem:[%s1 + $0x248] sm:$0xff]
  %v166 = vld [vmem:[%s1 + $0x250] sm:$0xff]
  %v167 = vld [vmem:[%s1 + $0x258] sm:$0xff]
  %v168 = vld [vmem:[%s1 + $0x260] sm:$0xff]
  %v169 = vld [vmem:[%s1 + $0x268] sm:$0xff]
  %v170 = vld [vmem:[%s1 + $0x270] sm:$0xff]
  %v171 = vld [vmem:[%s1 + $0x278] sm:$0xff]
  %v172 = vld [vmem:[%s1 + $0x280] sm:$0xff]
  %v173 = vld [vmem:[%s1 + $0x288] sm:$0xff]
  %v174 = vld [vmem:[%s1 + $0x290] sm:$0xff]
  %v175 = vld [vmem:[%s1 + $0x298] sm:$0xff]
  %v176 = vld [vmem:[%s1 + $0x2a0] sm:$0xff]
  %v177 = vld [vmem:[%s1 + $0x2a8] sm:$0xff]
  %v178 = vld [vmem:[%s1 + $0x2b0] sm:$0xff]
  %v179 = vld [vmem:[%s1 + $0x2b8] sm:$0xff]
  %v180 = vld [vmem:[%s1 + $0x2c0] sm:$0xff]
  %v181 = vld [vmem:[%s1 + $0x2c8] sm:$0xff]
  %v182 = vld [vmem:[%s1 + $0x2d0] sm:$0xff]
  %v183 = vld [vmem:[%s1 + $0x2d8] sm:$0xff]
  %v184 = vld [vmem:[%s1 + $0x2e0] sm:$0xff]
  %v185 = vld [vmem:[%s1 + $0x2e8] sm:$0xff]
  %v186 = vld [vmem:[%s1 + $0x2f0] sm:$0xff]
  %v187 = vld [vmem:[%s1 + $0x2f8] sm:$0xff]
  %v188 = vld [vmem:[%s1 + $0x300] sm:$0xff]
  %v189 = vld [vmem:[%s1 + $0x308] sm:$0xff]
  %v190 = vld [vmem:[%s1 + $0x310] sm:$0xff]
  %v191 = vld [vmem:[%s1 + $0x318] sm:$0xff]
  %v192 = vld [vmem:[%s1 + $0x320] sm:$0xff]
  %v193 = vld [vmem:[%s1 + $0x328] sm:$0xff]
  %v194 = vld [vmem:[%s1 + $0x330] sm:$0xff]
  %v195 = vld [vmem:[%s1 + $0x338] sm:$0xff]
  %v196 = vld [vmem:[%s1 + $0x340] sm:$0xff]
  %v197 = vld [vmem:[%s1 + $0x348] sm:$0xff]
  %v198 = vld [vmem:[%s1 + $0x350] sm:$0xff]
  %v199 = vld [vmem:[%s1 + $0x358] sm:$0xff]
  %v200 = vld [vmem:[%s1 + $0x360] sm:$0xff]
  %v201 = vld [vmem:[%s1 + $0x368] sm:$0xff]
  %v202 = vld [vmem:[%s1 + $0x370] sm:$0xff]
  %v203 = vld [vmem:[%s1 + $0x378] sm:$0xff]
  %v204 = vld [vmem:[%s1 + $0x380] sm:$0xff]
  %v205 = vld [vmem:[%s1 + $0x388] sm:$0xff]
  %v206 = vld [vmem:[%s1 + $0x390] sm:$0xff]
  %v207 = vld [vmem:[%s1 + $0x398] sm:$0xff]
  %v208 = vld [vmem:[%s1 + $0x3a0] sm:$0xff]
  %v209 = vld [vmem:[%s1 + $0x3a8] sm:$0xff]
  %v210 = vld [vmem:[%s1 + $0x3b0] sm:$0xff]
  %v211 = vld [vmem:[%s1 + $0x3b8] sm:$0xff]
  %v212 = vld [vmem:[%s1 + $0x3c0] sm:$0xff]
  %v213 = vld [vmem:[%s1 + $0x3c8] sm:$0xff]
  %v214 = vld [vmem:[%s1 + $0x3d0] sm:$0xff]
  %v215 = vld [vmem:[%s1 + $0x3d8] sm:$0xff]
  %v216 = vld [vmem:[%s1 + $0x3e0] sm:$0xff]
  %v217 = vld [vmem:[%s1 + $0x3e8] sm:$0xff]
  %v218 = vld [vmem:[%s1 + $0x3f0] sm:$0xff]
  %v219 = vld [vmem:[%s1 + $0x3f8] sm:$0xff]
  %v220 = vld [vmem:[%s1 + $0x400] sm:$0xff]
  %v221 = vld [vmem:[%s1 + $0x408] sm:$0xff]
  %v222 = vld [vmem:[%s1 + $0x410] sm:$0xff]
  %v223 = vld [vmem:[%s1 + $0x418] sm:$0xff]
  %v224 = vld [vmem:[%s1 + $0x420] sm:$0xff]
  %v225 = vld [vmem:[%s1 + $0x428] sm:$0xff]
  %v226 = vld [vmem:[%s1 + $0x430] sm:$0xff]
  %v227 = vld [vmem:[%s1 + $0x438] sm:$0xff]
  %v228 = vld [vmem:[%s1 + $0x440] sm:$0xff]
  %v229 = vld [vmem:[%s1 + $0x448] sm:$0xff]
  %v230 = vld [vmem:[%s1 + $0x450] sm:$0xff]
  %v231 = vld [vmem:[%s1 + $0x458] sm:$0xff]
  %v232 = vld [vmem:[%s1 + $0x460] sm:$0xff]
  %v233 = vld [vmem:[%s1 + $0x468] sm:$0xff]
  %v234 = vld [vmem:[%s1 + $0x470] sm:$0xff]
  %v235 = vld [vmem:[%s1 + $0x478] sm:$0xff]
  %v236 = vld [vmem:[%s1 + $0x480] sm:$0xff]
  %v237 = vld [vmem:[%s1 + $0x488] sm:$0xff]
  %v238 = vld [vmem:[%s1 + $0x490] sm:$0xff]
  %v239 = vld [vmem:[%s1 + $0x498] sm:$0xff]
  %v240 = vld [vmem:[%s1 + $0x4a0] sm:$0xff]
  %v241 = vld [vmem:[%s1 + $0x4a8] sm:$0xff]
  %v242 = vld [vmem:[%s1 + $0x4b0] sm:$0xff]
  %v243 = vld [vmem:[%s1 + $0x4b8] sm:$0xff]
  %v244 = vld [vmem:[%s1 + $0x4c0] sm:$0xff]
  %v245 = vld [vmem:[%s1 + $0x4c8] sm:$0xff]
  %v246 = vld [vmem:[%s1 + $0x4d0] sm:$0xff]
  %v247 = vld [vmem:[%s1 + $0x4d8] sm:$0xff]
  %v248 = vld [vmem:[%s1 + $0x4e0] sm:$0xff]
  %v249 = vld [vmem:[%s1 + $0x4e8] sm:$0xff]
  %v250 = vld [vmem:[%s1 + $0x4f0] sm:$0xff]
  %v251 = vld [vmem:[%s1 + $0x4f8] sm:$0xff]
  %v252 = vld [vmem:[%s1 + $0x500] sm:$0xff]
  %v253 = vld [vmem:[%s1 + $0x508] sm:$0xff]
  %v254 = vld [vmem:[%s1 + $0x510] sm:$0xff]
  %v255 = vld [vmem:[%s1 + $0x518] sm:$0xff]
  %v256 = vld [vmem:[%s1 + $0x520] sm:$0xff]
  %v257 = vld [vmem:[%s1 + $0x528] sm:$0xff]
  %v258 = vld [vmem:[%s1 + $0x530] sm:$0xff]
  %v259 = vld [vmem:[%s1 + $0x538] sm:$0xff]
  %v260 = vld [vmem:[%s1 + $0x540] sm:$0xff]
  %v261 = vld [vmem:[%s1 + $0x548] sm:$0xff]
  %v262 = vld [vmem:[%s1 + $0x550] sm:$0xff]
  %v263 = vld [vmem:[%s1 + $0x558] sm:$0xff]
  %v264 = vld [vmem:[%s1 + $0x560] sm:$0xff]
  %v265 = vld [vmem:[%s1 + $0x568] sm:$0xff]
  %v266 = vld [vmem:[%s1 + $0x570] sm:$0xff]
  %v267 = vld [vmem:[%s1 + $0x578] sm:$0xff]
  %v268 = vld [vmem:[%s1 + $0x580] sm:$0xff]
  %v269 = vld [vmem:[%s1 + $0x588] sm:$0xff]
  %v270 = vld [vmem:[%s1 + $0x590] sm:$0xff]
  %v271 = vld [vmem:[%s1 + $0x598] sm:$0xff]
  %v272 = vld [vmem:[%s1 + $0x5a0] sm:$0xff]
  %v273 = vld [vmem:[%s1 + $0x5a8] sm:$0xff]
  %v274 = vld [vmem:[%s1 + $0x5b0] sm:$0xff]
  %v275 = vld [vmem:[%s1 + $0x5b8] sm:$0xff]
  %v276 = vld [vmem:[%s1 + $0x5c0] sm:$0xff]
  %v277 = vld [vmem:[%s1 + $0x5c8] sm:$0xff]
  %v278 = vld [vmem:[%s1 + $0x5d0] sm:$0xff]
  %v279 = vld [vmem:[%s1 + $0x5d8] sm:$0xff]
  %v280 = vld [vmem:[%s1 + $0x5e0] sm:$0xff]
  %v281 = vld [vmem:[%s1 + $0x5e8] sm:$0xff]
  %v282 = vld [vmem:[%s1 + $0x5f0] sm:$0xff]
  %v283 = vld [vmem:[%s1 + $0x5f8] sm:$0xff]
  %v284 = vld [vmem:[%s1 + $0x600] sm:$0xff]
  %v285 = vld [vmem:[%s1 + $0x608] sm:$0xff]
  %v286 = vld [vmem:[%s1 + $0x610] sm:$0xff]
  %v287 = vld [vmem:[%s1 + $0x618] sm:$0xff]
  %v288 = vld [vmem:[%s1 + $0x620] sm:$0xff]
  %v289 = vld [vmem:[%s1 + $0x628] sm:$0xff]
  %v290 = vld [vmem:[%s1 + $0x630] sm:$0xff]
  %v291 = vld [vmem:[%s1 + $0x638] sm:$0xff]
  %v292 = vld [vmem:[%s1 + $0x640] sm:$0xff]
  %v293 = vld [vmem:[%s1 + $0x648] sm:$0xff]
  %v294 = vld [vmem:[%s1 + $0x650] sm:$0xff]
  %v295 = vld [vmem:[%s1 + $0x658] sm:$0xff]
  %v296 = vld [vmem:[%s1 + $0x660] sm:$0xff]
  %v297 = vld [vmem:[%s1 + $0x668] sm:$0xff]
  %v298 = vld [vmem:[%s1 + $0x670] sm:$0xff]
  %v299 = vld [vmem:[%s1 + $0x678] sm:$0xff]
  %v300 = vld [vmem:[%s1 + $0x680] sm:$0xff]
  %v301 = vld [vmem:[%s1 + $0x688] sm:$0xff]
  %v302 = vld [vmem:[%s1 + $0x690] sm:$0xff]
  %v303 = vld [vmem:[%s1 + $0x698] sm:$0xff]
  %v304 = vld [vmem:[%s1 + $0x6a0] sm:$0xff]
  %v305 = vld [vmem:[%s1 + $0x6a8] sm:$0xff]
  %v306 = vld [vmem:[%s1 + $0x6b0] sm:$0xff]
  %v307 = vld [vmem:[%s1 + $0x6b8] sm:$0xff]
  %v308 = vld [vmem:[%s1 + $0x6c0] sm:$0xff]
  %v309 = vld [vmem:[%s1 + $0x6c8] sm:$0xff]
  %v310 = vld [vmem:[%s1 + $0x6d0] sm:$0xff]
  %v311 = vld [vmem:[%s1 + $0x6d8] sm:$0xff]
  %v312 = vld [vmem:[%s1 + $0x6e0] sm:$0xff]
  %v313 = vld [vmem:[%s1 + $0x6e8] sm:$0xff]
  %v314 = vld [vmem:[%s1 + $0x6f0] sm:$0xff]
  %v315 = vld [vmem:[%s1 + $0x6f8] sm:$0xff]
  %v316 = vld [vmem:[%s1 + $0x700] sm:$0xff]
  %v317 = vld [vmem:[%s1 + $0x708] sm:$0xff]
  %v318 = vld [vmem:[%s1 + $0x710] sm:$0xff]
  %v319 = vld [vmem:[%s1 + $0x718] sm:$0xff]
  %v320 = vld [vmem:[%s1 + $0x720] sm:$0xff]
  %v321 = vld [vmem:[%s1 + $0x728] sm:$0xff]
  %v322 = vld [vmem:[%s1 + $0x730] sm:$0xff]
  %v323 = vld [vmem:[%s1 + $0x738] sm:$0xff]
  %v324 = vld [vmem:[%s1 + $0x740] sm:$0xff]
  %v325 = vld [vmem:[%s1 + $0x748] sm:$0xff]
  %v326 = vld [vmem:[%s1 + $0x750] sm:$0xff]
  %v327 = vld [vmem:[%s1 + $0x758] sm:$0xff]
  %v328 = vld [vmem:[%s1 + $0x760] sm:$0xff]
  %v329 = vld [vmem:[%s1 + $0x768] sm:$0xff]
  %v330 = vld [vmem:[%s1 + $0x770] sm:$0xff]
  %v331 = vld [vmem:[%s1 + $0x778] sm:$0xff]
  %v332 = vld [vmem:[%s1 + $0x780] sm:$0xff]
  %v333 = vld [vmem:[%s1 + $0x788] sm:$0xff]
  %v334 = vld [vmem:[%s1 + $0x790] sm:$0xff]
  %v335 = vld [vmem:[%s1 + $0x798] sm:$0xff]
  %v336 = vld [vmem:[%s1 + $0x7a0] sm:$0xff]
  %v337 = vld [vmem:[%s1 + $0x7a8] sm:$0xff]
  %v338 = vld [vmem:[%s1 + $0x7b0] sm:$0xff]
  %v339 = vld [vmem:[%s1 + $0x7b8] sm:$0xff]
  %v340 = vld [vmem:[%s1 + $0x7c0] sm:$0xff]
  %v341 = vld [vmem:[%s1 + $0x7c8] sm:$0xff]
  %v342 = vld [vmem:[%s1 + $0x7d0] sm:$0xff]
  %v343 = vld [vmem:[%s1 + $0x7d8] sm:$0xff]
  %v344 = vld [vmem:[%s1 + $0x7e0] sm:$0xff]
  %v345 = vld [vmem:[%s1 + $0x7e8] sm:$0xff]
  %v346 = vld [vmem:[%s1 + $0x7f0] sm:$0xff]
  %v347 = vld [vmem:[%s1 + $0x7f8] sm:$0xff]
  %v348 = vld [vmem:[%s1 + $0x800] sm:$0xff]
  %v349 = vld [vmem:[%s1 + $0x808] sm:$0xff]
  %v350 = vld [vmem:[%s1 + $0x810] sm:$0xff]
  %v351 = vld [vmem:[%s1 + $0x818] sm:$0xff]
  %v352 = vld [vmem:[%s1 + $0x820] sm:$0xff]
  %v353 = vld [vmem:[%s1 + $0x828] sm:$0xff]
  %v354 = vld [vmem:[%s1 + $0x830] sm:$0xff]
  %v355 = vld [vmem:[%s1 + $0x838] sm:$0xff]
  %v356 = vld [vmem:[%s1 + $0x840] sm:$0xff]
  %v357 = vld [vmem:[%s1 + $0x848] sm:$0xff]
  %v358 = vld [vmem:[%s1 + $0x850] sm:$0xff]
  %v359 = vld [vmem:[%s1 + $0x858] sm:$0xff]
  %v360 = vld [vmem:[%s1 + $0x860] sm:$0xff]
  %v361 = vld [vmem:[%s1 + $0x868] sm:$0xff]
  %v362 = vld [vmem:[%s1 + $0x870] sm:$0xff]
  %v363 = vld [vmem:[%s1 + $0x878] sm:$0xff]
  %v364 = vld [vmem:[%s1 + $0x880] sm:$0xff]
  %v365 = vld [vmem:[%s1 + $0x888] sm:$0xff]
  %v366 = vld [vmem:[%s1 + $0x890] sm:$0xff]
  %v367 = vld [vmem:[%s1 + $0x898] sm:$0xff]
  %v368 = vld [vmem:[%s1 + $0x8a0] sm:$0xff]
  %v369 = vld [vmem:[%s1 + $0x8a8] sm:$0xff]
  %v370 = vld [vmem:[%s1 + $0x8b0] sm:$0xff]
  %v371 = vld [vmem:[%s1 + $0x8b8] sm:$0xff]
  %v372 = vld [vmem:[%s1 + $0x8c0] sm:$0xff]
  %v373 = vld [vmem:[%s1 + $0x8c8] sm:$0xff]
  %v374 = vld [vmem:[%s1 + $0x8d0] sm:$0xff]
  %v375 = vld [vmem:[%s1 + $0x8d8] sm:$0xff]
  %v376 = vld [vmem:[%s1 + $0x8e0] sm:$0xff]
  %v377 = vld [vmem:[%s1 + $0x8e8] sm:$0xff]
  %v378 = vld [vmem:[%s1 + $0x8f0] sm:$0xff]
  %v379 = vld [vmem:[%s1 + $0x8f8] sm:$0xff]
  %v380 = vld [vmem:[%s1 + $0x900] sm:$0xff]
  %v381 = vld [vmem:[%s1 + $0x908] sm:$0xff]
  %v382 = vld [vmem:[%s1 + $0x910] sm:$0xff]
  %v383 = vld [vmem:[%s1 + $0x918] sm:$0xff]
  %v384 = vld [vmem:[%s1 + $0x920] sm:$0xff]
  %v385 = vld [vmem:[%s1 + $0x928] sm:$0xff]
  %v386 = vld [vmem:[%s1 + $0x930] sm:$0xff]
  %v387 = vld [vmem:[%s1 + $0x938] sm:$0xff]
  %v388 = vld [vmem:[%s1 + $0x940] sm:$0xff]
  %v389 = vld [vmem:[%s1 + $0x948] sm:$0xff]
  %v390 = vld [vmem:[%s1 + $0x950] sm:$0xff]
  %v391 = vld [vmem:[%s1 + $0x958] sm:$0xff]
  %v392 = vld [vmem:[%s1 + $0x960] sm:$0xff]
  %v393 = vld [vmem:[%s1 + $0x968] sm:$0xff]
  %v394 = vld [vmem:[%s1 + $0x970] sm:$0xff]
  %v395 = vld [vmem:[%s1 + $0x978] sm:$0xff]
  %v396 = vld [vmem:[%s1 + $0x980] sm:$0xff]
  %v397 = vld [vmem:[%s1 + $0x988] sm:$0xff]
  %v398 = vld [vmem:[%s1 + $0x990] sm:$0xff]
  %v399 = vld [vmem:[%s1 + $0x998] sm:$0xff]
  %v400 = vld [vmem:[%s1 + $0x9a0] sm:$0xff]
  %v401 = vld [vmem:[%s1 + $0x9a8] sm:$0xff]
  %v402 = vld [vmem:[%s1 + $0x9b0] sm:$0xff]
  %v403 = vld [vmem:[%s1 + $0x9b8] sm:$0xff]
  %v404 = vld [vmem:[%s1 + $0x9c0] sm:$0xff]
  %v405 = vld [vmem:[%s1 + $0x9c8] sm:$0xff]
  %v406 = vld [vmem:[%s1 + $0x9d0] sm:$0xff]
  %v407 = vld [vmem:[%s1 + $0x9d8] sm:$0xff]
  %v408 = vld [vmem:[%s1 + $0x9e0] sm:$0xff]
  %v409 = vld [vmem:[%s1 + $0x9e8] sm:$0xff]
  %v410 = vld [vmem:[%s1 + $0x9f0] sm:$0xff]
  %v411 = vld [vmem:[%s1 + $0x9f8] sm:$0xff]
  %v412 = vld [vmem:[%s1 + $0xa00] sm:$0xff]
  %v413 = vld [vmem:[%s1 + $0xa08] sm:$0xff]
  %v414 = vld [vmem:[%s1 + $0xa10] sm:$0xff]
  %v415 = vld [vmem:[%s1 + $0xa18] sm:$0xff]
  %v416 = vld [vmem:[%s1 + $0xa20] sm:$0xff]
  %v417 = vld [vmem:[%s1 + $0xa28] sm:$0xff]
  %v418 = vld [vmem:[%s1 + $0xa30] sm:$0xff]
  %v419 = vld [vmem:[%s1 + $0xa38] sm:$0xff]
  %v420 = vld [vmem:[%s1 + $0xa40] sm:$0xff]
  %v421 = vld [vmem:[%s1 + $0xa48] sm:$0xff]
  %v422 = vld [vmem:[%s1 + $0xa50] sm:$0xff]
  %v423 = vld [vmem:[%s1 + $0xa58] sm:$0xff]
  %v424 = vld [vmem:[%s1 + $0xa60] sm:$0xff]
  %v425 = vld [vmem:[%s1 + $0xa68] sm:$0xff]
  %v426 = vld [vmem:[%s1 + $0xa70] sm:$0xff]
  %v427 = vld [vmem:[%s1 + $0xa78] sm:$0xff]
  %v428 = vld [vmem:[%s1 + $0xa80] sm:$0xff]
  %v429 = vld [vmem:[%s1 + $0xa88] sm:$0xff]
  %v430 = vld [vmem:[%s1 + $0xa90] sm:$0xff]
  %v431 = vld [vmem:[%s1 + $0xa98] sm:$0xff]
  %v432 = vld [vmem:[%s1 + $0xaa0] sm:$0xff]
  %v433 = vld [vmem:[%s1 + $0xaa8] sm:$0xff]
  %v434 = vld [vmem:[%s1 + $0xab0] sm:$0xff]
  %v435 = vld [vmem:[%s1 + $0xab8] sm:$0xff]
  %v436 = vld [vmem:[%s1 + $0xac0] sm:$0xff]
  %v437 = vld [vmem:[%s1 + $0xac8] sm:$0xff]
  %v438 = vld [vmem:[%s1 + $0xad0] sm:$0xff]
  %v439 = vld [vmem:[%s1 + $0xad8] sm:$0xff]
  %v440 = vld [vmem:[%s1 + $0xae0] sm:$0xff]
  %v441 = vld [vmem:[%s1 + $0xae8] sm:$0xff]
  %v442 = vld [vmem:[%s1 + $0xaf0] sm:$0xff]
  %v443 = vld [vmem:[%s1 + $0xaf8] sm:$0xff]
  %v444 = vld [vmem:[%s1 + $0xb00] sm:$0xff]
  %v445 = vld [vmem:[%s1 + $0xb08] sm:$0xff]
  %v446 = vld [vmem:[%s1 + $0xb10] sm:$0xff]
  %v447 = vld [vmem:[%s1 + $0xb18] sm:$0xff]
  %v448 = vld [vmem:[%s1 + $0xb20] sm:$0xff]
  %v449 = vld [vmem:[%s1 + $0xb28] sm:$0xff]
  %v450 = vld [vmem:[%s1 + $0xb30] sm:$0xff]
  %v451 = vld [vmem:[%s1 + $0xb38] sm:$0xff]
  %v452 = vld [vmem:[%s1 + $0xb40] sm:$0xff]
  %v453 = vld [vmem:[%s1 + $0xb48] sm:$0xff]
  %v454 = vld [vmem:[%s1 + $0xb50] sm:$0xff]
  %v455 = vld [vmem:[%s1 + $0xb58] sm:$0xff]
  %v456 = vld [vmem:[%s1 + $0xb60] sm:$0xff]
  %v457 = vld [vmem:[%s1 + $0xb68] sm:$0xff]
  %v458 = vld [vmem:[%s1 + $0xb70] sm:$0xff]
  %v459 = vld [vmem:[%s1 + $0xb78] sm:$0xff]
  %v460 = vld [vmem:[%s1 + $0xb80] sm:$0xff]
  %v461 = vld [vmem:[%s1 + $0xb88] sm:$0xff]
  %v462 = vld [vmem:[%s1 + $0xb90] sm:$0xff]
  %v463 = vld [vmem:[%s1 + $0xb98] sm:$0xff]
  %v464 = vld [vmem:[%s1 + $0xba0] sm:$0xff]
  %v465 = vld [vmem:[%s1 + $0xba8] sm:$0xff]
  %v466 = vld [vmem:[%s1 + $0xbb0] sm:$0xff]
  %v467 = vld [vmem:[%s1 + $0xbb8] sm:$0xff]
  %v468 = vld [vmem:[%s1 + $0xbc0] sm:$0xff]
  %v469 = vld [vmem:[%s1 + $0xbc8] sm:$0xff]
  %v470 = vld [vmem:[%s1 + $0xbd0] sm:$0xff]
  %v471 = vld [vmem:[%s1 + $0xbd8] sm:$0xff]
  %v472 = vld [vmem:[%s1 + $0xbe0] sm:$0xff]
  %v473 = vld [vmem:[%s1 + $0xbe8] sm:$0xff]
  %v474 = vld [vmem:[%s1 + $0xbf0] sm:$0xff]
  %v475 = vld [vmem:[%s1 + $0xbf8] sm:$0xff]
  %v476 = vld [vmem:[%s1 + $0xc00] sm:$0xff]
  %v477 = vld [vmem:[%s1 + $0xc08] sm:$0xff]
  %v478 = vld [vmem:[%s1 + $0xc10] sm:$0xff]
  %v479 = vld [vmem:[%s1 + $0xc18] sm:$0xff]
  %v480 = vld [vmem:[%s1 + $0xc20] sm:$0xff]
  %v481 = vld [vmem:[%s1 + $0xc28] sm:$0xff]
  %v482 = vld [vmem:[%s1 + $0xc30] sm:$0xff]
  %v483 = vld [vmem:[%s1 + $0xc38] sm:$0xff]
  %v484 = vld [vmem:[%s1 + $0xc40] sm:$0xff]
  %v485 = vld [vmem:[%s1 + $0xc48] sm:$0xff]
  %v486 = vld [vmem:[%s1 + $0xc50] sm:$0xff]
  %v487 = vld [vmem:[%s1 + $0xc58] sm:$0xff]
  %v488 = vld [vmem:[%s1 + $0xc60] sm:$0xff]
  %v489 = vld [vmem:[%s1 + $0xc68] sm:$0xff]
  %v490 = vld [vmem:[%s1 + $0xc70] sm:$0xff]
  %v491 = vld [vmem:[%s1 + $0xc78] sm:$0xff]
  %v492 = vld [vmem:[%s1 + $0xc80] sm:$0xff]
  %v493 = vld [vmem:[%s1 + $0xc88] sm:$0xff]
  %v494 = vld [vmem:[%s1 + $0xc90] sm:$0xff]
  %v495 = vld [vmem:[%s1 + $0xc98] sm:$0xff]
  %v496 = vld [vmem:[%s1 + $0xca0] sm:$0xff]
  %v497 = vld [vmem:[%s1 + $0xca8] sm:$0xff]
  %v498 = vld [vmem:[%s1 + $0xcb0] sm:$0xff]
  %v499 = vld [vmem:[%s1 + $0xcb8] sm:$0xff]
  %v500 = vld [vmem:[%s1 + $0xcc0] sm:$0xff]
  %v501 = vld [vmem:[%s1 + $0xcc8] sm:$0xff]
  %v502 = vld [vmem:[%s1 + $0xcd0] sm:$0xff]
  %v503 = vld [vmem:[%s1 + $0xcd8] sm:$0xff]
  %v504 = vld [vmem:[%s1 + $0xce0] sm:$0xff]
  %v505 = vld [vmem:[%s1 + $0xce8] sm:$0xff]
  %v506 = vld [vmem:[%s1 + $0xcf0] sm:$0xff]
  %v507 = vld [vmem:[%s1 + $0xcf8] sm:$0xff]
  %v508 = vld [vmem:[%s1 + $0xd00] sm:$0xff]
  %v509 = vld [vmem:[%s1 + $0xd08] sm:$0xff]
  %v510 = vld [vmem:[%s1 + $0xd10] sm:$0xff]
  %v511 = vld [vmem:[%s1 + $0xd18] sm:$0xff]
  %v512 = vld [vmem:[%s1 + $0xd20] sm:$0xff]
  %v513 = vld [vmem:[%s1 + $0xd28] sm:$0xff]
  %v514 = vld [vmem:[%s1 + $0xd30] sm:$0xff]
  %v515 = vld [vmem:[%s1 + $0xd38] sm:$0xff]
  %v516 = vld [vmem:[%s1 + $0xd40] sm:$0xff]
  %v517 = vld [vmem:[%s1 + $0xd48] sm:$0xff]
  %v518 = vld [vmem:[%s1 + $0xd50] sm:$0xff]
  %v519 = vld [vmem:[%s1 + $0xd58] sm:$0xff]
  %v520 = vld [vmem:[%s1 + $0xd60] sm:$0xff]
  %v521 = vld [vmem:[%s1 + $0xd68] sm:$0xff]
  %v522 = vld [vmem:[%s1 + $0xd70] sm:$0xff]
  %v523 = vld [vmem:[%s1 + $0xd78] sm:$0xff]
  %v524 = vld [vmem:[%s1 + $0xd80] sm:$0xff]
  %v525 = vld [vmem:[%s1 + $0xd88] sm:$0xff]
  %v526 = vld [vmem:[%s1 + $0xd90] sm:$0xff]
  %v527 = vld [vmem:[%s1 + $0xd98] sm:$0xff]
  %v528 = vld [vmem:[%s1 + $0xda0] sm:$0xff]
  %v529 = vld [vmem:[%s1 + $0xda8] sm:$0xff]
  %v530 = vld [vmem:[%s1 + $0xdb0] sm:$0xff]
  %v531 = vld [vmem:[%s1 + $0xdb8] sm:$0xff]
  %v532 = vld [vmem:[%s1 + $0xdc0] sm:$0xff]
  %v533 = vld [vmem:[%s1 + $0xdc8] sm:$0xff]
  %v534 = vld [vmem:[%s1 + $0xdd0] sm:$0xff]
  %v535 = vld [vmem:[%s1 + $0xdd8] sm:$0xff]
  %v536 = vld [vmem:[%s1 + $0xde0] sm:$0xff]
  %v537 = vld [vmem:[%s1 + $0xde8] sm:$0xff]
  %v538 = vld [vmem:[%s1 + $0xdf0] sm:$0xff]
  %v539 = vld [vmem:[%s1 + $0xdf8] sm:$0xff]
  %v540 = vld [vmem:[%s1 + $0xe00] sm:$0xff]
  %v541 = vld [vmem:[%s1 + $0xe08] sm:$0xff]
  %v542 = vld [vmem:[%s1 + $0xe10] sm:$0xff]
  %v543 = vld [vmem:[%s1 + $0xe18] sm:$0xff]
  %v544 = vld [vmem:[%s1 + $0xe20] sm:$0xff]
  %v545 = vld [vmem:[%s1 + $0xe28] sm:$0xff]
  %v546 = vld [vmem:[%s1 + $0xe30] sm:$0xff]
  %v547 = vld [vmem:[%s1 + $0xe38] sm:$0xff]
  %v548 = vld [vmem:[%s1 + $0xe40] sm:$0xff]
  %v549 = vld [vmem:[%s1 + $0xe48] sm:$0xff]
  %v550 = vld [vmem:[%s1 + $0xe50] sm:$0xff]
  %v551 = vld [vmem:[%s1 + $0xe58] sm:$0xff]
  %v552 = vld [vmem:[%s1 + $0xe60] sm:$0xff]
  %v553 = vld [vmem:[%s1 + $0xe68] sm:$0xff]
  %v554 = vld [vmem:[%s1 + $0xe70] sm:$0xff]
  %v555 = vld [vmem:[%s1 + $0xe78] sm:$0xff]
  %v556 = vld [vmem:[%s1 + $0xe80] sm:$0xff]
  %v557 = vld [vmem:[%s1 + $0xe88] sm:$0xff]
  %v558 = vld [vmem:[%s1 + $0xe90] sm:$0xff]
  %v559 = vld [vmem:[%s1 + $0xe98] sm:$0xff]
  %v560 = vld [vmem:[%s1 + $0xea0] sm:$0xff]
  %v561 = vld [vmem:[%s1 + $0xea8] sm:$0xff]
  %v562 = vld [vmem:[%s1 + $0xeb0] sm:$0xff]
  %v563 = vld [vmem:[%s1 + $0xeb8] sm:$0xff]
  %v564 = vld [vmem:[%s1 + $0xec0] sm:$0xff]
  %v565 = vld [vmem:[%s1 + $0xec8] sm:$0xff]
  %v566 = vld [vmem:[%s1 + $0xed0] sm:$0xff]
  %v567 = vld [vmem:[%s1 + $0xed8] sm:$0xff]
  %v568 = vld [vmem:[%s1 + $0xee0] sm:$0xff]
  %v569 = vld [vmem:[%s1 + $0xee8] sm:$0xff]
  %v570 = vld [vmem:[%s1 + $0xef0] sm:$0xff]
  %v571 = vld [vmem:[%s1 + $0xef8] sm:$0xff]
  %v572 = vld [vmem:[%s1 + $0xf00] sm:$0xff]
  %v573 = vld [vmem:[%s1 + $0xf08] sm:$0xff]
  %v574 = vld [vmem:[%s1 + $0xf10] sm:$0xff]
  %v575 = vld [vmem:[%s1 + $0xf18] sm:$0xff]
  %v576 = vld [vmem:[%s1 + $0xf20] sm:$0xff]
  %v577 = vld [vmem:[%s1 + $0xf28] sm:$0xff]
  %v578 = vld [vmem:[%s1 + $0xf30] sm:$0xff]
  %v579 = vld [vmem:[%s1 + $0xf38] sm:$0xff]
  %v580 = vld [vmem:[%s1 + $0xf40] sm:$0xff]
  %v581 = vld [vmem:[%s1 + $0xf48] sm:$0xff]
  %v582 = vld [vmem:[%s1 + $0xf50] sm:$0xff]
  %v583 = vld [vmem:[%s1 + $0xf58] sm:$0xff]
  %v584 = vld [vmem:[%s1 + $0xf60] sm:$0xff]
  %v585 = vld [vmem:[%s1 + $0xf68] sm:$0xff]
  %v586 = vld [vmem:[%s1 + $0xf70] sm:$0xff]
  %v587 = vld [vmem:[%s1 + $0xf78] sm:$0xff]
  %v588 = vld [vmem:[%s1 + $0xf80] sm:$0xff]
  %v589 = vld [vmem:[%s1 + $0xf88] sm:$0xff]
  %v590 = vld [vmem:[%s1 + $0xf90] sm:$0xff]
  %v591 = vld [vmem:[%s1 + $0xf98] sm:$0xff]
  %v592 = vld [vmem:[%s1 + $0xfa0] sm:$0xff]
  %v593 = vld [vmem:[%s1 + $0xfa8] sm:$0xff]
  %v594 = vld [vmem:[%s1 + $0xfb0] sm:$0xff]
  %v595 = vld [vmem:[%s1 + $0xfb8] sm:$0xff]
  %v596 = vld [vmem:[%s1 + $0xfc0] sm:$0xff]
  %v597 = vld [vmem:[%s1 + $0xfc8] sm:$0xff]
  %v598 = vld [vmem:[%s1 + $0xfd0] sm:$0xff]
  %v599 = vld [vmem:[%s1 + $0xfd8] sm:$0xff]
  %v600 = vld [vmem:[%s1 + $0xfe0] sm:$0xff]
  %v601 = vld [vmem:[%s1 + $0xfe8] sm:$0xff]
  %v602 = vld [vmem:[%s1 + $0xff0] sm:$0xff]
  %v603 = vld [vmem:[%s1 + $0xff8] sm:$0xff]
  %v604 = vld [vmem:[%s1 + $0x1000] sm:$0xff]
  %v605 = vld [vmem:[%s1 + $0x1008] sm:$0xff]
  %v606 = vld [vmem:[%s1 + $0x1010] sm:$0xff]
  %v607 = vld [vmem:[%s1 + $0x1018] sm:$0xff]
  %v608 = vld [vmem:[%s1 + $0x1020] sm:$0xff]
  %v609 = vld [vmem:[%s1 + $0x1028] sm:$0xff]
  %v610 = vld [vmem:[%s1 + $0x1030] sm:$0xff]
  %v611 = vld [vmem:[%s1 + $0x1038] sm:$0xff]
  %v612 = vld [vmem:[%s1 + $0x1040] sm:$0xff]
  %v613 = vld [vmem:[%s1 + $0x1048] sm:$0xff]
  %v614 = vld [vmem:[%s1 + $0x1050] sm:$0xff]
  %v615 = vld [vmem:[%s1 + $0x1058] sm:$0xff]
  %v616 = vld [vmem:[%s1 + $0x1060] sm:$0xff]
  %v617 = vld [vmem:[%s1 + $0x1068] sm:$0xff]
  %v618 = vld [vmem:[%s1 + $0x1070] sm:$0xff]
  %v619 = vld [vmem:[%s1 + $0x1078] sm:$0xff]
  %v620 = vld [vmem:[%s1 + $0x1080] sm:$0xff]
  %v621 = vld [vmem:[%s1 + $0x1088] sm:$0xff]
  %v622 = vld [vmem:[%s1 + $0x1090] sm:$0xff]
  %v623 = vld [vmem:[%s1 + $0x1098] sm:$0xff]
  %v624 = vld [vmem:[%s1 + $0x10a0] sm:$0xff]
  %v625 = vld [vmem:[%s1 + $0x10a8] sm:$0xff]
  %v626 = vld [vmem:[%s1 + $0x10b0] sm:$0xff]
  %v627 = vld [vmem:[%s1 + $0x10b8] sm:$0xff]
  %v628 = vld [vmem:[%s1 + $0x10c0] sm:$0xff]
  %v629 = vld [vmem:[%s1 + $0x10c8] sm:$0xff]
  %v630 = vld [vmem:[%s1 + $0x10d0] sm:$0xff]
  %v631 = vld [vmem:[%s1 + $0x10d8] sm:$0xff]
  %v632 = vld [vmem:[%s1 + $0x10e0] sm:$0xff]
  %v633 = vld [vmem:[%s1 + $0x10e8] sm:$0xff]
  %v634 = vld [vmem:[%s1 + $0x10f0] sm:$0xff]
  %v635 = vld [vmem:[%s1 + $0x10f8] sm:$0xff]
  %v636 = vld [vmem:[%s1 + $0x1100] sm:$0xff]
  %v637 = vld [vmem:[%s1 + $0x1108] sm:$0xff]
  %v638 = vld [vmem:[%s1 + $0x1110] sm:$0xff]
  %v639 = vld [vmem:[%s1 + $0x1118] sm:$0xff]
  %v640 = vld [vmem:[%s1 + $0x1120] sm:$0xff]
  %v641 = vld [vmem:[%s1 + $0x1128] sm:$0xff]
  %v642 = vld [vmem:[%s1 + $0x1130] sm:$0xff]
  %v643 = vld [vmem:[%s1 + $0x1138] sm:$0xff]
  %v644 = vld [vmem:[%s1 + $0x1140] sm:$0xff]
  %v645 = vld [vmem:[%s1 + $0x1148] sm:$0xff]
  %v646 = vld [vmem:[%s1 + $0x1150] sm:$0xff]
  %v647 = vld [vmem:[%s1 + $0x1158] sm:$0xff]
  %v648 = vld [vmem:[%s1 + $0x1160] sm:$0xff]
  %v649 = vld [vmem:[%s1 + $0x1168] sm:$0xff]
  %v650 = vld [vmem:[%s1 + $0x1170] sm:$0xff]
  %v651 = vld [vmem:[%s1 + $0x1178] sm:$0xff]
  %v652 = vld [vmem:[%s1 + $0x1180] sm:$0xff]
  %v653 = vld [vmem:[%s1 + $0x1188] sm:$0xff]
  %v654 = vld [vmem:[%s1 + $0x1190] sm:$0xff]
  %v655 = vld [vmem:[%s1 + $0x1198] sm:$0xff]
  %v656 = vld [vmem:[%s1 + $0x11a0] sm:$0xff]
  %v657 = vld [vmem:[%s1 + $0x11a8] sm:$0xff]
  %v658 = vld [vmem:[%s1 + $0x11b0] sm:$0xff]
  %v659 = vld [vmem:[%s1 + $0x11b8] sm:$0xff]
  %v660 = vld [vmem:[%s1 + $0x11c0] sm:$0xff]
  %v661 = vld [vmem:[%s1 + $0x11c8] sm:$0xff]
  %v662 = vld [vmem:[%s1 + $0x11d0] sm:$0xff]
  %v663 = vld [vmem:[%s1 + $0x11d8] sm:$0xff]
  %v664 = vld [vmem:[%s1 + $0x11e0] sm:$0xff]
  %v665 = vld [vmem:[%s1 + $0x11e8] sm:$0xff]
  %v666 = vld [vmem:[%s1 + $0x11f0] sm:$0xff]
  %v667 = vld [vmem:[%s1 + $0x11f8] sm:$0xff]
  %v668 = vld [vmem:[%s1 + $0x1200] sm:$0xff]
  %v669 = vld [vmem:[%s1 + $0x1208] sm:$0xff]
  %v670 = vld [vmem:[%s1 + $0x1210] sm:$0xff]
  %v671 = vld [vmem:[%s1 + $0x1218] sm:$0xff]
  %v672 = vld [vmem:[%s1 + $0x1220] sm:$0xff]
  %v673 = vld [vmem:[%s1 + $0x1228] sm:$0xff]
  %v674 = vld [vmem:[%s1 + $0x1230] sm:$0xff]
  %v675 = vld [vmem:[%s1 + $0x1238] sm:$0xff]
  %v676 = vld [vmem:[%s1 + $0x1240] sm:$0xff]
  %v677 = vld [vmem:[%s1 + $0x1248] sm:$0xff]
  %v678 = vld [vmem:[%s1 + $0x1250] sm:$0xff]
  %v679 = vld [vmem:[%s1 + $0x1258] sm:$0xff]
  %v680 = vld [vmem:[%s1 + $0x1260] sm:$0xff]
  %v681 = vld [vmem:[%s1 + $0x1268] sm:$0xff]
  %v682 = vld [vmem:[%s1 + $0x1270] sm:$0xff]
  %v683 = vld [vmem:[%s1 + $0x1278] sm:$0xff]
  %v684 = vld [vmem:[%s1 + $0x1280] sm:$0xff]
  %v685 = vld [vmem:[%s1 + $0x1288] sm:$0xff]
  %v686 = vld [vmem:[%s1 + $0x1290] sm:$0xff]
  %v687 = vld [vmem:[%s1 + $0x1298] sm:$0xff]
  %v688 = vld [vmem:[%s1 + $0x12a0] sm:$0xff]
  %v689 = vld [vmem:[%s1 + $0x12a8] sm:$0xff]
  %v690 = vld [vmem:[%s1 + $0x12b0] sm:$0xff]
  %v691 = vld [vmem:[%s1 + $0x12b8] sm:$0xff]
  %v692 = vld [vmem:[%s1 + $0x12c0] sm:$0xff]
  %v693 = vld [vmem:[%s1 + $0x12c8] sm:$0xff]
  %v694 = vld [vmem:[%s1 + $0x12d0] sm:$0xff]
  %v695 = vld [vmem:[%s1 + $0x12d8] sm:$0xff]
  %v696 = vld [vmem:[%s1 + $0x12e0] sm:$0xff]
  %v697 = vld [vmem:[%s1 + $0x12e8] sm:$0xff]
  %v698 = vld [vmem:[%s1 + $0x12f0] sm:$0xff]
  %v699 = vld [vmem:[%s1 + $0x12f8] sm:$0xff]
  %v700 = vld [vmem:[%s1 + $0x1300] sm:$0xff]
  %v701 = vld [vmem:[%s1 + $0x1308] sm:$0xff]
  %v702 = vld [vmem:[%s1 + $0x1310] sm:$0xff]
  %v703 = vld [vmem:[%s1 + $0x1318] sm:$0xff]
  %v704 = vld [vmem:[%s1 + $0x1320] sm:$0xff]
  %v705 = vld [vmem:[%s1 + $0x1328] sm:$0xff]
  %v706 = vld [vmem:[%s1 + $0x1330] sm:$0xff]
  %v707 = vld [vmem:[%s1 + $0x1338] sm:$0xff]
  %v708 = vld [vmem:[%s1 + $0x1340] sm:$0xff]
  %v709 = vld [vmem:[%s1 + $0x1348] sm:$0xff]
  %v710 = vld [vmem:[%s1 + $0x1350] sm:$0xff]
  %v711 = vld [vmem:[%s1 + $0x1358] sm:$0xff]
  %v712 = vld [vmem:[%s1 + $0x1360] sm:$0xff]
  %v713 = vld [vmem:[%s1 + $0x1368] sm:$0xff]
  %v714 = vld [vmem:[%s1 + $0x1370] sm:$0xff]
  %v715 = vld [vmem:[%s1 + $0x1378] sm:$0xff]
  %v716 = vld [vmem:[%s1 + $0x1380] sm:$0xff]
  %v717 = vld [vmem:[%s1 + $0x1388] sm:$0xff]
  %v718 = vld [vmem:[%s1 + $0x1390] sm:$0xff]
  %v719 = vld [vmem:[%s1 + $0x1398] sm:$0xff]
  %v720 = vld [vmem:[%s1 + $0x13a0] sm:$0xff]
  %v721 = vld [vmem:[%s1 + $0x13a8] sm:$0xff]
  %v722 = vld [vmem:[%s1 + $0x13b0] sm:$0xff]
  %v723 = vld [vmem:[%s1 + $0x13b8] sm:$0xff]
  %v724 = vld [vmem:[%s1 + $0x13c0] sm:$0xff]
  %v725 = vld [vmem:[%s1 + $0x13c8] sm:$0xff]
  %v726 = vld [vmem:[%s1 + $0x13d0] sm:$0xff]
  %v727 = vld [vmem:[%s1 + $0x13d8] sm:$0xff]
  %v728 = vld [vmem:[%s1 + $0x13e0] sm:$0xff]
  %v729 = vld [vmem:[%s1 + $0x13e8] sm:$0xff]
  %v730 = vld [vmem:[%s1 + $0x13f0] sm:$0xff]
  %v731 = vld [vmem:[%s1 + $0x13f8] sm:$0xff]
  %v732 = vld [vmem:[%s1 + $0x1400] sm:$0xff]
  %v733 = vld [vmem:[%s1 + $0x1408] sm:$0xff]
  %v734 = vld [vmem:[%s1 + $0x1410] sm:$0xff]
  %v735 = vld [vmem:[%s1 + $0x1418] sm:$0xff]
  %v736 = vld [vmem:[%s1 + $0x1420] sm:$0xff]
  %v737 = vld [vmem:[%s1 + $0x1428] sm:$0xff]
  %v738 = vld [vmem:[%s1 + $0x1430] sm:$0xff]
  %v739 = vld [vmem:[%s1 + $0x1438] sm:$0xff]
  %v740 = vld [vmem:[%s1 + $0x1440] sm:$0xff]
  %v741 = vld [vmem:[%s1 + $0x1448] sm:$0xff]
  %v742 = vld [vmem:[%s1 + $0x1450] sm:$0xff]
  %v743 = vld [vmem:[%s1 + $0x1458] sm:$0xff]
  %v744 = vld [vmem:[%s1 + $0x1460] sm:$0xff]
  %v745 = vld [vmem:[%s1 + $0x1468] sm:$0xff]
  %v746 = vld [vmem:[%s1 + $0x1470] sm:$0xff]
  %v747 = vld [vmem:[%s1 + $0x1478] sm:$0xff]
  %v748 = vld [vmem:[%s1 + $0x1480] sm:$0xff]
  %v749 = vld [vmem:[%s1 + $0x1488] sm:$0xff]
  %v750 = vld [vmem:[%s1 + $0x1490] sm:$0xff]
  %v751 = vld [vmem:[%s1 + $0x1498] sm:$0xff]
  %v752 = vld [vmem:[%s1 + $0x14a0] sm:$0xff]
  %v753 = vld [vmem:[%s1 + $0x14a8] sm:$0xff]
  %v754 = vld [vmem:[%s1 + $0x14b0] sm:$0xff]
  %v755 = vld [vmem:[%s1 + $0x14b8] sm:$0xff]
  %v756 = vld [vmem:[%s1 + $0x14c0] sm:$0xff]
  %v757 = vld [vmem:[%s1 + $0x14c8] sm:$0xff]
  %v758 = vld [vmem:[%s1 + $0x14d0] sm:$0xff]
  %v759 = vld [vmem:[%s1 + $0x14d8] sm:$0xff]
  %v760 = vld [vmem:[%s1 + $0x14e0] sm:$0xff]
  %v761 = vld [vmem:[%s1 + $0x14e8] sm:$0xff]
  %v762 = vld [vmem:[%s1 + $0x14f0] sm:$0xff]
  %v763 = vld [vmem:[%s1 + $0x14f8] sm:$0xff]
  %v764 = vld [vmem:[%s1 + $0x1500] sm:$0xff]
  %v765 = vld [vmem:[%s1 + $0x1508] sm:$0xff]
  %v766 = vld [vmem:[%s1 + $0x1510] sm:$0xff]
  %v767 = vld [vmem:[%s1 + $0x1518] sm:$0xff]
  %v768 = vld [vmem:[%s1 + $0x1520] sm:$0xff]
  %v769 = vld [vmem:[%s1 + $0x1528] sm:$0xff]
  %v770 = vld [vmem:[%s1 + $0x1530] sm:$0xff]
  %v771 = vld [vmem:[%s1 + $0x1538] sm:$0xff]
  %v772 = vld [vmem:[%s1 + $0x1540] sm:$0xff]
  %v773 = vld [vmem:[%s1 + $0x1548] sm:$0xff]
  %v774 = vld [vmem:[%s1 + $0x1550] sm:$0xff]
  %v775 = vld [vmem:[%s1 + $0x1558] sm:$0xff]
  %v776 = vld [vmem:[%s1 + $0x1560] sm:$0xff]
  %v777 = vld [vmem:[%s1 + $0x1568] sm:$0xff]
  %v778 = vld [vmem:[%s1 + $0x1570] sm:$0xff]
  %v779 = vld [vmem:[%s1 + $0x1578] sm:$0xff]
  %v780 = vld [vmem:[%s1 + $0x1580] sm:$0xff]
  %v781 = vld [vmem:[%s1 + $0x1588] sm:$0xff]
  %v782 = vld [vmem:[%s1 + $0x1590] sm:$0xff]
  %v783 = vld [vmem:[%s1 + $0x1598] sm:$0xff]
  %v784 = vld [vmem:[%s1 + $0x15a0] sm:$0xff]
  %v785 = vld [vmem:[%s1 + $0x15a8] sm:$0xff]
  %v786 = vld [vmem:[%s1 + $0x15b0] sm:$0xff]
  %v787 = vld [vmem:[%s1 + $0x15b8] sm:$0xff]
  %v788 = vld [vmem:[%s1 + $0x15c0] sm:$0xff]
  %v789 = vld [vmem:[%s1 + $0x15c8] sm:$0xff]
  %v790 = vld [vmem:[%s1 + $0x15d0] sm:$0xff]
  %v791 = vld [vmem:[%s1 + $0x15d8] sm:$0xff]
  %v792 = vld [vmem:[%s1 + $0x15e0] sm:$0xff]
  %v793 = vld [vmem:[%s1 + $0x15e8] sm:$0xff]
  %v794 = vld [vmem:[%s1 + $0x15f0] sm:$0xff]
  %v795 = vld [vmem:[%s1 + $0x15f8] sm:$0xff]
  %v796 = vld [vmem:[%s1 + $0x1600] sm:$0xff]
  %v797 = vld [vmem:[%s1 + $0x1608] sm:$0xff]
  %v798 = vld [vmem:[%s1 + $0x1610] sm:$0xff]
  %v799 = vld [vmem:[%s1 + $0x1618] sm:$0xff]
  %v800 = vld [vmem:[%s1 + $0x1620] sm:$0xff]
  %v801 = vld [vmem:[%s1 + $0x1628] sm:$0xff]
  %v802 = vld [vmem:[%s1 + $0x1630] sm:$0xff]
  %v803 = vld [vmem:[%s1 + $0x1638] sm:$0xff]
  %v804 = vld [vmem:[%s1 + $0x1640] sm:$0xff]
  %v805 = vld [vmem:[%s1 + $0x1648] sm:$0xff]
  %v806 = vld [vmem:[%s1 + $0x1650] sm:$0xff]
  %v807 = vld [vmem:[%s1 + $0x1658] sm:$0xff]
  %v808 = vld [vmem:[%s1 + $0x1660] sm:$0xff]
  %v809 = vld [vmem:[%s1 + $0x1668] sm:$0xff]
  %v810 = vld [vmem:[%s1 + $0x1670] sm:$0xff]
  %v811 = vld [vmem:[%s1 + $0x1678] sm:$0xff]
  %v812 = vld [vmem:[%s1 + $0x1680] sm:$0xff]
  %v813 = vld [vmem:[%s1 + $0x1688] sm:$0xff]
  %v814 = vld [vmem:[%s1 + $0x1690] sm:$0xff]
  %v815 = vld [vmem:[%s1 + $0x1698] sm:$0xff]
  %v816 = vld [vmem:[%s1 + $0x16a0] sm:$0xff]
  %v817 = vld [vmem:[%s1 + $0x16a8] sm:$0xff]
  %v818 = vld [vmem:[%s1 + $0x16b0] sm:$0xff]
  %v819 = vld [vmem:[%s1 + $0x16b8] sm:$0xff]
  %v820 = vld [vmem:[%s1 + $0x16c0] sm:$0xff]
  %v821 = vld [vmem:[%s1 + $0x16c8] sm:$0xff]
  %v822 = vld [vmem:[%s1 + $0x16d0] sm:$0xff]
  %v823 = vld [vmem:[%s1 + $0x16d8] sm:$0xff]
  %v824 = vld [vmem:[%s1 + $0x16e0] sm:$0xff]
  %v825 = vld [vmem:[%s1 + $0x16e8] sm:$0xff]
  %v826 = vld [vmem:[%s1 + $0x16f0] sm:$0xff]
  %v827 = vld [vmem:[%s1 + $0x16f8] sm:$0xff]
  %v828 = vld [vmem:[%s1 + $0x1700] sm:$0xff]
  %v829 = vld [vmem:[%s1 + $0x1708] sm:$0xff]
  %v830 = vld [vmem:[%s1 + $0x1710] sm:$0xff]
  %v831 = vld [vmem:[%s1 + $0x1718] sm:$0xff]
  %v832 = vld [vmem:[%s1 + $0x1720] sm:$0xff]
  %v833 = vld [vmem:[%s1 + $0x1728] sm:$0xff]
  %v834 = vld [vmem:[%s1 + $0x1730] sm:$0xff]
  %v835 = vld [vmem:[%s1 + $0x1738] sm:$0xff]
  %v836 = vld [vmem:[%s1 + $0x1740] sm:$0xff]
  %v837 = vld [vmem:[%s1 + $0x1748] sm:$0xff]
  %v838 = vld [vmem:[%s1 + $0x1750] sm:$0xff]
  %v839 = vld [vmem:[%s1 + $0x1758] sm:$0xff]
  %v840 = vld [vmem:[%s1 + $0x1760] sm:$0xff]
  %v841 = vld [vmem:[%s1 + $0x1768] sm:$0xff]
  %v842 = vld [vmem:[%s1 + $0x1770] sm:$0xff]
  %v843 = vld [vmem:[%s1 + $0x1778] sm:$0xff]
  %v844 = vld [vmem:[%s1 + $0x1780] sm:$0xff]
  %v845 = vld [vmem:[%s1 + $0x1788] sm:$0xff]
  %v846 = vld [vmem:[%s1 + $0x1790] sm:$0xff]
  %v847 = vld [vmem:[%s1 + $0x1798] sm:$0xff]
  %v848 = vld [vmem:[%s1 + $0x17a0] sm:$0xff]
  %v849 = vld [vmem:[%s1 + $0x17a8] sm:$0xff]
  %v850 = vld [vmem:[%s1 + $0x17b0] sm:$0xff]
  %v851 = vld [vmem:[%s1 + $0x17b8] sm:$0xff]
  %v852 = vld [vmem:[%s1 + $0x17c0] sm:$0xff]
  %v853 = vld [vmem:[%s1 + $0x17c8] sm:$0xff]
  %v854 = vld [vmem:[%s1 + $0x17d0] sm:$0xff]
  %v855 = vld [vmem:[%s1 + $0x17d8] sm:$0xff]
  %v856 = vld [vmem:[%s1 + $0x17e0] sm:$0xff]
  %v857 = vld [vmem:[%s1 + $0x17e8] sm:$0xff]
  %v858 = vld [vmem:[%s1 + $0x17f0] sm:$0xff]
  %v859 = vld [vmem:[%s1 + $0x17f8] sm:$0xff]
  %v860 = vld [vmem:[%s1 + $0x1800] sm:$0xff]
  %v861 = vld [vmem:[%s1 + $0x1808] sm:$0xff]
  %v862 = vld [vmem:[%s1 + $0x1810] sm:$0xff]
  %v863 = vld [vmem:[%s1 + $0x1818] sm:$0xff]
  %v864 = vld [vmem:[%s1 + $0x1820] sm:$0xff]
  %v865 = vld [vmem:[%s1 + $0x1828] sm:$0xff]
  %v866 = vld [vmem:[%s1 + $0x1830] sm:$0xff]
  %v867 = vld [vmem:[%s1 + $0x1838] sm:$0xff]
  %v868 = vld [vmem:[%s1 + $0x1840] sm:$0xff]
  %v869 = vld [vmem:[%s1 + $0x1848] sm:$0xff]
  %v870 = vld [vmem:[%s1 + $0x1850] sm:$0xff]
  %v871 = vld [vmem:[%s1 + $0x1858] sm:$0xff]
  %v872 = vld [vmem:[%s1 + $0x1860] sm:$0xff]
  %v873 = vld [vmem:[%s1 + $0x1868] sm:$0xff]
  %v874 = vld [vmem:[%s1 + $0x1870] sm:$0xff]
  %v875 = vld [vmem:[%s1 + $0x1878] sm:$0xff]
  %v876 = vld [vmem:[%s1 + $0x1880] sm:$0xff]
  %v877 = vld [vmem:[%s1 + $0x1888] sm:$0xff]
  %v878 = vld [vmem:[%s1 + $0x1890] sm:$0xff]
  %v879 = vld [vmem:[%s1 + $0x1898] sm:$0xff]
  %v880 = vld [vmem:[%s1 + $0x18a0] sm:$0xff]
  %v881 = vld [vmem:[%s1 + $0x18a8] sm:$0xff]
  %v882 = vld [vmem:[%s1 + $0x18b0] sm:$0xff]
  %v883 = vld [vmem:[%s1 + $0x18b8] sm:$0xff]
  %v884 = vld [vmem:[%s1 + $0x18c0] sm:$0xff]
  %v885 = vld [vmem:[%s1 + $0x18c8] sm:$0xff]
  %v886 = vld [vmem:[%s1 + $0x18d0] sm:$0xff]
  %v887 = vld [vmem:[%s1 + $0x18d8] sm:$0xff]
  %v888 = vld [vmem:[%s1 + $0x18e0] sm:$0xff]
  %v889 = vld [vmem:[%s1 + $0x18e8] sm:$0xff]
  %v890 = vld [vmem:[%s1 + $0x18f0] sm:$0xff]
  %v891 = vld [vmem:[%s1 + $0x18f8] sm:$0xff]
  %v892 = vld [vmem:[%s1 + $0x1900] sm:$0xff]
  %v893 = vld [vmem:[%s1 + $0x1908] sm:$0xff]
  %v894 = vld [vmem:[%s1 + $0x1910] sm:$0xff]
  %v895 = vld [vmem:[%s1 + $0x1918] sm:$0xff]
  %v896 = vld [vmem:[%s1 + $0x1920] sm:$0xff]
  %v897 = vld [vmem:[%s1 + $0x1928] sm:$0xff]
  %v898 = vld [vmem:[%s1 + $0x1930] sm:$0xff]
  %v899 = vld [vmem:[%s1 + $0x1938] sm:$0xff]
  %v900 = vld [vmem:[%s1 + $0x1940] sm:$0xff]
  %v901 = vld [vmem:[%s1 + $0x1948] sm:$0xff]
  %v902 = vld [vmem:[%s1 + $0x1950] sm:$0xff]
  %v903 = vld [vmem:[%s1 + $0x1958] sm:$0xff]
  %v904 = vld [vmem:[%s1 + $0x1960] sm:$0xff]
  %v905 = vld [vmem:[%s1 + $0x1968] sm:$0xff]
  %v906 = vld [vmem:[%s1 + $0x1970] sm:$0xff]
  %v907 = vld [vmem:[%s1 + $0x1978] sm:$0xff]
  %v908 = vld [vmem:[%s1 + $0x1980] sm:$0xff]
  %v909 = vld [vmem:[%s1 + $0x1988] sm:$0xff]
  %v910 = vld [vmem:[%s1 + $0x1990] sm:$0xff]
  %v911 = vld [vmem:[%s1 + $0x1998] sm:$0xff]
  %v912 = vld [vmem:[%s1 + $0x19a0] sm:$0xff]
  %v913 = vld [vmem:[%s1 + $0x19a8] sm:$0xff]
  %v914 = vld [vmem:[%s1 + $0x19b0] sm:$0xff]
  %v915 = vld [vmem:[%s1 + $0x19b8] sm:$0xff]
  %v916 = vld [vmem:[%s1 + $0x19c0] sm:$0xff]
  %v917 = vld [vmem:[%s1 + $0x19c8] sm:$0xff]
  %v918 = vld [vmem:[%s1 + $0x19d0] sm:$0xff]
  %v919 = vld [vmem:[%s1 + $0x19d8] sm:$0xff]
  %v920 = vld [vmem:[%s1 + $0x19e0] sm:$0xff]
  %v921 = vld [vmem:[%s1 + $0x19e8] sm:$0xff]
  %v922 = vld [vmem:[%s1 + $0x19f0] sm:$0xff]
  %v923 = vld [vmem:[%s1 + $0x19f8] sm:$0xff]
  %v924 = vld [vmem:[%s1 + $0x1a00] sm:$0xff]
  %v925 = vld [vmem:[%s1 + $0x1a08] sm:$0xff]
  %v926 = vld [vmem:[%s1 + $0x1a10] sm:$0xff]
  %v927 = vld [vmem:[%s1 + $0x1a18] sm:$0xff]
  %v928 = vld [vmem:[%s1 + $0x1a20] sm:$0xff]
  %v929 = vld [vmem:[%s1 + $0x1a28] sm:$0xff]
  %v930 = vld [vmem:[%s1 + $0x1a30] sm:$0xff]
  %v931 = vld [vmem:[%s1 + $0x1a38] sm:$0xff]
  %v932 = vld [vmem:[%s1 + $0x1a40] sm:$0xff]
  %v933 = vld [vmem:[%s1 + $0x1a48] sm:$0xff]
  %v934 = vld [vmem:[%s1 + $0x1a50] sm:$0xff]
  %v935 = vld [vmem:[%s1 + $0x1a58] sm:$0xff]
  %v936 = vld [vmem:[%s1 + $0x1a60] sm:$0xff]
  %v937 = vld [vmem:[%s1 + $0x1a68] sm:$0xff]
  %v938 = vld [vmem:[%s1 + $0x1a70] sm:$0xff]
  %v939 = vld [vmem:[%s1 + $0x1a78] sm:$0xff]
  %v940 = vld [vmem:[%s1 + $0x1a80] sm:$0xff]
  %v941 = vld [vmem:[%s1 + $0x1a88] sm:$0xff]
  %v942 = vld [vmem:[%s1 + $0x1a90] sm:$0xff]
  %v943 = vld [vmem:[%s1 + $0x1a98] sm:$0xff]
  %v944 = vld [vmem:[%s1 + $0x1aa0] sm:$0xff]
  %v945 = vld [vmem:[%s1 + $0x1aa8] sm:$0xff]
  %v946 = vld [vmem:[%s1 + $0x1ab0] sm:$0xff]
  %v947 = vld [vmem:[%s1 + $0x1ab8] sm:$0xff]
  %v948 = vld [vmem:[%s1 + $0x1ac0] sm:$0xff]
  %v949 = vld [vmem:[%s1 + $0x1ac8] sm:$0xff]
  %v950 = vld [vmem:[%s1 + $0x1ad0] sm:$0xff]
  %v951 = vld [vmem:[%s1 + $0x1ad8] sm:$0xff]
  %v952 = vld [vmem:[%s1 + $0x1ae0] sm:$0xff]
  %v953 = vld [vmem:[%s1 + $0x1ae8] sm:$0xff]
  %v954 = vld [vmem:[%s1 + $0x1af0] sm:$0xff]
  %v955 = vld [vmem:[%s1 + $0x1af8] sm:$0xff]
  %v956 = vld [vmem:[%s1 + $0x1b00] sm:$0xff]
  %v957 = vld [vmem:[%s1 + $0x1b08] sm:$0xff]
  %v958 = vld [vmem:[%s1 + $0x1b10] sm:$0xff]
  %v959 = vld [vmem:[%s1 + $0x1b18] sm:$0xff]
  %v960 = vld [vmem:[%s1 + $0x1b20] sm:$0xff]
  %v961 = vld [vmem:[%s1 + $0x1b28] sm:$0xff]
  %v962 = vld [vmem:[%s1 + $0x1b30] sm:$0xff]
  %v963 = vld [vmem:[%s1 + $0x1b38] sm:$0xff]
  %v964 = vld [vmem:[%s1 + $0x1b40] sm:$0xff]
  %v965 = vld [vmem:[%s1 + $0x1b48] sm:$0xff]
  %v966 = vld [vmem:[%s1 + $0x1b50] sm:$0xff]
  %v967 = vld [vmem:[%s1 + $0x1b58] sm:$0xff]
  %v968 = vld [vmem:[%s1 + $0x1b60] sm:$0xff]
  %v969 = vld [vmem:[%s1 + $0x1b68] sm:$0xff]
  %v970 = vld [vmem:[%s1 + $0x1b70] sm:$0xff]
  %v971 = vld [vmem:[%s1 + $0x1b78] sm:$0xff]
  %v972 = vld [vmem:[%s1 + $0x1b80] sm:$0xff]
  %v973 = vld [vmem:[%s1 + $0x1b88] sm:$0xff]
  %v974 = vld [vmem:[%s1 + $0x1b90] sm:$0xff]
  %v975 = vld [vmem:[%s1 + $0x1b98] sm:$0xff]
  %v976 = vld [vmem:[%s1 + $0x1ba0] sm:$0xff]
  %v977 = vld [vmem:[%s1 + $0x1ba8] sm:$0xff]
  %v978 = vld [vmem:[%s1 + $0x1bb0] sm:$0xff]
  %v979 = vld [vmem:[%s1 + $0x1bb8] sm:$0xff]
  %v980 = vld [vmem:[%s1 + $0x1bc0] sm:$0xff]
  %v981 = vld [vmem:[%s1 + $0x1bc8] sm:$0xff]
  %v982 = vld [vmem:[%s1 + $0x1bd0] sm:$0xff]
  %v983 = vld [vmem:[%s1 + $0x1bd8] sm:$0xff]
  %v984 = vld [vmem:[%s1 + $0x1be0] sm:$0xff]
  %v985 = vld [vmem:[%s1 + $0x1be8] sm:$0xff]
  %v986 = vld [vmem:[%s1 + $0x1bf0] sm:$0xff]
  %v987 = vld [vmem:[%s1 + $0x1bf8] sm:$0xff]
  %v988 = vld [vmem:[%s1 + $0x1c00] sm:$0xff]
  %v989 = vld [vmem:[%s1 + $0x1c08] sm:$0xff]
  %v990 = vld [vmem:[%s1 + $0x1c10] sm:$0xff]
  %v991 = vld [vmem:[%s1 + $0x1c18] sm:$0xff]
  %v992 = vld [vmem:[%s1 + $0x1c20] sm:$0xff]
  %v993 = vld [vmem:[%s1 + $0x1c28] sm:$0xff]
  %v994 = vld [vmem:[%s1 + $0x1c30] sm:$0xff]
  %v995 = vld [vmem:[%s1 + $0x1c38] sm:$0xff]
  %v996 = vld [vmem:[%s1 + $0x1c40] sm:$0xff]
  %v997 = vld [vmem:[%s1 + $0x1c48] sm:$0xff]
  %v998 = vld [vmem:[%s1 + $0x1c50] sm:$0xff]
  %v999 = vld [vmem:[%s1 + $0x1c58] sm:$0xff]
  %v1000 = vld [vmem:[%s1 + $0x1c60] sm:$0xff]
  %v1001 = vld [vmem:[%s1 + $0x1c68] sm:$0xff]
  %v1002 = vld [vmem:[%s1 + $0x1c70] sm:$0xff]
  %v1003 = vld [vmem:[%s1 + $0x1c78] sm:$0xff]
  %v1004 = vld [vmem:[%s1 + $0x1c80] sm:$0xff]
  %v1005 = vld [vmem:[%s1 + $0x1c88] sm:$0xff]
  %v1006 = vld [vmem:[%s1 + $0x1c90] sm:$0xff]
  %v1007 = vld [vmem:[%s1 + $0x1c98] sm:$0xff]
  %v1008 = vld [vmem:[%s1 + $0x1ca0] sm:$0xff]
  %v1009 = vld [vmem:[%s1 + $0x1ca8] sm:$0xff]
  %v1010 = vld [vmem:[%s1 + $0x1cb0] sm:$0xff]
  %v1011 = vld [vmem:[%s1 + $0x1cb8] sm:$0xff]
  %v1012 = vld [vmem:[%s1 + $0x1cc0] sm:$0xff]
  %v1013 = vld [vmem:[%s1 + $0x1cc8] sm:$0xff]
  %v1014 = vld [vmem:[%s1 + $0x1cd0] sm:$0xff]
  %v1015 = vld [vmem:[%s1 + $0x1cd8] sm:$0xff]
  %v1016 = vld [vmem:[%s1 + $0x1ce0] sm:$0xff]
  %v1017 = vld [vmem:[%s1 + $0x1ce8] sm:$0xff]
  %v1018 = vld [vmem:[%s1 + $0x1cf0] sm:$0xff]
  %v1019 = vld [vmem:[%s1 + $0x1cf8] sm:$0xff]
  %v1020 = vld [vmem:[%s1 + $0x1d00] sm:$0xff]
  %v1021 = vld [vmem:[%s1 + $0x1d08] sm:$0xff]
  %v1022 = vld [vmem:[%s1 + $0x1d10] sm:$0xff]
  %v1023 = vld [vmem:[%s1 + $0x1d18] sm:$0xff]
  %v1024 = vld [vmem:[%s1 + $0x1d20] sm:$0xff]
  %v1025 = vld [vmem:[%s1 + $0x1d28] sm:$0xff]
  %v1026 = vld [vmem:[%s1 + $0x1d30] sm:$0xff]
  %v1027 = vld [vmem:[%s1 + $0x1d38] sm:$0xff]
  %v1028 = vld [vmem:[%s1 + $0x1d40] sm:$0xff]
  %v1029 = vld [vmem:[%s1 + $0x1d48] sm:$0xff]
  %v1030 = vld [vmem:[%s1 + $0x1d50] sm:$0xff]
  %v1031 = vld [vmem:[%s1 + $0x1d58] sm:$0xff]
  %v1032 = vld [vmem:[%s1 + $0x1d60] sm:$0xff]
  %v1033 = vld [vmem:[%s1 + $0x1d68] sm:$0xff]
  %v1034 = vld [vmem:[%s1 + $0x1d70] sm:$0xff]
  %v1035 = vld [vmem:[%s1 + $0x1d78] sm:$0xff]
  %v1036 = vld [vmem:[%s1 + $0x1d80] sm:$0xff]
  %v1037 = vld [vmem:[%s1 + $0x1d88] sm:$0xff]
  %v1038 = vld [vmem:[%s1 + $0x1d90] sm:$0xff]
  %v1039 = vld [vmem:[%s1 + $0x1d98] sm:$0xff]
  %v1040 = vld [vmem:[%s1 + $0x1da0] sm:$0xff]
  %v1041 = vld [vmem:[%s1 + $0x1da8] sm:$0xff]
  %v1042 = vld [vmem:[%s1 + $0x1db0] sm:$0xff]
  %v1043 = vld [vmem:[%s1 + $0x1db8] sm:$0xff]
  %v1044 = vld [vmem:[%s1 + $0x1dc0] sm:$0xff]
  %v1045 = vld [vmem:[%s1 + $0x1dc8] sm:$0xff]
  %v1046 = vld [vmem:[%s1 + $0x1dd0] sm:$0xff]
  %v1047 = vld [vmem:[%s1 + $0x1dd8] sm:$0xff]
  %v1048 = vld [vmem:[%s1 + $0x1de0] sm:$0xff]
  %v1049 = vld [vmem:[%s1 + $0x1de8] sm:$0xff]
  %v1050 = vld [vmem:[%s1 + $0x1df0] sm:$0xff]
  %v1051 = vld [vmem:[%s1 + $0x1df8] sm:$0xff]
  %v1052 = vld [vmem:[%s1 + $0x1e00] sm:$0xff]
  %v1053 = vld [vmem:[%s1 + $0x1e08] sm:$0xff]
  %v1054 = vld [vmem:[%s1 + $0x1e10] sm:$0xff]
  %v1055 = vld [vmem:[%s1 + $0x1e18] sm:$0xff]
  %v1056 = vld [vmem:[%s1 + $0x1e20] sm:$0xff]
  %v1057 = vld [vmem:[%s1 + $0x1e28] sm:$0xff]
  %v1058 = vld [vmem:[%s1 + $0x1e30] sm:$0xff]
  %v1059 = vld [vmem:[%s1 + $0x1e38] sm:$0xff]
  %v1060 = vld [vmem:[%s1 + $0x1e40] sm:$0xff]
  %v1061 = vld [vmem:[%s1 + $0x1e48] sm:$0xff]
  %v1062 = vld [vmem:[%s1 + $0x1e50] sm:$0xff]
  %v1063 = vld [vmem:[%s1 + $0x1e58] sm:$0xff]
  %v1064 = vld [vmem:[%s1 + $0x1e60] sm:$0xff]
  %v1065 = vld [vmem:[%s1 + $0x1e68] sm:$0xff]
  %v1066 = vld [vmem:[%s1 + $0x1e70] sm:$0xff]
  %v1067 = vld [vmem:[%s1 + $0x1e78] sm:$0xff]
  %v1068 = vld [vmem:[%s1 + $0x1e80] sm:$0xff]
  %v1069 = vld [vmem:[%s1 + $0x1e88] sm:$0xff]
  %v1070 = vld [vmem:[%s1 + $0x1e90] sm:$0xff]
  %v1071 = vld [vmem:[%s1 + $0x1e98] sm:$0xff]
  %v1072 = vld [vmem:[%s1 + $0x1ea0] sm:$0xff]
  %v1073 = vld [vmem:[%s1 + $0x1ea8] sm:$0xff]
  %v1074 = vld [vmem:[%s1 + $0x1eb0] sm:$0xff]
  %v1075 = vld [vmem:[%s1 + $0x1eb8] sm:$0xff]
  %v1076 = vld [vmem:[%s1 + $0x1ec0] sm:$0xff]
  %v1077 = vld [vmem:[%s1 + $0x1ec8] sm:$0xff]
  %v1078 = vld [vmem:[%s1 + $0x1ed0] sm:$0xff]
  %v1079 = vld [vmem:[%s1 + $0x1ed8] sm:$0xff]
  %v1080 = vld [vmem:[%s1 + $0x1ee0] sm:$0xff]
  %v1081 = vld [vmem:[%s1 + $0x1ee8] sm:$0xff]
  %v1082 = vld [vmem:[%s1 + $0x1ef0] sm:$0xff]
  %v1083 = vld [vmem:[%s1 + $0x1ef8] sm:$0xff]
  %v1084 = vld [vmem:[%s1 + $0x1f00] sm:$0xff]
  %v1085 = vld [vmem:[%s1 + $0x1f08] sm:$0xff]
  %v1086 = vld [vmem:[%s1 + $0x1f10] sm:$0xff]
  %v1087 = vld [vmem:[%s1 + $0x1f18] sm:$0xff]
  %v1088 = vld [vmem:[%s1 + $0x1f20] sm:$0xff]
  %v1089 = vld [vmem:[%s1 + $0x1f28] sm:$0xff]
  %v1090 = vld [vmem:[%s1 + $0x1f30] sm:$0xff]
  %v1091 = vld [vmem:[%s1 + $0x1f38] sm:$0xff]
  %v1092 = vld [vmem:[%s1 + $0x1f40] sm:$0xff]
  %v1093 = vld [vmem:[%s1 + $0x1f48] sm:$0xff]
  %v1094 = vld [vmem:[%s1 + $0x1f50] sm:$0xff]
  %v1095 = vld [vmem:[%s1 + $0x1f58] sm:$0xff]
  %v1096 = vld [vmem:[%s1 + $0x1f60] sm:$0xff]
  %v1097 = vld [vmem:[%s1 + $0x1f68] sm:$0xff]
  %v1098 = vld [vmem:[%s1 + $0x1f70] sm:$0xff]
  %v1099 = vld [vmem:[%s1 + $0x1f78] sm:$0xff]
  %v1100 = vld [vmem:[%s1 + $0x1f80] sm:$0xff]
  %v1101 = vld [vmem:[%s1 + $0x1f88] sm:$0xff]
  %v1102 = vld [vmem:[%s1 + $0x1f90] sm:$0xff]
  %v1103 = vld [vmem:[%s1 + $0x1f98] sm:$0xff]
  %v1104 = vld [vmem:[%s1 + $0x1fa0] sm:$0xff]
  %v1105 = vld [vmem:[%s1 + $0x1fa8] sm:$0xff]
  %v1106 = vld [vmem:[%s1 + $0x1fb0] sm:$0xff]
  %v1107 = vld [vmem:[%s1 + $0x1fb8] sm:$0xff]
  %v1108 = vld [vmem:[%s1 + $0x1fc0] sm:$0xff]
  %v1109 = vld [vmem:[%s1 + $0x1fc8] sm:$0xff]
  %v1110 = vld [vmem:[%s1 + $0x1fd0] sm:$0xff]
  %v1111 = vld [vmem:[%s1 + $0x1fd8] sm:$0xff]
  %v1112 = vld [vmem:[%s1 + $0x1fe0] sm:$0xff]
  %v1113 = vld [vmem:[%s1 + $0x1fe8] sm:$0xff]
  %v1114 = vld [vmem:[%s1 + $0x1ff0] sm:$0xff]
  %v1115 = vld [vmem:[%s1 + $0x1ff8] sm:$0xff]
  %v1180 = vunpack.c.l.b16 %v28
  %v1181 = vunpack.c.h.b16 %v28
  %v1182 = vunpack.c.l.b16 %v29
  %v1183 = vunpack.c.h.b16 %v29
  %v1184 = vunpack.c.l.b16 %v30
  %v1185 = vunpack.c.h.b16 %v30
  %v1186 = vunpack.c.l.b16 %v31
  %v1187 = vunpack.c.h.b16 %v31
  %v1188 = vunpack.c.l.b16 %v32
  %v1189 = vunpack.c.h.b16 %v32
  %v1190 = vunpack.c.l.b16 %v33
  %v1191 = vunpack.c.h.b16 %v33
  %v1192 = vunpack.c.l.b16 %v34
  %v1193 = vunpack.c.h.b16 %v34
  %v1194 = vunpack.c.l.b16 %v35
  %v1195 = vunpack.c.h.b16 %v35
  %v1196 = vunpack.c.l.b16 %v36
  %v1197 = vunpack.c.h.b16 %v36
  %v1198 = vunpack.c.l.b16 %v37
  %v1199 = vunpack.c.h.b16 %v37
  %v1200 = vunpack.c.l.b16 %v38
  %v1201 = vunpack.c.h.b16 %v38
  %v1202 = vunpack.c.l.b16 %v39
  %v1203 = vunpack.c.h.b16 %v39
  %v1204 = vunpack.c.l.b16 %v40
  %v1205 = vunpack.c.h.b16 %v40
  %v1206 = vunpack.c.l.b16 %v41
  %v1207 = vunpack.c.h.b16 %v41
  %v1208 = vunpack.c.l.b16 %v42
  %v1209 = vunpack.c.h.b16 %v42
  %v1210 = vunpack.c.l.b16 %v43
  %v1211 = vunpack.c.h.b16 %v43
  %v1212 = vunpack.c.l.b16 %v44
  %v1213 = vunpack.c.h.b16 %v44
  %v1214 = vunpack.c.l.b16 %v45
  %v1215 = vunpack.c.h.b16 %v45
  %v1216 = vunpack.c.l.b16 %v46
  %v1217 = vunpack.c.h.b16 %v46
  %v1218 = vunpack.c.l.b16 %v47
  %v1219 = vunpack.c.h.b16 %v47
  %v1220 = vunpack.c.l.b16 %v48
  %v1221 = vunpack.c.h.b16 %v48
  %v1222 = vunpack.c.l.b16 %v49
  %v1223 = vunpack.c.h.b16 %v49
  %v1224 = vunpack.c.l.b16 %v50
  %v1225 = vunpack.c.h.b16 %v50
  %v1226 = vunpack.c.l.b16 %v51
  %v1227 = vunpack.c.h.b16 %v51
  %v1228 = vunpack.c.l.b16 %v52
  %v1229 = vunpack.c.h.b16 %v52
  %v1230 = vunpack.c.l.b16 %v53
  %v1231 = vunpack.c.h.b16 %v53
  %v1232 = vunpack.c.l.b16 %v54
  %v1233 = vunpack.c.h.b16 %v54
  %v1234 = vunpack.c.l.b16 %v55
  %v1235 = vunpack.c.h.b16 %v55
  %v1236 = vunpack.c.l.b16 %v56
  %v1237 = vunpack.c.h.b16 %v56
  %v1238 = vunpack.c.l.b16 %v57
  %v1239 = vunpack.c.h.b16 %v57
  %v1240 = vunpack.c.l.b16 %v58
  %v1241 = vunpack.c.h.b16 %v58
  %v1242 = vunpack.c.l.b16 %v59
  %v1243 = vunpack.c.h.b16 %v59
  %v1244 = vunpack.c.l.b16 %v60
  %v1245 = vunpack.c.h.b16 %v60
  %v1246 = vunpack.c.l.b16 %v61
  %v1247 = vunpack.c.h.b16 %v61
  %v1248 = vunpack.c.l.b16 %v62
  %v1249 = vunpack.c.h.b16 %v62
  %v1250 = vunpack.c.l.b16 %v63
  %v1251 = vunpack.c.h.b16 %v63
  %v1252 = vunpack.c.l.b16 %v64
  %v1253 = vunpack.c.h.b16 %v64
  %v1254 = vunpack.c.l.b16 %v65
  %v1255 = vunpack.c.h.b16 %v65
  %v1256 = vunpack.c.l.b16 %v66
  %v1257 = vunpack.c.h.b16 %v66
  %v1258 = vunpack.c.l.b16 %v67
  %v1259 = vunpack.c.h.b16 %v67
  %v1260 = vunpack.c.l.b16 %v68
  %v1261 = vunpack.c.h.b16 %v68
  %v1262 = vunpack.c.l.b16 %v69
  %v1263 = vunpack.c.h.b16 %v69
  %v1264 = vunpack.c.l.b16 %v70
  %v1265 = vunpack.c.h.b16 %v70
  %v1266 = vunpack.c.l.b16 %v71
  %v1267 = vunpack.c.h.b16 %v71
  %v1268 = vunpack.c.l.b16 %v72
  %v1269 = vunpack.c.h.b16 %v72
  %v1270 = vunpack.c.l.b16 %v73
  %v1271 = vunpack.c.h.b16 %v73
  %v1272 = vunpack.c.l.b16 %v74
  %v1273 = vunpack.c.h.b16 %v74
  %v1274 = vunpack.c.l.b16 %v75
  %v1275 = vunpack.c.h.b16 %v75
  %v1276 = vunpack.c.l.b16 %v76
  %v1277 = vunpack.c.h.b16 %v76
  %v1278 = vunpack.c.l.b16 %v77
  %v1279 = vunpack.c.h.b16 %v77
  %v1280 = vunpack.c.l.b16 %v78
  %v1281 = vunpack.c.h.b16 %v78
  %v1282 = vunpack.c.l.b16 %v79
  %v1283 = vunpack.c.h.b16 %v79
  %v1284 = vunpack.c.l.b16 %v80
  %v1285 = vunpack.c.h.b16 %v80
  %v1286 = vunpack.c.l.b16 %v81
  %v1287 = vunpack.c.h.b16 %v81
  %v1288 = vunpack.c.l.b16 %v82
  %v1289 = vunpack.c.h.b16 %v82
  %v1290 = vunpack.c.l.b16 %v83
  %v1291 = vunpack.c.h.b16 %v83
  %v1292 = vunpack.c.l.b16 %v84
  %v1293 = vunpack.c.h.b16 %v84
  %v1294 = vunpack.c.l.b16 %v85
  %v1295 = vunpack.c.h.b16 %v85
  %v1296 = vunpack.c.l.b16 %v86
  %v1297 = vunpack.c.h.b16 %v86
  %v1298 = vunpack.c.l.b16 %v87
  %v1299 = vunpack.c.h.b16 %v87
  %v1300 = vunpack.c.l.b16 %v88
  %v1301 = vunpack.c.h.b16 %v88
  %v1302 = vunpack.c.l.b16 %v89
  %v1303 = vunpack.c.h.b16 %v89
  %v1304 = vunpack.c.l.b16 %v90
  %v1305 = vunpack.c.h.b16 %v90
  %v1306 = vunpack.c.l.b16 %v91
  %v1307 = vunpack.c.h.b16 %v91
  %v1308 = vpack.c.b16 %v1212, %v1180
  %v1309 = vpack.c.b16 %v1213, %v1181
  %v1310 = vpack.c.b16 %v1214, %v1182
  %v1311 = vpack.c.b16 %v1215, %v1183
  %v1312 = vpack.c.b16 %v1216, %v1184
  %v1313 = vpack.c.b16 %v1217, %v1185
  %v1314 = vpack.c.b16 %v1218, %v1186
  %v1315 = vpack.c.b16 %v1219, %v1187
  %v1316 = vpack.c.b16 %v1220, %v1188
  %v1317 = vpack.c.b16 %v1221, %v1189
  %v1318 = vpack.c.b16 %v1222, %v1190
  %v1319 = vpack.c.b16 %v1223, %v1191
  %v1320 = vpack.c.b16 %v1224, %v1192
  %v1321 = vpack.c.b16 %v1225, %v1193
  %v1322 = vpack.c.b16 %v1226, %v1194
  %v1323 = vpack.c.b16 %v1227, %v1195
  %v1324 = vpack.c.b16 %v1228, %v1196
  %v1325 = vpack.c.b16 %v1229, %v1197
  %v1326 = vpack.c.b16 %v1230, %v1198
  %v1327 = vpack.c.b16 %v1231, %v1199
  %v1328 = vpack.c.b16 %v1232, %v1200
  %v1329 = vpack.c.b16 %v1233, %v1201
  %v1330 = vpack.c.b16 %v1234, %v1202
  %v1331 = vpack.c.b16 %v1235, %v1203
  %v1332 = vpack.c.b16 %v1236, %v1204
  %v1333 = vpack.c.b16 %v1237, %v1205
  %v1334 = vpack.c.b16 %v1238, %v1206
  %v1335 = vpack.c.b16 %v1239, %v1207
  %v1336 = vpack.c.b16 %v1240, %v1208
  %v1337 = vpack.c.b16 %v1241, %v1209
  %v1338 = vpack.c.b16 %v1242, %v1210
  %v1339 = vpack.c.b16 %v1243, %v1211
  %v1340 = vpack.c.b16 %v1276, %v1244
  %v1341 = vpack.c.b16 %v1277, %v1245
  %v1342 = vpack.c.b16 %v1278, %v1246
  %v1343 = vpack.c.b16 %v1279, %v1247
  %v1344 = vpack.c.b16 %v1280, %v1248
  %v1345 = vpack.c.b16 %v1281, %v1249
  %v1346 = vpack.c.b16 %v1282, %v1250
  %v1347 = vpack.c.b16 %v1283, %v1251
  %v1348 = vpack.c.b16 %v1284, %v1252
  %v1349 = vpack.c.b16 %v1285, %v1253
  %v1350 = vpack.c.b16 %v1286, %v1254
  %v1351 = vpack.c.b16 %v1287, %v1255
  %v1352 = vpack.c.b16 %v1288, %v1256
  %v1353 = vpack.c.b16 %v1289, %v1257
  %v1354 = vpack.c.b16 %v1290, %v1258
  %v1355 = vpack.c.b16 %v1291, %v1259
  %v1356 = vpack.c.b16 %v1292, %v1260
  %v1357 = vpack.c.b16 %v1293, %v1261
  %v1358 = vpack.c.b16 %v1294, %v1262
  %v1359 = vpack.c.b16 %v1295, %v1263
  %v1360 = vpack.c.b16 %v1296, %v1264
  %v1361 = vpack.c.b16 %v1297, %v1265
  %v1362 = vpack.c.b16 %v1298, %v1266
  %v1363 = vpack.c.b16 %v1299, %v1267
  %v1364 = vpack.c.b16 %v1300, %v1268
  %v1365 = vpack.c.b16 %v1301, %v1269
  %v1366 = vpack.c.b16 %v1302, %v1270
  %v1367 = vpack.c.b16 %v1303, %v1271
  %v1368 = vpack.c.b16 %v1304, %v1272
  %v1369 = vpack.c.b16 %v1305, %v1273
  %v1370 = vpack.c.b16 %v1306, %v1274
  %v1371 = vpack.c.b16 %v1307, %v1275
  %v2460 = vunpack.c.l.b16 %v92
  %v2461 = vunpack.c.h.b16 %v92
  %v2462 = vunpack.c.l.b16 %v93
  %v2463 = vunpack.c.h.b16 %v93
  %v2464 = vunpack.c.l.b16 %v94
  %v2465 = vunpack.c.h.b16 %v94
  %v2466 = vunpack.c.l.b16 %v95
  %v2467 = vunpack.c.h.b16 %v95
  %v2468 = vunpack.c.l.b16 %v96
  %v2469 = vunpack.c.h.b16 %v96
  %v2470 = vunpack.c.l.b16 %v97
  %v2471 = vunpack.c.h.b16 %v97
  %v2472 = vunpack.c.l.b16 %v98
  %v2473 = vunpack.c.h.b16 %v98
  %v2474 = vunpack.c.l.b16 %v99
  %v2475 = vunpack.c.h.b16 %v99
  %v2476 = vunpack.c.l.b16 %v100
  %v2477 = vunpack.c.h.b16 %v100
  %v2478 = vunpack.c.l.b16 %v101
  %v2479 = vunpack.c.h.b16 %v101
  %v2480 = vunpack.c.l.b16 %v102
  %v2481 = vunpack.c.h.b16 %v102
  %v2482 = vunpack.c.l.b16 %v103
  %v2483 = vunpack.c.h.b16 %v103
  %v2484 = vunpack.c.l.b16 %v104
  %v2485 = vunpack.c.h.b16 %v104
  %v2486 = vunpack.c.l.b16 %v105
  %v2487 = vunpack.c.h.b16 %v105
  %v2488 = vunpack.c.l.b16 %v106
  %v2489 = vunpack.c.h.b16 %v106
  %v2490 = vunpack.c.l.b16 %v107
  %v2491 = vunpack.c.h.b16 %v107
  %v2492 = vunpack.c.l.b16 %v108
  %v2493 = vunpack.c.h.b16 %v108
  %v2494 = vunpack.c.l.b16 %v109
  %v2495 = vunpack.c.h.b16 %v109
  %v2496 = vunpack.c.l.b16 %v110
  %v2497 = vunpack.c.h.b16 %v110
  %v2498 = vunpack.c.l.b16 %v111
  %v2499 = vunpack.c.h.b16 %v111
  %v2500 = vunpack.c.l.b16 %v112
  %v2501 = vunpack.c.h.b16 %v112
  %v2502 = vunpack.c.l.b16 %v113
  %v2503 = vunpack.c.h.b16 %v113
  %v2504 = vunpack.c.l.b16 %v114
  %v2505 = vunpack.c.h.b16 %v114
  %v2506 = vunpack.c.l.b16 %v115
  %v2507 = vunpack.c.h.b16 %v115
  %v2508 = vunpack.c.l.b16 %v116
  %v2509 = vunpack.c.h.b16 %v116
  %v2510 = vunpack.c.l.b16 %v117
  %v2511 = vunpack.c.h.b16 %v117
  %v2512 = vunpack.c.l.b16 %v118
  %v2513 = vunpack.c.h.b16 %v118
  %v2514 = vunpack.c.l.b16 %v119
  %v2515 = vunpack.c.h.b16 %v119
  %v2516 = vunpack.c.l.b16 %v120
  %v2517 = vunpack.c.h.b16 %v120
  %v2518 = vunpack.c.l.b16 %v121
  %v2519 = vunpack.c.h.b16 %v121
  %v2520 = vunpack.c.l.b16 %v122
  %v2521 = vunpack.c.h.b16 %v122
  %v2522 = vunpack.c.l.b16 %v123
  %v2523 = vunpack.c.h.b16 %v123
  %v2524 = vunpack.c.l.b16 %v124
  %v2525 = vunpack.c.h.b16 %v124
  %v2526 = vunpack.c.l.b16 %v125
  %v2527 = vunpack.c.h.b16 %v125
  %v2528 = vunpack.c.l.b16 %v126
  %v2529 = vunpack.c.h.b16 %v126
  %v2530 = vunpack.c.l.b16 %v127
  %v2531 = vunpack.c.h.b16 %v127
  %v2532 = vunpack.c.l.b16 %v128
  %v2533 = vunpack.c.h.b16 %v128
  %v2534 = vunpack.c.l.b16 %v129
  %v2535 = vunpack.c.h.b16 %v129
  %v2536 = vunpack.c.l.b16 %v130
  %v2537 = vunpack.c.h.b16 %v130
  %v2538 = vunpack.c.l.b16 %v131
  %v2539 = vunpack.c.h.b16 %v131
  %v2540 = vunpack.c.l.b16 %v132
  %v2541 = vunpack.c.h.b16 %v132
  %v2542 = vunpack.c.l.b16 %v133
  %v2543 = vunpack.c.h.b16 %v133
  %v2544 = vunpack.c.l.b16 %v134
  %v2545 = vunpack.c.h.b16 %v134
  %v2546 = vunpack.c.l.b16 %v135
  %v2547 = vunpack.c.h.b16 %v135
  %v2548 = vunpack.c.l.b16 %v136
  %v2549 = vunpack.c.h.b16 %v136
  %v2550 = vunpack.c.l.b16 %v137
  %v2551 = vunpack.c.h.b16 %v137
  %v2552 = vunpack.c.l.b16 %v138
  %v2553 = vunpack.c.h.b16 %v138
  %v2554 = vunpack.c.l.b16 %v139
  %v2555 = vunpack.c.h.b16 %v139
  %v2556 = vunpack.c.l.b16 %v140
  %v2557 = vunpack.c.h.b16 %v140
  %v2558 = vunpack.c.l.b16 %v141
  %v2559 = vunpack.c.h.b16 %v141
  %v2560 = vunpack.c.l.b16 %v142
  %v2561 = vunpack.c.h.b16 %v142
  %v2562 = vunpack.c.l.b16 %v143
  %v2563 = vunpack.c.h.b16 %v143
  %v2564 = vunpack.c.l.b16 %v144
  %v2565 = vunpack.c.h.b16 %v144
  %v2566 = vunpack.c.l.b16 %v145
  %v2567 = vunpack.c.h.b16 %v145
  %v2568 = vunpack.c.l.b16 %v146
  %v2569 = vunpack.c.h.b16 %v146
  %v2570 = vunpack.c.l.b16 %v147
  %v2571 = vunpack.c.h.b16 %v147
  %v2572 = vunpack.c.l.b16 %v148
  %v2573 = vunpack.c.h.b16 %v148
  %v2574 = vunpack.c.l.b16 %v149
  %v2575 = vunpack.c.h.b16 %v149
  %v2576 = vunpack.c.l.b16 %v150
  %v2577 = vunpack.c.h.b16 %v150
  %v2578 = vunpack.c.l.b16 %v151
  %v2579 = vunpack.c.h.b16 %v151
  %v2580 = vunpack.c.l.b16 %v152
  %v2581 = vunpack.c.h.b16 %v152
  %v2582 = vunpack.c.l.b16 %v153
  %v2583 = vunpack.c.h.b16 %v153
  %v2584 = vunpack.c.l.b16 %v154
  %v2585 = vunpack.c.h.b16 %v154
  %v2586 = vunpack.c.l.b16 %v155
  %v2587 = vunpack.c.h.b16 %v155
  %v2588 = vunpack.c.l.b16 %v156
  %v2589 = vunpack.c.h.b16 %v156
  %v2590 = vunpack.c.l.b16 %v157
  %v2591 = vunpack.c.h.b16 %v157
  %v2592 = vunpack.c.l.b16 %v158
  %v2593 = vunpack.c.h.b16 %v158
  %v2594 = vunpack.c.l.b16 %v159
  %v2595 = vunpack.c.h.b16 %v159
  %v2596 = vunpack.c.l.b16 %v160
  %v2597 = vunpack.c.h.b16 %v160
  %v2598 = vunpack.c.l.b16 %v161
  %v2599 = vunpack.c.h.b16 %v161
  %v2600 = vunpack.c.l.b16 %v162
  %v2601 = vunpack.c.h.b16 %v162
  %v2602 = vunpack.c.l.b16 %v163
  %v2603 = vunpack.c.h.b16 %v163
  %v2604 = vunpack.c.l.b16 %v164
  %v2605 = vunpack.c.h.b16 %v164
  %v2606 = vunpack.c.l.b16 %v165
  %v2607 = vunpack.c.h.b16 %v165
  %v2608 = vunpack.c.l.b16 %v166
  %v2609 = vunpack.c.h.b16 %v166
  %v2610 = vunpack.c.l.b16 %v167
  %v2611 = vunpack.c.h.b16 %v167
  %v2612 = vunpack.c.l.b16 %v168
  %v2613 = vunpack.c.h.b16 %v168
  %v2614 = vunpack.c.l.b16 %v169
  %v2615 = vunpack.c.h.b16 %v169
  %v2616 = vunpack.c.l.b16 %v170
  %v2617 = vunpack.c.h.b16 %v170
  %v2618 = vunpack.c.l.b16 %v171
  %v2619 = vunpack.c.h.b16 %v171
  %v2620 = vunpack.c.l.b16 %v172
  %v2621 = vunpack.c.h.b16 %v172
  %v2622 = vunpack.c.l.b16 %v173
  %v2623 = vunpack.c.h.b16 %v173
  %v2624 = vunpack.c.l.b16 %v174
  %v2625 = vunpack.c.h.b16 %v174
  %v2626 = vunpack.c.l.b16 %v175
  %v2627 = vunpack.c.h.b16 %v175
  %v2628 = vunpack.c.l.b16 %v176
  %v2629 = vunpack.c.h.b16 %v176
  %v2630 = vunpack.c.l.b16 %v177
  %v2631 = vunpack.c.h.b16 %v177
  %v2632 = vunpack.c.l.b16 %v178
  %v2633 = vunpack.c.h.b16 %v178
  %v2634 = vunpack.c.l.b16 %v179
  %v2635 = vunpack.c.h.b16 %v179
  %v2636 = vunpack.c.l.b16 %v180
  %v2637 = vunpack.c.h.b16 %v180
  %v2638 = vunpack.c.l.b16 %v181
  %v2639 = vunpack.c.h.b16 %v181
  %v2640 = vunpack.c.l.b16 %v182
  %v2641 = vunpack.c.h.b16 %v182
  %v2642 = vunpack.c.l.b16 %v183
  %v2643 = vunpack.c.h.b16 %v183
  %v2644 = vunpack.c.l.b16 %v184
  %v2645 = vunpack.c.h.b16 %v184
  %v2646 = vunpack.c.l.b16 %v185
  %v2647 = vunpack.c.h.b16 %v185
  %v2648 = vunpack.c.l.b16 %v186
  %v2649 = vunpack.c.h.b16 %v186
  %v2650 = vunpack.c.l.b16 %v187
  %v2651 = vunpack.c.h.b16 %v187
  %v2652 = vunpack.c.l.b16 %v188
  %v2653 = vunpack.c.h.b16 %v188
  %v2654 = vunpack.c.l.b16 %v189
  %v2655 = vunpack.c.h.b16 %v189
  %v2656 = vunpack.c.l.b16 %v190
  %v2657 = vunpack.c.h.b16 %v190
  %v2658 = vunpack.c.l.b16 %v191
  %v2659 = vunpack.c.h.b16 %v191
  %v2660 = vunpack.c.l.b16 %v192
  %v2661 = vunpack.c.h.b16 %v192
  %v2662 = vunpack.c.l.b16 %v193
  %v2663 = vunpack.c.h.b16 %v193
  %v2664 = vunpack.c.l.b16 %v194
  %v2665 = vunpack.c.h.b16 %v194
  %v2666 = vunpack.c.l.b16 %v195
  %v2667 = vunpack.c.h.b16 %v195
  %v2668 = vunpack.c.l.b16 %v196
  %v2669 = vunpack.c.h.b16 %v196
  %v2670 = vunpack.c.l.b16 %v197
  %v2671 = vunpack.c.h.b16 %v197
  %v2672 = vunpack.c.l.b16 %v198
  %v2673 = vunpack.c.h.b16 %v198
  %v2674 = vunpack.c.l.b16 %v199
  %v2675 = vunpack.c.h.b16 %v199
  %v2676 = vunpack.c.l.b16 %v200
  %v2677 = vunpack.c.h.b16 %v200
  %v2678 = vunpack.c.l.b16 %v201
  %v2679 = vunpack.c.h.b16 %v201
  %v2680 = vunpack.c.l.b16 %v202
  %v2681 = vunpack.c.h.b16 %v202
  %v2682 = vunpack.c.l.b16 %v203
  %v2683 = vunpack.c.h.b16 %v203
  %v2684 = vunpack.c.l.b16 %v204
  %v2685 = vunpack.c.h.b16 %v204
  %v2686 = vunpack.c.l.b16 %v205
  %v2687 = vunpack.c.h.b16 %v205
  %v2688 = vunpack.c.l.b16 %v206
  %v2689 = vunpack.c.h.b16 %v206
  %v2690 = vunpack.c.l.b16 %v207
  %v2691 = vunpack.c.h.b16 %v207
  %v2692 = vunpack.c.l.b16 %v208
  %v2693 = vunpack.c.h.b16 %v208
  %v2694 = vunpack.c.l.b16 %v209
  %v2695 = vunpack.c.h.b16 %v209
  %v2696 = vunpack.c.l.b16 %v210
  %v2697 = vunpack.c.h.b16 %v210
  %v2698 = vunpack.c.l.b16 %v211
  %v2699 = vunpack.c.h.b16 %v211
  %v2700 = vunpack.c.l.b16 %v212
  %v2701 = vunpack.c.h.b16 %v212
  %v2702 = vunpack.c.l.b16 %v213
  %v2703 = vunpack.c.h.b16 %v213
  %v2704 = vunpack.c.l.b16 %v214
  %v2705 = vunpack.c.h.b16 %v214
  %v2706 = vunpack.c.l.b16 %v215
  %v2707 = vunpack.c.h.b16 %v215
  %v2708 = vunpack.c.l.b16 %v216
  %v2709 = vunpack.c.h.b16 %v216
  %v2710 = vunpack.c.l.b16 %v217
  %v2711 = vunpack.c.h.b16 %v217
  %v2712 = vunpack.c.l.b16 %v218
  %v2713 = vunpack.c.h.b16 %v218
  %v2714 = vunpack.c.l.b16 %v219
  %v2715 = vunpack.c.h.b16 %v219
  %v2716 = vunpack.c.l.b16 %v220
  %v2717 = vunpack.c.h.b16 %v220
  %v2718 = vunpack.c.l.b16 %v221
  %v2719 = vunpack.c.h.b16 %v221
  %v2720 = vunpack.c.l.b16 %v222
  %v2721 = vunpack.c.h.b16 %v222
  %v2722 = vunpack.c.l.b16 %v223
  %v2723 = vunpack.c.h.b16 %v223
  %v2724 = vunpack.c.l.b16 %v224
  %v2725 = vunpack.c.h.b16 %v224
  %v2726 = vunpack.c.l.b16 %v225
  %v2727 = vunpack.c.h.b16 %v225
  %v2728 = vunpack.c.l.b16 %v226
  %v2729 = vunpack.c.h.b16 %v226
  %v2730 = vunpack.c.l.b16 %v227
  %v2731 = vunpack.c.h.b16 %v227
  %v2732 = vunpack.c.l.b16 %v228
  %v2733 = vunpack.c.h.b16 %v228
  %v2734 = vunpack.c.l.b16 %v229
  %v2735 = vunpack.c.h.b16 %v229
  %v2736 = vunpack.c.l.b16 %v230
  %v2737 = vunpack.c.h.b16 %v230
  %v2738 = vunpack.c.l.b16 %v231
  %v2739 = vunpack.c.h.b16 %v231
  %v2740 = vunpack.c.l.b16 %v232
  %v2741 = vunpack.c.h.b16 %v232
  %v2742 = vunpack.c.l.b16 %v233
  %v2743 = vunpack.c.h.b16 %v233
  %v2744 = vunpack.c.l.b16 %v234
  %v2745 = vunpack.c.h.b16 %v234
  %v2746 = vunpack.c.l.b16 %v235
  %v2747 = vunpack.c.h.b16 %v235
  %v2748 = vunpack.c.l.b16 %v236
  %v2749 = vunpack.c.h.b16 %v236
  %v2750 = vunpack.c.l.b16 %v237
  %v2751 = vunpack.c.h.b16 %v237
  %v2752 = vunpack.c.l.b16 %v238
  %v2753 = vunpack.c.h.b16 %v238
  %v2754 = vunpack.c.l.b16 %v239
  %v2755 = vunpack.c.h.b16 %v239
  %v2756 = vunpack.c.l.b16 %v240
  %v2757 = vunpack.c.h.b16 %v240
  %v2758 = vunpack.c.l.b16 %v241
  %v2759 = vunpack.c.h.b16 %v241
  %v2760 = vunpack.c.l.b16 %v242
  %v2761 = vunpack.c.h.b16 %v242
  %v2762 = vunpack.c.l.b16 %v243
  %v2763 = vunpack.c.h.b16 %v243
  %v2764 = vunpack.c.l.b16 %v244
  %v2765 = vunpack.c.h.b16 %v244
  %v2766 = vunpack.c.l.b16 %v245
  %v2767 = vunpack.c.h.b16 %v245
  %v2768 = vunpack.c.l.b16 %v246
  %v2769 = vunpack.c.h.b16 %v246
  %v2770 = vunpack.c.l.b16 %v247
  %v2771 = vunpack.c.h.b16 %v247
  %v2772 = vunpack.c.l.b16 %v248
  %v2773 = vunpack.c.h.b16 %v248
  %v2774 = vunpack.c.l.b16 %v249
  %v2775 = vunpack.c.h.b16 %v249
  %v2776 = vunpack.c.l.b16 %v250
  %v2777 = vunpack.c.h.b16 %v250
  %v2778 = vunpack.c.l.b16 %v251
  %v2779 = vunpack.c.h.b16 %v251
  %v2780 = vunpack.c.l.b16 %v252
  %v2781 = vunpack.c.h.b16 %v252
  %v2782 = vunpack.c.l.b16 %v253
  %v2783 = vunpack.c.h.b16 %v253
  %v2784 = vunpack.c.l.b16 %v254
  %v2785 = vunpack.c.h.b16 %v254
  %v2786 = vunpack.c.l.b16 %v255
  %v2787 = vunpack.c.h.b16 %v255
  %v2788 = vunpack.c.l.b16 %v256
  %v2789 = vunpack.c.h.b16 %v256
  %v2790 = vunpack.c.l.b16 %v257
  %v2791 = vunpack.c.h.b16 %v257
  %v2792 = vunpack.c.l.b16 %v258
  %v2793 = vunpack.c.h.b16 %v258
  %v2794 = vunpack.c.l.b16 %v259
  %v2795 = vunpack.c.h.b16 %v259
  %v2796 = vunpack.c.l.b16 %v260
  %v2797 = vunpack.c.h.b16 %v260
  %v2798 = vunpack.c.l.b16 %v261
  %v2799 = vunpack.c.h.b16 %v261
  %v2800 = vunpack.c.l.b16 %v262
  %v2801 = vunpack.c.h.b16 %v262
  %v2802 = vunpack.c.l.b16 %v263
  %v2803 = vunpack.c.h.b16 %v263
  %v2804 = vunpack.c.l.b16 %v264
  %v2805 = vunpack.c.h.b16 %v264
  %v2806 = vunpack.c.l.b16 %v265
  %v2807 = vunpack.c.h.b16 %v265
  %v2808 = vunpack.c.l.b16 %v266
  %v2809 = vunpack.c.h.b16 %v266
  %v2810 = vunpack.c.l.b16 %v267
  %v2811 = vunpack.c.h.b16 %v267
  %v2812 = vunpack.c.l.b16 %v268
  %v2813 = vunpack.c.h.b16 %v268
  %v2814 = vunpack.c.l.b16 %v269
  %v2815 = vunpack.c.h.b16 %v269
  %v2816 = vunpack.c.l.b16 %v270
  %v2817 = vunpack.c.h.b16 %v270
  %v2818 = vunpack.c.l.b16 %v271
  %v2819 = vunpack.c.h.b16 %v271
  %v2820 = vunpack.c.l.b16 %v272
  %v2821 = vunpack.c.h.b16 %v272
  %v2822 = vunpack.c.l.b16 %v273
  %v2823 = vunpack.c.h.b16 %v273
  %v2824 = vunpack.c.l.b16 %v274
  %v2825 = vunpack.c.h.b16 %v274
  %v2826 = vunpack.c.l.b16 %v275
  %v2827 = vunpack.c.h.b16 %v275
  %v2828 = vunpack.c.l.b16 %v276
  %v2829 = vunpack.c.h.b16 %v276
  %v2830 = vunpack.c.l.b16 %v277
  %v2831 = vunpack.c.h.b16 %v277
  %v2832 = vunpack.c.l.b16 %v278
  %v2833 = vunpack.c.h.b16 %v278
  %v2834 = vunpack.c.l.b16 %v279
  %v2835 = vunpack.c.h.b16 %v279
  %v2836 = vunpack.c.l.b16 %v280
  %v2837 = vunpack.c.h.b16 %v280
  %v2838 = vunpack.c.l.b16 %v281
  %v2839 = vunpack.c.h.b16 %v281
  %v2840 = vunpack.c.l.b16 %v282
  %v2841 = vunpack.c.h.b16 %v282
  %v2842 = vunpack.c.l.b16 %v283
  %v2843 = vunpack.c.h.b16 %v283
  %v2844 = vunpack.c.l.b16 %v284
  %v2845 = vunpack.c.h.b16 %v284
  %v2846 = vunpack.c.l.b16 %v285
  %v2847 = vunpack.c.h.b16 %v285
  %v2848 = vunpack.c.l.b16 %v286
  %v2849 = vunpack.c.h.b16 %v286
  %v2850 = vunpack.c.l.b16 %v287
  %v2851 = vunpack.c.h.b16 %v287
  %v2852 = vunpack.c.l.b16 %v288
  %v2853 = vunpack.c.h.b16 %v288
  %v2854 = vunpack.c.l.b16 %v289
  %v2855 = vunpack.c.h.b16 %v289
  %v2856 = vunpack.c.l.b16 %v290
  %v2857 = vunpack.c.h.b16 %v290
  %v2858 = vunpack.c.l.b16 %v291
  %v2859 = vunpack.c.h.b16 %v291
  %v2860 = vunpack.c.l.b16 %v292
  %v2861 = vunpack.c.h.b16 %v292
  %v2862 = vunpack.c.l.b16 %v293
  %v2863 = vunpack.c.h.b16 %v293
  %v2864 = vunpack.c.l.b16 %v294
  %v2865 = vunpack.c.h.b16 %v294
  %v2866 = vunpack.c.l.b16 %v295
  %v2867 = vunpack.c.h.b16 %v295
  %v2868 = vunpack.c.l.b16 %v296
  %v2869 = vunpack.c.h.b16 %v296
  %v2870 = vunpack.c.l.b16 %v297
  %v2871 = vunpack.c.h.b16 %v297
  %v2872 = vunpack.c.l.b16 %v298
  %v2873 = vunpack.c.h.b16 %v298
  %v2874 = vunpack.c.l.b16 %v299
  %v2875 = vunpack.c.h.b16 %v299
  %v2876 = vunpack.c.l.b16 %v300
  %v2877 = vunpack.c.h.b16 %v300
  %v2878 = vunpack.c.l.b16 %v301
  %v2879 = vunpack.c.h.b16 %v301
  %v2880 = vunpack.c.l.b16 %v302
  %v2881 = vunpack.c.h.b16 %v302
  %v2882 = vunpack.c.l.b16 %v303
  %v2883 = vunpack.c.h.b16 %v303
  %v2884 = vunpack.c.l.b16 %v304
  %v2885 = vunpack.c.h.b16 %v304
  %v2886 = vunpack.c.l.b16 %v305
  %v2887 = vunpack.c.h.b16 %v305
  %v2888 = vunpack.c.l.b16 %v306
  %v2889 = vunpack.c.h.b16 %v306
  %v2890 = vunpack.c.l.b16 %v307
  %v2891 = vunpack.c.h.b16 %v307
  %v2892 = vunpack.c.l.b16 %v308
  %v2893 = vunpack.c.h.b16 %v308
  %v2894 = vunpack.c.l.b16 %v309
  %v2895 = vunpack.c.h.b16 %v309
  %v2896 = vunpack.c.l.b16 %v310
  %v2897 = vunpack.c.h.b16 %v310
  %v2898 = vunpack.c.l.b16 %v311
  %v2899 = vunpack.c.h.b16 %v311
  %v2900 = vunpack.c.l.b16 %v312
  %v2901 = vunpack.c.h.b16 %v312
  %v2902 = vunpack.c.l.b16 %v313
  %v2903 = vunpack.c.h.b16 %v313
  %v2904 = vunpack.c.l.b16 %v314
  %v2905 = vunpack.c.h.b16 %v314
  %v2906 = vunpack.c.l.b16 %v315
  %v2907 = vunpack.c.h.b16 %v315
  %v2908 = vunpack.c.l.b16 %v316
  %v2909 = vunpack.c.h.b16 %v316
  %v2910 = vunpack.c.l.b16 %v317
  %v2911 = vunpack.c.h.b16 %v317
  %v2912 = vunpack.c.l.b16 %v318
  %v2913 = vunpack.c.h.b16 %v318
  %v2914 = vunpack.c.l.b16 %v319
  %v2915 = vunpack.c.h.b16 %v319
  %v2916 = vunpack.c.l.b16 %v320
  %v2917 = vunpack.c.h.b16 %v320
  %v2918 = vunpack.c.l.b16 %v321
  %v2919 = vunpack.c.h.b16 %v321
  %v2920 = vunpack.c.l.b16 %v322
  %v2921 = vunpack.c.h.b16 %v322
  %v2922 = vunpack.c.l.b16 %v323
  %v2923 = vunpack.c.h.b16 %v323
  %v2924 = vunpack.c.l.b16 %v324
  %v2925 = vunpack.c.h.b16 %v324
  %v2926 = vunpack.c.l.b16 %v325
  %v2927 = vunpack.c.h.b16 %v325
  %v2928 = vunpack.c.l.b16 %v326
  %v2929 = vunpack.c.h.b16 %v326
  %v2930 = vunpack.c.l.b16 %v327
  %v2931 = vunpack.c.h.b16 %v327
  %v2932 = vunpack.c.l.b16 %v328
  %v2933 = vunpack.c.h.b16 %v328
  %v2934 = vunpack.c.l.b16 %v329
  %v2935 = vunpack.c.h.b16 %v329
  %v2936 = vunpack.c.l.b16 %v330
  %v2937 = vunpack.c.h.b16 %v330
  %v2938 = vunpack.c.l.b16 %v331
  %v2939 = vunpack.c.h.b16 %v331
  %v2940 = vunpack.c.l.b16 %v332
  %v2941 = vunpack.c.h.b16 %v332
  %v2942 = vunpack.c.l.b16 %v333
  %v2943 = vunpack.c.h.b16 %v333
  %v2944 = vunpack.c.l.b16 %v334
  %v2945 = vunpack.c.h.b16 %v334
  %v2946 = vunpack.c.l.b16 %v335
  %v2947 = vunpack.c.h.b16 %v335
  %v2948 = vunpack.c.l.b16 %v336
  %v2949 = vunpack.c.h.b16 %v336
  %v2950 = vunpack.c.l.b16 %v337
  %v2951 = vunpack.c.h.b16 %v337
  %v2952 = vunpack.c.l.b16 %v338
  %v2953 = vunpack.c.h.b16 %v338
  %v2954 = vunpack.c.l.b16 %v339
  %v2955 = vunpack.c.h.b16 %v339
  %v2956 = vunpack.c.l.b16 %v340
  %v2957 = vunpack.c.h.b16 %v340
  %v2958 = vunpack.c.l.b16 %v341
  %v2959 = vunpack.c.h.b16 %v341
  %v2960 = vunpack.c.l.b16 %v342
  %v2961 = vunpack.c.h.b16 %v342
  %v2962 = vunpack.c.l.b16 %v343
  %v2963 = vunpack.c.h.b16 %v343
  %v2964 = vunpack.c.l.b16 %v344
  %v2965 = vunpack.c.h.b16 %v344
  %v2966 = vunpack.c.l.b16 %v345
  %v2967 = vunpack.c.h.b16 %v345
  %v2968 = vunpack.c.l.b16 %v346
  %v2969 = vunpack.c.h.b16 %v346
  %v2970 = vunpack.c.l.b16 %v347
  %v2971 = vunpack.c.h.b16 %v347
  %v2972 = vunpack.c.l.b16 %v348
  %v2973 = vunpack.c.h.b16 %v348
  %v2974 = vunpack.c.l.b16 %v349
  %v2975 = vunpack.c.h.b16 %v349
  %v2976 = vunpack.c.l.b16 %v350
  %v2977 = vunpack.c.h.b16 %v350
  %v2978 = vunpack.c.l.b16 %v351
  %v2979 = vunpack.c.h.b16 %v351
  %v2980 = vunpack.c.l.b16 %v352
  %v2981 = vunpack.c.h.b16 %v352
  %v2982 = vunpack.c.l.b16 %v353
  %v2983 = vunpack.c.h.b16 %v353
  %v2984 = vunpack.c.l.b16 %v354
  %v2985 = vunpack.c.h.b16 %v354
  %v2986 = vunpack.c.l.b16 %v355
  %v2987 = vunpack.c.h.b16 %v355
  %v2988 = vunpack.c.l.b16 %v356
  %v2989 = vunpack.c.h.b16 %v356
  %v2990 = vunpack.c.l.b16 %v357
  %v2991 = vunpack.c.h.b16 %v357
  %v2992 = vunpack.c.l.b16 %v358
  %v2993 = vunpack.c.h.b16 %v358
  %v2994 = vunpack.c.l.b16 %v359
  %v2995 = vunpack.c.h.b16 %v359
  %v2996 = vunpack.c.l.b16 %v360
  %v2997 = vunpack.c.h.b16 %v360
  %v2998 = vunpack.c.l.b16 %v361
  %v2999 = vunpack.c.h.b16 %v361
  %v3000 = vunpack.c.l.b16 %v362
  %v3001 = vunpack.c.h.b16 %v362
  %v3002 = vunpack.c.l.b16 %v363
  %v3003 = vunpack.c.h.b16 %v363
  %v3004 = vunpack.c.l.b16 %v364
  %v3005 = vunpack.c.h.b16 %v364
  %v3006 = vunpack.c.l.b16 %v365
  %v3007 = vunpack.c.h.b16 %v365
  %v3008 = vunpack.c.l.b16 %v366
  %v3009 = vunpack.c.h.b16 %v366
  %v3010 = vunpack.c.l.b16 %v367
  %v3011 = vunpack.c.h.b16 %v367
  %v3012 = vunpack.c.l.b16 %v368
  %v3013 = vunpack.c.h.b16 %v368
  %v3014 = vunpack.c.l.b16 %v369
  %v3015 = vunpack.c.h.b16 %v369
  %v3016 = vunpack.c.l.b16 %v370
  %v3017 = vunpack.c.h.b16 %v370
  %v3018 = vunpack.c.l.b16 %v371
  %v3019 = vunpack.c.h.b16 %v371
  %v3020 = vunpack.c.l.b16 %v372
  %v3021 = vunpack.c.h.b16 %v372
  %v3022 = vunpack.c.l.b16 %v373
  %v3023 = vunpack.c.h.b16 %v373
  %v3024 = vunpack.c.l.b16 %v374
  %v3025 = vunpack.c.h.b16 %v374
  %v3026 = vunpack.c.l.b16 %v375
  %v3027 = vunpack.c.h.b16 %v375
  %v3028 = vunpack.c.l.b16 %v376
  %v3029 = vunpack.c.h.b16 %v376
  %v3030 = vunpack.c.l.b16 %v377
  %v3031 = vunpack.c.h.b16 %v377
  %v3032 = vunpack.c.l.b16 %v378
  %v3033 = vunpack.c.h.b16 %v378
  %v3034 = vunpack.c.l.b16 %v379
  %v3035 = vunpack.c.h.b16 %v379
  %v3036 = vunpack.c.l.b16 %v380
  %v3037 = vunpack.c.h.b16 %v380
  %v3038 = vunpack.c.l.b16 %v381
  %v3039 = vunpack.c.h.b16 %v381
  %v3040 = vunpack.c.l.b16 %v382
  %v3041 = vunpack.c.h.b16 %v382
  %v3042 = vunpack.c.l.b16 %v383
  %v3043 = vunpack.c.h.b16 %v383
  %v3044 = vunpack.c.l.b16 %v384
  %v3045 = vunpack.c.h.b16 %v384
  %v3046 = vunpack.c.l.b16 %v385
  %v3047 = vunpack.c.h.b16 %v385
  %v3048 = vunpack.c.l.b16 %v386
  %v3049 = vunpack.c.h.b16 %v386
  %v3050 = vunpack.c.l.b16 %v387
  %v3051 = vunpack.c.h.b16 %v387
  %v3052 = vunpack.c.l.b16 %v388
  %v3053 = vunpack.c.h.b16 %v388
  %v3054 = vunpack.c.l.b16 %v389
  %v3055 = vunpack.c.h.b16 %v389
  %v3056 = vunpack.c.l.b16 %v390
  %v3057 = vunpack.c.h.b16 %v390
  %v3058 = vunpack.c.l.b16 %v391
  %v3059 = vunpack.c.h.b16 %v391
  %v3060 = vunpack.c.l.b16 %v392
  %v3061 = vunpack.c.h.b16 %v392
  %v3062 = vunpack.c.l.b16 %v393
  %v3063 = vunpack.c.h.b16 %v393
  %v3064 = vunpack.c.l.b16 %v394
  %v3065 = vunpack.c.h.b16 %v394
  %v3066 = vunpack.c.l.b16 %v395
  %v3067 = vunpack.c.h.b16 %v395
  %v3068 = vunpack.c.l.b16 %v396
  %v3069 = vunpack.c.h.b16 %v396
  %v3070 = vunpack.c.l.b16 %v397
  %v3071 = vunpack.c.h.b16 %v397
  %v3072 = vunpack.c.l.b16 %v398
  %v3073 = vunpack.c.h.b16 %v398
  %v3074 = vunpack.c.l.b16 %v399
  %v3075 = vunpack.c.h.b16 %v399
  %v3076 = vunpack.c.l.b16 %v400
  %v3077 = vunpack.c.h.b16 %v400
  %v3078 = vunpack.c.l.b16 %v401
  %v3079 = vunpack.c.h.b16 %v401
  %v3080 = vunpack.c.l.b16 %v402
  %v3081 = vunpack.c.h.b16 %v402
  %v3082 = vunpack.c.l.b16 %v403
  %v3083 = vunpack.c.h.b16 %v403
  %v3084 = vunpack.c.l.b16 %v404
  %v3085 = vunpack.c.h.b16 %v404
  %v3086 = vunpack.c.l.b16 %v405
  %v3087 = vunpack.c.h.b16 %v405
  %v3088 = vunpack.c.l.b16 %v406
  %v3089 = vunpack.c.h.b16 %v406
  %v3090 = vunpack.c.l.b16 %v407
  %v3091 = vunpack.c.h.b16 %v407
  %v3092 = vunpack.c.l.b16 %v408
  %v3093 = vunpack.c.h.b16 %v408
  %v3094 = vunpack.c.l.b16 %v409
  %v3095 = vunpack.c.h.b16 %v409
  %v3096 = vunpack.c.l.b16 %v410
  %v3097 = vunpack.c.h.b16 %v410
  %v3098 = vunpack.c.l.b16 %v411
  %v3099 = vunpack.c.h.b16 %v411
  %v3100 = vunpack.c.l.b16 %v412
  %v3101 = vunpack.c.h.b16 %v412
  %v3102 = vunpack.c.l.b16 %v413
  %v3103 = vunpack.c.h.b16 %v413
  %v3104 = vunpack.c.l.b16 %v414
  %v3105 = vunpack.c.h.b16 %v414
  %v3106 = vunpack.c.l.b16 %v415
  %v3107 = vunpack.c.h.b16 %v415
  %v3108 = vunpack.c.l.b16 %v416
  %v3109 = vunpack.c.h.b16 %v416
  %v3110 = vunpack.c.l.b16 %v417
  %v3111 = vunpack.c.h.b16 %v417
  %v3112 = vunpack.c.l.b16 %v418
  %v3113 = vunpack.c.h.b16 %v418
  %v3114 = vunpack.c.l.b16 %v419
  %v3115 = vunpack.c.h.b16 %v419
  %v3116 = vunpack.c.l.b16 %v420
  %v3117 = vunpack.c.h.b16 %v420
  %v3118 = vunpack.c.l.b16 %v421
  %v3119 = vunpack.c.h.b16 %v421
  %v3120 = vunpack.c.l.b16 %v422
  %v3121 = vunpack.c.h.b16 %v422
  %v3122 = vunpack.c.l.b16 %v423
  %v3123 = vunpack.c.h.b16 %v423
  %v3124 = vunpack.c.l.b16 %v424
  %v3125 = vunpack.c.h.b16 %v424
  %v3126 = vunpack.c.l.b16 %v425
  %v3127 = vunpack.c.h.b16 %v425
  %v3128 = vunpack.c.l.b16 %v426
  %v3129 = vunpack.c.h.b16 %v426
  %v3130 = vunpack.c.l.b16 %v427
  %v3131 = vunpack.c.h.b16 %v427
  %v3132 = vunpack.c.l.b16 %v428
  %v3133 = vunpack.c.h.b16 %v428
  %v3134 = vunpack.c.l.b16 %v429
  %v3135 = vunpack.c.h.b16 %v429
  %v3136 = vunpack.c.l.b16 %v430
  %v3137 = vunpack.c.h.b16 %v430
  %v3138 = vunpack.c.l.b16 %v431
  %v3139 = vunpack.c.h.b16 %v431
  %v3140 = vunpack.c.l.b16 %v432
  %v3141 = vunpack.c.h.b16 %v432
  %v3142 = vunpack.c.l.b16 %v433
  %v3143 = vunpack.c.h.b16 %v433
  %v3144 = vunpack.c.l.b16 %v434
  %v3145 = vunpack.c.h.b16 %v434
  %v3146 = vunpack.c.l.b16 %v435
  %v3147 = vunpack.c.h.b16 %v435
  %v3148 = vunpack.c.l.b16 %v436
  %v3149 = vunpack.c.h.b16 %v436
  %v3150 = vunpack.c.l.b16 %v437
  %v3151 = vunpack.c.h.b16 %v437
  %v3152 = vunpack.c.l.b16 %v438
  %v3153 = vunpack.c.h.b16 %v438
  %v3154 = vunpack.c.l.b16 %v439
  %v3155 = vunpack.c.h.b16 %v439
  %v3156 = vunpack.c.l.b16 %v440
  %v3157 = vunpack.c.h.b16 %v440
  %v3158 = vunpack.c.l.b16 %v441
  %v3159 = vunpack.c.h.b16 %v441
  %v3160 = vunpack.c.l.b16 %v442
  %v3161 = vunpack.c.h.b16 %v442
  %v3162 = vunpack.c.l.b16 %v443
  %v3163 = vunpack.c.h.b16 %v443
  %v3164 = vunpack.c.l.b16 %v444
  %v3165 = vunpack.c.h.b16 %v444
  %v3166 = vunpack.c.l.b16 %v445
  %v3167 = vunpack.c.h.b16 %v445
  %v3168 = vunpack.c.l.b16 %v446
  %v3169 = vunpack.c.h.b16 %v446
  %v3170 = vunpack.c.l.b16 %v447
  %v3171 = vunpack.c.h.b16 %v447
  %v3172 = vunpack.c.l.b16 %v448
  %v3173 = vunpack.c.h.b16 %v448
  %v3174 = vunpack.c.l.b16 %v449
  %v3175 = vunpack.c.h.b16 %v449
  %v3176 = vunpack.c.l.b16 %v450
  %v3177 = vunpack.c.h.b16 %v450
  %v3178 = vunpack.c.l.b16 %v451
  %v3179 = vunpack.c.h.b16 %v451
  %v3180 = vunpack.c.l.b16 %v452
  %v3181 = vunpack.c.h.b16 %v452
  %v3182 = vunpack.c.l.b16 %v453
  %v3183 = vunpack.c.h.b16 %v453
  %v3184 = vunpack.c.l.b16 %v454
  %v3185 = vunpack.c.h.b16 %v454
  %v3186 = vunpack.c.l.b16 %v455
  %v3187 = vunpack.c.h.b16 %v455
  %v3188 = vunpack.c.l.b16 %v456
  %v3189 = vunpack.c.h.b16 %v456
  %v3190 = vunpack.c.l.b16 %v457
  %v3191 = vunpack.c.h.b16 %v457
  %v3192 = vunpack.c.l.b16 %v458
  %v3193 = vunpack.c.h.b16 %v458
  %v3194 = vunpack.c.l.b16 %v459
  %v3195 = vunpack.c.h.b16 %v459
  %v3196 = vunpack.c.l.b16 %v460
  %v3197 = vunpack.c.h.b16 %v460
  %v3198 = vunpack.c.l.b16 %v461
  %v3199 = vunpack.c.h.b16 %v461
  %v3200 = vunpack.c.l.b16 %v462
  %v3201 = vunpack.c.h.b16 %v462
  %v3202 = vunpack.c.l.b16 %v463
  %v3203 = vunpack.c.h.b16 %v463
  %v3204 = vunpack.c.l.b16 %v464
  %v3205 = vunpack.c.h.b16 %v464
  %v3206 = vunpack.c.l.b16 %v465
  %v3207 = vunpack.c.h.b16 %v465
  %v3208 = vunpack.c.l.b16 %v466
  %v3209 = vunpack.c.h.b16 %v466
  %v3210 = vunpack.c.l.b16 %v467
  %v3211 = vunpack.c.h.b16 %v467
  %v3212 = vunpack.c.l.b16 %v468
  %v3213 = vunpack.c.h.b16 %v468
  %v3214 = vunpack.c.l.b16 %v469
  %v3215 = vunpack.c.h.b16 %v469
  %v3216 = vunpack.c.l.b16 %v470
  %v3217 = vunpack.c.h.b16 %v470
  %v3218 = vunpack.c.l.b16 %v471
  %v3219 = vunpack.c.h.b16 %v471
  %v3220 = vunpack.c.l.b16 %v472
  %v3221 = vunpack.c.h.b16 %v472
  %v3222 = vunpack.c.l.b16 %v473
  %v3223 = vunpack.c.h.b16 %v473
  %v3224 = vunpack.c.l.b16 %v474
  %v3225 = vunpack.c.h.b16 %v474
  %v3226 = vunpack.c.l.b16 %v475
  %v3227 = vunpack.c.h.b16 %v475
  %v3228 = vunpack.c.l.b16 %v476
  %v3229 = vunpack.c.h.b16 %v476
  %v3230 = vunpack.c.l.b16 %v477
  %v3231 = vunpack.c.h.b16 %v477
  %v3232 = vunpack.c.l.b16 %v478
  %v3233 = vunpack.c.h.b16 %v478
  %v3234 = vunpack.c.l.b16 %v479
  %v3235 = vunpack.c.h.b16 %v479
  %v3236 = vunpack.c.l.b16 %v480
  %v3237 = vunpack.c.h.b16 %v480
  %v3238 = vunpack.c.l.b16 %v481
  %v3239 = vunpack.c.h.b16 %v481
  %v3240 = vunpack.c.l.b16 %v482
  %v3241 = vunpack.c.h.b16 %v482
  %v3242 = vunpack.c.l.b16 %v483
  %v3243 = vunpack.c.h.b16 %v483
  %v3244 = vunpack.c.l.b16 %v484
  %v3245 = vunpack.c.h.b16 %v484
  %v3246 = vunpack.c.l.b16 %v485
  %v3247 = vunpack.c.h.b16 %v485
  %v3248 = vunpack.c.l.b16 %v486
  %v3249 = vunpack.c.h.b16 %v486
  %v3250 = vunpack.c.l.b16 %v487
  %v3251 = vunpack.c.h.b16 %v487
  %v3252 = vunpack.c.l.b16 %v488
  %v3253 = vunpack.c.h.b16 %v488
  %v3254 = vunpack.c.l.b16 %v489
  %v3255 = vunpack.c.h.b16 %v489
  %v3256 = vunpack.c.l.b16 %v490
  %v3257 = vunpack.c.h.b16 %v490
  %v3258 = vunpack.c.l.b16 %v491
  %v3259 = vunpack.c.h.b16 %v491
  %v3260 = vunpack.c.l.b16 %v492
  %v3261 = vunpack.c.h.b16 %v492
  %v3262 = vunpack.c.l.b16 %v493
  %v3263 = vunpack.c.h.b16 %v493
  %v3264 = vunpack.c.l.b16 %v494
  %v3265 = vunpack.c.h.b16 %v494
  %v3266 = vunpack.c.l.b16 %v495
  %v3267 = vunpack.c.h.b16 %v495
  %v3268 = vunpack.c.l.b16 %v496
  %v3269 = vunpack.c.h.b16 %v496
  %v3270 = vunpack.c.l.b16 %v497
  %v3271 = vunpack.c.h.b16 %v497
  %v3272 = vunpack.c.l.b16 %v498
  %v3273 = vunpack.c.h.b16 %v498
  %v3274 = vunpack.c.l.b16 %v499
  %v3275 = vunpack.c.h.b16 %v499
  %v3276 = vunpack.c.l.b16 %v500
  %v3277 = vunpack.c.h.b16 %v500
  %v3278 = vunpack.c.l.b16 %v501
  %v3279 = vunpack.c.h.b16 %v501
  %v3280 = vunpack.c.l.b16 %v502
  %v3281 = vunpack.c.h.b16 %v502
  %v3282 = vunpack.c.l.b16 %v503
  %v3283 = vunpack.c.h.b16 %v503
  %v3284 = vunpack.c.l.b16 %v504
  %v3285 = vunpack.c.h.b16 %v504
  %v3286 = vunpack.c.l.b16 %v505
  %v3287 = vunpack.c.h.b16 %v505
  %v3288 = vunpack.c.l.b16 %v506
  %v3289 = vunpack.c.h.b16 %v506
  %v3290 = vunpack.c.l.b16 %v507
  %v3291 = vunpack.c.h.b16 %v507
  %v3292 = vunpack.c.l.b16 %v508
  %v3293 = vunpack.c.h.b16 %v508
  %v3294 = vunpack.c.l.b16 %v509
  %v3295 = vunpack.c.h.b16 %v509
  %v3296 = vunpack.c.l.b16 %v510
  %v3297 = vunpack.c.h.b16 %v510
  %v3298 = vunpack.c.l.b16 %v511
  %v3299 = vunpack.c.h.b16 %v511
  %v3300 = vunpack.c.l.b16 %v512
  %v3301 = vunpack.c.h.b16 %v512
  %v3302 = vunpack.c.l.b16 %v513
  %v3303 = vunpack.c.h.b16 %v513
  %v3304 = vunpack.c.l.b16 %v514
  %v3305 = vunpack.c.h.b16 %v514
  %v3306 = vunpack.c.l.b16 %v515
  %v3307 = vunpack.c.h.b16 %v515
  %v3308 = vunpack.c.l.b16 %v516
  %v3309 = vunpack.c.h.b16 %v516
  %v3310 = vunpack.c.l.b16 %v517
  %v3311 = vunpack.c.h.b16 %v517
  %v3312 = vunpack.c.l.b16 %v518
  %v3313 = vunpack.c.h.b16 %v518
  %v3314 = vunpack.c.l.b16 %v519
  %v3315 = vunpack.c.h.b16 %v519
  %v3316 = vunpack.c.l.b16 %v520
  %v3317 = vunpack.c.h.b16 %v520
  %v3318 = vunpack.c.l.b16 %v521
  %v3319 = vunpack.c.h.b16 %v521
  %v3320 = vunpack.c.l.b16 %v522
  %v3321 = vunpack.c.h.b16 %v522
  %v3322 = vunpack.c.l.b16 %v523
  %v3323 = vunpack.c.h.b16 %v523
  %v3324 = vunpack.c.l.b16 %v524
  %v3325 = vunpack.c.h.b16 %v524
  %v3326 = vunpack.c.l.b16 %v525
  %v3327 = vunpack.c.h.b16 %v525
  %v3328 = vunpack.c.l.b16 %v526
  %v3329 = vunpack.c.h.b16 %v526
  %v3330 = vunpack.c.l.b16 %v527
  %v3331 = vunpack.c.h.b16 %v527
  %v3332 = vunpack.c.l.b16 %v528
  %v3333 = vunpack.c.h.b16 %v528
  %v3334 = vunpack.c.l.b16 %v529
  %v3335 = vunpack.c.h.b16 %v529
  %v3336 = vunpack.c.l.b16 %v530
  %v3337 = vunpack.c.h.b16 %v530
  %v3338 = vunpack.c.l.b16 %v531
  %v3339 = vunpack.c.h.b16 %v531
  %v3340 = vunpack.c.l.b16 %v532
  %v3341 = vunpack.c.h.b16 %v532
  %v3342 = vunpack.c.l.b16 %v533
  %v3343 = vunpack.c.h.b16 %v533
  %v3344 = vunpack.c.l.b16 %v534
  %v3345 = vunpack.c.h.b16 %v534
  %v3346 = vunpack.c.l.b16 %v535
  %v3347 = vunpack.c.h.b16 %v535
  %v3348 = vunpack.c.l.b16 %v536
  %v3349 = vunpack.c.h.b16 %v536
  %v3350 = vunpack.c.l.b16 %v537
  %v3351 = vunpack.c.h.b16 %v537
  %v3352 = vunpack.c.l.b16 %v538
  %v3353 = vunpack.c.h.b16 %v538
  %v3354 = vunpack.c.l.b16 %v539
  %v3355 = vunpack.c.h.b16 %v539
  %v3356 = vunpack.c.l.b16 %v540
  %v3357 = vunpack.c.h.b16 %v540
  %v3358 = vunpack.c.l.b16 %v541
  %v3359 = vunpack.c.h.b16 %v541
  %v3360 = vunpack.c.l.b16 %v542
  %v3361 = vunpack.c.h.b16 %v542
  %v3362 = vunpack.c.l.b16 %v543
  %v3363 = vunpack.c.h.b16 %v543
  %v3364 = vunpack.c.l.b16 %v544
  %v3365 = vunpack.c.h.b16 %v544
  %v3366 = vunpack.c.l.b16 %v545
  %v3367 = vunpack.c.h.b16 %v545
  %v3368 = vunpack.c.l.b16 %v546
  %v3369 = vunpack.c.h.b16 %v546
  %v3370 = vunpack.c.l.b16 %v547
  %v3371 = vunpack.c.h.b16 %v547
  %v3372 = vunpack.c.l.b16 %v548
  %v3373 = vunpack.c.h.b16 %v548
  %v3374 = vunpack.c.l.b16 %v549
  %v3375 = vunpack.c.h.b16 %v549
  %v3376 = vunpack.c.l.b16 %v550
  %v3377 = vunpack.c.h.b16 %v550
  %v3378 = vunpack.c.l.b16 %v551
  %v3379 = vunpack.c.h.b16 %v551
  %v3380 = vunpack.c.l.b16 %v552
  %v3381 = vunpack.c.h.b16 %v552
  %v3382 = vunpack.c.l.b16 %v553
  %v3383 = vunpack.c.h.b16 %v553
  %v3384 = vunpack.c.l.b16 %v554
  %v3385 = vunpack.c.h.b16 %v554
  %v3386 = vunpack.c.l.b16 %v555
  %v3387 = vunpack.c.h.b16 %v555
  %v3388 = vunpack.c.l.b16 %v556
  %v3389 = vunpack.c.h.b16 %v556
  %v3390 = vunpack.c.l.b16 %v557
  %v3391 = vunpack.c.h.b16 %v557
  %v3392 = vunpack.c.l.b16 %v558
  %v3393 = vunpack.c.h.b16 %v558
  %v3394 = vunpack.c.l.b16 %v559
  %v3395 = vunpack.c.h.b16 %v559
  %v3396 = vunpack.c.l.b16 %v560
  %v3397 = vunpack.c.h.b16 %v560
  %v3398 = vunpack.c.l.b16 %v561
  %v3399 = vunpack.c.h.b16 %v561
  %v3400 = vunpack.c.l.b16 %v562
  %v3401 = vunpack.c.h.b16 %v562
  %v3402 = vunpack.c.l.b16 %v563
  %v3403 = vunpack.c.h.b16 %v563
  %v3404 = vunpack.c.l.b16 %v564
  %v3405 = vunpack.c.h.b16 %v564
  %v3406 = vunpack.c.l.b16 %v565
  %v3407 = vunpack.c.h.b16 %v565
  %v3408 = vunpack.c.l.b16 %v566
  %v3409 = vunpack.c.h.b16 %v566
  %v3410 = vunpack.c.l.b16 %v567
  %v3411 = vunpack.c.h.b16 %v567
  %v3412 = vunpack.c.l.b16 %v568
  %v3413 = vunpack.c.h.b16 %v568
  %v3414 = vunpack.c.l.b16 %v569
  %v3415 = vunpack.c.h.b16 %v569
  %v3416 = vunpack.c.l.b16 %v570
  %v3417 = vunpack.c.h.b16 %v570
  %v3418 = vunpack.c.l.b16 %v571
  %v3419 = vunpack.c.h.b16 %v571
  %v3420 = vunpack.c.l.b16 %v572
  %v3421 = vunpack.c.h.b16 %v572
  %v3422 = vunpack.c.l.b16 %v573
  %v3423 = vunpack.c.h.b16 %v573
  %v3424 = vunpack.c.l.b16 %v574
  %v3425 = vunpack.c.h.b16 %v574
  %v3426 = vunpack.c.l.b16 %v575
  %v3427 = vunpack.c.h.b16 %v575
  %v3428 = vunpack.c.l.b16 %v576
  %v3429 = vunpack.c.h.b16 %v576
  %v3430 = vunpack.c.l.b16 %v577
  %v3431 = vunpack.c.h.b16 %v577
  %v3432 = vunpack.c.l.b16 %v578
  %v3433 = vunpack.c.h.b16 %v578
  %v3434 = vunpack.c.l.b16 %v579
  %v3435 = vunpack.c.h.b16 %v579
  %v3436 = vunpack.c.l.b16 %v580
  %v3437 = vunpack.c.h.b16 %v580
  %v3438 = vunpack.c.l.b16 %v581
  %v3439 = vunpack.c.h.b16 %v581
  %v3440 = vunpack.c.l.b16 %v582
  %v3441 = vunpack.c.h.b16 %v582
  %v3442 = vunpack.c.l.b16 %v583
  %v3443 = vunpack.c.h.b16 %v583
  %v3444 = vunpack.c.l.b16 %v584
  %v3445 = vunpack.c.h.b16 %v584
  %v3446 = vunpack.c.l.b16 %v585
  %v3447 = vunpack.c.h.b16 %v585
  %v3448 = vunpack.c.l.b16 %v586
  %v3449 = vunpack.c.h.b16 %v586
  %v3450 = vunpack.c.l.b16 %v587
  %v3451 = vunpack.c.h.b16 %v587
  %v3452 = vunpack.c.l.b16 %v588
  %v3453 = vunpack.c.h.b16 %v588
  %v3454 = vunpack.c.l.b16 %v589
  %v3455 = vunpack.c.h.b16 %v589
  %v3456 = vunpack.c.l.b16 %v590
  %v3457 = vunpack.c.h.b16 %v590
  %v3458 = vunpack.c.l.b16 %v591
  %v3459 = vunpack.c.h.b16 %v591
  %v3460 = vunpack.c.l.b16 %v592
  %v3461 = vunpack.c.h.b16 %v592
  %v3462 = vunpack.c.l.b16 %v593
  %v3463 = vunpack.c.h.b16 %v593
  %v3464 = vunpack.c.l.b16 %v594
  %v3465 = vunpack.c.h.b16 %v594
  %v3466 = vunpack.c.l.b16 %v595
  %v3467 = vunpack.c.h.b16 %v595
  %v3468 = vunpack.c.l.b16 %v596
  %v3469 = vunpack.c.h.b16 %v596
  %v3470 = vunpack.c.l.b16 %v597
  %v3471 = vunpack.c.h.b16 %v597
  %v3472 = vunpack.c.l.b16 %v598
  %v3473 = vunpack.c.h.b16 %v598
  %v3474 = vunpack.c.l.b16 %v599
  %v3475 = vunpack.c.h.b16 %v599
  %v3476 = vunpack.c.l.b16 %v600
  %v3477 = vunpack.c.h.b16 %v600
  %v3478 = vunpack.c.l.b16 %v601
  %v3479 = vunpack.c.h.b16 %v601
  %v3480 = vunpack.c.l.b16 %v602
  %v3481 = vunpack.c.h.b16 %v602
  %v3482 = vunpack.c.l.b16 %v603
  %v3483 = vunpack.c.h.b16 %v603
  %v3484 = vunpack.c.l.b16 %v604
  %v3485 = vunpack.c.h.b16 %v604
  %v3486 = vunpack.c.l.b16 %v605
  %v3487 = vunpack.c.h.b16 %v605
  %v3488 = vunpack.c.l.b16 %v606
  %v3489 = vunpack.c.h.b16 %v606
  %v3490 = vunpack.c.l.b16 %v607
  %v3491 = vunpack.c.h.b16 %v607
  %v3492 = vunpack.c.l.b16 %v608
  %v3493 = vunpack.c.h.b16 %v608
  %v3494 = vunpack.c.l.b16 %v609
  %v3495 = vunpack.c.h.b16 %v609
  %v3496 = vunpack.c.l.b16 %v610
  %v3497 = vunpack.c.h.b16 %v610
  %v3498 = vunpack.c.l.b16 %v611
  %v3499 = vunpack.c.h.b16 %v611
  %v3500 = vunpack.c.l.b16 %v612
  %v3501 = vunpack.c.h.b16 %v612
  %v3502 = vunpack.c.l.b16 %v613
  %v3503 = vunpack.c.h.b16 %v613
  %v3504 = vunpack.c.l.b16 %v614
  %v3505 = vunpack.c.h.b16 %v614
  %v3506 = vunpack.c.l.b16 %v615
  %v3507 = vunpack.c.h.b16 %v615
  %v3508 = vunpack.c.l.b16 %v616
  %v3509 = vunpack.c.h.b16 %v616
  %v3510 = vunpack.c.l.b16 %v617
  %v3511 = vunpack.c.h.b16 %v617
  %v3512 = vunpack.c.l.b16 %v618
  %v3513 = vunpack.c.h.b16 %v618
  %v3514 = vunpack.c.l.b16 %v619
  %v3515 = vunpack.c.h.b16 %v619
  %v3516 = vunpack.c.l.b16 %v620
  %v3517 = vunpack.c.h.b16 %v620
  %v3518 = vunpack.c.l.b16 %v621
  %v3519 = vunpack.c.h.b16 %v621
  %v3520 = vunpack.c.l.b16 %v622
  %v3521 = vunpack.c.h.b16 %v622
  %v3522 = vunpack.c.l.b16 %v623
  %v3523 = vunpack.c.h.b16 %v623
  %v3524 = vunpack.c.l.b16 %v624
  %v3525 = vunpack.c.h.b16 %v624
  %v3526 = vunpack.c.l.b16 %v625
  %v3527 = vunpack.c.h.b16 %v625
  %v3528 = vunpack.c.l.b16 %v626
  %v3529 = vunpack.c.h.b16 %v626
  %v3530 = vunpack.c.l.b16 %v627
  %v3531 = vunpack.c.h.b16 %v627
  %v3532 = vunpack.c.l.b16 %v628
  %v3533 = vunpack.c.h.b16 %v628
  %v3534 = vunpack.c.l.b16 %v629
  %v3535 = vunpack.c.h.b16 %v629
  %v3536 = vunpack.c.l.b16 %v630
  %v3537 = vunpack.c.h.b16 %v630
  %v3538 = vunpack.c.l.b16 %v631
  %v3539 = vunpack.c.h.b16 %v631
  %v3540 = vunpack.c.l.b16 %v632
  %v3541 = vunpack.c.h.b16 %v632
  %v3542 = vunpack.c.l.b16 %v633
  %v3543 = vunpack.c.h.b16 %v633
  %v3544 = vunpack.c.l.b16 %v634
  %v3545 = vunpack.c.h.b16 %v634
  %v3546 = vunpack.c.l.b16 %v635
  %v3547 = vunpack.c.h.b16 %v635
  %v3548 = vunpack.c.l.b16 %v636
  %v3549 = vunpack.c.h.b16 %v636
  %v3550 = vunpack.c.l.b16 %v637
  %v3551 = vunpack.c.h.b16 %v637
  %v3552 = vunpack.c.l.b16 %v638
  %v3553 = vunpack.c.h.b16 %v638
  %v3554 = vunpack.c.l.b16 %v639
  %v3555 = vunpack.c.h.b16 %v639
  %v3556 = vunpack.c.l.b16 %v640
  %v3557 = vunpack.c.h.b16 %v640
  %v3558 = vunpack.c.l.b16 %v641
  %v3559 = vunpack.c.h.b16 %v641
  %v3560 = vunpack.c.l.b16 %v642
  %v3561 = vunpack.c.h.b16 %v642
  %v3562 = vunpack.c.l.b16 %v643
  %v3563 = vunpack.c.h.b16 %v643
  %v3564 = vunpack.c.l.b16 %v644
  %v3565 = vunpack.c.h.b16 %v644
  %v3566 = vunpack.c.l.b16 %v645
  %v3567 = vunpack.c.h.b16 %v645
  %v3568 = vunpack.c.l.b16 %v646
  %v3569 = vunpack.c.h.b16 %v646
  %v3570 = vunpack.c.l.b16 %v647
  %v3571 = vunpack.c.h.b16 %v647
  %v3572 = vunpack.c.l.b16 %v648
  %v3573 = vunpack.c.h.b16 %v648
  %v3574 = vunpack.c.l.b16 %v649
  %v3575 = vunpack.c.h.b16 %v649
  %v3576 = vunpack.c.l.b16 %v650
  %v3577 = vunpack.c.h.b16 %v650
  %v3578 = vunpack.c.l.b16 %v651
  %v3579 = vunpack.c.h.b16 %v651
  %v3580 = vunpack.c.l.b16 %v652
  %v3581 = vunpack.c.h.b16 %v652
  %v3582 = vunpack.c.l.b16 %v653
  %v3583 = vunpack.c.h.b16 %v653
  %v3584 = vunpack.c.l.b16 %v654
  %v3585 = vunpack.c.h.b16 %v654
  %v3586 = vunpack.c.l.b16 %v655
  %v3587 = vunpack.c.h.b16 %v655
  %v3588 = vunpack.c.l.b16 %v656
  %v3589 = vunpack.c.h.b16 %v656
  %v3590 = vunpack.c.l.b16 %v657
  %v3591 = vunpack.c.h.b16 %v657
  %v3592 = vunpack.c.l.b16 %v658
  %v3593 = vunpack.c.h.b16 %v658
  %v3594 = vunpack.c.l.b16 %v659
  %v3595 = vunpack.c.h.b16 %v659
  %v3596 = vunpack.c.l.b16 %v660
  %v3597 = vunpack.c.h.b16 %v660
  %v3598 = vunpack.c.l.b16 %v661
  %v3599 = vunpack.c.h.b16 %v661
  %v3600 = vunpack.c.l.b16 %v662
  %v3601 = vunpack.c.h.b16 %v662
  %v3602 = vunpack.c.l.b16 %v663
  %v3603 = vunpack.c.h.b16 %v663
  %v3604 = vunpack.c.l.b16 %v664
  %v3605 = vunpack.c.h.b16 %v664
  %v3606 = vunpack.c.l.b16 %v665
  %v3607 = vunpack.c.h.b16 %v665
  %v3608 = vunpack.c.l.b16 %v666
  %v3609 = vunpack.c.h.b16 %v666
  %v3610 = vunpack.c.l.b16 %v667
  %v3611 = vunpack.c.h.b16 %v667
  %v3612 = vunpack.c.l.b16 %v668
  %v3613 = vunpack.c.h.b16 %v668
  %v3614 = vunpack.c.l.b16 %v669
  %v3615 = vunpack.c.h.b16 %v669
  %v3616 = vunpack.c.l.b16 %v670
  %v3617 = vunpack.c.h.b16 %v670
  %v3618 = vunpack.c.l.b16 %v671
  %v3619 = vunpack.c.h.b16 %v671
  %v3620 = vunpack.c.l.b16 %v672
  %v3621 = vunpack.c.h.b16 %v672
  %v3622 = vunpack.c.l.b16 %v673
  %v3623 = vunpack.c.h.b16 %v673
  %v3624 = vunpack.c.l.b16 %v674
  %v3625 = vunpack.c.h.b16 %v674
  %v3626 = vunpack.c.l.b16 %v675
  %v3627 = vunpack.c.h.b16 %v675
  %v3628 = vunpack.c.l.b16 %v676
  %v3629 = vunpack.c.h.b16 %v676
  %v3630 = vunpack.c.l.b16 %v677
  %v3631 = vunpack.c.h.b16 %v677
  %v3632 = vunpack.c.l.b16 %v678
  %v3633 = vunpack.c.h.b16 %v678
  %v3634 = vunpack.c.l.b16 %v679
  %v3635 = vunpack.c.h.b16 %v679
  %v3636 = vunpack.c.l.b16 %v680
  %v3637 = vunpack.c.h.b16 %v680
  %v3638 = vunpack.c.l.b16 %v681
  %v3639 = vunpack.c.h.b16 %v681
  %v3640 = vunpack.c.l.b16 %v682
  %v3641 = vunpack.c.h.b16 %v682
  %v3642 = vunpack.c.l.b16 %v683
  %v3643 = vunpack.c.h.b16 %v683
  %v3644 = vunpack.c.l.b16 %v684
  %v3645 = vunpack.c.h.b16 %v684
  %v3646 = vunpack.c.l.b16 %v685
  %v3647 = vunpack.c.h.b16 %v685
  %v3648 = vunpack.c.l.b16 %v686
  %v3649 = vunpack.c.h.b16 %v686
  %v3650 = vunpack.c.l.b16 %v687
  %v3651 = vunpack.c.h.b16 %v687
  %v3652 = vunpack.c.l.b16 %v688
  %v3653 = vunpack.c.h.b16 %v688
  %v3654 = vunpack.c.l.b16 %v689
  %v3655 = vunpack.c.h.b16 %v689
  %v3656 = vunpack.c.l.b16 %v690
  %v3657 = vunpack.c.h.b16 %v690
  %v3658 = vunpack.c.l.b16 %v691
  %v3659 = vunpack.c.h.b16 %v691
  %v3660 = vunpack.c.l.b16 %v692
  %v3661 = vunpack.c.h.b16 %v692
  %v3662 = vunpack.c.l.b16 %v693
  %v3663 = vunpack.c.h.b16 %v693
  %v3664 = vunpack.c.l.b16 %v694
  %v3665 = vunpack.c.h.b16 %v694
  %v3666 = vunpack.c.l.b16 %v695
  %v3667 = vunpack.c.h.b16 %v695
  %v3668 = vunpack.c.l.b16 %v696
  %v3669 = vunpack.c.h.b16 %v696
  %v3670 = vunpack.c.l.b16 %v697
  %v3671 = vunpack.c.h.b16 %v697
  %v3672 = vunpack.c.l.b16 %v698
  %v3673 = vunpack.c.h.b16 %v698
  %v3674 = vunpack.c.l.b16 %v699
  %v3675 = vunpack.c.h.b16 %v699
  %v3676 = vunpack.c.l.b16 %v700
  %v3677 = vunpack.c.h.b16 %v700
  %v3678 = vunpack.c.l.b16 %v701
  %v3679 = vunpack.c.h.b16 %v701
  %v3680 = vunpack.c.l.b16 %v702
  %v3681 = vunpack.c.h.b16 %v702
  %v3682 = vunpack.c.l.b16 %v703
  %v3683 = vunpack.c.h.b16 %v703
  %v3684 = vunpack.c.l.b16 %v704
  %v3685 = vunpack.c.h.b16 %v704
  %v3686 = vunpack.c.l.b16 %v705
  %v3687 = vunpack.c.h.b16 %v705
  %v3688 = vunpack.c.l.b16 %v706
  %v3689 = vunpack.c.h.b16 %v706
  %v3690 = vunpack.c.l.b16 %v707
  %v3691 = vunpack.c.h.b16 %v707
  %v3692 = vunpack.c.l.b16 %v708
  %v3693 = vunpack.c.h.b16 %v708
  %v3694 = vunpack.c.l.b16 %v709
  %v3695 = vunpack.c.h.b16 %v709
  %v3696 = vunpack.c.l.b16 %v710
  %v3697 = vunpack.c.h.b16 %v710
  %v3698 = vunpack.c.l.b16 %v711
  %v3699 = vunpack.c.h.b16 %v711
  %v3700 = vunpack.c.l.b16 %v712
  %v3701 = vunpack.c.h.b16 %v712
  %v3702 = vunpack.c.l.b16 %v713
  %v3703 = vunpack.c.h.b16 %v713
  %v3704 = vunpack.c.l.b16 %v714
  %v3705 = vunpack.c.h.b16 %v714
  %v3706 = vunpack.c.l.b16 %v715
  %v3707 = vunpack.c.h.b16 %v715
  %v3708 = vunpack.c.l.b16 %v716
  %v3709 = vunpack.c.h.b16 %v716
  %v3710 = vunpack.c.l.b16 %v717
  %v3711 = vunpack.c.h.b16 %v717
  %v3712 = vunpack.c.l.b16 %v718
  %v3713 = vunpack.c.h.b16 %v718
  %v3714 = vunpack.c.l.b16 %v719
  %v3715 = vunpack.c.h.b16 %v719
  %v3716 = vunpack.c.l.b16 %v720
  %v3717 = vunpack.c.h.b16 %v720
  %v3718 = vunpack.c.l.b16 %v721
  %v3719 = vunpack.c.h.b16 %v721
  %v3720 = vunpack.c.l.b16 %v722
  %v3721 = vunpack.c.h.b16 %v722
  %v3722 = vunpack.c.l.b16 %v723
  %v3723 = vunpack.c.h.b16 %v723
  %v3724 = vunpack.c.l.b16 %v724
  %v3725 = vunpack.c.h.b16 %v724
  %v3726 = vunpack.c.l.b16 %v725
  %v3727 = vunpack.c.h.b16 %v725
  %v3728 = vunpack.c.l.b16 %v726
  %v3729 = vunpack.c.h.b16 %v726
  %v3730 = vunpack.c.l.b16 %v727
  %v3731 = vunpack.c.h.b16 %v727
  %v3732 = vunpack.c.l.b16 %v728
  %v3733 = vunpack.c.h.b16 %v728
  %v3734 = vunpack.c.l.b16 %v729
  %v3735 = vunpack.c.h.b16 %v729
  %v3736 = vunpack.c.l.b16 %v730
  %v3737 = vunpack.c.h.b16 %v730
  %v3738 = vunpack.c.l.b16 %v731
  %v3739 = vunpack.c.h.b16 %v731
  %v3740 = vunpack.c.l.b16 %v732
  %v3741 = vunpack.c.h.b16 %v732
  %v3742 = vunpack.c.l.b16 %v733
  %v3743 = vunpack.c.h.b16 %v733
  %v3744 = vunpack.c.l.b16 %v734
  %v3745 = vunpack.c.h.b16 %v734
  %v3746 = vunpack.c.l.b16 %v735
  %v3747 = vunpack.c.h.b16 %v735
  %v3748 = vunpack.c.l.b16 %v736
  %v3749 = vunpack.c.h.b16 %v736
  %v3750 = vunpack.c.l.b16 %v737
  %v3751 = vunpack.c.h.b16 %v737
  %v3752 = vunpack.c.l.b16 %v738
  %v3753 = vunpack.c.h.b16 %v738
  %v3754 = vunpack.c.l.b16 %v739
  %v3755 = vunpack.c.h.b16 %v739
  %v3756 = vunpack.c.l.b16 %v740
  %v3757 = vunpack.c.h.b16 %v740
  %v3758 = vunpack.c.l.b16 %v741
  %v3759 = vunpack.c.h.b16 %v741
  %v3760 = vunpack.c.l.b16 %v742
  %v3761 = vunpack.c.h.b16 %v742
  %v3762 = vunpack.c.l.b16 %v743
  %v3763 = vunpack.c.h.b16 %v743
  %v3764 = vunpack.c.l.b16 %v744
  %v3765 = vunpack.c.h.b16 %v744
  %v3766 = vunpack.c.l.b16 %v745
  %v3767 = vunpack.c.h.b16 %v745
  %v3768 = vunpack.c.l.b16 %v746
  %v3769 = vunpack.c.h.b16 %v746
  %v3770 = vunpack.c.l.b16 %v747
  %v3771 = vunpack.c.h.b16 %v747
  %v3772 = vunpack.c.l.b16 %v748
  %v3773 = vunpack.c.h.b16 %v748
  %v3774 = vunpack.c.l.b16 %v749
  %v3775 = vunpack.c.h.b16 %v749
  %v3776 = vunpack.c.l.b16 %v750
  %v3777 = vunpack.c.h.b16 %v750
  %v3778 = vunpack.c.l.b16 %v751
  %v3779 = vunpack.c.h.b16 %v751
  %v3780 = vunpack.c.l.b16 %v752
  %v3781 = vunpack.c.h.b16 %v752
  %v3782 = vunpack.c.l.b16 %v753
  %v3783 = vunpack.c.h.b16 %v753
  %v3784 = vunpack.c.l.b16 %v754
  %v3785 = vunpack.c.h.b16 %v754
  %v3786 = vunpack.c.l.b16 %v755
  %v3787 = vunpack.c.h.b16 %v755
  %v3788 = vunpack.c.l.b16 %v756
  %v3789 = vunpack.c.h.b16 %v756
  %v3790 = vunpack.c.l.b16 %v757
  %v3791 = vunpack.c.h.b16 %v757
  %v3792 = vunpack.c.l.b16 %v758
  %v3793 = vunpack.c.h.b16 %v758
  %v3794 = vunpack.c.l.b16 %v759
  %v3795 = vunpack.c.h.b16 %v759
  %v3796 = vunpack.c.l.b16 %v760
  %v3797 = vunpack.c.h.b16 %v760
  %v3798 = vunpack.c.l.b16 %v761
  %v3799 = vunpack.c.h.b16 %v761
  %v3800 = vunpack.c.l.b16 %v762
  %v3801 = vunpack.c.h.b16 %v762
  %v3802 = vunpack.c.l.b16 %v763
  %v3803 = vunpack.c.h.b16 %v763
  %v3804 = vunpack.c.l.b16 %v764
  %v3805 = vunpack.c.h.b16 %v764
  %v3806 = vunpack.c.l.b16 %v765
  %v3807 = vunpack.c.h.b16 %v765
  %v3808 = vunpack.c.l.b16 %v766
  %v3809 = vunpack.c.h.b16 %v766
  %v3810 = vunpack.c.l.b16 %v767
  %v3811 = vunpack.c.h.b16 %v767
  %v3812 = vunpack.c.l.b16 %v768
  %v3813 = vunpack.c.h.b16 %v768
  %v3814 = vunpack.c.l.b16 %v769
  %v3815 = vunpack.c.h.b16 %v769
  %v3816 = vunpack.c.l.b16 %v770
  %v3817 = vunpack.c.h.b16 %v770
  %v3818 = vunpack.c.l.b16 %v771
  %v3819 = vunpack.c.h.b16 %v771
  %v3820 = vunpack.c.l.b16 %v772
  %v3821 = vunpack.c.h.b16 %v772
  %v3822 = vunpack.c.l.b16 %v773
  %v3823 = vunpack.c.h.b16 %v773
  %v3824 = vunpack.c.l.b16 %v774
  %v3825 = vunpack.c.h.b16 %v774
  %v3826 = vunpack.c.l.b16 %v775
  %v3827 = vunpack.c.h.b16 %v775
  %v3828 = vunpack.c.l.b16 %v776
  %v3829 = vunpack.c.h.b16 %v776
  %v3830 = vunpack.c.l.b16 %v777
  %v3831 = vunpack.c.h.b16 %v777
  %v3832 = vunpack.c.l.b16 %v778
  %v3833 = vunpack.c.h.b16 %v778
  %v3834 = vunpack.c.l.b16 %v779
  %v3835 = vunpack.c.h.b16 %v779
  %v3836 = vunpack.c.l.b16 %v780
  %v3837 = vunpack.c.h.b16 %v780
  %v3838 = vunpack.c.l.b16 %v781
  %v3839 = vunpack.c.h.b16 %v781
  %v3840 = vunpack.c.l.b16 %v782
  %v3841 = vunpack.c.h.b16 %v782
  %v3842 = vunpack.c.l.b16 %v783
  %v3843 = vunpack.c.h.b16 %v783
  %v3844 = vunpack.c.l.b16 %v784
  %v3845 = vunpack.c.h.b16 %v784
  %v3846 = vunpack.c.l.b16 %v785
  %v3847 = vunpack.c.h.b16 %v785
  %v3848 = vunpack.c.l.b16 %v786
  %v3849 = vunpack.c.h.b16 %v786
  %v3850 = vunpack.c.l.b16 %v787
  %v3851 = vunpack.c.h.b16 %v787
  %v3852 = vunpack.c.l.b16 %v788
  %v3853 = vunpack.c.h.b16 %v788
  %v3854 = vunpack.c.l.b16 %v789
  %v3855 = vunpack.c.h.b16 %v789
  %v3856 = vunpack.c.l.b16 %v790
  %v3857 = vunpack.c.h.b16 %v790
  %v3858 = vunpack.c.l.b16 %v791
  %v3859 = vunpack.c.h.b16 %v791
  %v3860 = vunpack.c.l.b16 %v792
  %v3861 = vunpack.c.h.b16 %v792
  %v3862 = vunpack.c.l.b16 %v793
  %v3863 = vunpack.c.h.b16 %v793
  %v3864 = vunpack.c.l.b16 %v794
  %v3865 = vunpack.c.h.b16 %v794
  %v3866 = vunpack.c.l.b16 %v795
  %v3867 = vunpack.c.h.b16 %v795
  %v3868 = vunpack.c.l.b16 %v796
  %v3869 = vunpack.c.h.b16 %v796
  %v3870 = vunpack.c.l.b16 %v797
  %v3871 = vunpack.c.h.b16 %v797
  %v3872 = vunpack.c.l.b16 %v798
  %v3873 = vunpack.c.h.b16 %v798
  %v3874 = vunpack.c.l.b16 %v799
  %v3875 = vunpack.c.h.b16 %v799
  %v3876 = vunpack.c.l.b16 %v800
  %v3877 = vunpack.c.h.b16 %v800
  %v3878 = vunpack.c.l.b16 %v801
  %v3879 = vunpack.c.h.b16 %v801
  %v3880 = vunpack.c.l.b16 %v802
  %v3881 = vunpack.c.h.b16 %v802
  %v3882 = vunpack.c.l.b16 %v803
  %v3883 = vunpack.c.h.b16 %v803
  %v3884 = vunpack.c.l.b16 %v804
  %v3885 = vunpack.c.h.b16 %v804
  %v3886 = vunpack.c.l.b16 %v805
  %v3887 = vunpack.c.h.b16 %v805
  %v3888 = vunpack.c.l.b16 %v806
  %v3889 = vunpack.c.h.b16 %v806
  %v3890 = vunpack.c.l.b16 %v807
  %v3891 = vunpack.c.h.b16 %v807
  %v3892 = vunpack.c.l.b16 %v808
  %v3893 = vunpack.c.h.b16 %v808
  %v3894 = vunpack.c.l.b16 %v809
  %v3895 = vunpack.c.h.b16 %v809
  %v3896 = vunpack.c.l.b16 %v810
  %v3897 = vunpack.c.h.b16 %v810
  %v3898 = vunpack.c.l.b16 %v811
  %v3899 = vunpack.c.h.b16 %v811
  %v3900 = vunpack.c.l.b16 %v812
  %v3901 = vunpack.c.h.b16 %v812
  %v3902 = vunpack.c.l.b16 %v813
  %v3903 = vunpack.c.h.b16 %v813
  %v3904 = vunpack.c.l.b16 %v814
  %v3905 = vunpack.c.h.b16 %v814
  %v3906 = vunpack.c.l.b16 %v815
  %v3907 = vunpack.c.h.b16 %v815
  %v3908 = vunpack.c.l.b16 %v816
  %v3909 = vunpack.c.h.b16 %v816
  %v3910 = vunpack.c.l.b16 %v817
  %v3911 = vunpack.c.h.b16 %v817
  %v3912 = vunpack.c.l.b16 %v818
  %v3913 = vunpack.c.h.b16 %v818
  %v3914 = vunpack.c.l.b16 %v819
  %v3915 = vunpack.c.h.b16 %v819
  %v3916 = vunpack.c.l.b16 %v820
  %v3917 = vunpack.c.h.b16 %v820
  %v3918 = vunpack.c.l.b16 %v821
  %v3919 = vunpack.c.h.b16 %v821
  %v3920 = vunpack.c.l.b16 %v822
  %v3921 = vunpack.c.h.b16 %v822
  %v3922 = vunpack.c.l.b16 %v823
  %v3923 = vunpack.c.h.b16 %v823
  %v3924 = vunpack.c.l.b16 %v824
  %v3925 = vunpack.c.h.b16 %v824
  %v3926 = vunpack.c.l.b16 %v825
  %v3927 = vunpack.c.h.b16 %v825
  %v3928 = vunpack.c.l.b16 %v826
  %v3929 = vunpack.c.h.b16 %v826
  %v3930 = vunpack.c.l.b16 %v827
  %v3931 = vunpack.c.h.b16 %v827
  %v3932 = vunpack.c.l.b16 %v828
  %v3933 = vunpack.c.h.b16 %v828
  %v3934 = vunpack.c.l.b16 %v829
  %v3935 = vunpack.c.h.b16 %v829
  %v3936 = vunpack.c.l.b16 %v830
  %v3937 = vunpack.c.h.b16 %v830
  %v3938 = vunpack.c.l.b16 %v831
  %v3939 = vunpack.c.h.b16 %v831
  %v3940 = vunpack.c.l.b16 %v832
  %v3941 = vunpack.c.h.b16 %v832
  %v3942 = vunpack.c.l.b16 %v833
  %v3943 = vunpack.c.h.b16 %v833
  %v3944 = vunpack.c.l.b16 %v834
  %v3945 = vunpack.c.h.b16 %v834
  %v3946 = vunpack.c.l.b16 %v835
  %v3947 = vunpack.c.h.b16 %v835
  %v3948 = vunpack.c.l.b16 %v836
  %v3949 = vunpack.c.h.b16 %v836
  %v3950 = vunpack.c.l.b16 %v837
  %v3951 = vunpack.c.h.b16 %v837
  %v3952 = vunpack.c.l.b16 %v838
  %v3953 = vunpack.c.h.b16 %v838
  %v3954 = vunpack.c.l.b16 %v839
  %v3955 = vunpack.c.h.b16 %v839
  %v3956 = vunpack.c.l.b16 %v840
  %v3957 = vunpack.c.h.b16 %v840
  %v3958 = vunpack.c.l.b16 %v841
  %v3959 = vunpack.c.h.b16 %v841
  %v3960 = vunpack.c.l.b16 %v842
  %v3961 = vunpack.c.h.b16 %v842
  %v3962 = vunpack.c.l.b16 %v843
  %v3963 = vunpack.c.h.b16 %v843
  %v3964 = vunpack.c.l.b16 %v844
  %v3965 = vunpack.c.h.b16 %v844
  %v3966 = vunpack.c.l.b16 %v845
  %v3967 = vunpack.c.h.b16 %v845
  %v3968 = vunpack.c.l.b16 %v846
  %v3969 = vunpack.c.h.b16 %v846
  %v3970 = vunpack.c.l.b16 %v847
  %v3971 = vunpack.c.h.b16 %v847
  %v3972 = vunpack.c.l.b16 %v848
  %v3973 = vunpack.c.h.b16 %v848
  %v3974 = vunpack.c.l.b16 %v849
  %v3975 = vunpack.c.h.b16 %v849
  %v3976 = vunpack.c.l.b16 %v850
  %v3977 = vunpack.c.h.b16 %v850
  %v3978 = vunpack.c.l.b16 %v851
  %v3979 = vunpack.c.h.b16 %v851
  %v3980 = vunpack.c.l.b16 %v852
  %v3981 = vunpack.c.h.b16 %v852
  %v3982 = vunpack.c.l.b16 %v853
  %v3983 = vunpack.c.h.b16 %v853
  %v3984 = vunpack.c.l.b16 %v854
  %v3985 = vunpack.c.h.b16 %v854
  %v3986 = vunpack.c.l.b16 %v855
  %v3987 = vunpack.c.h.b16 %v855
  %v3988 = vunpack.c.l.b16 %v856
  %v3989 = vunpack.c.h.b16 %v856
  %v3990 = vunpack.c.l.b16 %v857
  %v3991 = vunpack.c.h.b16 %v857
  %v3992 = vunpack.c.l.b16 %v858
  %v3993 = vunpack.c.h.b16 %v858
  %v3994 = vunpack.c.l.b16 %v859
  %v3995 = vunpack.c.h.b16 %v859
  %v3996 = vunpack.c.l.b16 %v860
  %v3997 = vunpack.c.h.b16 %v860
  %v3998 = vunpack.c.l.b16 %v861
  %v3999 = vunpack.c.h.b16 %v861
  %v4000 = vunpack.c.l.b16 %v862
  %v4001 = vunpack.c.h.b16 %v862
  %v4002 = vunpack.c.l.b16 %v863
  %v4003 = vunpack.c.h.b16 %v863
  %v4004 = vunpack.c.l.b16 %v864
  %v4005 = vunpack.c.h.b16 %v864
  %v4006 = vunpack.c.l.b16 %v865
  %v4007 = vunpack.c.h.b16 %v865
  %v4008 = vunpack.c.l.b16 %v866
  %v4009 = vunpack.c.h.b16 %v866
  %v4010 = vunpack.c.l.b16 %v867
  %v4011 = vunpack.c.h.b16 %v867
  %v4012 = vunpack.c.l.b16 %v868
  %v4013 = vunpack.c.h.b16 %v868
  %v4014 = vunpack.c.l.b16 %v869
  %v4015 = vunpack.c.h.b16 %v869
  %v4016 = vunpack.c.l.b16 %v870
  %v4017 = vunpack.c.h.b16 %v870
  %v4018 = vunpack.c.l.b16 %v871
  %v4019 = vunpack.c.h.b16 %v871
  %v4020 = vunpack.c.l.b16 %v872
  %v4021 = vunpack.c.h.b16 %v872
  %v4022 = vunpack.c.l.b16 %v873
  %v4023 = vunpack.c.h.b16 %v873
  %v4024 = vunpack.c.l.b16 %v874
  %v4025 = vunpack.c.h.b16 %v874
  %v4026 = vunpack.c.l.b16 %v875
  %v4027 = vunpack.c.h.b16 %v875
  %v4028 = vunpack.c.l.b16 %v876
  %v4029 = vunpack.c.h.b16 %v876
  %v4030 = vunpack.c.l.b16 %v877
  %v4031 = vunpack.c.h.b16 %v877
  %v4032 = vunpack.c.l.b16 %v878
  %v4033 = vunpack.c.h.b16 %v878
  %v4034 = vunpack.c.l.b16 %v879
  %v4035 = vunpack.c.h.b16 %v879
  %v4036 = vunpack.c.l.b16 %v880
  %v4037 = vunpack.c.h.b16 %v880
  %v4038 = vunpack.c.l.b16 %v881
  %v4039 = vunpack.c.h.b16 %v881
  %v4040 = vunpack.c.l.b16 %v882
  %v4041 = vunpack.c.h.b16 %v882
  %v4042 = vunpack.c.l.b16 %v883
  %v4043 = vunpack.c.h.b16 %v883
  %v4044 = vunpack.c.l.b16 %v884
  %v4045 = vunpack.c.h.b16 %v884
  %v4046 = vunpack.c.l.b16 %v885
  %v4047 = vunpack.c.h.b16 %v885
  %v4048 = vunpack.c.l.b16 %v886
  %v4049 = vunpack.c.h.b16 %v886
  %v4050 = vunpack.c.l.b16 %v887
  %v4051 = vunpack.c.h.b16 %v887
  %v4052 = vunpack.c.l.b16 %v888
  %v4053 = vunpack.c.h.b16 %v888
  %v4054 = vunpack.c.l.b16 %v889
  %v4055 = vunpack.c.h.b16 %v889
  %v4056 = vunpack.c.l.b16 %v890
  %v4057 = vunpack.c.h.b16 %v890
  %v4058 = vunpack.c.l.b16 %v891
  %v4059 = vunpack.c.h.b16 %v891
  %v4060 = vunpack.c.l.b16 %v892
  %v4061 = vunpack.c.h.b16 %v892
  %v4062 = vunpack.c.l.b16 %v893
  %v4063 = vunpack.c.h.b16 %v893
  %v4064 = vunpack.c.l.b16 %v894
  %v4065 = vunpack.c.h.b16 %v894
  %v4066 = vunpack.c.l.b16 %v895
  %v4067 = vunpack.c.h.b16 %v895
  %v4068 = vunpack.c.l.b16 %v896
  %v4069 = vunpack.c.h.b16 %v896
  %v4070 = vunpack.c.l.b16 %v897
  %v4071 = vunpack.c.h.b16 %v897
  %v4072 = vunpack.c.l.b16 %v898
  %v4073 = vunpack.c.h.b16 %v898
  %v4074 = vunpack.c.l.b16 %v899
  %v4075 = vunpack.c.h.b16 %v899
  %v4076 = vunpack.c.l.b16 %v900
  %v4077 = vunpack.c.h.b16 %v900
  %v4078 = vunpack.c.l.b16 %v901
  %v4079 = vunpack.c.h.b16 %v901
  %v4080 = vunpack.c.l.b16 %v902
  %v4081 = vunpack.c.h.b16 %v902
  %v4082 = vunpack.c.l.b16 %v903
  %v4083 = vunpack.c.h.b16 %v903
  %v4084 = vunpack.c.l.b16 %v904
  %v4085 = vunpack.c.h.b16 %v904
  %v4086 = vunpack.c.l.b16 %v905
  %v4087 = vunpack.c.h.b16 %v905
  %v4088 = vunpack.c.l.b16 %v906
  %v4089 = vunpack.c.h.b16 %v906
  %v4090 = vunpack.c.l.b16 %v907
  %v4091 = vunpack.c.h.b16 %v907
  %v4092 = vunpack.c.l.b16 %v908
  %v4093 = vunpack.c.h.b16 %v908
  %v4094 = vunpack.c.l.b16 %v909
  %v4095 = vunpack.c.h.b16 %v909
  %v4096 = vunpack.c.l.b16 %v910
  %v4097 = vunpack.c.h.b16 %v910
  %v4098 = vunpack.c.l.b16 %v911
  %v4099 = vunpack.c.h.b16 %v911
  %v4100 = vunpack.c.l.b16 %v912
  %v4101 = vunpack.c.h.b16 %v912
  %v4102 = vunpack.c.l.b16 %v913
  %v4103 = vunpack.c.h.b16 %v913
  %v4104 = vunpack.c.l.b16 %v914
  %v4105 = vunpack.c.h.b16 %v914
  %v4106 = vunpack.c.l.b16 %v915
  %v4107 = vunpack.c.h.b16 %v915
  %v4108 = vunpack.c.l.b16 %v916
  %v4109 = vunpack.c.h.b16 %v916
  %v4110 = vunpack.c.l.b16 %v917
  %v4111 = vunpack.c.h.b16 %v917
  %v4112 = vunpack.c.l.b16 %v918
  %v4113 = vunpack.c.h.b16 %v918
  %v4114 = vunpack.c.l.b16 %v919
  %v4115 = vunpack.c.h.b16 %v919
  %v4116 = vunpack.c.l.b16 %v920
  %v4117 = vunpack.c.h.b16 %v920
  %v4118 = vunpack.c.l.b16 %v921
  %v4119 = vunpack.c.h.b16 %v921
  %v4120 = vunpack.c.l.b16 %v922
  %v4121 = vunpack.c.h.b16 %v922
  %v4122 = vunpack.c.l.b16 %v923
  %v4123 = vunpack.c.h.b16 %v923
  %v4124 = vunpack.c.l.b16 %v924
  %v4125 = vunpack.c.h.b16 %v924
  %v4126 = vunpack.c.l.b16 %v925
  %v4127 = vunpack.c.h.b16 %v925
  %v4128 = vunpack.c.l.b16 %v926
  %v4129 = vunpack.c.h.b16 %v926
  %v4130 = vunpack.c.l.b16 %v927
  %v4131 = vunpack.c.h.b16 %v927
  %v4132 = vunpack.c.l.b16 %v928
  %v4133 = vunpack.c.h.b16 %v928
  %v4134 = vunpack.c.l.b16 %v929
  %v4135 = vunpack.c.h.b16 %v929
  %v4136 = vunpack.c.l.b16 %v930
  %v4137 = vunpack.c.h.b16 %v930
  %v4138 = vunpack.c.l.b16 %v931
  %v4139 = vunpack.c.h.b16 %v931
  %v4140 = vunpack.c.l.b16 %v932
  %v4141 = vunpack.c.h.b16 %v932
  %v4142 = vunpack.c.l.b16 %v933
  %v4143 = vunpack.c.h.b16 %v933
  %v4144 = vunpack.c.l.b16 %v934
  %v4145 = vunpack.c.h.b16 %v934
  %v4146 = vunpack.c.l.b16 %v935
  %v4147 = vunpack.c.h.b16 %v935
  %v4148 = vunpack.c.l.b16 %v936
  %v4149 = vunpack.c.h.b16 %v936
  %v4150 = vunpack.c.l.b16 %v937
  %v4151 = vunpack.c.h.b16 %v937
  %v4152 = vunpack.c.l.b16 %v938
  %v4153 = vunpack.c.h.b16 %v938
  %v4154 = vunpack.c.l.b16 %v939
  %v4155 = vunpack.c.h.b16 %v939
  %v4156 = vunpack.c.l.b16 %v940
  %v4157 = vunpack.c.h.b16 %v940
  %v4158 = vunpack.c.l.b16 %v941
  %v4159 = vunpack.c.h.b16 %v941
  %v4160 = vunpack.c.l.b16 %v942
  %v4161 = vunpack.c.h.b16 %v942
  %v4162 = vunpack.c.l.b16 %v943
  %v4163 = vunpack.c.h.b16 %v943
  %v4164 = vunpack.c.l.b16 %v944
  %v4165 = vunpack.c.h.b16 %v944
  %v4166 = vunpack.c.l.b16 %v945
  %v4167 = vunpack.c.h.b16 %v945
  %v4168 = vunpack.c.l.b16 %v946
  %v4169 = vunpack.c.h.b16 %v946
  %v4170 = vunpack.c.l.b16 %v947
  %v4171 = vunpack.c.h.b16 %v947
  %v4172 = vunpack.c.l.b16 %v948
  %v4173 = vunpack.c.h.b16 %v948
  %v4174 = vunpack.c.l.b16 %v949
  %v4175 = vunpack.c.h.b16 %v949
  %v4176 = vunpack.c.l.b16 %v950
  %v4177 = vunpack.c.h.b16 %v950
  %v4178 = vunpack.c.l.b16 %v951
  %v4179 = vunpack.c.h.b16 %v951
  %v4180 = vunpack.c.l.b16 %v952
  %v4181 = vunpack.c.h.b16 %v952
  %v4182 = vunpack.c.l.b16 %v953
  %v4183 = vunpack.c.h.b16 %v953
  %v4184 = vunpack.c.l.b16 %v954
  %v4185 = vunpack.c.h.b16 %v954
  %v4186 = vunpack.c.l.b16 %v955
  %v4187 = vunpack.c.h.b16 %v955
  %v4188 = vunpack.c.l.b16 %v956
  %v4189 = vunpack.c.h.b16 %v956
  %v4190 = vunpack.c.l.b16 %v957
  %v4191 = vunpack.c.h.b16 %v957
  %v4192 = vunpack.c.l.b16 %v958
  %v4193 = vunpack.c.h.b16 %v958
  %v4194 = vunpack.c.l.b16 %v959
  %v4195 = vunpack.c.h.b16 %v959
  %v4196 = vunpack.c.l.b16 %v960
  %v4197 = vunpack.c.h.b16 %v960
  %v4198 = vunpack.c.l.b16 %v961
  %v4199 = vunpack.c.h.b16 %v961
  %v4200 = vunpack.c.l.b16 %v962
  %v4201 = vunpack.c.h.b16 %v962
  %v4202 = vunpack.c.l.b16 %v963
  %v4203 = vunpack.c.h.b16 %v963
  %v4204 = vunpack.c.l.b16 %v964
  %v4205 = vunpack.c.h.b16 %v964
  %v4206 = vunpack.c.l.b16 %v965
  %v4207 = vunpack.c.h.b16 %v965
  %v4208 = vunpack.c.l.b16 %v966
  %v4209 = vunpack.c.h.b16 %v966
  %v4210 = vunpack.c.l.b16 %v967
  %v4211 = vunpack.c.h.b16 %v967
  %v4212 = vunpack.c.l.b16 %v968
  %v4213 = vunpack.c.h.b16 %v968
  %v4214 = vunpack.c.l.b16 %v969
  %v4215 = vunpack.c.h.b16 %v969
  %v4216 = vunpack.c.l.b16 %v970
  %v4217 = vunpack.c.h.b16 %v970
  %v4218 = vunpack.c.l.b16 %v971
  %v4219 = vunpack.c.h.b16 %v971
  %v4220 = vunpack.c.l.b16 %v972
  %v4221 = vunpack.c.h.b16 %v972
  %v4222 = vunpack.c.l.b16 %v973
  %v4223 = vunpack.c.h.b16 %v973
  %v4224 = vunpack.c.l.b16 %v974
  %v4225 = vunpack.c.h.b16 %v974
  %v4226 = vunpack.c.l.b16 %v975
  %v4227 = vunpack.c.h.b16 %v975
  %v4228 = vunpack.c.l.b16 %v976
  %v4229 = vunpack.c.h.b16 %v976
  %v4230 = vunpack.c.l.b16 %v977
  %v4231 = vunpack.c.h.b16 %v977
  %v4232 = vunpack.c.l.b16 %v978
  %v4233 = vunpack.c.h.b16 %v978
  %v4234 = vunpack.c.l.b16 %v979
  %v4235 = vunpack.c.h.b16 %v979
  %v4236 = vunpack.c.l.b16 %v980
  %v4237 = vunpack.c.h.b16 %v980
  %v4238 = vunpack.c.l.b16 %v981
  %v4239 = vunpack.c.h.b16 %v981
  %v4240 = vunpack.c.l.b16 %v982
  %v4241 = vunpack.c.h.b16 %v982
  %v4242 = vunpack.c.l.b16 %v983
  %v4243 = vunpack.c.h.b16 %v983
  %v4244 = vunpack.c.l.b16 %v984
  %v4245 = vunpack.c.h.b16 %v984
  %v4246 = vunpack.c.l.b16 %v985
  %v4247 = vunpack.c.h.b16 %v985
  %v4248 = vunpack.c.l.b16 %v986
  %v4249 = vunpack.c.h.b16 %v986
  %v4250 = vunpack.c.l.b16 %v987
  %v4251 = vunpack.c.h.b16 %v987
  %v4252 = vunpack.c.l.b16 %v988
  %v4253 = vunpack.c.h.b16 %v988
  %v4254 = vunpack.c.l.b16 %v989
  %v4255 = vunpack.c.h.b16 %v989
  %v4256 = vunpack.c.l.b16 %v990
  %v4257 = vunpack.c.h.b16 %v990
  %v4258 = vunpack.c.l.b16 %v991
  %v4259 = vunpack.c.h.b16 %v991
  %v4260 = vunpack.c.l.b16 %v992
  %v4261 = vunpack.c.h.b16 %v992
  %v4262 = vunpack.c.l.b16 %v993
  %v4263 = vunpack.c.h.b16 %v993
  %v4264 = vunpack.c.l.b16 %v994
  %v4265 = vunpack.c.h.b16 %v994
  %v4266 = vunpack.c.l.b16 %v995
  %v4267 = vunpack.c.h.b16 %v995
  %v4268 = vunpack.c.l.b16 %v996
  %v4269 = vunpack.c.h.b16 %v996
  %v4270 = vunpack.c.l.b16 %v997
  %v4271 = vunpack.c.h.b16 %v997
  %v4272 = vunpack.c.l.b16 %v998
  %v4273 = vunpack.c.h.b16 %v998
  %v4274 = vunpack.c.l.b16 %v999
  %v4275 = vunpack.c.h.b16 %v999
  %v4276 = vunpack.c.l.b16 %v1000
  %v4277 = vunpack.c.h.b16 %v1000
  %v4278 = vunpack.c.l.b16 %v1001
  %v4279 = vunpack.c.h.b16 %v1001
  %v4280 = vunpack.c.l.b16 %v1002
  %v4281 = vunpack.c.h.b16 %v1002
  %v4282 = vunpack.c.l.b16 %v1003
  %v4283 = vunpack.c.h.b16 %v1003
  %v4284 = vunpack.c.l.b16 %v1004
  %v4285 = vunpack.c.h.b16 %v1004
  %v4286 = vunpack.c.l.b16 %v1005
  %v4287 = vunpack.c.h.b16 %v1005
  %v4288 = vunpack.c.l.b16 %v1006
  %v4289 = vunpack.c.h.b16 %v1006
  %v4290 = vunpack.c.l.b16 %v1007
  %v4291 = vunpack.c.h.b16 %v1007
  %v4292 = vunpack.c.l.b16 %v1008
  %v4293 = vunpack.c.h.b16 %v1008
  %v4294 = vunpack.c.l.b16 %v1009
  %v4295 = vunpack.c.h.b16 %v1009
  %v4296 = vunpack.c.l.b16 %v1010
  %v4297 = vunpack.c.h.b16 %v1010
  %v4298 = vunpack.c.l.b16 %v1011
  %v4299 = vunpack.c.h.b16 %v1011
  %v4300 = vunpack.c.l.b16 %v1012
  %v4301 = vunpack.c.h.b16 %v1012
  %v4302 = vunpack.c.l.b16 %v1013
  %v4303 = vunpack.c.h.b16 %v1013
  %v4304 = vunpack.c.l.b16 %v1014
  %v4305 = vunpack.c.h.b16 %v1014
  %v4306 = vunpack.c.l.b16 %v1015
  %v4307 = vunpack.c.h.b16 %v1015
  %v4308 = vunpack.c.l.b16 %v1016
  %v4309 = vunpack.c.h.b16 %v1016
  %v4310 = vunpack.c.l.b16 %v1017
  %v4311 = vunpack.c.h.b16 %v1017
  %v4312 = vunpack.c.l.b16 %v1018
  %v4313 = vunpack.c.h.b16 %v1018
  %v4314 = vunpack.c.l.b16 %v1019
  %v4315 = vunpack.c.h.b16 %v1019
  %v4316 = vunpack.c.l.b16 %v1020
  %v4317 = vunpack.c.h.b16 %v1020
  %v4318 = vunpack.c.l.b16 %v1021
  %v4319 = vunpack.c.h.b16 %v1021
  %v4320 = vunpack.c.l.b16 %v1022
  %v4321 = vunpack.c.h.b16 %v1022
  %v4322 = vunpack.c.l.b16 %v1023
  %v4323 = vunpack.c.h.b16 %v1023
  %v4324 = vunpack.c.l.b16 %v1024
  %v4325 = vunpack.c.h.b16 %v1024
  %v4326 = vunpack.c.l.b16 %v1025
  %v4327 = vunpack.c.h.b16 %v1025
  %v4328 = vunpack.c.l.b16 %v1026
  %v4329 = vunpack.c.h.b16 %v1026
  %v4330 = vunpack.c.l.b16 %v1027
  %v4331 = vunpack.c.h.b16 %v1027
  %v4332 = vunpack.c.l.b16 %v1028
  %v4333 = vunpack.c.h.b16 %v1028
  %v4334 = vunpack.c.l.b16 %v1029
  %v4335 = vunpack.c.h.b16 %v1029
  %v4336 = vunpack.c.l.b16 %v1030
  %v4337 = vunpack.c.h.b16 %v1030
  %v4338 = vunpack.c.l.b16 %v1031
  %v4339 = vunpack.c.h.b16 %v1031
  %v4340 = vunpack.c.l.b16 %v1032
  %v4341 = vunpack.c.h.b16 %v1032
  %v4342 = vunpack.c.l.b16 %v1033
  %v4343 = vunpack.c.h.b16 %v1033
  %v4344 = vunpack.c.l.b16 %v1034
  %v4345 = vunpack.c.h.b16 %v1034
  %v4346 = vunpack.c.l.b16 %v1035
  %v4347 = vunpack.c.h.b16 %v1035
  %v4348 = vunpack.c.l.b16 %v1036
  %v4349 = vunpack.c.h.b16 %v1036
  %v4350 = vunpack.c.l.b16 %v1037
  %v4351 = vunpack.c.h.b16 %v1037
  %v4352 = vunpack.c.l.b16 %v1038
  %v4353 = vunpack.c.h.b16 %v1038
  %v4354 = vunpack.c.l.b16 %v1039
  %v4355 = vunpack.c.h.b16 %v1039
  %v4356 = vunpack.c.l.b16 %v1040
  %v4357 = vunpack.c.h.b16 %v1040
  %v4358 = vunpack.c.l.b16 %v1041
  %v4359 = vunpack.c.h.b16 %v1041
  %v4360 = vunpack.c.l.b16 %v1042
  %v4361 = vunpack.c.h.b16 %v1042
  %v4362 = vunpack.c.l.b16 %v1043
  %v4363 = vunpack.c.h.b16 %v1043
  %v4364 = vunpack.c.l.b16 %v1044
  %v4365 = vunpack.c.h.b16 %v1044
  %v4366 = vunpack.c.l.b16 %v1045
  %v4367 = vunpack.c.h.b16 %v1045
  %v4368 = vunpack.c.l.b16 %v1046
  %v4369 = vunpack.c.h.b16 %v1046
  %v4370 = vunpack.c.l.b16 %v1047
  %v4371 = vunpack.c.h.b16 %v1047
  %v4372 = vunpack.c.l.b16 %v1048
  %v4373 = vunpack.c.h.b16 %v1048
  %v4374 = vunpack.c.l.b16 %v1049
  %v4375 = vunpack.c.h.b16 %v1049
  %v4376 = vunpack.c.l.b16 %v1050
  %v4377 = vunpack.c.h.b16 %v1050
  %v4378 = vunpack.c.l.b16 %v1051
  %v4379 = vunpack.c.h.b16 %v1051
  %v4380 = vunpack.c.l.b16 %v1052
  %v4381 = vunpack.c.h.b16 %v1052
  %v4382 = vunpack.c.l.b16 %v1053
  %v4383 = vunpack.c.h.b16 %v1053
  %v4384 = vunpack.c.l.b16 %v1054
  %v4385 = vunpack.c.h.b16 %v1054
  %v4386 = vunpack.c.l.b16 %v1055
  %v4387 = vunpack.c.h.b16 %v1055
  %v4388 = vunpack.c.l.b16 %v1056
  %v4389 = vunpack.c.h.b16 %v1056
  %v4390 = vunpack.c.l.b16 %v1057
  %v4391 = vunpack.c.h.b16 %v1057
  %v4392 = vunpack.c.l.b16 %v1058
  %v4393 = vunpack.c.h.b16 %v1058
  %v4394 = vunpack.c.l.b16 %v1059
  %v4395 = vunpack.c.h.b16 %v1059
  %v4396 = vunpack.c.l.b16 %v1060
  %v4397 = vunpack.c.h.b16 %v1060
  %v4398 = vunpack.c.l.b16 %v1061
  %v4399 = vunpack.c.h.b16 %v1061
  %v4400 = vunpack.c.l.b16 %v1062
  %v4401 = vunpack.c.h.b16 %v1062
  %v4402 = vunpack.c.l.b16 %v1063
  %v4403 = vunpack.c.h.b16 %v1063
  %v4404 = vunpack.c.l.b16 %v1064
  %v4405 = vunpack.c.h.b16 %v1064
  %v4406 = vunpack.c.l.b16 %v1065
  %v4407 = vunpack.c.h.b16 %v1065
  %v4408 = vunpack.c.l.b16 %v1066
  %v4409 = vunpack.c.h.b16 %v1066
  %v4410 = vunpack.c.l.b16 %v1067
  %v4411 = vunpack.c.h.b16 %v1067
  %v4412 = vunpack.c.l.b16 %v1068
  %v4413 = vunpack.c.h.b16 %v1068
  %v4414 = vunpack.c.l.b16 %v1069
  %v4415 = vunpack.c.h.b16 %v1069
  %v4416 = vunpack.c.l.b16 %v1070
  %v4417 = vunpack.c.h.b16 %v1070
  %v4418 = vunpack.c.l.b16 %v1071
  %v4419 = vunpack.c.h.b16 %v1071
  %v4420 = vunpack.c.l.b16 %v1072
  %v4421 = vunpack.c.h.b16 %v1072
  %v4422 = vunpack.c.l.b16 %v1073
  %v4423 = vunpack.c.h.b16 %v1073
  %v4424 = vunpack.c.l.b16 %v1074
  %v4425 = vunpack.c.h.b16 %v1074
  %v4426 = vunpack.c.l.b16 %v1075
  %v4427 = vunpack.c.h.b16 %v1075
  %v4428 = vunpack.c.l.b16 %v1076
  %v4429 = vunpack.c.h.b16 %v1076
  %v4430 = vunpack.c.l.b16 %v1077
  %v4431 = vunpack.c.h.b16 %v1077
  %v4432 = vunpack.c.l.b16 %v1078
  %v4433 = vunpack.c.h.b16 %v1078
  %v4434 = vunpack.c.l.b16 %v1079
  %v4435 = vunpack.c.h.b16 %v1079
  %v4436 = vunpack.c.l.b16 %v1080
  %v4437 = vunpack.c.h.b16 %v1080
  %v4438 = vunpack.c.l.b16 %v1081
  %v4439 = vunpack.c.h.b16 %v1081
  %v4440 = vunpack.c.l.b16 %v1082
  %v4441 = vunpack.c.h.b16 %v1082
  %v4442 = vunpack.c.l.b16 %v1083
  %v4443 = vunpack.c.h.b16 %v1083
  %v4444 = vunpack.c.l.b16 %v1084
  %v4445 = vunpack.c.h.b16 %v1084
  %v4446 = vunpack.c.l.b16 %v1085
  %v4447 = vunpack.c.h.b16 %v1085
  %v4448 = vunpack.c.l.b16 %v1086
  %v4449 = vunpack.c.h.b16 %v1086
  %v4450 = vunpack.c.l.b16 %v1087
  %v4451 = vunpack.c.h.b16 %v1087
  %v4452 = vunpack.c.l.b16 %v1088
  %v4453 = vunpack.c.h.b16 %v1088
  %v4454 = vunpack.c.l.b16 %v1089
  %v4455 = vunpack.c.h.b16 %v1089
  %v4456 = vunpack.c.l.b16 %v1090
  %v4457 = vunpack.c.h.b16 %v1090
  %v4458 = vunpack.c.l.b16 %v1091
  %v4459 = vunpack.c.h.b16 %v1091
  %v4460 = vunpack.c.l.b16 %v1092
  %v4461 = vunpack.c.h.b16 %v1092
  %v4462 = vunpack.c.l.b16 %v1093
  %v4463 = vunpack.c.h.b16 %v1093
  %v4464 = vunpack.c.l.b16 %v1094
  %v4465 = vunpack.c.h.b16 %v1094
  %v4466 = vunpack.c.l.b16 %v1095
  %v4467 = vunpack.c.h.b16 %v1095
  %v4468 = vunpack.c.l.b16 %v1096
  %v4469 = vunpack.c.h.b16 %v1096
  %v4470 = vunpack.c.l.b16 %v1097
  %v4471 = vunpack.c.h.b16 %v1097
  %v4472 = vunpack.c.l.b16 %v1098
  %v4473 = vunpack.c.h.b16 %v1098
  %v4474 = vunpack.c.l.b16 %v1099
  %v4475 = vunpack.c.h.b16 %v1099
  %v4476 = vunpack.c.l.b16 %v1100
  %v4477 = vunpack.c.h.b16 %v1100
  %v4478 = vunpack.c.l.b16 %v1101
  %v4479 = vunpack.c.h.b16 %v1101
  %v4480 = vunpack.c.l.b16 %v1102
  %v4481 = vunpack.c.h.b16 %v1102
  %v4482 = vunpack.c.l.b16 %v1103
  %v4483 = vunpack.c.h.b16 %v1103
  %v4484 = vunpack.c.l.b16 %v1104
  %v4485 = vunpack.c.h.b16 %v1104
  %v4486 = vunpack.c.l.b16 %v1105
  %v4487 = vunpack.c.h.b16 %v1105
  %v4488 = vunpack.c.l.b16 %v1106
  %v4489 = vunpack.c.h.b16 %v1106
  %v4490 = vunpack.c.l.b16 %v1107
  %v4491 = vunpack.c.h.b16 %v1107
  %v4492 = vunpack.c.l.b16 %v1108
  %v4493 = vunpack.c.h.b16 %v1108
  %v4494 = vunpack.c.l.b16 %v1109
  %v4495 = vunpack.c.h.b16 %v1109
  %v4496 = vunpack.c.l.b16 %v1110
  %v4497 = vunpack.c.h.b16 %v1110
  %v4498 = vunpack.c.l.b16 %v1111
  %v4499 = vunpack.c.h.b16 %v1111
  %v4500 = vunpack.c.l.b16 %v1112
  %v4501 = vunpack.c.h.b16 %v1112
  %v4502 = vunpack.c.l.b16 %v1113
  %v4503 = vunpack.c.h.b16 %v1113
  %v4504 = vunpack.c.l.b16 %v1114
  %v4505 = vunpack.c.h.b16 %v1114
  %v4506 = vunpack.c.l.b16 %v1115
  %v4507 = vunpack.c.h.b16 %v1115
  %v4508 = vpack.c.b16 %v2464, %v2460
  %v4509 = vpack.c.b16 %v2465, %v2461
  %v4510 = vpack.c.b16 %v2466, %v2462
  %v4511 = vpack.c.b16 %v2467, %v2463
  %v4512 = vpack.c.b16 %v2472, %v2468
  %v4513 = vpack.c.b16 %v2473, %v2469
  %v4514 = vpack.c.b16 %v2474, %v2470
  %v4515 = vpack.c.b16 %v2475, %v2471
  %v4516 = vpack.c.b16 %v2480, %v2476
  %v4517 = vpack.c.b16 %v2481, %v2477
  %v4518 = vpack.c.b16 %v2482, %v2478
  %v4519 = vpack.c.b16 %v2483, %v2479
  %v4520 = vpack.c.b16 %v2488, %v2484
  %v4521 = vpack.c.b16 %v2489, %v2485
  %v4522 = vpack.c.b16 %v2490, %v2486
  %v4523 = vpack.c.b16 %v2491, %v2487
  %v4524 = vpack.c.b16 %v2496, %v2492
  %v4525 = vpack.c.b16 %v2497, %v2493
  %v4526 = vpack.c.b16 %v2498, %v2494
  %v4527 = vpack.c.b16 %v2499, %v2495
  %v4528 = vpack.c.b16 %v2504, %v2500
  %v4529 = vpack.c.b16 %v2505, %v2501
  %v4530 = vpack.c.b16 %v2506, %v2502
  %v4531 = vpack.c.b16 %v2507, %v2503
  %v4532 = vpack.c.b16 %v2512, %v2508
  %v4533 = vpack.c.b16 %v2513, %v2509
  %v4534 = vpack.c.b16 %v2514, %v2510
  %v4535 = vpack.c.b16 %v2515, %v2511
  %v4536 = vpack.c.b16 %v2520, %v2516
  %v4537 = vpack.c.b16 %v2521, %v2517
  %v4538 = vpack.c.b16 %v2522, %v2518
  %v4539 = vpack.c.b16 %v2523, %v2519
  %v4540 = vpack.c.b16 %v2528, %v2524
  %v4541 = vpack.c.b16 %v2529, %v2525
  %v4542 = vpack.c.b16 %v2530, %v2526
  %v4543 = vpack.c.b16 %v2531, %v2527
  %v4544 = vpack.c.b16 %v2536, %v2532
  %v4545 = vpack.c.b16 %v2537, %v2533
  %v4546 = vpack.c.b16 %v2538, %v2534
  %v4547 = vpack.c.b16 %v2539, %v2535
  %v4548 = vpack.c.b16 %v2544, %v2540
  %v4549 = vpack.c.b16 %v2545, %v2541
  %v4550 = vpack.c.b16 %v2546, %v2542
  %v4551 = vpack.c.b16 %v2547, %v2543
  %v4552 = vpack.c.b16 %v2552, %v2548
  %v4553 = vpack.c.b16 %v2553, %v2549
  %v4554 = vpack.c.b16 %v2554, %v2550
  %v4555 = vpack.c.b16 %v2555, %v2551
  %v4556 = vpack.c.b16 %v2560, %v2556
  %v4557 = vpack.c.b16 %v2561, %v2557
  %v4558 = vpack.c.b16 %v2562, %v2558
  %v4559 = vpack.c.b16 %v2563, %v2559
  %v4560 = vpack.c.b16 %v2568, %v2564
  %v4561 = vpack.c.b16 %v2569, %v2565
  %v4562 = vpack.c.b16 %v2570, %v2566
  %v4563 = vpack.c.b16 %v2571, %v2567
  %v4564 = vpack.c.b16 %v2576, %v2572
  %v4565 = vpack.c.b16 %v2577, %v2573
  %v4566 = vpack.c.b16 %v2578, %v2574
  %v4567 = vpack.c.b16 %v2579, %v2575
  %v4568 = vpack.c.b16 %v2584, %v2580
  %v4569 = vpack.c.b16 %v2585, %v2581
  %v4570 = vpack.c.b16 %v2586, %v2582
  %v4571 = vpack.c.b16 %v2587, %v2583
  %v4572 = vpack.c.b16 %v2592, %v2588
  %v4573 = vpack.c.b16 %v2593, %v2589
  %v4574 = vpack.c.b16 %v2594, %v2590
  %v4575 = vpack.c.b16 %v2595, %v2591
  %v4576 = vpack.c.b16 %v2600, %v2596
  %v4577 = vpack.c.b16 %v2601, %v2597
  %v4578 = vpack.c.b16 %v2602, %v2598
  %v4579 = vpack.c.b16 %v2603, %v2599
  %v4580 = vpack.c.b16 %v2608, %v2604
  %v4581 = vpack.c.b16 %v2609, %v2605
  %v4582 = vpack.c.b16 %v2610, %v2606
  %v4583 = vpack.c.b16 %v2611, %v2607
  %v4584 = vpack.c.b16 %v2616, %v2612
  %v4585 = vpack.c.b16 %v2617, %v2613
  %v4586 = vpack.c.b16 %v2618, %v2614
  %v4587 = vpack.c.b16 %v2619, %v2615
  %v4588 = vpack.c.b16 %v2624, %v2620
  %v4589 = vpack.c.b16 %v2625, %v2621
  %v4590 = vpack.c.b16 %v2626, %v2622
  %v4591 = vpack.c.b16 %v2627, %v2623
  %v4592 = vpack.c.b16 %v2632, %v2628
  %v4593 = vpack.c.b16 %v2633, %v2629
  %v4594 = vpack.c.b16 %v2634, %v2630
  %v4595 = vpack.c.b16 %v2635, %v2631
  %v4596 = vpack.c.b16 %v2640, %v2636
  %v4597 = vpack.c.b16 %v2641, %v2637
  %v4598 = vpack.c.b16 %v2642, %v2638
  %v4599 = vpack.c.b16 %v2643, %v2639
  %v4600 = vpack.c.b16 %v2648, %v2644
  %v4601 = vpack.c.b16 %v2649, %v2645
  %v4602 = vpack.c.b16 %v2650, %v2646
  %v4603 = vpack.c.b16 %v2651, %v2647
  %v4604 = vpack.c.b16 %v2656, %v2652
  %v4605 = vpack.c.b16 %v2657, %v2653
  %v4606 = vpack.c.b16 %v2658, %v2654
  %v4607 = vpack.c.b16 %v2659, %v2655
  %v4608 = vpack.c.b16 %v2664, %v2660
  %v4609 = vpack.c.b16 %v2665, %v2661
  %v4610 = vpack.c.b16 %v2666, %v2662
  %v4611 = vpack.c.b16 %v2667, %v2663
  %v4612 = vpack.c.b16 %v2672, %v2668
  %v4613 = vpack.c.b16 %v2673, %v2669
  %v4614 = vpack.c.b16 %v2674, %v2670
  %v4615 = vpack.c.b16 %v2675, %v2671
  %v4616 = vpack.c.b16 %v2680, %v2676
  %v4617 = vpack.c.b16 %v2681, %v2677
  %v4618 = vpack.c.b16 %v2682, %v2678
  %v4619 = vpack.c.b16 %v2683, %v2679
  %v4620 = vpack.c.b16 %v2688, %v2684
  %v4621 = vpack.c.b16 %v2689, %v2685
  %v4622 = vpack.c.b16 %v2690, %v2686
  %v4623 = vpack.c.b16 %v2691, %v2687
  %v4624 = vpack.c.b16 %v2696, %v2692
  %v4625 = vpack.c.b16 %v2697, %v2693
  %v4626 = vpack.c.b16 %v2698, %v2694
  %v4627 = vpack.c.b16 %v2699, %v2695
  %v4628 = vpack.c.b16 %v2704, %v2700
  %v4629 = vpack.c.b16 %v2705, %v2701
  %v4630 = vpack.c.b16 %v2706, %v2702
  %v4631 = vpack.c.b16 %v2707, %v2703
  %v4632 = vpack.c.b16 %v2712, %v2708
  %v4633 = vpack.c.b16 %v2713, %v2709
  %v4634 = vpack.c.b16 %v2714, %v2710
  %v4635 = vpack.c.b16 %v2715, %v2711
  %v4636 = vpack.c.b16 %v2720, %v2716
  %v4637 = vpack.c.b16 %v2721, %v2717
  %v4638 = vpack.c.b16 %v2722, %v2718
  %v4639 = vpack.c.b16 %v2723, %v2719
  %v4640 = vpack.c.b16 %v2728, %v2724
  %v4641 = vpack.c.b16 %v2729, %v2725
  %v4642 = vpack.c.b16 %v2730, %v2726
  %v4643 = vpack.c.b16 %v2731, %v2727
  %v4644 = vpack.c.b16 %v2736, %v2732
  %v4645 = vpack.c.b16 %v2737, %v2733
  %v4646 = vpack.c.b16 %v2738, %v2734
  %v4647 = vpack.c.b16 %v2739, %v2735
  %v4648 = vpack.c.b16 %v2744, %v2740
  %v4649 = vpack.c.b16 %v2745, %v2741
  %v4650 = vpack.c.b16 %v2746, %v2742
  %v4651 = vpack.c.b16 %v2747, %v2743
  %v4652 = vpack.c.b16 %v2752, %v2748
  %v4653 = vpack.c.b16 %v2753, %v2749
  %v4654 = vpack.c.b16 %v2754, %v2750
  %v4655 = vpack.c.b16 %v2755, %v2751
  %v4656 = vpack.c.b16 %v2760, %v2756
  %v4657 = vpack.c.b16 %v2761, %v2757
  %v4658 = vpack.c.b16 %v2762, %v2758
  %v4659 = vpack.c.b16 %v2763, %v2759
  %v4660 = vpack.c.b16 %v2768, %v2764
  %v4661 = vpack.c.b16 %v2769, %v2765
  %v4662 = vpack.c.b16 %v2770, %v2766
  %v4663 = vpack.c.b16 %v2771, %v2767
  %v4664 = vpack.c.b16 %v2776, %v2772
  %v4665 = vpack.c.b16 %v2777, %v2773
  %v4666 = vpack.c.b16 %v2778, %v2774
  %v4667 = vpack.c.b16 %v2779, %v2775
  %v4668 = vpack.c.b16 %v2784, %v2780
  %v4669 = vpack.c.b16 %v2785, %v2781
  %v4670 = vpack.c.b16 %v2786, %v2782
  %v4671 = vpack.c.b16 %v2787, %v2783
  %v4672 = vpack.c.b16 %v2792, %v2788
  %v4673 = vpack.c.b16 %v2793, %v2789
  %v4674 = vpack.c.b16 %v2794, %v2790
  %v4675 = vpack.c.b16 %v2795, %v2791
  %v4676 = vpack.c.b16 %v2800, %v2796
  %v4677 = vpack.c.b16 %v2801, %v2797
  %v4678 = vpack.c.b16 %v2802, %v2798
  %v4679 = vpack.c.b16 %v2803, %v2799
  %v4680 = vpack.c.b16 %v2808, %v2804
  %v4681 = vpack.c.b16 %v2809, %v2805
  %v4682 = vpack.c.b16 %v2810, %v2806
  %v4683 = vpack.c.b16 %v2811, %v2807
  %v4684 = vpack.c.b16 %v2816, %v2812
  %v4685 = vpack.c.b16 %v2817, %v2813
  %v4686 = vpack.c.b16 %v2818, %v2814
  %v4687 = vpack.c.b16 %v2819, %v2815
  %v4688 = vpack.c.b16 %v2824, %v2820
  %v4689 = vpack.c.b16 %v2825, %v2821
  %v4690 = vpack.c.b16 %v2826, %v2822
  %v4691 = vpack.c.b16 %v2827, %v2823
  %v4692 = vpack.c.b16 %v2832, %v2828
  %v4693 = vpack.c.b16 %v2833, %v2829
  %v4694 = vpack.c.b16 %v2834, %v2830
  %v4695 = vpack.c.b16 %v2835, %v2831
  %v4696 = vpack.c.b16 %v2840, %v2836
  %v4697 = vpack.c.b16 %v2841, %v2837
  %v4698 = vpack.c.b16 %v2842, %v2838
  %v4699 = vpack.c.b16 %v2843, %v2839
  %v4700 = vpack.c.b16 %v2848, %v2844
  %v4701 = vpack.c.b16 %v2849, %v2845
  %v4702 = vpack.c.b16 %v2850, %v2846
  %v4703 = vpack.c.b16 %v2851, %v2847
  %v4704 = vpack.c.b16 %v2856, %v2852
  %v4705 = vpack.c.b16 %v2857, %v2853
  %v4706 = vpack.c.b16 %v2858, %v2854
  %v4707 = vpack.c.b16 %v2859, %v2855
  %v4708 = vpack.c.b16 %v2864, %v2860
  %v4709 = vpack.c.b16 %v2865, %v2861
  %v4710 = vpack.c.b16 %v2866, %v2862
  %v4711 = vpack.c.b16 %v2867, %v2863
  %v4712 = vpack.c.b16 %v2872, %v2868
  %v4713 = vpack.c.b16 %v2873, %v2869
  %v4714 = vpack.c.b16 %v2874, %v2870
  %v4715 = vpack.c.b16 %v2875, %v2871
  %v4716 = vpack.c.b16 %v2880, %v2876
  %v4717 = vpack.c.b16 %v2881, %v2877
  %v4718 = vpack.c.b16 %v2882, %v2878
  %v4719 = vpack.c.b16 %v2883, %v2879
  %v4720 = vpack.c.b16 %v2888, %v2884
  %v4721 = vpack.c.b16 %v2889, %v2885
  %v4722 = vpack.c.b16 %v2890, %v2886
  %v4723 = vpack.c.b16 %v2891, %v2887
  %v4724 = vpack.c.b16 %v2896, %v2892
  %v4725 = vpack.c.b16 %v2897, %v2893
  %v4726 = vpack.c.b16 %v2898, %v2894
  %v4727 = vpack.c.b16 %v2899, %v2895
  %v4728 = vpack.c.b16 %v2904, %v2900
  %v4729 = vpack.c.b16 %v2905, %v2901
  %v4730 = vpack.c.b16 %v2906, %v2902
  %v4731 = vpack.c.b16 %v2907, %v2903
  %v4732 = vpack.c.b16 %v2912, %v2908
  %v4733 = vpack.c.b16 %v2913, %v2909
  %v4734 = vpack.c.b16 %v2914, %v2910
  %v4735 = vpack.c.b16 %v2915, %v2911
  %v4736 = vpack.c.b16 %v2920, %v2916
  %v4737 = vpack.c.b16 %v2921, %v2917
  %v4738 = vpack.c.b16 %v2922, %v2918
  %v4739 = vpack.c.b16 %v2923, %v2919
  %v4740 = vpack.c.b16 %v2928, %v2924
  %v4741 = vpack.c.b16 %v2929, %v2925
  %v4742 = vpack.c.b16 %v2930, %v2926
  %v4743 = vpack.c.b16 %v2931, %v2927
  %v4744 = vpack.c.b16 %v2936, %v2932
  %v4745 = vpack.c.b16 %v2937, %v2933
  %v4746 = vpack.c.b16 %v2938, %v2934
  %v4747 = vpack.c.b16 %v2939, %v2935
  %v4748 = vpack.c.b16 %v2944, %v2940
  %v4749 = vpack.c.b16 %v2945, %v2941
  %v4750 = vpack.c.b16 %v2946, %v2942
  %v4751 = vpack.c.b16 %v2947, %v2943
  %v4752 = vpack.c.b16 %v2952, %v2948
  %v4753 = vpack.c.b16 %v2953, %v2949
  %v4754 = vpack.c.b16 %v2954, %v2950
  %v4755 = vpack.c.b16 %v2955, %v2951
  %v4756 = vpack.c.b16 %v2960, %v2956
  %v4757 = vpack.c.b16 %v2961, %v2957
  %v4758 = vpack.c.b16 %v2962, %v2958
  %v4759 = vpack.c.b16 %v2963, %v2959
  %v4760 = vpack.c.b16 %v2968, %v2964
  %v4761 = vpack.c.b16 %v2969, %v2965
  %v4762 = vpack.c.b16 %v2970, %v2966
  %v4763 = vpack.c.b16 %v2971, %v2967
  %v4764 = vpack.c.b16 %v2976, %v2972
  %v4765 = vpack.c.b16 %v2977, %v2973
  %v4766 = vpack.c.b16 %v2978, %v2974
  %v4767 = vpack.c.b16 %v2979, %v2975
  %v4768 = vpack.c.b16 %v2984, %v2980
  %v4769 = vpack.c.b16 %v2985, %v2981
  %v4770 = vpack.c.b16 %v2986, %v2982
  %v4771 = vpack.c.b16 %v2987, %v2983
  %v4772 = vpack.c.b16 %v2992, %v2988
  %v4773 = vpack.c.b16 %v2993, %v2989
  %v4774 = vpack.c.b16 %v2994, %v2990
  %v4775 = vpack.c.b16 %v2995, %v2991
  %v4776 = vpack.c.b16 %v3000, %v2996
  %v4777 = vpack.c.b16 %v3001, %v2997
  %v4778 = vpack.c.b16 %v3002, %v2998
  %v4779 = vpack.c.b16 %v3003, %v2999
  %v4780 = vpack.c.b16 %v3008, %v3004
  %v4781 = vpack.c.b16 %v3009, %v3005
  %v4782 = vpack.c.b16 %v3010, %v3006
  %v4783 = vpack.c.b16 %v3011, %v3007
  %v4784 = vpack.c.b16 %v3016, %v3012
  %v4785 = vpack.c.b16 %v3017, %v3013
  %v4786 = vpack.c.b16 %v3018, %v3014
  %v4787 = vpack.c.b16 %v3019, %v3015
  %v4788 = vpack.c.b16 %v3024, %v3020
  %v4789 = vpack.c.b16 %v3025, %v3021
  %v4790 = vpack.c.b16 %v3026, %v3022
  %v4791 = vpack.c.b16 %v3027, %v3023
  %v4792 = vpack.c.b16 %v3032, %v3028
  %v4793 = vpack.c.b16 %v3033, %v3029
  %v4794 = vpack.c.b16 %v3034, %v3030
  %v4795 = vpack.c.b16 %v3035, %v3031
  %v4796 = vpack.c.b16 %v3040, %v3036
  %v4797 = vpack.c.b16 %v3041, %v3037
  %v4798 = vpack.c.b16 %v3042, %v3038
  %v4799 = vpack.c.b16 %v3043, %v3039
  %v4800 = vpack.c.b16 %v3048, %v3044
  %v4801 = vpack.c.b16 %v3049, %v3045
  %v4802 = vpack.c.b16 %v3050, %v3046
  %v4803 = vpack.c.b16 %v3051, %v3047
  %v4804 = vpack.c.b16 %v3056, %v3052
  %v4805 = vpack.c.b16 %v3057, %v3053
  %v4806 = vpack.c.b16 %v3058, %v3054
  %v4807 = vpack.c.b16 %v3059, %v3055
  %v4808 = vpack.c.b16 %v3064, %v3060
  %v4809 = vpack.c.b16 %v3065, %v3061
  %v4810 = vpack.c.b16 %v3066, %v3062
  %v4811 = vpack.c.b16 %v3067, %v3063
  %v4812 = vpack.c.b16 %v3072, %v3068
  %v4813 = vpack.c.b16 %v3073, %v3069
  %v4814 = vpack.c.b16 %v3074, %v3070
  %v4815 = vpack.c.b16 %v3075, %v3071
  %v4816 = vpack.c.b16 %v3080, %v3076
  %v4817 = vpack.c.b16 %v3081, %v3077
  %v4818 = vpack.c.b16 %v3082, %v3078
  %v4819 = vpack.c.b16 %v3083, %v3079
  %v4820 = vpack.c.b16 %v3088, %v3084
  %v4821 = vpack.c.b16 %v3089, %v3085
  %v4822 = vpack.c.b16 %v3090, %v3086
  %v4823 = vpack.c.b16 %v3091, %v3087
  %v4824 = vpack.c.b16 %v3096, %v3092
  %v4825 = vpack.c.b16 %v3097, %v3093
  %v4826 = vpack.c.b16 %v3098, %v3094
  %v4827 = vpack.c.b16 %v3099, %v3095
  %v4828 = vpack.c.b16 %v3104, %v3100
  %v4829 = vpack.c.b16 %v3105, %v3101
  %v4830 = vpack.c.b16 %v3106, %v3102
  %v4831 = vpack.c.b16 %v3107, %v3103
  %v4832 = vpack.c.b16 %v3112, %v3108
  %v4833 = vpack.c.b16 %v3113, %v3109
  %v4834 = vpack.c.b16 %v3114, %v3110
  %v4835 = vpack.c.b16 %v3115, %v3111
  %v4836 = vpack.c.b16 %v3120, %v3116
  %v4837 = vpack.c.b16 %v3121, %v3117
  %v4838 = vpack.c.b16 %v3122, %v3118
  %v4839 = vpack.c.b16 %v3123, %v3119
  %v4840 = vpack.c.b16 %v3128, %v3124
  %v4841 = vpack.c.b16 %v3129, %v3125
  %v4842 = vpack.c.b16 %v3130, %v3126
  %v4843 = vpack.c.b16 %v3131, %v3127
  %v4844 = vpack.c.b16 %v3136, %v3132
  %v4845 = vpack.c.b16 %v3137, %v3133
  %v4846 = vpack.c.b16 %v3138, %v3134
  %v4847 = vpack.c.b16 %v3139, %v3135
  %v4848 = vpack.c.b16 %v3144, %v3140
  %v4849 = vpack.c.b16 %v3145, %v3141
  %v4850 = vpack.c.b16 %v3146, %v3142
  %v4851 = vpack.c.b16 %v3147, %v3143
  %v4852 = vpack.c.b16 %v3152, %v3148
  %v4853 = vpack.c.b16 %v3153, %v3149
  %v4854 = vpack.c.b16 %v3154, %v3150
  %v4855 = vpack.c.b16 %v3155, %v3151
  %v4856 = vpack.c.b16 %v3160, %v3156
  %v4857 = vpack.c.b16 %v3161, %v3157
  %v4858 = vpack.c.b16 %v3162, %v3158
  %v4859 = vpack.c.b16 %v3163, %v3159
  %v4860 = vpack.c.b16 %v3168, %v3164
  %v4861 = vpack.c.b16 %v3169, %v3165
  %v4862 = vpack.c.b16 %v3170, %v3166
  %v4863 = vpack.c.b16 %v3171, %v3167
  %v4864 = vpack.c.b16 %v3176, %v3172
  %v4865 = vpack.c.b16 %v3177, %v3173
  %v4866 = vpack.c.b16 %v3178, %v3174
  %v4867 = vpack.c.b16 %v3179, %v3175
  %v4868 = vpack.c.b16 %v3184, %v3180
  %v4869 = vpack.c.b16 %v3185, %v3181
  %v4870 = vpack.c.b16 %v3186, %v3182
  %v4871 = vpack.c.b16 %v3187, %v3183
  %v4872 = vpack.c.b16 %v3192, %v3188
  %v4873 = vpack.c.b16 %v3193, %v3189
  %v4874 = vpack.c.b16 %v3194, %v3190
  %v4875 = vpack.c.b16 %v3195, %v3191
  %v4876 = vpack.c.b16 %v3200, %v3196
  %v4877 = vpack.c.b16 %v3201, %v3197
  %v4878 = vpack.c.b16 %v3202, %v3198
  %v4879 = vpack.c.b16 %v3203, %v3199
  %v4880 = vpack.c.b16 %v3208, %v3204
  %v4881 = vpack.c.b16 %v3209, %v3205
  %v4882 = vpack.c.b16 %v3210, %v3206
  %v4883 = vpack.c.b16 %v3211, %v3207
  %v4884 = vpack.c.b16 %v3216, %v3212
  %v4885 = vpack.c.b16 %v3217, %v3213
  %v4886 = vpack.c.b16 %v3218, %v3214
  %v4887 = vpack.c.b16 %v3219, %v3215
  %v4888 = vpack.c.b16 %v3224, %v3220
  %v4889 = vpack.c.b16 %v3225, %v3221
  %v4890 = vpack.c.b16 %v3226, %v3222
  %v4891 = vpack.c.b16 %v3227, %v3223
  %v4892 = vpack.c.b16 %v3232, %v3228
  %v4893 = vpack.c.b16 %v3233, %v3229
  %v4894 = vpack.c.b16 %v3234, %v3230
  %v4895 = vpack.c.b16 %v3235, %v3231
  %v4896 = vpack.c.b16 %v3240, %v3236
  %v4897 = vpack.c.b16 %v3241, %v3237
  %v4898 = vpack.c.b16 %v3242, %v3238
  %v4899 = vpack.c.b16 %v3243, %v3239
  %v4900 = vpack.c.b16 %v3248, %v3244
  %v4901 = vpack.c.b16 %v3249, %v3245
  %v4902 = vpack.c.b16 %v3250, %v3246
  %v4903 = vpack.c.b16 %v3251, %v3247
  %v4904 = vpack.c.b16 %v3256, %v3252
  %v4905 = vpack.c.b16 %v3257, %v3253
  %v4906 = vpack.c.b16 %v3258, %v3254
  %v4907 = vpack.c.b16 %v3259, %v3255
  %v4908 = vpack.c.b16 %v3264, %v3260
  %v4909 = vpack.c.b16 %v3265, %v3261
  %v4910 = vpack.c.b16 %v3266, %v3262
  %v4911 = vpack.c.b16 %v3267, %v3263
  %v4912 = vpack.c.b16 %v3272, %v3268
  %v4913 = vpack.c.b16 %v3273, %v3269
  %v4914 = vpack.c.b16 %v3274, %v3270
  %v4915 = vpack.c.b16 %v3275, %v3271
  %v4916 = vpack.c.b16 %v3280, %v3276
  %v4917 = vpack.c.b16 %v3281, %v3277
  %v4918 = vpack.c.b16 %v3282, %v3278
  %v4919 = vpack.c.b16 %v3283, %v3279
  %v4920 = vpack.c.b16 %v3288, %v3284
  %v4921 = vpack.c.b16 %v3289, %v3285
  %v4922 = vpack.c.b16 %v3290, %v3286
  %v4923 = vpack.c.b16 %v3291, %v3287
  %v4924 = vpack.c.b16 %v3296, %v3292
  %v4925 = vpack.c.b16 %v3297, %v3293
  %v4926 = vpack.c.b16 %v3298, %v3294
  %v4927 = vpack.c.b16 %v3299, %v3295
  %v4928 = vpack.c.b16 %v3304, %v3300
  %v4929 = vpack.c.b16 %v3305, %v3301
  %v4930 = vpack.c.b16 %v3306, %v3302
  %v4931 = vpack.c.b16 %v3307, %v3303
  %v4932 = vpack.c.b16 %v3312, %v3308
  %v4933 = vpack.c.b16 %v3313, %v3309
  %v4934 = vpack.c.b16 %v3314, %v3310
  %v4935 = vpack.c.b16 %v3315, %v3311
  %v4936 = vpack.c.b16 %v3320, %v3316
  %v4937 = vpack.c.b16 %v3321, %v3317
  %v4938 = vpack.c.b16 %v3322, %v3318
  %v4939 = vpack.c.b16 %v3323, %v3319
  %v4940 = vpack.c.b16 %v3328, %v3324
  %v4941 = vpack.c.b16 %v3329, %v3325
  %v4942 = vpack.c.b16 %v3330, %v3326
  %v4943 = vpack.c.b16 %v3331, %v3327
  %v4944 = vpack.c.b16 %v3336, %v3332
  %v4945 = vpack.c.b16 %v3337, %v3333
  %v4946 = vpack.c.b16 %v3338, %v3334
  %v4947 = vpack.c.b16 %v3339, %v3335
  %v4948 = vpack.c.b16 %v3344, %v3340
  %v4949 = vpack.c.b16 %v3345, %v3341
  %v4950 = vpack.c.b16 %v3346, %v3342
  %v4951 = vpack.c.b16 %v3347, %v3343
  %v4952 = vpack.c.b16 %v3352, %v3348
  %v4953 = vpack.c.b16 %v3353, %v3349
  %v4954 = vpack.c.b16 %v3354, %v3350
  %v4955 = vpack.c.b16 %v3355, %v3351
  %v4956 = vpack.c.b16 %v3360, %v3356
  %v4957 = vpack.c.b16 %v3361, %v3357
  %v4958 = vpack.c.b16 %v3362, %v3358
  %v4959 = vpack.c.b16 %v3363, %v3359
  %v4960 = vpack.c.b16 %v3368, %v3364
  %v4961 = vpack.c.b16 %v3369, %v3365
  %v4962 = vpack.c.b16 %v3370, %v3366
  %v4963 = vpack.c.b16 %v3371, %v3367
  %v4964 = vpack.c.b16 %v3376, %v3372
  %v4965 = vpack.c.b16 %v3377, %v3373
  %v4966 = vpack.c.b16 %v3378, %v3374
  %v4967 = vpack.c.b16 %v3379, %v3375
  %v4968 = vpack.c.b16 %v3384, %v3380
  %v4969 = vpack.c.b16 %v3385, %v3381
  %v4970 = vpack.c.b16 %v3386, %v3382
  %v4971 = vpack.c.b16 %v3387, %v3383
  %v4972 = vpack.c.b16 %v3392, %v3388
  %v4973 = vpack.c.b16 %v3393, %v3389
  %v4974 = vpack.c.b16 %v3394, %v3390
  %v4975 = vpack.c.b16 %v3395, %v3391
  %v4976 = vpack.c.b16 %v3400, %v3396
  %v4977 = vpack.c.b16 %v3401, %v3397
  %v4978 = vpack.c.b16 %v3402, %v3398
  %v4979 = vpack.c.b16 %v3403, %v3399
  %v4980 = vpack.c.b16 %v3408, %v3404
  %v4981 = vpack.c.b16 %v3409, %v3405
  %v4982 = vpack.c.b16 %v3410, %v3406
  %v4983 = vpack.c.b16 %v3411, %v3407
  %v4984 = vpack.c.b16 %v3416, %v3412
  %v4985 = vpack.c.b16 %v3417, %v3413
  %v4986 = vpack.c.b16 %v3418, %v3414
  %v4987 = vpack.c.b16 %v3419, %v3415
  %v4988 = vpack.c.b16 %v3424, %v3420
  %v4989 = vpack.c.b16 %v3425, %v3421
  %v4990 = vpack.c.b16 %v3426, %v3422
  %v4991 = vpack.c.b16 %v3427, %v3423
  %v4992 = vpack.c.b16 %v3432, %v3428
  %v4993 = vpack.c.b16 %v3433, %v3429
  %v4994 = vpack.c.b16 %v3434, %v3430
  %v4995 = vpack.c.b16 %v3435, %v3431
  %v4996 = vpack.c.b16 %v3440, %v3436
  %v4997 = vpack.c.b16 %v3441, %v3437
  %v4998 = vpack.c.b16 %v3442, %v3438
  %v4999 = vpack.c.b16 %v3443, %v3439
  %v5000 = vpack.c.b16 %v3448, %v3444
  %v5001 = vpack.c.b16 %v3449, %v3445
  %v5002 = vpack.c.b16 %v3450, %v3446
  %v5003 = vpack.c.b16 %v3451, %v3447
  %v5004 = vpack.c.b16 %v3456, %v3452
  %v5005 = vpack.c.b16 %v3457, %v3453
  %v5006 = vpack.c.b16 %v3458, %v3454
  %v5007 = vpack.c.b16 %v3459, %v3455
  %v5008 = vpack.c.b16 %v3464, %v3460
  %v5009 = vpack.c.b16 %v3465, %v3461
  %v5010 = vpack.c.b16 %v3466, %v3462
  %v5011 = vpack.c.b16 %v3467, %v3463
  %v5012 = vpack.c.b16 %v3472, %v3468
  %v5013 = vpack.c.b16 %v3473, %v3469
  %v5014 = vpack.c.b16 %v3474, %v3470
  %v5015 = vpack.c.b16 %v3475, %v3471
  %v5016 = vpack.c.b16 %v3480, %v3476
  %v5017 = vpack.c.b16 %v3481, %v3477
  %v5018 = vpack.c.b16 %v3482, %v3478
  %v5019 = vpack.c.b16 %v3483, %v3479
  %v5020 = vpack.c.b16 %v3488, %v3484
  %v5021 = vpack.c.b16 %v3489, %v3485
  %v5022 = vpack.c.b16 %v3490, %v3486
  %v5023 = vpack.c.b16 %v3491, %v3487
  %v5024 = vpack.c.b16 %v3496, %v3492
  %v5025 = vpack.c.b16 %v3497, %v3493
  %v5026 = vpack.c.b16 %v3498, %v3494
  %v5027 = vpack.c.b16 %v3499, %v3495
  %v5028 = vpack.c.b16 %v3504, %v3500
  %v5029 = vpack.c.b16 %v3505, %v3501
  %v5030 = vpack.c.b16 %v3506, %v3502
  %v5031 = vpack.c.b16 %v3507, %v3503
  %v5032 = vpack.c.b16 %v3512, %v3508
  %v5033 = vpack.c.b16 %v3513, %v3509
  %v5034 = vpack.c.b16 %v3514, %v3510
  %v5035 = vpack.c.b16 %v3515, %v3511
  %v5036 = vpack.c.b16 %v3520, %v3516
  %v5037 = vpack.c.b16 %v3521, %v3517
  %v5038 = vpack.c.b16 %v3522, %v3518
  %v5039 = vpack.c.b16 %v3523, %v3519
  %v5040 = vpack.c.b16 %v3528, %v3524
  %v5041 = vpack.c.b16 %v3529, %v3525
  %v5042 = vpack.c.b16 %v3530, %v3526
  %v5043 = vpack.c.b16 %v3531, %v3527
  %v5044 = vpack.c.b16 %v3536, %v3532
  %v5045 = vpack.c.b16 %v3537, %v3533
  %v5046 = vpack.c.b16 %v3538, %v3534
  %v5047 = vpack.c.b16 %v3539, %v3535
  %v5048 = vpack.c.b16 %v3544, %v3540
  %v5049 = vpack.c.b16 %v3545, %v3541
  %v5050 = vpack.c.b16 %v3546, %v3542
  %v5051 = vpack.c.b16 %v3547, %v3543
  %v5052 = vpack.c.b16 %v3552, %v3548
  %v5053 = vpack.c.b16 %v3553, %v3549
  %v5054 = vpack.c.b16 %v3554, %v3550
  %v5055 = vpack.c.b16 %v3555, %v3551
  %v5056 = vpack.c.b16 %v3560, %v3556
  %v5057 = vpack.c.b16 %v3561, %v3557
  %v5058 = vpack.c.b16 %v3562, %v3558
  %v5059 = vpack.c.b16 %v3563, %v3559
  %v5060 = vpack.c.b16 %v3568, %v3564
  %v5061 = vpack.c.b16 %v3569, %v3565
  %v5062 = vpack.c.b16 %v3570, %v3566
  %v5063 = vpack.c.b16 %v3571, %v3567
  %v5064 = vpack.c.b16 %v3576, %v3572
  %v5065 = vpack.c.b16 %v3577, %v3573
  %v5066 = vpack.c.b16 %v3578, %v3574
  %v5067 = vpack.c.b16 %v3579, %v3575
  %v5068 = vpack.c.b16 %v3584, %v3580
  %v5069 = vpack.c.b16 %v3585, %v3581
  %v5070 = vpack.c.b16 %v3586, %v3582
  %v5071 = vpack.c.b16 %v3587, %v3583
  %v5072 = vpack.c.b16 %v3592, %v3588
  %v5073 = vpack.c.b16 %v3593, %v3589
  %v5074 = vpack.c.b16 %v3594, %v3590
  %v5075 = vpack.c.b16 %v3595, %v3591
  %v5076 = vpack.c.b16 %v3600, %v3596
  %v5077 = vpack.c.b16 %v3601, %v3597
  %v5078 = vpack.c.b16 %v3602, %v3598
  %v5079 = vpack.c.b16 %v3603, %v3599
  %v5080 = vpack.c.b16 %v3608, %v3604
  %v5081 = vpack.c.b16 %v3609, %v3605
  %v5082 = vpack.c.b16 %v3610, %v3606
  %v5083 = vpack.c.b16 %v3611, %v3607
  %v5084 = vpack.c.b16 %v3616, %v3612
  %v5085 = vpack.c.b16 %v3617, %v3613
  %v5086 = vpack.c.b16 %v3618, %v3614
  %v5087 = vpack.c.b16 %v3619, %v3615
  %v5088 = vpack.c.b16 %v3624, %v3620
  %v5089 = vpack.c.b16 %v3625, %v3621
  %v5090 = vpack.c.b16 %v3626, %v3622
  %v5091 = vpack.c.b16 %v3627, %v3623
  %v5092 = vpack.c.b16 %v3632, %v3628
  %v5093 = vpack.c.b16 %v3633, %v3629
  %v5094 = vpack.c.b16 %v3634, %v3630
  %v5095 = vpack.c.b16 %v3635, %v3631
  %v5096 = vpack.c.b16 %v3640, %v3636
  %v5097 = vpack.c.b16 %v3641, %v3637
  %v5098 = vpack.c.b16 %v3642, %v3638
  %v5099 = vpack.c.b16 %v3643, %v3639
  %v5100 = vpack.c.b16 %v3648, %v3644
  %v5101 = vpack.c.b16 %v3649, %v3645
  %v5102 = vpack.c.b16 %v3650, %v3646
  %v5103 = vpack.c.b16 %v3651, %v3647
  %v5104 = vpack.c.b16 %v3656, %v3652
  %v5105 = vpack.c.b16 %v3657, %v3653
  %v5106 = vpack.c.b16 %v3658, %v3654
  %v5107 = vpack.c.b16 %v3659, %v3655
  %v5108 = vpack.c.b16 %v3664, %v3660
  %v5109 = vpack.c.b16 %v3665, %v3661
  %v5110 = vpack.c.b16 %v3666, %v3662
  %v5111 = vpack.c.b16 %v3667, %v3663
  %v5112 = vpack.c.b16 %v3672, %v3668
  %v5113 = vpack.c.b16 %v3673, %v3669
  %v5114 = vpack.c.b16 %v3674, %v3670
  %v5115 = vpack.c.b16 %v3675, %v3671
  %v5116 = vpack.c.b16 %v3680, %v3676
  %v5117 = vpack.c.b16 %v3681, %v3677
  %v5118 = vpack.c.b16 %v3682, %v3678
  %v5119 = vpack.c.b16 %v3683, %v3679
  %v5120 = vpack.c.b16 %v3688, %v3684
  %v5121 = vpack.c.b16 %v3689, %v3685
  %v5122 = vpack.c.b16 %v3690, %v3686
  %v5123 = vpack.c.b16 %v3691, %v3687
  %v5124 = vpack.c.b16 %v3696, %v3692
  %v5125 = vpack.c.b16 %v3697, %v3693
  %v5126 = vpack.c.b16 %v3698, %v3694
  %v5127 = vpack.c.b16 %v3699, %v3695
  %v5128 = vpack.c.b16 %v3704, %v3700
  %v5129 = vpack.c.b16 %v3705, %v3701
  %v5130 = vpack.c.b16 %v3706, %v3702
  %v5131 = vpack.c.b16 %v3707, %v3703
  %v5132 = vpack.c.b16 %v3712, %v3708
  %v5133 = vpack.c.b16 %v3713, %v3709
  %v5134 = vpack.c.b16 %v3714, %v3710
  %v5135 = vpack.c.b16 %v3715, %v3711
  %v5136 = vpack.c.b16 %v3720, %v3716
  %v5137 = vpack.c.b16 %v3721, %v3717
  %v5138 = vpack.c.b16 %v3722, %v3718
  %v5139 = vpack.c.b16 %v3723, %v3719
  %v5140 = vpack.c.b16 %v3728, %v3724
  %v5141 = vpack.c.b16 %v3729, %v3725
  %v5142 = vpack.c.b16 %v3730, %v3726
  %v5143 = vpack.c.b16 %v3731, %v3727
  %v5144 = vpack.c.b16 %v3736, %v3732
  %v5145 = vpack.c.b16 %v3737, %v3733
  %v5146 = vpack.c.b16 %v3738, %v3734
  %v5147 = vpack.c.b16 %v3739, %v3735
  %v5148 = vpack.c.b16 %v3744, %v3740
  %v5149 = vpack.c.b16 %v3745, %v3741
  %v5150 = vpack.c.b16 %v3746, %v3742
  %v5151 = vpack.c.b16 %v3747, %v3743
  %v5152 = vpack.c.b16 %v3752, %v3748
  %v5153 = vpack.c.b16 %v3753, %v3749
  %v5154 = vpack.c.b16 %v3754, %v3750
  %v5155 = vpack.c.b16 %v3755, %v3751
  %v5156 = vpack.c.b16 %v3760, %v3756
  %v5157 = vpack.c.b16 %v3761, %v3757
  %v5158 = vpack.c.b16 %v3762, %v3758
  %v5159 = vpack.c.b16 %v3763, %v3759
  %v5160 = vpack.c.b16 %v3768, %v3764
  %v5161 = vpack.c.b16 %v3769, %v3765
  %v5162 = vpack.c.b16 %v3770, %v3766
  %v5163 = vpack.c.b16 %v3771, %v3767
  %v5164 = vpack.c.b16 %v3776, %v3772
  %v5165 = vpack.c.b16 %v3777, %v3773
  %v5166 = vpack.c.b16 %v3778, %v3774
  %v5167 = vpack.c.b16 %v3779, %v3775
  %v5168 = vpack.c.b16 %v3784, %v3780
  %v5169 = vpack.c.b16 %v3785, %v3781
  %v5170 = vpack.c.b16 %v3786, %v3782
  %v5171 = vpack.c.b16 %v3787, %v3783
  %v5172 = vpack.c.b16 %v3792, %v3788
  %v5173 = vpack.c.b16 %v3793, %v3789
  %v5174 = vpack.c.b16 %v3794, %v3790
  %v5175 = vpack.c.b16 %v3795, %v3791
  %v5176 = vpack.c.b16 %v3800, %v3796
  %v5177 = vpack.c.b16 %v3801, %v3797
  %v5178 = vpack.c.b16 %v3802, %v3798
  %v5179 = vpack.c.b16 %v3803, %v3799
  %v5180 = vpack.c.b16 %v3808, %v3804
  %v5181 = vpack.c.b16 %v3809, %v3805
  %v5182 = vpack.c.b16 %v3810, %v3806
  %v5183 = vpack.c.b16 %v3811, %v3807
  %v5184 = vpack.c.b16 %v3816, %v3812
  %v5185 = vpack.c.b16 %v3817, %v3813
  %v5186 = vpack.c.b16 %v3818, %v3814
  %v5187 = vpack.c.b16 %v3819, %v3815
  %v5188 = vpack.c.b16 %v3824, %v3820
  %v5189 = vpack.c.b16 %v3825, %v3821
  %v5190 = vpack.c.b16 %v3826, %v3822
  %v5191 = vpack.c.b16 %v3827, %v3823
  %v5192 = vpack.c.b16 %v3832, %v3828
  %v5193 = vpack.c.b16 %v3833, %v3829
  %v5194 = vpack.c.b16 %v3834, %v3830
  %v5195 = vpack.c.b16 %v3835, %v3831
  %v5196 = vpack.c.b16 %v3840, %v3836
  %v5197 = vpack.c.b16 %v3841, %v3837
  %v5198 = vpack.c.b16 %v3842, %v3838
  %v5199 = vpack.c.b16 %v3843, %v3839
  %v5200 = vpack.c.b16 %v3848, %v3844
  %v5201 = vpack.c.b16 %v3849, %v3845
  %v5202 = vpack.c.b16 %v3850, %v3846
  %v5203 = vpack.c.b16 %v3851, %v3847
  %v5204 = vpack.c.b16 %v3856, %v3852
  %v5205 = vpack.c.b16 %v3857, %v3853
  %v5206 = vpack.c.b16 %v3858, %v3854
  %v5207 = vpack.c.b16 %v3859, %v3855
  %v5208 = vpack.c.b16 %v3864, %v3860
  %v5209 = vpack.c.b16 %v3865, %v3861
  %v5210 = vpack.c.b16 %v3866, %v3862
  %v5211 = vpack.c.b16 %v3867, %v3863
  %v5212 = vpack.c.b16 %v3872, %v3868
  %v5213 = vpack.c.b16 %v3873, %v3869
  %v5214 = vpack.c.b16 %v3874, %v3870
  %v5215 = vpack.c.b16 %v3875, %v3871
  %v5216 = vpack.c.b16 %v3880, %v3876
  %v5217 = vpack.c.b16 %v3881, %v3877
  %v5218 = vpack.c.b16 %v3882, %v3878
  %v5219 = vpack.c.b16 %v3883, %v3879
  %v5220 = vpack.c.b16 %v3888, %v3884
  %v5221 = vpack.c.b16 %v3889, %v3885
  %v5222 = vpack.c.b16 %v3890, %v3886
  %v5223 = vpack.c.b16 %v3891, %v3887
  %v5224 = vpack.c.b16 %v3896, %v3892
  %v5225 = vpack.c.b16 %v3897, %v3893
  %v5226 = vpack.c.b16 %v3898, %v3894
  %v5227 = vpack.c.b16 %v3899, %v3895
  %v5228 = vpack.c.b16 %v3904, %v3900
  %v5229 = vpack.c.b16 %v3905, %v3901
  %v5230 = vpack.c.b16 %v3906, %v3902
  %v5231 = vpack.c.b16 %v3907, %v3903
  %v5232 = vpack.c.b16 %v3912, %v3908
  %v5233 = vpack.c.b16 %v3913, %v3909
  %v5234 = vpack.c.b16 %v3914, %v3910
  %v5235 = vpack.c.b16 %v3915, %v3911
  %v5236 = vpack.c.b16 %v3920, %v3916
  %v5237 = vpack.c.b16 %v3921, %v3917
  %v5238 = vpack.c.b16 %v3922, %v3918
  %v5239 = vpack.c.b16 %v3923, %v3919
  %v5240 = vpack.c.b16 %v3928, %v3924
  %v5241 = vpack.c.b16 %v3929, %v3925
  %v5242 = vpack.c.b16 %v3930, %v3926
  %v5243 = vpack.c.b16 %v3931, %v3927
  %v5244 = vpack.c.b16 %v3936, %v3932
  %v5245 = vpack.c.b16 %v3937, %v3933
  %v5246 = vpack.c.b16 %v3938, %v3934
  %v5247 = vpack.c.b16 %v3939, %v3935
  %v5248 = vpack.c.b16 %v3944, %v3940
  %v5249 = vpack.c.b16 %v3945, %v3941
  %v5250 = vpack.c.b16 %v3946, %v3942
  %v5251 = vpack.c.b16 %v3947, %v3943
  %v5252 = vpack.c.b16 %v3952, %v3948
  %v5253 = vpack.c.b16 %v3953, %v3949
  %v5254 = vpack.c.b16 %v3954, %v3950
  %v5255 = vpack.c.b16 %v3955, %v3951
  %v5256 = vpack.c.b16 %v3960, %v3956
  %v5257 = vpack.c.b16 %v3961, %v3957
  %v5258 = vpack.c.b16 %v3962, %v3958
  %v5259 = vpack.c.b16 %v3963, %v3959
  %v5260 = vpack.c.b16 %v3968, %v3964
  %v5261 = vpack.c.b16 %v3969, %v3965
  %v5262 = vpack.c.b16 %v3970, %v3966
  %v5263 = vpack.c.b16 %v3971, %v3967
  %v5264 = vpack.c.b16 %v3976, %v3972
  %v5265 = vpack.c.b16 %v3977, %v3973
  %v5266 = vpack.c.b16 %v3978, %v3974
  %v5267 = vpack.c.b16 %v3979, %v3975
  %v5268 = vpack.c.b16 %v3984, %v3980
  %v5269 = vpack.c.b16 %v3985, %v3981
  %v5270 = vpack.c.b16 %v3986, %v3982
  %v5271 = vpack.c.b16 %v3987, %v3983
  %v5272 = vpack.c.b16 %v3992, %v3988
  %v5273 = vpack.c.b16 %v3993, %v3989
  %v5274 = vpack.c.b16 %v3994, %v3990
  %v5275 = vpack.c.b16 %v3995, %v3991
  %v5276 = vpack.c.b16 %v4000, %v3996
  %v5277 = vpack.c.b16 %v4001, %v3997
  %v5278 = vpack.c.b16 %v4002, %v3998
  %v5279 = vpack.c.b16 %v4003, %v3999
  %v5280 = vpack.c.b16 %v4008, %v4004
  %v5281 = vpack.c.b16 %v4009, %v4005
  %v5282 = vpack.c.b16 %v4010, %v4006
  %v5283 = vpack.c.b16 %v4011, %v4007
  %v5284 = vpack.c.b16 %v4016, %v4012
  %v5285 = vpack.c.b16 %v4017, %v4013
  %v5286 = vpack.c.b16 %v4018, %v4014
  %v5287 = vpack.c.b16 %v4019, %v4015
  %v5288 = vpack.c.b16 %v4024, %v4020
  %v5289 = vpack.c.b16 %v4025, %v4021
  %v5290 = vpack.c.b16 %v4026, %v4022
  %v5291 = vpack.c.b16 %v4027, %v4023
  %v5292 = vpack.c.b16 %v4032, %v4028
  %v5293 = vpack.c.b16 %v4033, %v4029
  %v5294 = vpack.c.b16 %v4034, %v4030
  %v5295 = vpack.c.b16 %v4035, %v4031
  %v5296 = vpack.c.b16 %v4040, %v4036
  %v5297 = vpack.c.b16 %v4041, %v4037
  %v5298 = vpack.c.b16 %v4042, %v4038
  %v5299 = vpack.c.b16 %v4043, %v4039
  %v5300 = vpack.c.b16 %v4048, %v4044
  %v5301 = vpack.c.b16 %v4049, %v4045
  %v5302 = vpack.c.b16 %v4050, %v4046
  %v5303 = vpack.c.b16 %v4051, %v4047
  %v5304 = vpack.c.b16 %v4056, %v4052
  %v5305 = vpack.c.b16 %v4057, %v4053
  %v5306 = vpack.c.b16 %v4058, %v4054
  %v5307 = vpack.c.b16 %v4059, %v4055
  %v5308 = vpack.c.b16 %v4064, %v4060
  %v5309 = vpack.c.b16 %v4065, %v4061
  %v5310 = vpack.c.b16 %v4066, %v4062
  %v5311 = vpack.c.b16 %v4067, %v4063
  %v5312 = vpack.c.b16 %v4072, %v4068
  %v5313 = vpack.c.b16 %v4073, %v4069
  %v5314 = vpack.c.b16 %v4074, %v4070
  %v5315 = vpack.c.b16 %v4075, %v4071
  %v5316 = vpack.c.b16 %v4080, %v4076
  %v5317 = vpack.c.b16 %v4081, %v4077
  %v5318 = vpack.c.b16 %v4082, %v4078
  %v5319 = vpack.c.b16 %v4083, %v4079
  %v5320 = vpack.c.b16 %v4088, %v4084
  %v5321 = vpack.c.b16 %v4089, %v4085
  %v5322 = vpack.c.b16 %v4090, %v4086
  %v5323 = vpack.c.b16 %v4091, %v4087
  %v5324 = vpack.c.b16 %v4096, %v4092
  %v5325 = vpack.c.b16 %v4097, %v4093
  %v5326 = vpack.c.b16 %v4098, %v4094
  %v5327 = vpack.c.b16 %v4099, %v4095
  %v5328 = vpack.c.b16 %v4104, %v4100
  %v5329 = vpack.c.b16 %v4105, %v4101
  %v5330 = vpack.c.b16 %v4106, %v4102
  %v5331 = vpack.c.b16 %v4107, %v4103
  %v5332 = vpack.c.b16 %v4112, %v4108
  %v5333 = vpack.c.b16 %v4113, %v4109
  %v5334 = vpack.c.b16 %v4114, %v4110
  %v5335 = vpack.c.b16 %v4115, %v4111
  %v5336 = vpack.c.b16 %v4120, %v4116
  %v5337 = vpack.c.b16 %v4121, %v4117
  %v5338 = vpack.c.b16 %v4122, %v4118
  %v5339 = vpack.c.b16 %v4123, %v4119
  %v5340 = vpack.c.b16 %v4128, %v4124
  %v5341 = vpack.c.b16 %v4129, %v4125
  %v5342 = vpack.c.b16 %v4130, %v4126
  %v5343 = vpack.c.b16 %v4131, %v4127
  %v5344 = vpack.c.b16 %v4136, %v4132
  %v5345 = vpack.c.b16 %v4137, %v4133
  %v5346 = vpack.c.b16 %v4138, %v4134
  %v5347 = vpack.c.b16 %v4139, %v4135
  %v5348 = vpack.c.b16 %v4144, %v4140
  %v5349 = vpack.c.b16 %v4145, %v4141
  %v5350 = vpack.c.b16 %v4146, %v4142
  %v5351 = vpack.c.b16 %v4147, %v4143
  %v5352 = vpack.c.b16 %v4152, %v4148
  %v5353 = vpack.c.b16 %v4153, %v4149
  %v5354 = vpack.c.b16 %v4154, %v4150
  %v5355 = vpack.c.b16 %v4155, %v4151
  %v5356 = vpack.c.b16 %v4160, %v4156
  %v5357 = vpack.c.b16 %v4161, %v4157
  %v5358 = vpack.c.b16 %v4162, %v4158
  %v5359 = vpack.c.b16 %v4163, %v4159
  %v5360 = vpack.c.b16 %v4168, %v4164
  %v5361 = vpack.c.b16 %v4169, %v4165
  %v5362 = vpack.c.b16 %v4170, %v4166
  %v5363 = vpack.c.b16 %v4171, %v4167
  %v5364 = vpack.c.b16 %v4176, %v4172
  %v5365 = vpack.c.b16 %v4177, %v4173
  %v5366 = vpack.c.b16 %v4178, %v4174
  %v5367 = vpack.c.b16 %v4179, %v4175
  %v5368 = vpack.c.b16 %v4184, %v4180
  %v5369 = vpack.c.b16 %v4185, %v4181
  %v5370 = vpack.c.b16 %v4186, %v4182
  %v5371 = vpack.c.b16 %v4187, %v4183
  %v5372 = vpack.c.b16 %v4192, %v4188
  %v5373 = vpack.c.b16 %v4193, %v4189
  %v5374 = vpack.c.b16 %v4194, %v4190
  %v5375 = vpack.c.b16 %v4195, %v4191
  %v5376 = vpack.c.b16 %v4200, %v4196
  %v5377 = vpack.c.b16 %v4201, %v4197
  %v5378 = vpack.c.b16 %v4202, %v4198
  %v5379 = vpack.c.b16 %v4203, %v4199
  %v5380 = vpack.c.b16 %v4208, %v4204
  %v5381 = vpack.c.b16 %v4209, %v4205
  %v5382 = vpack.c.b16 %v4210, %v4206
  %v5383 = vpack.c.b16 %v4211, %v4207
  %v5384 = vpack.c.b16 %v4216, %v4212
  %v5385 = vpack.c.b16 %v4217, %v4213
  %v5386 = vpack.c.b16 %v4218, %v4214
  %v5387 = vpack.c.b16 %v4219, %v4215
  %v5388 = vpack.c.b16 %v4224, %v4220
  %v5389 = vpack.c.b16 %v4225, %v4221
  %v5390 = vpack.c.b16 %v4226, %v4222
  %v5391 = vpack.c.b16 %v4227, %v4223
  %v5392 = vpack.c.b16 %v4232, %v4228
  %v5393 = vpack.c.b16 %v4233, %v4229
  %v5394 = vpack.c.b16 %v4234, %v4230
  %v5395 = vpack.c.b16 %v4235, %v4231
  %v5396 = vpack.c.b16 %v4240, %v4236
  %v5397 = vpack.c.b16 %v4241, %v4237
  %v5398 = vpack.c.b16 %v4242, %v4238
  %v5399 = vpack.c.b16 %v4243, %v4239
  %v5400 = vpack.c.b16 %v4248, %v4244
  %v5401 = vpack.c.b16 %v4249, %v4245
  %v5402 = vpack.c.b16 %v4250, %v4246
  %v5403 = vpack.c.b16 %v4251, %v4247
  %v5404 = vpack.c.b16 %v4256, %v4252
  %v5405 = vpack.c.b16 %v4257, %v4253
  %v5406 = vpack.c.b16 %v4258, %v4254
  %v5407 = vpack.c.b16 %v4259, %v4255
  %v5408 = vpack.c.b16 %v4264, %v4260
  %v5409 = vpack.c.b16 %v4265, %v4261
  %v5410 = vpack.c.b16 %v4266, %v4262
  %v5411 = vpack.c.b16 %v4267, %v4263
  %v5412 = vpack.c.b16 %v4272, %v4268
  %v5413 = vpack.c.b16 %v4273, %v4269
  %v5414 = vpack.c.b16 %v4274, %v4270
  %v5415 = vpack.c.b16 %v4275, %v4271
  %v5416 = vpack.c.b16 %v4280, %v4276
  %v5417 = vpack.c.b16 %v4281, %v4277
  %v5418 = vpack.c.b16 %v4282, %v4278
  %v5419 = vpack.c.b16 %v4283, %v4279
  %v5420 = vpack.c.b16 %v4288, %v4284
  %v5421 = vpack.c.b16 %v4289, %v4285
  %v5422 = vpack.c.b16 %v4290, %v4286
  %v5423 = vpack.c.b16 %v4291, %v4287
  %v5424 = vpack.c.b16 %v4296, %v4292
  %v5425 = vpack.c.b16 %v4297, %v4293
  %v5426 = vpack.c.b16 %v4298, %v4294
  %v5427 = vpack.c.b16 %v4299, %v4295
  %v5428 = vpack.c.b16 %v4304, %v4300
  %v5429 = vpack.c.b16 %v4305, %v4301
  %v5430 = vpack.c.b16 %v4306, %v4302
  %v5431 = vpack.c.b16 %v4307, %v4303
  %v5432 = vpack.c.b16 %v4312, %v4308
  %v5433 = vpack.c.b16 %v4313, %v4309
  %v5434 = vpack.c.b16 %v4314, %v4310
  %v5435 = vpack.c.b16 %v4315, %v4311
  %v5436 = vpack.c.b16 %v4320, %v4316
  %v5437 = vpack.c.b16 %v4321, %v4317
  %v5438 = vpack.c.b16 %v4322, %v4318
  %v5439 = vpack.c.b16 %v4323, %v4319
  %v5440 = vpack.c.b16 %v4328, %v4324
  %v5441 = vpack.c.b16 %v4329, %v4325
  %v5442 = vpack.c.b16 %v4330, %v4326
  %v5443 = vpack.c.b16 %v4331, %v4327
  %v5444 = vpack.c.b16 %v4336, %v4332
  %v5445 = vpack.c.b16 %v4337, %v4333
  %v5446 = vpack.c.b16 %v4338, %v4334
  %v5447 = vpack.c.b16 %v4339, %v4335
  %v5448 = vpack.c.b16 %v4344, %v4340
  %v5449 = vpack.c.b16 %v4345, %v4341
  %v5450 = vpack.c.b16 %v4346, %v4342
  %v5451 = vpack.c.b16 %v4347, %v4343
  %v5452 = vpack.c.b16 %v4352, %v4348
  %v5453 = vpack.c.b16 %v4353, %v4349
  %v5454 = vpack.c.b16 %v4354, %v4350
  %v5455 = vpack.c.b16 %v4355, %v4351
  %v5456 = vpack.c.b16 %v4360, %v4356
  %v5457 = vpack.c.b16 %v4361, %v4357
  %v5458 = vpack.c.b16 %v4362, %v4358
  %v5459 = vpack.c.b16 %v4363, %v4359
  %v5460 = vpack.c.b16 %v4368, %v4364
  %v5461 = vpack.c.b16 %v4369, %v4365
  %v5462 = vpack.c.b16 %v4370, %v4366
  %v5463 = vpack.c.b16 %v4371, %v4367
  %v5464 = vpack.c.b16 %v4376, %v4372
  %v5465 = vpack.c.b16 %v4377, %v4373
  %v5466 = vpack.c.b16 %v4378, %v4374
  %v5467 = vpack.c.b16 %v4379, %v4375
  %v5468 = vpack.c.b16 %v4384, %v4380
  %v5469 = vpack.c.b16 %v4385, %v4381
  %v5470 = vpack.c.b16 %v4386, %v4382
  %v5471 = vpack.c.b16 %v4387, %v4383
  %v5472 = vpack.c.b16 %v4392, %v4388
  %v5473 = vpack.c.b16 %v4393, %v4389
  %v5474 = vpack.c.b16 %v4394, %v4390
  %v5475 = vpack.c.b16 %v4395, %v4391
  %v5476 = vpack.c.b16 %v4400, %v4396
  %v5477 = vpack.c.b16 %v4401, %v4397
  %v5478 = vpack.c.b16 %v4402, %v4398
  %v5479 = vpack.c.b16 %v4403, %v4399
  %v5480 = vpack.c.b16 %v4408, %v4404
  %v5481 = vpack.c.b16 %v4409, %v4405
  %v5482 = vpack.c.b16 %v4410, %v4406
  %v5483 = vpack.c.b16 %v4411, %v4407
  %v5484 = vpack.c.b16 %v4416, %v4412
  %v5485 = vpack.c.b16 %v4417, %v4413
  %v5486 = vpack.c.b16 %v4418, %v4414
  %v5487 = vpack.c.b16 %v4419, %v4415
  %v5488 = vpack.c.b16 %v4424, %v4420
  %v5489 = vpack.c.b16 %v4425, %v4421
  %v5490 = vpack.c.b16 %v4426, %v4422
  %v5491 = vpack.c.b16 %v4427, %v4423
  %v5492 = vpack.c.b16 %v4432, %v4428
  %v5493 = vpack.c.b16 %v4433, %v4429
  %v5494 = vpack.c.b16 %v4434, %v4430
  %v5495 = vpack.c.b16 %v4435, %v4431
  %v5496 = vpack.c.b16 %v4440, %v4436
  %v5497 = vpack.c.b16 %v4441, %v4437
  %v5498 = vpack.c.b16 %v4442, %v4438
  %v5499 = vpack.c.b16 %v4443, %v4439
  %v5500 = vpack.c.b16 %v4448, %v4444
  %v5501 = vpack.c.b16 %v4449, %v4445
  %v5502 = vpack.c.b16 %v4450, %v4446
  %v5503 = vpack.c.b16 %v4451, %v4447
  %v5504 = vpack.c.b16 %v4456, %v4452
  %v5505 = vpack.c.b16 %v4457, %v4453
  %v5506 = vpack.c.b16 %v4458, %v4454
  %v5507 = vpack.c.b16 %v4459, %v4455
  %v5508 = vpack.c.b16 %v4464, %v4460
  %v5509 = vpack.c.b16 %v4465, %v4461
  %v5510 = vpack.c.b16 %v4466, %v4462
  %v5511 = vpack.c.b16 %v4467, %v4463
  %v5512 = vpack.c.b16 %v4472, %v4468
  %v5513 = vpack.c.b16 %v4473, %v4469
  %v5514 = vpack.c.b16 %v4474, %v4470
  %v5515 = vpack.c.b16 %v4475, %v4471
  %v5516 = vpack.c.b16 %v4480, %v4476
  %v5517 = vpack.c.b16 %v4481, %v4477
  %v5518 = vpack.c.b16 %v4482, %v4478
  %v5519 = vpack.c.b16 %v4483, %v4479
  %v5520 = vpack.c.b16 %v4488, %v4484
  %v5521 = vpack.c.b16 %v4489, %v4485
  %v5522 = vpack.c.b16 %v4490, %v4486
  %v5523 = vpack.c.b16 %v4491, %v4487
  %v5524 = vpack.c.b16 %v4496, %v4492
  %v5525 = vpack.c.b16 %v4497, %v4493
  %v5526 = vpack.c.b16 %v4498, %v4494
  %v5527 = vpack.c.b16 %v4499, %v4495
  %v5528 = vpack.c.b16 %v4504, %v4500
  %v5529 = vpack.c.b16 %v4505, %v4501
  %v5530 = vpack.c.b16 %v4506, %v4502
  %v5531 = vpack.c.b16 %v4507, %v4503
  %6556 = vmatprep.subr.bf16.mxu0 %v4509
  %6557 = vmatpush1.bf16.msra.mxu0 %v4508
  %6558 = vmatprep.subr.bf16.mxu0 %v4513
  %6559 = vmatpush1.bf16.msra.mxu0 %v4512
  %6560 = vmatprep.subr.bf16.mxu0 %v4517
  %6561 = vmatpush1.bf16.msra.mxu0 %v4516
  %6562 = vmatprep.subr.bf16.mxu0 %v4521
  %6563 = vmatpush1.bf16.msra.mxu0 %v4520
  %6564 = vmatprep.subr.bf16.mxu0 %v4525
  %6565 = vmatpush1.bf16.msra.mxu0 %v4524
  %6566 = vmatprep.subr.bf16.mxu0 %v4529
  %6567 = vmatpush1.bf16.msra.mxu0 %v4528
  %6568 = vmatprep.subr.bf16.mxu0 %v4533
  %6569 = vmatpush1.bf16.msra.mxu0 %v4532
  %6570 = vmatprep.subr.bf16.mxu0 %v4537
  %6571 = vmatpush1.bf16.msra.mxu0 %v4536
  %6572 = vmatprep.subr.bf16.mxu0 %v4541
  %6573 = vmatpush1.bf16.msra.mxu0 %v4540
  %6574 = vmatprep.subr.bf16.mxu0 %v4545
  %6575 = vmatpush1.bf16.msra.mxu0 %v4544
  %6576 = vmatprep.subr.bf16.mxu0 %v4549
  %6577 = vmatpush1.bf16.msra.mxu0 %v4548
  %6578 = vmatprep.subr.bf16.mxu0 %v4553
  %6579 = vmatpush1.bf16.msra.mxu0 %v4552
  %6580 = vmatprep.subr.bf16.mxu0 %v4557
  %6581 = vmatpush1.bf16.msra.mxu0 %v4556
  %6582 = vmatprep.subr.bf16.mxu0 %v4561
  %6583 = vmatpush1.bf16.msra.mxu0 %v4560
  %6584 = vmatprep.subr.bf16.mxu0 %v4565
  %6585 = vmatpush1.bf16.msra.mxu0 %v4564
  %6586 = vmatprep.subr.bf16.mxu0 %v4569
  %6587 = vmatpush1.bf16.msra.mxu0 %v4568
  %6588 = vmatprep.mubr.bf16.mxu0 %v1309
  %6589 = vmatmul.mubr.bf16.gmra.mrb[0].mxu0 %v1308
  %v6590 = vpop.f32.mrb[0].mxu0
  %v6591 = vadd.f32 0.0, %v6590
  %v6592 = vpop.f32.mrb[0].mxu0
  %v6593 = vadd.f32 0.0, %v6592
  %v6594 = vpop.f32.mrb[0].mxu0
  %v6595 = vadd.f32 0.0, %v6594
  %v6596 = vpop.f32.mrb[0].mxu0
  %v6597 = vadd.f32 0.0, %v6596
  %6598 = vmatprep.mubr.bf16.mxu0 %v1341
  %6599 = vmatmul.mubr.bf16.gmra.mrb[0].mxu0 %v1340
  %v6600 = vpop.f32.mrb[0].mxu0
  %v6601 = vadd.f32 0.0, %v6600
  %v6602 = vpop.f32.mrb[0].mxu0
  %v6603 = vadd.f32 0.0, %v6602
  %v6604 = vpop.f32.mrb[0].mxu0
  %v6605 = vadd.f32 0.0, %v6604
  %v6606 = vpop.f32.mrb[0].mxu0
  %v6607 = vadd.f32 0.0, %v6606
  %6608 = vdwg.mxu0
  %6609 = vmatprep.subr.bf16.mxu0 %v4573
  %6610 = vmatpush1.bf16.msra.mxu0 %v4572
  %6611 = vmatprep.subr.bf16.mxu0 %v4577
  %6612 = vmatpush1.bf16.msra.mxu0 %v4576
  %6613 = vmatprep.subr.bf16.mxu0 %v4581
  %6614 = vmatpush1.bf16.msra.mxu0 %v4580
  %6615 = vmatprep.subr.bf16.mxu0 %v4585
  %6616 = vmatpush1.bf16.msra.mxu0 %v4584
  %6617 = vmatprep.subr.bf16.mxu0 %v4589
  %6618 = vmatpush1.bf16.msra.mxu0 %v4588
  %6619 = vmatprep.subr.bf16.mxu0 %v4593
  %6620 = vmatpush1.bf16.msra.mxu0 %v4592
  %6621 = vmatprep.subr.bf16.mxu0 %v4597
  %6622 = vmatpush1.bf16.msra.mxu0 %v4596
  %6623 = vmatprep.subr.bf16.mxu0 %v4601
  %6624 = vmatpush1.bf16.msra.mxu0 %v4600
  %6625 = vmatprep.subr.bf16.mxu0 %v4605
  %6626 = vmatpush1.bf16.msra.mxu0 %v4604
  %6627 = vmatprep.subr.bf16.mxu0 %v4609
  %6628 = vmatpush1.bf16.msra.mxu0 %v4608
  %6629 = vmatprep.subr.bf16.mxu0 %v4613
  %6630 = vmatpush1.bf16.msra.mxu0 %v4612
  %6631 = vmatprep.subr.bf16.mxu0 %v4617
  %6632 = vmatpush1.bf16.msra.mxu0 %v4616
  %6633 = vmatprep.subr.bf16.mxu0 %v4621
  %6634 = vmatpush1.bf16.msra.mxu0 %v4620
  %6635 = vmatprep.subr.bf16.mxu0 %v4625
  %6636 = vmatpush1.bf16.msra.mxu0 %v4624
  %6637 = vmatprep.subr.bf16.mxu0 %v4629
  %6638 = vmatpush1.bf16.msra.mxu0 %v4628
  %6639 = vmatprep.subr.bf16.mxu0 %v4633
  %6640 = vmatpush1.bf16.msra.mxu0 %v4632
  %6641 = vmatprep.mubr.bf16.mxu0 %v1311
  %6642 = vmatmul.mubr.bf16.gmra.mrb[0].mxu0 %v1310
  %v6643 = vpop.f32.mrb[0].mxu0
  %v6644 = vadd.f32 %v6591, %v6643
  %v6645 = vpop.f32.mrb[0].mxu0
  %v6646 = vadd.f32 %v6593, %v6645
  %v6647 = vpop.f32.mrb[0].mxu0
  %v6648 = vadd.f32 %v6595, %v6647
  %v6649 = vpop.f32.mrb[0].mxu0
  %v6650 = vadd.f32 %v6597, %v6649
  %6651 = vmatprep.mubr.bf16.mxu0 %v1343
  %6652 = vmatmul.mubr.bf16.gmra.mrb[0].mxu0 %v1342
  %v6653 = vpop.f32.mrb[0].mxu0
  %v6654 = vadd.f32 %v6601, %v6653
  %v6655 = vpop.f32.mrb[0].mxu0
  %v6656 = vadd.f32 %v6603, %v6655
  %v6657 = vpop.f32.mrb[0].mxu0
  %v6658 = vadd.f32 %v6605, %v6657
  %v6659 = vpop.f32.mrb[0].mxu0
  %v6660 = vadd.f32 %v6607, %v6659
  %6661 = vdwg.mxu0
  %6662 = vmatprep.subr.bf16.mxu0 %v4637
  %6663 = vmatpush1.bf16.msra.mxu0 %v4636
  %6664 = vmatprep.subr.bf16.mxu0 %v4641
  %6665 = vmatpush1.bf16.msra.mxu0 %v4640
  %6666 = vmatprep.subr.bf16.mxu0 %v4645
  %6667 = vmatpush1.bf16.msra.mxu0 %v4644
  %6668 = vmatprep.subr.bf16.mxu0 %v4649
  %6669 = vmatpush1.bf16.msra.mxu0 %v4648
  %6670 = vmatprep.subr.bf16.mxu0 %v4653
  %6671 = vmatpush1.bf16.msra.mxu0 %v4652
  %6672 = vmatprep.subr.bf16.mxu0 %v4657
  %6673 = vmatpush1.bf16.msra.mxu0 %v4656
  %6674 = vmatprep.subr.bf16.mxu0 %v4661
  %6675 = vmatpush1.bf16.msra.mxu0 %v4660
  %6676 = vmatprep.subr.bf16.mxu0 %v4665
  %6677 = vmatpush1.bf16.msra.mxu0 %v4664
  %6678 = vmatprep.subr.bf16.mxu0 %v4669
  %6679 = vmatpush1.bf16.msra.mxu0 %v4668
  %6680 = vmatprep.subr.bf16.mxu0 %v4673
  %6681 = vmatpush1.bf16.msra.mxu0 %v4672
  %6682 = vmatprep.subr.bf16.mxu0 %v4677
  %6683 = vmatpush1.bf16.msra.mxu0 %v4676
  %6684 = vmatprep.subr.bf16.mxu0 %v4681
  %6685 = vmatpush1.bf16.msra.mxu0 %v4680
  %6686 = vmatprep.subr.bf16.mxu0 %v4685
  %6687 = vmatpush1.bf16.msra.mxu0 %v4684
  %6688 = vmatprep.subr.bf16.mxu0 %v4689
  %6689 = vmatpush1.bf16.msra.mxu0 %v4688
  %6690 = vmatprep.subr.bf16.mxu0 %v4693
  %6691 = vmatpush1.bf16.msra.mxu0 %v4692
  %6692 = vmatprep.subr.bf16.mxu0 %v4697
  %6693 = vmatpush1.bf16.msra.mxu0 %v4696
  %6694 = vmatprep.mubr.bf16.mxu0 %v1313
  %6695 = vmatmul.mubr.bf16.gmra.mrb[0].mxu0 %v1312
  %v6696 = vpop.f32.mrb[0].mxu0
  %v6697 = vadd.f32 %v6644, %v6696
  %v6698 = vpop.f32.mrb[0].mxu0
  %v6699 = vadd.f32 %v6646, %v6698
  %v6700 = vpop.f32.mrb[0].mxu0
  %v6701 = vadd.f32 %v6648, %v6700
  %v6702 = vpop.f32.mrb[0].mxu0
  %v6703 = vadd.f32 %v6650, %v6702
  %6704 = vmatprep.mubr.bf16.mxu0 %v1345
  %6705 = vmatmul.mubr.bf16.gmra.mrb[0].mxu0 %v1344
  %v6706 = vpop.f32.mrb[0].mxu0
  %v6707 = vadd.f32 %v6654, %v6706
  %v6708 = vpop.f32.mrb[0].mxu0
  %v6709 = vadd.f32 %v6656, %v6708
  %v6710 = vpop.f32.mrb[0].mxu0
  %v6711 = vadd.f32 %v6658, %v6710
  %v6712 = vpop.f32.mrb[0].mxu0
  %v6713 = vadd.f32 %v6660, %v6712
  %6714 = vdwg.mxu0
  %6715 = vmatprep.subr.bf16.mxu0 %v4701
  %6716 = vmatpush1.bf16.msra.mxu0 %v4700
  %6717 = vmatprep.subr.bf16.mxu0 %v4705
  %6718 = vmatpush1.bf16.msra.mxu0 %v4704
  %6719 = vmatprep.subr.bf16.mxu0 %v4709
  %6720 = vmatpush1.bf16.msra.mxu0 %v4708
  %6721 = vmatprep.subr.bf16.mxu0 %v4713
  %6722 = vmatpush1.bf16.msra.mxu0 %v4712
  %6723 = vmatprep.subr.bf16.mxu0 %v4717
  %6724 = vmatpush1.bf16.msra.mxu0 %v4716
  %6725 = vmatprep.subr.bf16.mxu0 %v4721
  %6726 = vmatpush1.bf16.msra.mxu0 %v4720
  %6727 = vmatprep.subr.bf16.mxu0 %v4725
  %6728 = vmatpush1.bf16.msra.mxu0 %v4724
  %6729 = vmatprep.subr.bf16.mxu0 %v4729
  %6730 = vmatpush1.bf16.msra.mxu0 %v4728
  %6731 = vmatprep.subr.bf16.mxu0 %v4733
  %6732 = vmatpush1.bf16.msra.mxu0 %v4732
  %6733 = vmatprep.subr.bf16.mxu0 %v4737
  %6734 = vmatpush1.bf16.msra.mxu0 %v4736
  %6735 = vmatprep.subr.bf16.mxu0 %v4741
  %6736 = vmatpush1.bf16.msra.mxu0 %v4740
  %6737 = vmatprep.subr.bf16.mxu0 %v4745
  %6738 = vmatpush1.bf16.msra.mxu0 %v4744
  %6739 = vmatprep.subr.bf16.mxu0 %v4749
  %6740 = vmatpush1.bf16.msra.mxu0 %v4748
  %6741 = vmatprep.subr.bf16.mxu0 %v4753
  %6742 = vmatpush1.bf16.msra.mxu0 %v4752
  %6743 = vmatprep.subr.bf16.mxu0 %v4757
  %6744 = vmatpush1.bf16.msra.mxu0 %v4756
  %6745 = vmatprep.subr.bf16.mxu0 %v4761
  %6746 = vmatpush1.bf16.msra.mxu0 %v4760
  %6747 = vmatprep.mubr.bf16.mxu0 %v1315
  %6748 = vmatmul.mubr.bf16.gmra.mrb[0].mxu0 %v1314
  %v6749 = vpop.f32.mrb[0].mxu0
  %v6750 = vadd.f32 %v6697, %v6749
  %v6751 = vpop.f32.mrb[0].mxu0
  %v6752 = vadd.f32 %v6699, %v6751
  %v6753 = vpop.f32.mrb[0].mxu0
  %v6754 = vadd.f32 %v6701, %v6753
  %v6755 = vpop.f32.mrb[0].mxu0
  %v6756 = vadd.f32 %v6703, %v6755
  %6757 = vmatprep.mubr.bf16.mxu0 %v1347
  %6758 = vmatmul.mubr.bf16.gmra.mrb[0].mxu0 %v1346
  %v6759 = vpop.f32.mrb[0].mxu0
  %v6760 = vadd.f32 %v6707, %v6759
  %v6761 = vpop.f32.mrb[0].mxu0
  %v6762 = vadd.f32 %v6709, %v6761
  %v6763 = vpop.f32.mrb[0].mxu0
  %v6764 = vadd.f32 %v6711, %v6763
  %v6765 = vpop.f32.mrb[0].mxu0
  %v6766 = vadd.f32 %v6713, %v6765
  %6767 = vdwg.mxu0
  %6768 = vmatprep.subr.bf16.mxu0 %v4765
  %6769 = vmatpush1.bf16.msra.mxu0 %v4764
  %6770 = vmatprep.subr.bf16.mxu0 %v4769
  %6771 = vmatpush1.bf16.msra.mxu0 %v4768
  %6772 = vmatprep.subr.bf16.mxu0 %v4773
  %6773 = vmatpush1.bf16.msra.mxu0 %v4772
  %6774 = vmatprep.subr.bf16.mxu0 %v4777
  %6775 = vmatpush1.bf16.msra.mxu0 %v4776
  %6776 = vmatprep.subr.bf16.mxu0 %v4781
  %6777 = vmatpush1.bf16.msra.mxu0 %v4780
  %6778 = vmatprep.subr.bf16.mxu0 %v4785
  %6779 = vmatpush1.bf16.msra.mxu0 %v4784
  %6780 = vmatprep.subr.bf16.mxu0 %v4789
  %6781 = vmatpush1.bf16.msra.mxu0 %v4788
  %6782 = vmatprep.subr.bf16.mxu0 %v4793
  %6783 = vmatpush1.bf16.msra.mxu0 %v4792
  %6784 = vmatprep.subr.bf16.mxu0 %v4797
  %6785 = vmatpush1.bf16.msra.mxu0 %v4796
  %6786 = vmatprep.subr.bf16.mxu0 %v4801
  %6787 = vmatpush1.bf16.msra.mxu0 %v4800
  %6788 = vmatprep.subr.bf16.mxu0 %v4805
  %6789 = vmatpush1.bf16.msra.mxu0 %v4804
  %6790 = vmatprep.subr.bf16.mxu0 %v4809
  %6791 = vmatpush1.bf16.msra.mxu0 %v4808
  %6792 = vmatprep.subr.bf16.mxu0 %v4813
  %6793 = vmatpush1.bf16.msra.mxu0 %v4812
  %6794 = vmatprep.subr.bf16.mxu0 %v4817
  %6795 = vmatpush1.bf16.msra.mxu0 %v4816
  %6796 = vmatprep.subr.bf16.mxu0 %v4821
  %6797 = vmatpush1.bf16.msra.mxu0 %v4820
  %6798 = vmatprep.subr.bf16.mxu0 %v4825
  %6799 = vmatpush1.bf16.msra.mxu0 %v4824
  %6800 = vmatprep.mubr.bf16.mxu0 %v1317
  %6801 = vmatmul.mubr.bf16.gmra.mrb[0].mxu0 %v1316
  %v6802 = vpop.f32.mrb[0].mxu0
  %v6803 = vadd.f32 %v6750, %v6802
  %v6804 = vpop.f32.mrb[0].mxu0
  %v6805 = vadd.f32 %v6752, %v6804
  %v6806 = vpop.f32.mrb[0].mxu0
  %v6807 = vadd.f32 %v6754, %v6806
  %v6808 = vpop.f32.mrb[0].mxu0
  %v6809 = vadd.f32 %v6756, %v6808
  %6810 = vmatprep.mubr.bf16.mxu0 %v1349
  %6811 = vmatmul.mubr.bf16.gmra.mrb[0].mxu0 %v1348
  %v6812 = vpop.f32.mrb[0].mxu0
  %v6813 = vadd.f32 %v6760, %v6812
  %v6814 = vpop.f32.mrb[0].mxu0
  %v6815 = vadd.f32 %v6762, %v6814
  %v6816 = vpop.f32.mrb[0].mxu0
  %v6817 = vadd.f32 %v6764, %v6816
  %v6818 = vpop.f32.mrb[0].mxu0
  %v6819 = vadd.f32 %v6766, %v6818
  %6820 = vdwg.mxu0
  %6821 = vmatprep.subr.bf16.mxu0 %v4829
  %6822 = vmatpush1.bf16.msra.mxu0 %v4828
  %6823 = vmatprep.subr.bf16.mxu0 %v4833
  %6824 = vmatpush1.bf16.msra.mxu0 %v4832
  %6825 = vmatprep.subr.bf16.mxu0 %v4837
  %6826 = vmatpush1.bf16.msra.mxu0 %v4836
  %6827 = vmatprep.subr.bf16.mxu0 %v4841
  %6828 = vmatpush1.bf16.msra.mxu0 %v4840
  %6829 = vmatprep.subr.bf16.mxu0 %v4845
  %6830 = vmatpush1.bf16.msra.mxu0 %v4844
  %6831 = vmatprep.subr.bf16.mxu0 %v4849
  %6832 = vmatpush1.bf16.msra.mxu0 %v4848
  %6833 = vmatprep.subr.bf16.mxu0 %v4853
  %6834 = vmatpush1.bf16.msra.mxu0 %v4852
  %6835 = vmatprep.subr.bf16.mxu0 %v4857
  %6836 = vmatpush1.bf16.msra.mxu0 %v4856
  %6837 = vmatprep.subr.bf16.mxu0 %v4861
  %6838 = vmatpush1.bf16.msra.mxu0 %v4860
  %6839 = vmatprep.subr.bf16.mxu0 %v4865
  %6840 = vmatpush1.bf16.msra.mxu0 %v4864
  %6841 = vmatprep.subr.bf16.mxu0 %v4869
  %6842 = vmatpush1.bf16.msra.mxu0 %v4868
  %6843 = vmatprep.subr.bf16.mxu0 %v4873
  %6844 = vmatpush1.bf16.msra.mxu0 %v4872
  %6845 = vmatprep.subr.bf16.mxu0 %v4877
  %6846 = vmatpush1.bf16.msra.mxu0 %v4876
  %6847 = vmatprep.subr.bf16.mxu0 %v4881
  %6848 = vmatpush1.bf16.msra.mxu0 %v4880
  %6849 = vmatprep.subr.bf16.mxu0 %v4885
  %6850 = vmatpush1.bf16.msra.mxu0 %v4884
  %6851 = vmatprep.subr.bf16.mxu0 %v4889
  %6852 = vmatpush1.bf16.msra.mxu0 %v4888
  %6853 = vmatprep.mubr.bf16.mxu0 %v1319
  %6854 = vmatmul.mubr.bf16.gmra.mrb[0].mxu0 %v1318
  %v6855 = vpop.f32.mrb[0].mxu0
  %v6856 = vadd.f32 %v6803, %v6855
  %v6857 = vpop.f32.mrb[0].mxu0
  %v6858 = vadd.f32 %v6805, %v6857
  %v6859 = vpop.f32.mrb[0].mxu0
  %v6860 = vadd.f32 %v6807, %v6859
  %v6861 = vpop.f32.mrb[0].mxu0
  %v6862 = vadd.f32 %v6809, %v6861
  %6863 = vmatprep.mubr.bf16.mxu0 %v1351
  %6864 = vmatmul.mubr.bf16.gmra.mrb[0].mxu0 %v1350
  %v6865 = vpop.f32.mrb[0].mxu0
  %v6866 = vadd.f32 %v6813, %v6865
  %v6867 = vpop.f32.mrb[0].mxu0
  %v6868 = vadd.f32 %v6815, %v6867
  %v6869 = vpop.f32.mrb[0].mxu0
  %v6870 = vadd.f32 %v6817, %v6869
  %v6871 = vpop.f32.mrb[0].mxu0
  %v6872 = vadd.f32 %v6819, %v6871
  %6873 = vdwg.mxu0
  %6874 = vmatprep.subr.bf16.mxu0 %v4893
  %6875 = vmatpush1.bf16.msra.mxu0 %v4892
  %6876 = vmatprep.subr.bf16.mxu0 %v4897
  %6877 = vmatpush1.bf16.msra.mxu0 %v4896
  %6878 = vmatprep.subr.bf16.mxu0 %v4901
  %6879 = vmatpush1.bf16.msra.mxu0 %v4900
  %6880 = vmatprep.subr.bf16.mxu0 %v4905
  %6881 = vmatpush1.bf16.msra.mxu0 %v4904
  %6882 = vmatprep.subr.bf16.mxu0 %v4909
  %6883 = vmatpush1.bf16.msra.mxu0 %v4908
  %6884 = vmatprep.subr.bf16.mxu0 %v4913
  %6885 = vmatpush1.bf16.msra.mxu0 %v4912
  %6886 = vmatprep.subr.bf16.mxu0 %v4917
  %6887 = vmatpush1.bf16.msra.mxu0 %v4916
  %6888 = vmatprep.subr.bf16.mxu0 %v4921
  %6889 = vmatpush1.bf16.msra.mxu0 %v4920
  %6890 = vmatprep.subr.bf16.mxu0 %v4925
  %6891 = vmatpush1.bf16.msra.mxu0 %v4924
  %6892 = vmatprep.subr.bf16.mxu0 %v4929
  %6893 = vmatpush1.bf16.msra.mxu0 %v4928
  %6894 = vmatprep.subr.bf16.mxu0 %v4933
  %6895 = vmatpush1.bf16.msra.mxu0 %v4932
  %6896 = vmatprep.subr.bf16.mxu0 %v4937
  %6897 = vmatpush1.bf16.msra.mxu0 %v4936
  %6898 = vmatprep.subr.bf16.mxu0 %v4941
  %6899 = vmatpush1.bf16.msra.mxu0 %v4940
  %6900 = vmatprep.subr.bf16.mxu0 %v4945
  %6901 = vmatpush1.bf16.msra.mxu0 %v4944
  %6902 = vmatprep.subr.bf16.mxu0 %v4949
  %6903 = vmatpush1.bf16.msra.mxu0 %v4948
  %6904 = vmatprep.subr.bf16.mxu0 %v4953
  %6905 = vmatpush1.bf16.msra.mxu0 %v4952
  %6906 = vmatprep.mubr.bf16.mxu0 %v1321
  %6907 = vmatmul.mubr.bf16.gmra.mrb[0].mxu0 %v1320
  %v6908 = vpop.f32.mrb[0].mxu0
  %v6909 = vadd.f32 %v6856, %v6908
  %v6910 = vpop.f32.mrb[0].mxu0
  %v6911 = vadd.f32 %v6858, %v6910
  %v6912 = vpop.f32.mrb[0].mxu0
  %v6913 = vadd.f32 %v6860, %v6912
  %v6914 = vpop.f32.mrb[0].mxu0
  %v6915 = vadd.f32 %v6862, %v6914
  %6916 = vmatprep.mubr.bf16.mxu0 %v1353
  %6917 = vmatmul.mubr.bf16.gmra.mrb[0].mxu0 %v1352
  %v6918 = vpop.f32.mrb[0].mxu0
  %v6919 = vadd.f32 %v6866, %v6918
  %v6920 = vpop.f32.mrb[0].mxu0
  %v6921 = vadd.f32 %v6868, %v6920
  %v6922 = vpop.f32.mrb[0].mxu0
  %v6923 = vadd.f32 %v6870, %v6922
  %v6924 = vpop.f32.mrb[0].mxu0
  %v6925 = vadd.f32 %v6872, %v6924
  %6926 = vdwg.mxu0
  %6927 = vmatprep.subr.bf16.mxu0 %v4957
  %6928 = vmatpush1.bf16.msra.mxu0 %v4956
  %6929 = vmatprep.subr.bf16.mxu0 %v4961
  %6930 = vmatpush1.bf16.msra.mxu0 %v4960
  %6931 = vmatprep.subr.bf16.mxu0 %v4965
  %6932 = vmatpush1.bf16.msra.mxu0 %v4964
  %6933 = vmatprep.subr.bf16.mxu0 %v4969
  %6934 = vmatpush1.bf16.msra.mxu0 %v4968
  %6935 = vmatprep.subr.bf16.mxu0 %v4973
  %6936 = vmatpush1.bf16.msra.mxu0 %v4972
  %6937 = vmatprep.subr.bf16.mxu0 %v4977
  %6938 = vmatpush1.bf16.msra.mxu0 %v4976
  %6939 = vmatprep.subr.bf16.mxu0 %v4981
  %6940 = vmatpush1.bf16.msra.mxu0 %v4980
  %6941 = vmatprep.subr.bf16.mxu0 %v4985
  %6942 = vmatpush1.bf16.msra.mxu0 %v4984
  %6943 = vmatprep.subr.bf16.mxu0 %v4989
  %6944 = vmatpush1.bf16.msra.mxu0 %v4988
  %6945 = vmatprep.subr.bf16.mxu0 %v4993
  %6946 = vmatpush1.bf16.msra.mxu0 %v4992
  %6947 = vmatprep.subr.bf16.mxu0 %v4997
  %6948 = vmatpush1.bf16.msra.mxu0 %v4996
  %6949 = vmatprep.subr.bf16.mxu0 %v5001
  %6950 = vmatpush1.bf16.msra.mxu0 %v5000
  %6951 = vmatprep.subr.bf16.mxu0 %v5005
  %6952 = vmatpush1.bf16.msra.mxu0 %v5004
  %6953 = vmatprep.subr.bf16.mxu0 %v5009
  %6954 = vmatpush1.bf16.msra.mxu0 %v5008
  %6955 = vmatprep.subr.bf16.mxu0 %v5013
  %6956 = vmatpush1.bf16.msra.mxu0 %v5012
  %6957 = vmatprep.subr.bf16.mxu0 %v5017
  %6958 = vmatpush1.bf16.msra.mxu0 %v5016
  %6959 = vmatprep.mubr.bf16.mxu0 %v1323
  %6960 = vmatmul.mubr.bf16.gmra.mrb[0].mxu0 %v1322
  %v6961 = vpop.f32.mrb[0].mxu0
  %v6962 = vadd.f32 %v6909, %v6961
  %v6963 = vpop.f32.mrb[0].mxu0
  %v6964 = vadd.f32 %v6911, %v6963
  %v6965 = vpop.f32.mrb[0].mxu0
  %v6966 = vadd.f32 %v6913, %v6965
  %v6967 = vpop.f32.mrb[0].mxu0
  %v6968 = vadd.f32 %v6915, %v6967
  %6969 = vmatprep.mubr.bf16.mxu0 %v1355
  %6970 = vmatmul.mubr.bf16.gmra.mrb[0].mxu0 %v1354
  %v6971 = vpop.f32.mrb[0].mxu0
  %v6972 = vadd.f32 %v6919, %v6971
  %v6973 = vpop.f32.mrb[0].mxu0
  %v6974 = vadd.f32 %v6921, %v6973
  %v6975 = vpop.f32.mrb[0].mxu0
  %v6976 = vadd.f32 %v6923, %v6975
  %v6977 = vpop.f32.mrb[0].mxu0
  %v6978 = vadd.f32 %v6925, %v6977
  %6979 = vdwg.mxu0
  %6980 = vmatprep.subr.bf16.mxu0 %v5021
  %6981 = vmatpush1.bf16.msra.mxu0 %v5020
  %6982 = vmatprep.subr.bf16.mxu0 %v5025
  %6983 = vmatpush1.bf16.msra.mxu0 %v5024
  %6984 = vmatprep.subr.bf16.mxu0 %v5029
  %6985 = vmatpush1.bf16.msra.mxu0 %v5028
  %6986 = vmatprep.subr.bf16.mxu0 %v5033
  %6987 = vmatpush1.bf16.msra.mxu0 %v5032
  %6988 = vmatprep.subr.bf16.mxu0 %v5037
  %6989 = vmatpush1.bf16.msra.mxu0 %v5036
  %6990 = vmatprep.subr.bf16.mxu0 %v5041
  %6991 = vmatpush1.bf16.msra.mxu0 %v5040
  %6992 = vmatprep.subr.bf16.mxu0 %v5045
  %6993 = vmatpush1.bf16.msra.mxu0 %v5044
  %6994 = vmatprep.subr.bf16.mxu0 %v5049
  %6995 = vmatpush1.bf16.msra.mxu0 %v5048
  %6996 = vmatprep.subr.bf16.mxu0 %v5053
  %6997 = vmatpush1.bf16.msra.mxu0 %v5052
  %6998 = vmatprep.subr.bf16.mxu0 %v5057
  %6999 = vmatpush1.bf16.msra.mxu0 %v5056
  %7000 = vmatprep.subr.bf16.mxu0 %v5061
  %7001 = vmatpush1.bf16.msra.mxu0 %v5060
  %7002 = vmatprep.subr.bf16.mxu0 %v5065
  %7003 = vmatpush1.bf16.msra.mxu0 %v5064
  %7004 = vmatprep.subr.bf16.mxu0 %v5069
  %7005 = vmatpush1.bf16.msra.mxu0 %v5068
  %7006 = vmatprep.subr.bf16.mxu0 %v5073
  %7007 = vmatpush1.bf16.msra.mxu0 %v5072
  %7008 = vmatprep.subr.bf16.mxu0 %v5077
  %7009 = vmatpush1.bf16.msra.mxu0 %v5076
  %7010 = vmatprep.subr.bf16.mxu0 %v5081
  %7011 = vmatpush1.bf16.msra.mxu0 %v5080
  %7012 = vmatprep.mubr.bf16.mxu0 %v1325
  %7013 = vmatmul.mubr.bf16.gmra.mrb[0].mxu0 %v1324
  %v7014 = vpop.f32.mrb[0].mxu0
  %v7015 = vadd.f32 %v6962, %v7014
  %v7016 = vpop.f32.mrb[0].mxu0
  %v7017 = vadd.f32 %v6964, %v7016
  %v7018 = vpop.f32.mrb[0].mxu0
  %v7019 = vadd.f32 %v6966, %v7018
  %v7020 = vpop.f32.mrb[0].mxu0
  %v7021 = vadd.f32 %v6968, %v7020
  %7022 = vmatprep.mubr.bf16.mxu0 %v1357
  %7023 = vmatmul.mubr.bf16.gmra.mrb[0].mxu0 %v1356
  %v7024 = vpop.f32.mrb[0].mxu0
  %v7025 = vadd.f32 %v6972, %v7024
  %v7026 = vpop.f32.mrb[0].mxu0
  %v7027 = vadd.f32 %v6974, %v7026
  %v7028 = vpop.f32.mrb[0].mxu0
  %v7029 = vadd.f32 %v6976, %v7028
  %v7030 = vpop.f32.mrb[0].mxu0
  %v7031 = vadd.f32 %v6978, %v7030
  %7032 = vdwg.mxu0
  %7033 = vmatprep.subr.bf16.mxu0 %v5085
  %7034 = vmatpush1.bf16.msra.mxu0 %v5084
  %7035 = vmatprep.subr.bf16.mxu0 %v5089
  %7036 = vmatpush1.bf16.msra.mxu0 %v5088
  %7037 = vmatprep.subr.bf16.mxu0 %v5093
  %7038 = vmatpush1.bf16.msra.mxu0 %v5092
  %7039 = vmatprep.subr.bf16.mxu0 %v5097
  %7040 = vmatpush1.bf16.msra.mxu0 %v5096
  %7041 = vmatprep.subr.bf16.mxu0 %v5101
  %7042 = vmatpush1.bf16.msra.mxu0 %v5100
  %7043 = vmatprep.subr.bf16.mxu0 %v5105
  %7044 = vmatpush1.bf16.msra.mxu0 %v5104
  %7045 = vmatprep.subr.bf16.mxu0 %v5109
  %7046 = vmatpush1.bf16.msra.mxu0 %v5108
  %7047 = vmatprep.subr.bf16.mxu0 %v5113
  %7048 = vmatpush1.bf16.msra.mxu0 %v5112
  %7049 = vmatprep.subr.bf16.mxu0 %v5117
  %7050 = vmatpush1.bf16.msra.mxu0 %v5116
  %7051 = vmatprep.subr.bf16.mxu0 %v5121
  %7052 = vmatpush1.bf16.msra.mxu0 %v5120
  %7053 = vmatprep.subr.bf16.mxu0 %v5125
  %7054 = vmatpush1.bf16.msra.mxu0 %v5124
  %7055 = vmatprep.subr.bf16.mxu0 %v5129
  %7056 = vmatpush1.bf16.msra.mxu0 %v5128
  %7057 = vmatprep.subr.bf16.mxu0 %v5133
  %7058 = vmatpush1.bf16.msra.mxu0 %v5132
  %7059 = vmatprep.subr.bf16.mxu0 %v5137
  %7060 = vmatpush1.bf16.msra.mxu0 %v5136
  %7061 = vmatprep.subr.bf16.mxu0 %v5141
  %7062 = vmatpush1.bf16.msra.mxu0 %v5140
  %7063 = vmatprep.subr.bf16.mxu0 %v5145
  %7064 = vmatpush1.bf16.msra.mxu0 %v5144
  %7065 = vmatprep.mubr.bf16.mxu0 %v1327
  %7066 = vmatmul.mubr.bf16.gmra.mrb[0].mxu0 %v1326
  %v7067 = vpop.f32.mrb[0].mxu0
  %v7068 = vadd.f32 %v7015, %v7067
  %v7069 = vpop.f32.mrb[0].mxu0
  %v7070 = vadd.f32 %v7017, %v7069
  %v7071 = vpop.f32.mrb[0].mxu0
  %v7072 = vadd.f32 %v7019, %v7071
  %v7073 = vpop.f32.mrb[0].mxu0
  %v7074 = vadd.f32 %v7021, %v7073
  %7075 = vmatprep.mubr.bf16.mxu0 %v1359
  %7076 = vmatmul.mubr.bf16.gmra.mrb[0].mxu0 %v1358
  %v7077 = vpop.f32.mrb[0].mxu0
  %v7078 = vadd.f32 %v7025, %v7077
  %v7079 = vpop.f32.mrb[0].mxu0
  %v7080 = vadd.f32 %v7027, %v7079
  %v7081 = vpop.f32.mrb[0].mxu0
  %v7082 = vadd.f32 %v7029, %v7081
  %v7083 = vpop.f32.mrb[0].mxu0
  %v7084 = vadd.f32 %v7031, %v7083
  %7085 = vdwg.mxu0
  %7086 = vmatprep.subr.bf16.mxu0 %v5149
  %7087 = vmatpush1.bf16.msra.mxu0 %v5148
  %7088 = vmatprep.subr.bf16.mxu0 %v5153
  %7089 = vmatpush1.bf16.msra.mxu0 %v5152
  %7090 = vmatprep.subr.bf16.mxu0 %v5157
  %7091 = vmatpush1.bf16.msra.mxu0 %v5156
  %7092 = vmatprep.subr.bf16.mxu0 %v5161
  %7093 = vmatpush1.bf16.msra.mxu0 %v5160
  %7094 = vmatprep.subr.bf16.mxu0 %v5165
  %7095 = vmatpush1.bf16.msra.mxu0 %v5164
  %7096 = vmatprep.subr.bf16.mxu0 %v5169
  %7097 = vmatpush1.bf16.msra.mxu0 %v5168
  %7098 = vmatprep.subr.bf16.mxu0 %v5173
  %7099 = vmatpush1.bf16.msra.mxu0 %v5172
  %7100 = vmatprep.subr.bf16.mxu0 %v5177
  %7101 = vmatpush1.bf16.msra.mxu0 %v5176
  %7102 = vmatprep.subr.bf16.mxu0 %v5181
  %7103 = vmatpush1.bf16.msra.mxu0 %v5180
  %7104 = vmatprep.subr.bf16.mxu0 %v5185
  %7105 = vmatpush1.bf16.msra.mxu0 %v5184
  %7106 = vmatprep.subr.bf16.mxu0 %v5189
  %7107 = vmatpush1.bf16.msra.mxu0 %v5188
  %7108 = vmatprep.subr.bf16.mxu0 %v5193
  %7109 = vmatpush1.bf16.msra.mxu0 %v5192
  %7110 = vmatprep.subr.bf16.mxu0 %v5197
  %7111 = vmatpush1.bf16.msra.mxu0 %v5196
  %7112 = vmatprep.subr.bf16.mxu0 %v5201
  %7113 = vmatpush1.bf16.msra.mxu0 %v5200
  %7114 = vmatprep.subr.bf16.mxu0 %v5205
  %7115 = vmatpush1.bf16.msra.mxu0 %v5204
  %7116 = vmatprep.subr.bf16.mxu0 %v5209
  %7117 = vmatpush1.bf16.msra.mxu0 %v5208
  %7118 = vmatprep.mubr.bf16.mxu0 %v1329
  %7119 = vmatmul.mubr.bf16.gmra.mrb[0].mxu0 %v1328
  %v7120 = vpop.f32.mrb[0].mxu0
  %v7121 = vadd.f32 %v7068, %v7120
  %v7122 = vpop.f32.mrb[0].mxu0
  %v7123 = vadd.f32 %v7070, %v7122
  %v7124 = vpop.f32.mrb[0].mxu0
  %v7125 = vadd.f32 %v7072, %v7124
  %v7126 = vpop.f32.mrb[0].mxu0
  %v7127 = vadd.f32 %v7074, %v7126
  %7128 = vmatprep.mubr.bf16.mxu0 %v1361
  %7129 = vmatmul.mubr.bf16.gmra.mrb[0].mxu0 %v1360
  %v7130 = vpop.f32.mrb[0].mxu0
  %v7131 = vadd.f32 %v7078, %v7130
  %v7132 = vpop.f32.mrb[0].mxu0
  %v7133 = vadd.f32 %v7080, %v7132
  %v7134 = vpop.f32.mrb[0].mxu0
  %v7135 = vadd.f32 %v7082, %v7134
  %v7136 = vpop.f32.mrb[0].mxu0
  %v7137 = vadd.f32 %v7084, %v7136
  %7138 = vdwg.mxu0
  %7139 = vmatprep.subr.bf16.mxu0 %v5213
  %7140 = vmatpush1.bf16.msra.mxu0 %v5212
  %7141 = vmatprep.subr.bf16.mxu0 %v5217
  %7142 = vmatpush1.bf16.msra.mxu0 %v5216
  %7143 = vmatprep.subr.bf16.mxu0 %v5221
  %7144 = vmatpush1.bf16.msra.mxu0 %v5220
  %7145 = vmatprep.subr.bf16.mxu0 %v5225
  %7146 = vmatpush1.bf16.msra.mxu0 %v5224
  %7147 = vmatprep.subr.bf16.mxu0 %v5229
  %7148 = vmatpush1.bf16.msra.mxu0 %v5228
  %7149 = vmatprep.subr.bf16.mxu0 %v5233
  %7150 = vmatpush1.bf16.msra.mxu0 %v5232
  %7151 = vmatprep.subr.bf16.mxu0 %v5237
  %7152 = vmatpush1.bf16.msra.mxu0 %v5236
  %7153 = vmatprep.subr.bf16.mxu0 %v5241
  %7154 = vmatpush1.bf16.msra.mxu0 %v5240
  %7155 = vmatprep.subr.bf16.mxu0 %v5245
  %7156 = vmatpush1.bf16.msra.mxu0 %v5244
  %7157 = vmatprep.subr.bf16.mxu0 %v5249
  %7158 = vmatpush1.bf16.msra.mxu0 %v5248
  %7159 = vmatprep.subr.bf16.mxu0 %v5253
  %7160 = vmatpush1.bf16.msra.mxu0 %v5252
  %7161 = vmatprep.subr.bf16.mxu0 %v5257
  %7162 = vmatpush1.bf16.msra.mxu0 %v5256
  %7163 = vmatprep.subr.bf16.mxu0 %v5261
  %7164 = vmatpush1.bf16.msra.mxu0 %v5260
  %7165 = vmatprep.subr.bf16.mxu0 %v5265
  %7166 = vmatpush1.bf16.msra.mxu0 %v5264
  %7167 = vmatprep.subr.bf16.mxu0 %v5269
  %7168 = vmatpush1.bf16.msra.mxu0 %v5268
  %7169 = vmatprep.subr.bf16.mxu0 %v5273
  %7170 = vmatpush1.bf16.msra.mxu0 %v5272
  %7171 = vmatprep.mubr.bf16.mxu0 %v1331
  %7172 = vmatmul.mubr.bf16.gmra.mrb[0].mxu0 %v1330
  %v7173 = vpop.f32.mrb[0].mxu0
  %v7174 = vadd.f32 %v7121, %v7173
  %v7175 = vpop.f32.mrb[0].mxu0
  %v7176 = vadd.f32 %v7123, %v7175
  %v7177 = vpop.f32.mrb[0].mxu0
  %v7178 = vadd.f32 %v7125, %v7177
  %v7179 = vpop.f32.mrb[0].mxu0
  %v7180 = vadd.f32 %v7127, %v7179
  %7181 = vmatprep.mubr.bf16.mxu0 %v1363
  %7182 = vmatmul.mubr.bf16.gmra.mrb[0].mxu0 %v1362
  %v7183 = vpop.f32.mrb[0].mxu0
  %v7184 = vadd.f32 %v7131, %v7183
  %v7185 = vpop.f32.mrb[0].mxu0
  %v7186 = vadd.f32 %v7133, %v7185
  %v7187 = vpop.f32.mrb[0].mxu0
  %v7188 = vadd.f32 %v7135, %v7187
  %v7189 = vpop.f32.mrb[0].mxu0
  %v7190 = vadd.f32 %v7137, %v7189
  %7191 = vdwg.mxu0
  %7192 = vmatprep.subr.bf16.mxu0 %v5277
  %7193 = vmatpush1.bf16.msra.mxu0 %v5276
  %7194 = vmatprep.subr.bf16.mxu0 %v5281
  %7195 = vmatpush1.bf16.msra.mxu0 %v5280
  %7196 = vmatprep.subr.bf16.mxu0 %v5285
  %7197 = vmatpush1.bf16.msra.mxu0 %v5284
  %7198 = vmatprep.subr.bf16.mxu0 %v5289
  %7199 = vmatpush1.bf16.msra.mxu0 %v5288
  %7200 = vmatprep.subr.bf16.mxu0 %v5293
  %7201 = vmatpush1.bf16.msra.mxu0 %v5292
  %7202 = vmatprep.subr.bf16.mxu0 %v5297
  %7203 = vmatpush1.bf16.msra.mxu0 %v5296
  %7204 = vmatprep.subr.bf16.mxu0 %v5301
  %7205 = vmatpush1.bf16.msra.mxu0 %v5300
  %7206 = vmatprep.subr.bf16.mxu0 %v5305
  %7207 = vmatpush1.bf16.msra.mxu0 %v5304
  %7208 = vmatprep.subr.bf16.mxu0 %v5309
  %7209 = vmatpush1.bf16.msra.mxu0 %v5308
  %7210 = vmatprep.subr.bf16.mxu0 %v5313
  %7211 = vmatpush1.bf16.msra.mxu0 %v5312
  %7212 = vmatprep.subr.bf16.mxu0 %v5317
  %7213 = vmatpush1.bf16.msra.mxu0 %v5316
  %7214 = vmatprep.subr.bf16.mxu0 %v5321
  %7215 = vmatpush1.bf16.msra.mxu0 %v5320
  %7216 = vmatprep.subr.bf16.mxu0 %v5325
  %7217 = vmatpush1.bf16.msra.mxu0 %v5324
  %7218 = vmatprep.subr.bf16.mxu0 %v5329
  %7219 = vmatpush1.bf16.msra.mxu0 %v5328
  %7220 = vmatprep.subr.bf16.mxu0 %v5333
  %7221 = vmatpush1.bf16.msra.mxu0 %v5332
  %7222 = vmatprep.subr.bf16.mxu0 %v5337
  %7223 = vmatpush1.bf16.msra.mxu0 %v5336
  %7224 = vmatprep.mubr.bf16.mxu0 %v1333
  %7225 = vmatmul.mubr.bf16.gmra.mrb[0].mxu0 %v1332
  %v7226 = vpop.f32.mrb[0].mxu0
  %v7227 = vadd.f32 %v7174, %v7226
  %v7228 = vpop.f32.mrb[0].mxu0
  %v7229 = vadd.f32 %v7176, %v7228
  %v7230 = vpop.f32.mrb[0].mxu0
  %v7231 = vadd.f32 %v7178, %v7230
  %v7232 = vpop.f32.mrb[0].mxu0
  %v7233 = vadd.f32 %v7180, %v7232
  %7234 = vmatprep.mubr.bf16.mxu0 %v1365
  %7235 = vmatmul.mubr.bf16.gmra.mrb[0].mxu0 %v1364
  %v7236 = vpop.f32.mrb[0].mxu0
  %v7237 = vadd.f32 %v7184, %v7236
  %v7238 = vpop.f32.mrb[0].mxu0
  %v7239 = vadd.f32 %v7186, %v7238
  %v7240 = vpop.f32.mrb[0].mxu0
  %v7241 = vadd.f32 %v7188, %v7240
  %v7242 = vpop.f32.mrb[0].mxu0
  %v7243 = vadd.f32 %v7190, %v7242
  %7244 = vdwg.mxu0
  %7245 = vmatprep.subr.bf16.mxu0 %v5341
  %7246 = vmatpush1.bf16.msra.mxu0 %v5340
  %7247 = vmatprep.subr.bf16.mxu0 %v5345
  %7248 = vmatpush1.bf16.msra.mxu0 %v5344
  %7249 = vmatprep.subr.bf16.mxu0 %v5349
  %7250 = vmatpush1.bf16.msra.mxu0 %v5348
  %7251 = vmatprep.subr.bf16.mxu0 %v5353
  %7252 = vmatpush1.bf16.msra.mxu0 %v5352
  %7253 = vmatprep.subr.bf16.mxu0 %v5357
  %7254 = vmatpush1.bf16.msra.mxu0 %v5356
  %7255 = vmatprep.subr.bf16.mxu0 %v5361
  %7256 = vmatpush1.bf16.msra.mxu0 %v5360
  %7257 = vmatprep.subr.bf16.mxu0 %v5365
  %7258 = vmatpush1.bf16.msra.mxu0 %v5364
  %7259 = vmatprep.subr.bf16.mxu0 %v5369
  %7260 = vmatpush1.bf16.msra.mxu0 %v5368
  %7261 = vmatprep.subr.bf16.mxu0 %v5373
  %7262 = vmatpush1.bf16.msra.mxu0 %v5372
  %7263 = vmatprep.subr.bf16.mxu0 %v5377
  %7264 = vmatpush1.bf16.msra.mxu0 %v5376
  %7265 = vmatprep.subr.bf16.mxu0 %v5381
  %7266 = vmatpush1.bf16.msra.mxu0 %v5380
  %7267 = vmatprep.subr.bf16.mxu0 %v5385
  %7268 = vmatpush1.bf16.msra.mxu0 %v5384
  %7269 = vmatprep.subr.bf16.mxu0 %v5389
  %7270 = vmatpush1.bf16.msra.mxu0 %v5388
  %7271 = vmatprep.subr.bf16.mxu0 %v5393
  %7272 = vmatpush1.bf16.msra.mxu0 %v5392
  %7273 = vmatprep.subr.bf16.mxu0 %v5397
  %7274 = vmatpush1.bf16.msra.mxu0 %v5396
  %7275 = vmatprep.subr.bf16.mxu0 %v5401
  %7276 = vmatpush1.bf16.msra.mxu0 %v5400
  %7277 = vmatprep.mubr.bf16.mxu0 %v1335
  %7278 = vmatmul.mubr.bf16.gmra.mrb[0].mxu0 %v1334
  %v7279 = vpop.f32.mrb[0].mxu0
  %v7280 = vadd.f32 %v7227, %v7279
  %v7281 = vpop.f32.mrb[0].mxu0
  %v7282 = vadd.f32 %v7229, %v7281
  %v7283 = vpop.f32.mrb[0].mxu0
  %v7284 = vadd.f32 %v7231, %v7283
  %v7285 = vpop.f32.mrb[0].mxu0
  %v7286 = vadd.f32 %v7233, %v7285
  %7287 = vmatprep.mubr.bf16.mxu0 %v1367
  %7288 = vmatmul.mubr.bf16.gmra.mrb[0].mxu0 %v1366
  %v7289 = vpop.f32.mrb[0].mxu0
  %v7290 = vadd.f32 %v7237, %v7289
  %v7291 = vpop.f32.mrb[0].mxu0
  %v7292 = vadd.f32 %v7239, %v7291
  %v7293 = vpop.f32.mrb[0].mxu0
  %v7294 = vadd.f32 %v7241, %v7293
  %v7295 = vpop.f32.mrb[0].mxu0
  %v7296 = vadd.f32 %v7243, %v7295
  %7297 = vdwg.mxu0
  %7298 = vmatprep.subr.bf16.mxu0 %v5405
  %7299 = vmatpush1.bf16.msra.mxu0 %v5404
  %7300 = vmatprep.subr.bf16.mxu0 %v5409
  %7301 = vmatpush1.bf16.msra.mxu0 %v5408
  %7302 = vmatprep.subr.bf16.mxu0 %v5413
  %7303 = vmatpush1.bf16.msra.mxu0 %v5412
  %7304 = vmatprep.subr.bf16.mxu0 %v5417
  %7305 = vmatpush1.bf16.msra.mxu0 %v5416
  %7306 = vmatprep.subr.bf16.mxu0 %v5421
  %7307 = vmatpush1.bf16.msra.mxu0 %v5420
  %7308 = vmatprep.subr.bf16.mxu0 %v5425
  %7309 = vmatpush1.bf16.msra.mxu0 %v5424
  %7310 = vmatprep.subr.bf16.mxu0 %v5429
  %7311 = vmatpush1.bf16.msra.mxu0 %v5428
  %7312 = vmatprep.subr.bf16.mxu0 %v5433
  %7313 = vmatpush1.bf16.msra.mxu0 %v5432
  %7314 = vmatprep.subr.bf16.mxu0 %v5437
  %7315 = vmatpush1.bf16.msra.mxu0 %v5436
  %7316 = vmatprep.subr.bf16.mxu0 %v5441
  %7317 = vmatpush1.bf16.msra.mxu0 %v5440
  %7318 = vmatprep.subr.bf16.mxu0 %v5445
  %7319 = vmatpush1.bf16.msra.mxu0 %v5444
  %7320 = vmatprep.subr.bf16.mxu0 %v5449
  %7321 = vmatpush1.bf16.msra.mxu0 %v5448
  %7322 = vmatprep.subr.bf16.mxu0 %v5453
  %7323 = vmatpush1.bf16.msra.mxu0 %v5452
  %7324 = vmatprep.subr.bf16.mxu0 %v5457
  %7325 = vmatpush1.bf16.msra.mxu0 %v5456
  %7326 = vmatprep.subr.bf16.mxu0 %v5461
  %7327 = vmatpush1.bf16.msra.mxu0 %v5460
  %7328 = vmatprep.subr.bf16.mxu0 %v5465
  %7329 = vmatpush1.bf16.msra.mxu0 %v5464
  %7330 = vmatprep.mubr.bf16.mxu0 %v1337
  %7331 = vmatmul.mubr.bf16.gmra.mrb[0].mxu0 %v1336
  %v7332 = vpop.f32.mrb[0].mxu0
  %v7333 = vadd.f32 %v7280, %v7332
  %v7334 = vpop.f32.mrb[0].mxu0
  %v7335 = vadd.f32 %v7282, %v7334
  %v7336 = vpop.f32.mrb[0].mxu0
  %v7337 = vadd.f32 %v7284, %v7336
  %v7338 = vpop.f32.mrb[0].mxu0
  %v7339 = vadd.f32 %v7286, %v7338
  %7340 = vmatprep.mubr.bf16.mxu0 %v1369
  %7341 = vmatmul.mubr.bf16.gmra.mrb[0].mxu0 %v1368
  %v7342 = vpop.f32.mrb[0].mxu0
  %v7343 = vadd.f32 %v7290, %v7342
  %v7344 = vpop.f32.mrb[0].mxu0
  %v7345 = vadd.f32 %v7292, %v7344
  %v7346 = vpop.f32.mrb[0].mxu0
  %v7347 = vadd.f32 %v7294, %v7346
  %v7348 = vpop.f32.mrb[0].mxu0
  %v7349 = vadd.f32 %v7296, %v7348
  %7350 = vdwg.mxu0
  %7351 = vmatprep.subr.bf16.mxu0 %v5469
  %7352 = vmatpush1.bf16.msra.mxu0 %v5468
  %7353 = vmatprep.subr.bf16.mxu0 %v5473
  %7354 = vmatpush1.bf16.msra.mxu0 %v5472
  %7355 = vmatprep.subr.bf16.mxu0 %v5477
  %7356 = vmatpush1.bf16.msra.mxu0 %v5476
  %7357 = vmatprep.subr.bf16.mxu0 %v5481
  %7358 = vmatpush1.bf16.msra.mxu0 %v5480
  %7359 = vmatprep.subr.bf16.mxu0 %v5485
  %7360 = vmatpush1.bf16.msra.mxu0 %v5484
  %7361 = vmatprep.subr.bf16.mxu0 %v5489
  %7362 = vmatpush1.bf16.msra.mxu0 %v5488
  %7363 = vmatprep.subr.bf16.mxu0 %v5493
  %7364 = vmatpush1.bf16.msra.mxu0 %v5492
  %7365 = vmatprep.subr.bf16.mxu0 %v5497
  %7366 = vmatpush1.bf16.msra.mxu0 %v5496
  %7367 = vmatprep.subr.bf16.mxu0 %v5501
  %7368 = vmatpush1.bf16.msra.mxu0 %v5500
  %7369 = vmatprep.subr.bf16.mxu0 %v5505
  %7370 = vmatpush1.bf16.msra.mxu0 %v5504
  %7371 = vmatprep.subr.bf16.mxu0 %v5509
  %7372 = vmatpush1.bf16.msra.mxu0 %v5508
  %7373 = vmatprep.subr.bf16.mxu0 %v5513
  %7374 = vmatpush1.bf16.msra.mxu0 %v5512
  %7375 = vmatprep.subr.bf16.mxu0 %v5517
  %7376 = vmatpush1.bf16.msra.mxu0 %v5516
  %7377 = vmatprep.subr.bf16.mxu0 %v5521
  %7378 = vmatpush1.bf16.msra.mxu0 %v5520
  %7379 = vmatprep.subr.bf16.mxu0 %v5525
  %7380 = vmatpush1.bf16.msra.mxu0 %v5524
  %7381 = vmatprep.subr.bf16.mxu0 %v5529
  %7382 = vmatpush1.bf16.msra.mxu0 %v5528
  %7383 = vmatprep.mubr.bf16.mxu0 %v1339
  %7384 = vmatmul.mubr.bf16.gmra.mrb[0].mxu0 %v1338
  %v7385 = vpop.f32.mrb[0].mxu0
  %v7386 = vadd.f32 %v7333, %v7385
  %v7387 = vpop.f32.mrb[0].mxu0
  %v7388 = vadd.f32 %v7335, %v7387
  %v7389 = vpop.f32.mrb[0].mxu0
  %v7390 = vadd.f32 %v7337, %v7389
  %v7391 = vpop.f32.mrb[0].mxu0
  %v7392 = vadd.f32 %v7339, %v7391
  %7393 = vmatprep.mubr.bf16.mxu0 %v1371
  %7394 = vmatmul.mubr.bf16.gmra.mrb[0].mxu0 %v1370
  %v7395 = vpop.f32.mrb[0].mxu0
  %v7396 = vadd.f32 %v7343, %v7395
  %v7397 = vpop.f32.mrb[0].mxu0
  %v7398 = vadd.f32 %v7345, %v7397
  %v7399 = vpop.f32.mrb[0].mxu0
  %v7400 = vadd.f32 %v7347, %v7399
  %v7401 = vpop.f32.mrb[0].mxu0
  %v7402 = vadd.f32 %v7349, %v7401
  %7403 = vdwg.mxu0
  %7404 = vmatprep.subr.bf16.mxu0 %v4511
  %7405 = vmatpush1.bf16.msra.mxu0 %v4510
  %7406 = vmatprep.subr.bf16.mxu0 %v4515
  %7407 = vmatpush1.bf16.msra.mxu0 %v4514
  %7408 = vmatprep.subr.bf16.mxu0 %v4519
  %7409 = vmatpush1.bf16.msra.mxu0 %v4518
  %7410 = vmatprep.subr.bf16.mxu0 %v4523
  %7411 = vmatpush1.bf16.msra.mxu0 %v4522
  %7412 = vmatprep.subr.bf16.mxu0 %v4527
  %7413 = vmatpush1.bf16.msra.mxu0 %v4526
  %7414 = vmatprep.subr.bf16.mxu0 %v4531
  %7415 = vmatpush1.bf16.msra.mxu0 %v4530
  %7416 = vmatprep.subr.bf16.mxu0 %v4535
  %7417 = vmatpush1.bf16.msra.mxu0 %v4534
  %7418 = vmatprep.subr.bf16.mxu0 %v4539
  %7419 = vmatpush1.bf16.msra.mxu0 %v4538
  %7420 = vmatprep.subr.bf16.mxu0 %v4543
  %7421 = vmatpush1.bf16.msra.mxu0 %v4542
  %7422 = vmatprep.subr.bf16.mxu0 %v4547
  %7423 = vmatpush1.bf16.msra.mxu0 %v4546
  %7424 = vmatprep.subr.bf16.mxu0 %v4551
  %7425 = vmatpush1.bf16.msra.mxu0 %v4550
  %7426 = vmatprep.subr.bf16.mxu0 %v4555
  %7427 = vmatpush1.bf16.msra.mxu0 %v4554
  %7428 = vmatprep.subr.bf16.mxu0 %v4559
  %7429 = vmatpush1.bf16.msra.mxu0 %v4558
  %7430 = vmatprep.subr.bf16.mxu0 %v4563
  %7431 = vmatpush1.bf16.msra.mxu0 %v4562
  %7432 = vmatprep.subr.bf16.mxu0 %v4567
  %7433 = vmatpush1.bf16.msra.mxu0 %v4566
  %7434 = vmatprep.subr.bf16.mxu0 %v4571
  %7435 = vmatpush1.bf16.msra.mxu0 %v4570
  %7436 = vmatprep.mubr.bf16.mxu0 %v1309
  %7437 = vmatmul.mubr.bf16.gmra.mrb[0].mxu0 %v1308
  %v7438 = vpop.f32.mrb[0].mxu0
  %v7439 = vadd.f32 0.0, %v7438
  %v7440 = vpop.f32.mrb[0].mxu0
  %v7441 = vadd.f32 0.0, %v7440
  %v7442 = vpop.f32.mrb[0].mxu0
  %v7443 = vadd.f32 0.0, %v7442
  %v7444 = vpop.f32.mrb[0].mxu0
  %v7445 = vadd.f32 0.0, %v7444
  %7446 = vmatprep.mubr.bf16.mxu0 %v1341
  %7447 = vmatmul.mubr.bf16.gmra.mrb[0].mxu0 %v1340
  %v7448 = vpop.f32.mrb[0].mxu0
  %v7449 = vadd.f32 0.0, %v7448
  %v7450 = vpop.f32.mrb[0].mxu0
  %v7451 = vadd.f32 0.0, %v7450
  %v7452 = vpop.f32.mrb[0].mxu0
  %v7453 = vadd.f32 0.0, %v7452
  %v7454 = vpop.f32.mrb[0].mxu0
  %v7455 = vadd.f32 0.0, %v7454
  %7456 = vdwg.mxu0
  %7457 = vmatprep.subr.bf16.mxu0 %v4575
  %7458 = vmatpush1.bf16.msra.mxu0 %v4574
  %7459 = vmatprep.subr.bf16.mxu0 %v4579
  %7460 = vmatpush1.bf16.msra.mxu0 %v4578
  %7461 = vmatprep.subr.bf16.mxu0 %v4583
  %7462 = vmatpush1.bf16.msra.mxu0 %v4582
  %7463 = vmatprep.subr.bf16.mxu0 %v4587
  %7464 = vmatpush1.bf16.msra.mxu0 %v4586
  %7465 = vmatprep.subr.bf16.mxu0 %v4591
  %7466 = vmatpush1.bf16.msra.mxu0 %v4590
  %7467 = vmatprep.subr.bf16.mxu0 %v4595
  %7468 = vmatpush1.bf16.msra.mxu0 %v4594
  %7469 = vmatprep.subr.bf16.mxu0 %v4599
  %7470 = vmatpush1.bf16.msra.mxu0 %v4598
  %7471 = vmatprep.subr.bf16.mxu0 %v4603
  %7472 = vmatpush1.bf16.msra.mxu0 %v4602
  %7473 = vmatprep.subr.bf16.mxu0 %v4607
  %7474 = vmatpush1.bf16.msra.mxu0 %v4606
  %7475 = vmatprep.subr.bf16.mxu0 %v4611
  %7476 = vmatpush1.bf16.msra.mxu0 %v4610
  %7477 = vmatprep.subr.bf16.mxu0 %v4615
  %7478 = vmatpush1.bf16.msra.mxu0 %v4614
  %7479 = vmatprep.subr.bf16.mxu0 %v4619
  %7480 = vmatpush1.bf16.msra.mxu0 %v4618
  %7481 = vmatprep.subr.bf16.mxu0 %v4623
  %7482 = vmatpush1.bf16.msra.mxu0 %v4622
  %7483 = vmatprep.subr.bf16.mxu0 %v4627
  %7484 = vmatpush1.bf16.msra.mxu0 %v4626
  %7485 = vmatprep.subr.bf16.mxu0 %v4631
  %7486 = vmatpush1.bf16.msra.mxu0 %v4630
  %7487 = vmatprep.subr.bf16.mxu0 %v4635
  %7488 = vmatpush1.bf16.msra.mxu0 %v4634
  %7489 = vmatprep.mubr.bf16.mxu0 %v1311
  %7490 = vmatmul.mubr.bf16.gmra.mrb[0].mxu0 %v1310
  %v7491 = vpop.f32.mrb[0].mxu0
  %v7492 = vadd.f32 %v7439, %v7491
  %v7493 = vpop.f32.mrb[0].mxu0
  %v7494 = vadd.f32 %v7441, %v7493
  %v7495 = vpop.f32.mrb[0].mxu0
  %v7496 = vadd.f32 %v7443, %v7495
  %v7497 = vpop.f32.mrb[0].mxu0
  %v7498 = vadd.f32 %v7445, %v7497
  %7499 = vmatprep.mubr.bf16.mxu0 %v1343
  %7500 = vmatmul.mubr.bf16.gmra.mrb[0].mxu0 %v1342
  %v7501 = vpop.f32.mrb[0].mxu0
  %v7502 = vadd.f32 %v7449, %v7501
  %v7503 = vpop.f32.mrb[0].mxu0
  %v7504 = vadd.f32 %v7451, %v7503
  %v7505 = vpop.f32.mrb[0].mxu0
  %v7506 = vadd.f32 %v7453, %v7505
  %v7507 = vpop.f32.mrb[0].mxu0
  %v7508 = vadd.f32 %v7455, %v7507
  %7509 = vdwg.mxu0
  %7510 = vmatprep.subr.bf16.mxu0 %v4639
  %7511 = vmatpush1.bf16.msra.mxu0 %v4638
  %7512 = vmatprep.subr.bf16.mxu0 %v4643
  %7513 = vmatpush1.bf16.msra.mxu0 %v4642
  %7514 = vmatprep.subr.bf16.mxu0 %v4647
  %7515 = vmatpush1.bf16.msra.mxu0 %v4646
  %7516 = vmatprep.subr.bf16.mxu0 %v4651
  %7517 = vmatpush1.bf16.msra.mxu0 %v4650
  %7518 = vmatprep.subr.bf16.mxu0 %v4655
  %7519 = vmatpush1.bf16.msra.mxu0 %v4654
  %7520 = vmatprep.subr.bf16.mxu0 %v4659
  %7521 = vmatpush1.bf16.msra.mxu0 %v4658
  %7522 = vmatprep.subr.bf16.mxu0 %v4663
  %7523 = vmatpush1.bf16.msra.mxu0 %v4662
  %7524 = vmatprep.subr.bf16.mxu0 %v4667
  %7525 = vmatpush1.bf16.msra.mxu0 %v4666
  %7526 = vmatprep.subr.bf16.mxu0 %v4671
  %7527 = vmatpush1.bf16.msra.mxu0 %v4670
  %7528 = vmatprep.subr.bf16.mxu0 %v4675
  %7529 = vmatpush1.bf16.msra.mxu0 %v4674
  %7530 = vmatprep.subr.bf16.mxu0 %v4679
  %7531 = vmatpush1.bf16.msra.mxu0 %v4678
  %7532 = vmatprep.subr.bf16.mxu0 %v4683
  %7533 = vmatpush1.bf16.msra.mxu0 %v4682
  %7534 = vmatprep.subr.bf16.mxu0 %v4687
  %7535 = vmatpush1.bf16.msra.mxu0 %v4686
  %7536 = vmatprep.subr.bf16.mxu0 %v4691
  %7537 = vmatpush1.bf16.msra.mxu0 %v4690
  %7538 = vmatprep.subr.bf16.mxu0 %v4695
  %7539 = vmatpush1.bf16.msra.mxu0 %v4694
  %7540 = vmatprep.subr.bf16.mxu0 %v4699
  %7541 = vmatpush1.bf16.msra.mxu0 %v4698
  %7542 = vmatprep.mubr.bf16.mxu0 %v1313
  %7543 = vmatmul.mubr.bf16.gmra.mrb[0].mxu0 %v1312
  %v7544 = vpop.f32.mrb[0].mxu0
  %v7545 = vadd.f32 %v7492, %v7544
  %v7546 = vpop.f32.mrb[0].mxu0
  %v7547 = vadd.f32 %v7494, %v7546
  %v7548 = vpop.f32.mrb[0].mxu0
  %v7549 = vadd.f32 %v7496, %v7548
  %v7550 = vpop.f32.mrb[0].mxu0
  %v7551 = vadd.f32 %v7498, %v7550
  %7552 = vmatprep.mubr.bf16.mxu0 %v1345
  %7553 = vmatmul.mubr.bf16.gmra.mrb[0].mxu0 %v1344
  %v7554 = vpop.f32.mrb[0].mxu0
  %v7555 = vadd.f32 %v7502, %v7554
  %v7556 = vpop.f32.mrb[0].mxu0
  %v7557 = vadd.f32 %v7504, %v7556
  %v7558 = vpop.f32.mrb[0].mxu0
  %v7559 = vadd.f32 %v7506, %v7558
  %v7560 = vpop.f32.mrb[0].mxu0
  %v7561 = vadd.f32 %v7508, %v7560
  %7562 = vdwg.mxu0
  %7563 = vmatprep.subr.bf16.mxu0 %v4703
  %7564 = vmatpush1.bf16.msra.mxu0 %v4702
  %7565 = vmatprep.subr.bf16.mxu0 %v4707
  %7566 = vmatpush1.bf16.msra.mxu0 %v4706
  %7567 = vmatprep.subr.bf16.mxu0 %v4711
  %7568 = vmatpush1.bf16.msra.mxu0 %v4710
  %7569 = vmatprep.subr.bf16.mxu0 %v4715
  %7570 = vmatpush1.bf16.msra.mxu0 %v4714
  %7571 = vmatprep.subr.bf16.mxu0 %v4719
  %7572 = vmatpush1.bf16.msra.mxu0 %v4718
  %7573 = vmatprep.subr.bf16.mxu0 %v4723
  %7574 = vmatpush1.bf16.msra.mxu0 %v4722
  %7575 = vmatprep.subr.bf16.mxu0 %v4727
  %7576 = vmatpush1.bf16.msra.mxu0 %v4726
  %7577 = vmatprep.subr.bf16.mxu0 %v4731
  %7578 = vmatpush1.bf16.msra.mxu0 %v4730
  %7579 = vmatprep.subr.bf16.mxu0 %v4735
  %7580 = vmatpush1.bf16.msra.mxu0 %v4734
  %7581 = vmatprep.subr.bf16.mxu0 %v4739
  %7582 = vmatpush1.bf16.msra.mxu0 %v4738
  %7583 = vmatprep.subr.bf16.mxu0 %v4743
  %7584 = vmatpush1.bf16.msra.mxu0 %v4742
  %7585 = vmatprep.subr.bf16.mxu0 %v4747
  %7586 = vmatpush1.bf16.msra.mxu0 %v4746
  %7587 = vmatprep.subr.bf16.mxu0 %v4751
  %7588 = vmatpush1.bf16.msra.mxu0 %v4750
  %7589 = vmatprep.subr.bf16.mxu0 %v4755
  %7590 = vmatpush1.bf16.msra.mxu0 %v4754
  %7591 = vmatprep.subr.bf16.mxu0 %v4759
  %7592 = vmatpush1.bf16.msra.mxu0 %v4758
  %7593 = vmatprep.subr.bf16.mxu0 %v4763
  %7594 = vmatpush1.bf16.msra.mxu0 %v4762
  %7595 = vmatprep.mubr.bf16.mxu0 %v1315
  %7596 = vmatmul.mubr.bf16.gmra.mrb[0].mxu0 %v1314
  %v7597 = vpop.f32.mrb[0].mxu0
  %v7598 = vadd.f32 %v7545, %v7597
  %v7599 = vpop.f32.mrb[0].mxu0
  %v7600 = vadd.f32 %v7547, %v7599
  %v7601 = vpop.f32.mrb[0].mxu0
  %v7602 = vadd.f32 %v7549, %v7601
  %v7603 = vpop.f32.mrb[0].mxu0
  %v7604 = vadd.f32 %v7551, %v7603
  %7605 = vmatprep.mubr.bf16.mxu0 %v1347
  %7606 = vmatmul.mubr.bf16.gmra.mrb[0].mxu0 %v1346
  %v7607 = vpop.f32.mrb[0].mxu0
  %v7608 = vadd.f32 %v7555, %v7607
  %v7609 = vpop.f32.mrb[0].mxu0
  %v7610 = vadd.f32 %v7557, %v7609
  %v7611 = vpop.f32.mrb[0].mxu0
  %v7612 = vadd.f32 %v7559, %v7611
  %v7613 = vpop.f32.mrb[0].mxu0
  %v7614 = vadd.f32 %v7561, %v7613
  %7615 = vdwg.mxu0
  %7616 = vmatprep.subr.bf16.mxu0 %v4767
  %7617 = vmatpush1.bf16.msra.mxu0 %v4766
  %7618 = vmatprep.subr.bf16.mxu0 %v4771
  %7619 = vmatpush1.bf16.msra.mxu0 %v4770
  %7620 = vmatprep.subr.bf16.mxu0 %v4775
  %7621 = vmatpush1.bf16.msra.mxu0 %v4774
  %7622 = vmatprep.subr.bf16.mxu0 %v4779
  %7623 = vmatpush1.bf16.msra.mxu0 %v4778
  %7624 = vmatprep.subr.bf16.mxu0 %v4783
  %7625 = vmatpush1.bf16.msra.mxu0 %v4782
  %7626 = vmatprep.subr.bf16.mxu0 %v4787
  %7627 = vmatpush1.bf16.msra.mxu0 %v4786
  %7628 = vmatprep.subr.bf16.mxu0 %v4791
  %7629 = vmatpush1.bf16.msra.mxu0 %v4790
  %7630 = vmatprep.subr.bf16.mxu0 %v4795
  %7631 = vmatpush1.bf16.msra.mxu0 %v4794
  %7632 = vmatprep.subr.bf16.mxu0 %v4799
  %7633 = vmatpush1.bf16.msra.mxu0 %v4798
  %7634 = vmatprep.subr.bf16.mxu0 %v4803
  %7635 = vmatpush1.bf16.msra.mxu0 %v4802
  %7636 = vmatprep.subr.bf16.mxu0 %v4807
  %7637 = vmatpush1.bf16.msra.mxu0 %v4806
  %7638 = vmatprep.subr.bf16.mxu0 %v4811
  %7639 = vmatpush1.bf16.msra.mxu0 %v4810
  %7640 = vmatprep.subr.bf16.mxu0 %v4815
  %7641 = vmatpush1.bf16.msra.mxu0 %v4814
  %7642 = vmatprep.subr.bf16.mxu0 %v4819
  %7643 = vmatpush1.bf16.msra.mxu0 %v4818
  %7644 = vmatprep.subr.bf16.mxu0 %v4823
  %7645 = vmatpush1.bf16.msra.mxu0 %v4822
  %7646 = vmatprep.subr.bf16.mxu0 %v4827
  %7647 = vmatpush1.bf16.msra.mxu0 %v4826
  %7648 = vmatprep.mubr.bf16.mxu0 %v1317
  %7649 = vmatmul.mubr.bf16.gmra.mrb[0].mxu0 %v1316
  %v7650 = vpop.f32.mrb[0].mxu0
  %v7651 = vadd.f32 %v7598, %v7650
  %v7652 = vpop.f32.mrb[0].mxu0
  %v7653 = vadd.f32 %v7600, %v7652
  %v7654 = vpop.f32.mrb[0].mxu0
  %v7655 = vadd.f32 %v7602, %v7654
  %v7656 = vpop.f32.mrb[0].mxu0
  %v7657 = vadd.f32 %v7604, %v7656
  %7658 = vmatprep.mubr.bf16.mxu0 %v1349
  %7659 = vmatmul.mubr.bf16.gmra.mrb[0].mxu0 %v1348
  %v7660 = vpop.f32.mrb[0].mxu0
  %v7661 = vadd.f32 %v7608, %v7660
  %v7662 = vpop.f32.mrb[0].mxu0
  %v7663 = vadd.f32 %v7610, %v7662
  %v7664 = vpop.f32.mrb[0].mxu0
  %v7665 = vadd.f32 %v7612, %v7664
  %v7666 = vpop.f32.mrb[0].mxu0
  %v7667 = vadd.f32 %v7614, %v7666
  %7668 = vdwg.mxu0
  %7669 = vmatprep.subr.bf16.mxu0 %v4831
  %7670 = vmatpush1.bf16.msra.mxu0 %v4830
  %7671 = vmatprep.subr.bf16.mxu0 %v4835
  %7672 = vmatpush1.bf16.msra.mxu0 %v4834
  %7673 = vmatprep.subr.bf16.mxu0 %v4839
  %7674 = vmatpush1.bf16.msra.mxu0 %v4838
  %7675 = vmatprep.subr.bf16.mxu0 %v4843
  %7676 = vmatpush1.bf16.msra.mxu0 %v4842
  %7677 = vmatprep.subr.bf16.mxu0 %v4847
  %7678 = vmatpush1.bf16.msra.mxu0 %v4846
  %7679 = vmatprep.subr.bf16.mxu0 %v4851
  %7680 = vmatpush1.bf16.msra.mxu0 %v4850
  %7681 = vmatprep.subr.bf16.mxu0 %v4855
  %7682 = vmatpush1.bf16.msra.mxu0 %v4854
  %7683 = vmatprep.subr.bf16.mxu0 %v4859
  %7684 = vmatpush1.bf16.msra.mxu0 %v4858
  %7685 = vmatprep.subr.bf16.mxu0 %v4863
  %7686 = vmatpush1.bf16.msra.mxu0 %v4862
  %7687 = vmatprep.subr.bf16.mxu0 %v4867
  %7688 = vmatpush1.bf16.msra.mxu0 %v4866
  %7689 = vmatprep.subr.bf16.mxu0 %v4871
  %7690 = vmatpush1.bf16.msra.mxu0 %v4870
  %7691 = vmatprep.subr.bf16.mxu0 %v4875
  %7692 = vmatpush1.bf16.msra.mxu0 %v4874
  %7693 = vmatprep.subr.bf16.mxu0 %v4879
  %7694 = vmatpush1.bf16.msra.mxu0 %v4878
  %7695 = vmatprep.subr.bf16.mxu0 %v4883
  %7696 = vmatpush1.bf16.msra.mxu0 %v4882
  %7697 = vmatprep.subr.bf16.mxu0 %v4887
  %7698 = vmatpush1.bf16.msra.mxu0 %v4886
  %7699 = vmatprep.subr.bf16.mxu0 %v4891
  %7700 = vmatpush1.bf16.msra.mxu0 %v4890
  %7701 = vmatprep.mubr.bf16.mxu0 %v1319
  %7702 = vmatmul.mubr.bf16.gmra.mrb[0].mxu0 %v1318
  %v7703 = vpop.f32.mrb[0].mxu0
  %v7704 = vadd.f32 %v7651, %v7703
  %v7705 = vpop.f32.mrb[0].mxu0
  %v7706 = vadd.f32 %v7653, %v7705
  %v7707 = vpop.f32.mrb[0].mxu0
  %v7708 = vadd.f32 %v7655, %v7707
  %v7709 = vpop.f32.mrb[0].mxu0
  %v7710 = vadd.f32 %v7657, %v7709
  %7711 = vmatprep.mubr.bf16.mxu0 %v1351
  %7712 = vmatmul.mubr.bf16.gmra.mrb[0].mxu0 %v1350
  %v7713 = vpop.f32.mrb[0].mxu0
  %v7714 = vadd.f32 %v7661, %v7713
  %v7715 = vpop.f32.mrb[0].mxu0
  %v7716 = vadd.f32 %v7663, %v7715
  %v7717 = vpop.f32.mrb[0].mxu0
  %v7718 = vadd.f32 %v7665, %v7717
  %v7719 = vpop.f32.mrb[0].mxu0
  %v7720 = vadd.f32 %v7667, %v7719
  %7721 = vdwg.mxu0
  %7722 = vmatprep.subr.bf16.mxu0 %v4895
  %7723 = vmatpush1.bf16.msra.mxu0 %v4894
  %7724 = vmatprep.subr.bf16.mxu0 %v4899
  %7725 = vmatpush1.bf16.msra.mxu0 %v4898
  %7726 = vmatprep.subr.bf16.mxu0 %v4903
  %7727 = vmatpush1.bf16.msra.mxu0 %v4902
  %7728 = vmatprep.subr.bf16.mxu0 %v4907
  %7729 = vmatpush1.bf16.msra.mxu0 %v4906
  %7730 = vmatprep.subr.bf16.mxu0 %v4911
  %7731 = vmatpush1.bf16.msra.mxu0 %v4910
  %7732 = vmatprep.subr.bf16.mxu0 %v4915
  %7733 = vmatpush1.bf16.msra.mxu0 %v4914
  %7734 = vmatprep.subr.bf16.mxu0 %v4919
  %7735 = vmatpush1.bf16.msra.mxu0 %v4918
  %7736 = vmatprep.subr.bf16.mxu0 %v4923
  %7737 = vmatpush1.bf16.msra.mxu0 %v4922
  %7738 = vmatprep.subr.bf16.mxu0 %v4927
  %7739 = vmatpush1.bf16.msra.mxu0 %v4926
  %7740 = vmatprep.subr.bf16.mxu0 %v4931
  %7741 = vmatpush1.bf16.msra.mxu0 %v4930
  %7742 = vmatprep.subr.bf16.mxu0 %v4935
  %7743 = vmatpush1.bf16.msra.mxu0 %v4934
  %7744 = vmatprep.subr.bf16.mxu0 %v4939
  %7745 = vmatpush1.bf16.msra.mxu0 %v4938
  %7746 = vmatprep.subr.bf16.mxu0 %v4943
  %7747 = vmatpush1.bf16.msra.mxu0 %v4942
  %7748 = vmatprep.subr.bf16.mxu0 %v4947
  %7749 = vmatpush1.bf16.msra.mxu0 %v4946
  %7750 = vmatprep.subr.bf16.mxu0 %v4951
  %7751 = vmatpush1.bf16.msra.mxu0 %v4950
  %7752 = vmatprep.subr.bf16.mxu0 %v4955
  %7753 = vmatpush1.bf16.msra.mxu0 %v4954
  %7754 = vmatprep.mubr.bf16.mxu0 %v1321
  %7755 = vmatmul.mubr.bf16.gmra.mrb[0].mxu0 %v1320
  %v7756 = vpop.f32.mrb[0].mxu0
  %v7757 = vadd.f32 %v7704, %v7756
  %v7758 = vpop.f32.mrb[0].mxu0
  %v7759 = vadd.f32 %v7706, %v7758
  %v7760 = vpop.f32.mrb[0].mxu0
  %v7761 = vadd.f32 %v7708, %v7760
  %v7762 = vpop.f32.mrb[0].mxu0
  %v7763 = vadd.f32 %v7710, %v7762
  %7764 = vmatprep.mubr.bf16.mxu0 %v1353
  %7765 = vmatmul.mubr.bf16.gmra.mrb[0].mxu0 %v1352
  %v7766 = vpop.f32.mrb[0].mxu0
  %v7767 = vadd.f32 %v7714, %v7766
  %v7768 = vpop.f32.mrb[0].mxu0
  %v7769 = vadd.f32 %v7716, %v7768
  %v7770 = vpop.f32.mrb[0].mxu0
  %v7771 = vadd.f32 %v7718, %v7770
  %v7772 = vpop.f32.mrb[0].mxu0
  %v7773 = vadd.f32 %v7720, %v7772
  %7774 = vdwg.mxu0
  %7775 = vmatprep.subr.bf16.mxu0 %v4959
  %7776 = vmatpush1.bf16.msra.mxu0 %v4958
  %7777 = vmatprep.subr.bf16.mxu0 %v4963
  %7778 = vmatpush1.bf16.msra.mxu0 %v4962
  %7779 = vmatprep.subr.bf16.mxu0 %v4967
  %7780 = vmatpush1.bf16.msra.mxu0 %v4966
  %7781 = vmatprep.subr.bf16.mxu0 %v4971
  %7782 = vmatpush1.bf16.msra.mxu0 %v4970
  %7783 = vmatprep.subr.bf16.mxu0 %v4975
  %7784 = vmatpush1.bf16.msra.mxu0 %v4974
  %7785 = vmatprep.subr.bf16.mxu0 %v4979
  %7786 = vmatpush1.bf16.msra.mxu0 %v4978
  %7787 = vmatprep.subr.bf16.mxu0 %v4983
  %7788 = vmatpush1.bf16.msra.mxu0 %v4982
  %7789 = vmatprep.subr.bf16.mxu0 %v4987
  %7790 = vmatpush1.bf16.msra.mxu0 %v4986
  %7791 = vmatprep.subr.bf16.mxu0 %v4991
  %7792 = vmatpush1.bf16.msra.mxu0 %v4990
  %7793 = vmatprep.subr.bf16.mxu0 %v4995
  %7794 = vmatpush1.bf16.msra.mxu0 %v4994
  %7795 = vmatprep.subr.bf16.mxu0 %v4999
  %7796 = vmatpush1.bf16.msra.mxu0 %v4998
  %7797 = vmatprep.subr.bf16.mxu0 %v5003
  %7798 = vmatpush1.bf16.msra.mxu0 %v5002
  %7799 = vmatprep.subr.bf16.mxu0 %v5007
  %7800 = vmatpush1.bf16.msra.mxu0 %v5006
  %7801 = vmatprep.subr.bf16.mxu0 %v5011
  %7802 = vmatpush1.bf16.msra.mxu0 %v5010
  %7803 = vmatprep.subr.bf16.mxu0 %v5015
  %7804 = vmatpush1.bf16.msra.mxu0 %v5014
  %7805 = vmatprep.subr.bf16.mxu0 %v5019
  %7806 = vmatpush1.bf16.msra.mxu0 %v5018
  %7807 = vmatprep.mubr.bf16.mxu0 %v1323
  %7808 = vmatmul.mubr.bf16.gmra.mrb[0].mxu0 %v1322
  %v7809 = vpop.f32.mrb[0].mxu0
  %v7810 = vadd.f32 %v7757, %v7809
  %v7811 = vpop.f32.mrb[0].mxu0
  %v7812 = vadd.f32 %v7759, %v7811
  %v7813 = vpop.f32.mrb[0].mxu0
  %v7814 = vadd.f32 %v7761, %v7813
  %v7815 = vpop.f32.mrb[0].mxu0
  %v7816 = vadd.f32 %v7763, %v7815
  %7817 = vmatprep.mubr.bf16.mxu0 %v1355
  %7818 = vmatmul.mubr.bf16.gmra.mrb[0].mxu0 %v1354
  %v7819 = vpop.f32.mrb[0].mxu0
  %v7820 = vadd.f32 %v7767, %v7819
  %v7821 = vpop.f32.mrb[0].mxu0
  %v7822 = vadd.f32 %v7769, %v7821
  %v7823 = vpop.f32.mrb[0].mxu0
  %v7824 = vadd.f32 %v7771, %v7823
  %v7825 = vpop.f32.mrb[0].mxu0
  %v7826 = vadd.f32 %v7773, %v7825
  %7827 = vdwg.mxu0
  %7828 = vmatprep.subr.bf16.mxu0 %v5023
  %7829 = vmatpush1.bf16.msra.mxu0 %v5022
  %7830 = vmatprep.subr.bf16.mxu0 %v5027
  %7831 = vmatpush1.bf16.msra.mxu0 %v5026
  %7832 = vmatprep.subr.bf16.mxu0 %v5031
  %7833 = vmatpush1.bf16.msra.mxu0 %v5030
  %7834 = vmatprep.subr.bf16.mxu0 %v5035
  %7835 = vmatpush1.bf16.msra.mxu0 %v5034
  %7836 = vmatprep.subr.bf16.mxu0 %v5039
  %7837 = vmatpush1.bf16.msra.mxu0 %v5038
  %7838 = vmatprep.subr.bf16.mxu0 %v5043
  %7839 = vmatpush1.bf16.msra.mxu0 %v5042
  %7840 = vmatprep.subr.bf16.mxu0 %v5047
  %7841 = vmatpush1.bf16.msra.mxu0 %v5046
  %7842 = vmatprep.subr.bf16.mxu0 %v5051
  %7843 = vmatpush1.bf16.msra.mxu0 %v5050
  %7844 = vmatprep.subr.bf16.mxu0 %v5055
  %7845 = vmatpush1.bf16.msra.mxu0 %v5054
  %7846 = vmatprep.subr.bf16.mxu0 %v5059
  %7847 = vmatpush1.bf16.msra.mxu0 %v5058
  %7848 = vmatprep.subr.bf16.mxu0 %v5063
  %7849 = vmatpush1.bf16.msra.mxu0 %v5062
  %7850 = vmatprep.subr.bf16.mxu0 %v5067
  %7851 = vmatpush1.bf16.msra.mxu0 %v5066
  %7852 = vmatprep.subr.bf16.mxu0 %v5071
  %7853 = vmatpush1.bf16.msra.mxu0 %v5070
  %7854 = vmatprep.subr.bf16.mxu0 %v5075
  %7855 = vmatpush1.bf16.msra.mxu0 %v5074
  %7856 = vmatprep.subr.bf16.mxu0 %v5079
  %7857 = vmatpush1.bf16.msra.mxu0 %v5078
  %7858 = vmatprep.subr.bf16.mxu0 %v5083
  %7859 = vmatpush1.bf16.msra.mxu0 %v5082
  %7860 = vmatprep.mubr.bf16.mxu0 %v1325
  %7861 = vmatmul.mubr.bf16.gmra.mrb[0].mxu0 %v1324
  %v7862 = vpop.f32.mrb[0].mxu0
  %v7863 = vadd.f32 %v7810, %v7862
  %v7864 = vpop.f32.mrb[0].mxu0
  %v7865 = vadd.f32 %v7812, %v7864
  %v7866 = vpop.f32.mrb[0].mxu0
  %v7867 = vadd.f32 %v7814, %v7866
  %v7868 = vpop.f32.mrb[0].mxu0
  %v7869 = vadd.f32 %v7816, %v7868
  %7870 = vmatprep.mubr.bf16.mxu0 %v1357
  %7871 = vmatmul.mubr.bf16.gmra.mrb[0].mxu0 %v1356
  %v7872 = vpop.f32.mrb[0].mxu0
  %v7873 = vadd.f32 %v7820, %v7872
  %v7874 = vpop.f32.mrb[0].mxu0
  %v7875 = vadd.f32 %v7822, %v7874
  %v7876 = vpop.f32.mrb[0].mxu0
  %v7877 = vadd.f32 %v7824, %v7876
  %v7878 = vpop.f32.mrb[0].mxu0
  %v7879 = vadd.f32 %v7826, %v7878
  %7880 = vdwg.mxu0
  %7881 = vmatprep.subr.bf16.mxu0 %v5087
  %7882 = vmatpush1.bf16.msra.mxu0 %v5086
  %7883 = vmatprep.subr.bf16.mxu0 %v5091
  %7884 = vmatpush1.bf16.msra.mxu0 %v5090
  %7885 = vmatprep.subr.bf16.mxu0 %v5095
  %7886 = vmatpush1.bf16.msra.mxu0 %v5094
  %7887 = vmatprep.subr.bf16.mxu0 %v5099
  %7888 = vmatpush1.bf16.msra.mxu0 %v5098
  %7889 = vmatprep.subr.bf16.mxu0 %v5103
  %7890 = vmatpush1.bf16.msra.mxu0 %v5102
  %7891 = vmatprep.subr.bf16.mxu0 %v5107
  %7892 = vmatpush1.bf16.msra.mxu0 %v5106
  %7893 = vmatprep.subr.bf16.mxu0 %v5111
  %7894 = vmatpush1.bf16.msra.mxu0 %v5110
  %7895 = vmatprep.subr.bf16.mxu0 %v5115
  %7896 = vmatpush1.bf16.msra.mxu0 %v5114
  %7897 = vmatprep.subr.bf16.mxu0 %v5119
  %7898 = vmatpush1.bf16.msra.mxu0 %v5118
  %7899 = vmatprep.subr.bf16.mxu0 %v5123
  %7900 = vmatpush1.bf16.msra.mxu0 %v5122
  %7901 = vmatprep.subr.bf16.mxu0 %v5127
  %7902 = vmatpush1.bf16.msra.mxu0 %v5126
  %7903 = vmatprep.subr.bf16.mxu0 %v5131
  %7904 = vmatpush1.bf16.msra.mxu0 %v5130
  %7905 = vmatprep.subr.bf16.mxu0 %v5135
  %7906 = vmatpush1.bf16.msra.mxu0 %v5134
  %7907 = vmatprep.subr.bf16.mxu0 %v5139
  %7908 = vmatpush1.bf16.msra.mxu0 %v5138
  %7909 = vmatprep.subr.bf16.mxu0 %v5143
  %7910 = vmatpush1.bf16.msra.mxu0 %v5142
  %7911 = vmatprep.subr.bf16.mxu0 %v5147
  %7912 = vmatpush1.bf16.msra.mxu0 %v5146
  %7913 = vmatprep.mubr.bf16.mxu0 %v1327
  %7914 = vmatmul.mubr.bf16.gmra.mrb[0].mxu0 %v1326
  %v7915 = vpop.f32.mrb[0].mxu0
  %v7916 = vadd.f32 %v7863, %v7915
  %v7917 = vpop.f32.mrb[0].mxu0
  %v7918 = vadd.f32 %v7865, %v7917
  %v7919 = vpop.f32.mrb[0].mxu0
  %v7920 = vadd.f32 %v7867, %v7919
  %v7921 = vpop.f32.mrb[0].mxu0
  %v7922 = vadd.f32 %v7869, %v7921
  %7923 = vmatprep.mubr.bf16.mxu0 %v1359
  %7924 = vmatmul.mubr.bf16.gmra.mrb[0].mxu0 %v1358
  %v7925 = vpop.f32.mrb[0].mxu0
  %v7926 = vadd.f32 %v7873, %v7925
  %v7927 = vpop.f32.mrb[0].mxu0
  %v7928 = vadd.f32 %v7875, %v7927
  %v7929 = vpop.f32.mrb[0].mxu0
  %v7930 = vadd.f32 %v7877, %v7929
  %v7931 = vpop.f32.mrb[0].mxu0
  %v7932 = vadd.f32 %v7879, %v7931
  %7933 = vdwg.mxu0
  %7934 = vmatprep.subr.bf16.mxu0 %v5151
  %7935 = vmatpush1.bf16.msra.mxu0 %v5150
  %7936 = vmatprep.subr.bf16.mxu0 %v5155
  %7937 = vmatpush1.bf16.msra.mxu0 %v5154
  %7938 = vmatprep.subr.bf16.mxu0 %v5159
  %7939 = vmatpush1.bf16.msra.mxu0 %v5158
  %7940 = vmatprep.subr.bf16.mxu0 %v5163
  %7941 = vmatpush1.bf16.msra.mxu0 %v5162
  %7942 = vmatprep.subr.bf16.mxu0 %v5167
  %7943 = vmatpush1.bf16.msra.mxu0 %v5166
  %7944 = vmatprep.subr.bf16.mxu0 %v5171
  %7945 = vmatpush1.bf16.msra.mxu0 %v5170
  %7946 = vmatprep.subr.bf16.mxu0 %v5175
  %7947 = vmatpush1.bf16.msra.mxu0 %v5174
  %7948 = vmatprep.subr.bf16.mxu0 %v5179
  %7949 = vmatpush1.bf16.msra.mxu0 %v5178
  %7950 = vmatprep.subr.bf16.mxu0 %v5183
  %7951 = vmatpush1.bf16.msra.mxu0 %v5182
  %7952 = vmatprep.subr.bf16.mxu0 %v5187
  %7953 = vmatpush1.bf16.msra.mxu0 %v5186
  %7954 = vmatprep.subr.bf16.mxu0 %v5191
  %7955 = vmatpush1.bf16.msra.mxu0 %v5190
  %7956 = vmatprep.subr.bf16.mxu0 %v5195
  %7957 = vmatpush1.bf16.msra.mxu0 %v5194
  %7958 = vmatprep.subr.bf16.mxu0 %v5199
  %7959 = vmatpush1.bf16.msra.mxu0 %v5198
  %7960 = vmatprep.subr.bf16.mxu0 %v5203
  %7961 = vmatpush1.bf16.msra.mxu0 %v5202
  %7962 = vmatprep.subr.bf16.mxu0 %v5207
  %7963 = vmatpush1.bf16.msra.mxu0 %v5206
  %7964 = vmatprep.subr.bf16.mxu0 %v5211
  %7965 = vmatpush1.bf16.msra.mxu0 %v5210
  %7966 = vmatprep.mubr.bf16.mxu0 %v1329
  %7967 = vmatmul.mubr.bf16.gmra.mrb[0].mxu0 %v1328
  %v7968 = vpop.f32.mrb[0].mxu0
  %v7969 = vadd.f32 %v7916, %v7968
  %v7970 = vpop.f32.mrb[0].mxu0
  %v7971 = vadd.f32 %v7918, %v7970
  %v7972 = vpop.f32.mrb[0].mxu0
  %v7973 = vadd.f32 %v7920, %v7972
  %v7974 = vpop.f32.mrb[0].mxu0
  %v7975 = vadd.f32 %v7922, %v7974
  %7976 = vmatprep.mubr.bf16.mxu0 %v1361
  %7977 = vmatmul.mubr.bf16.gmra.mrb[0].mxu0 %v1360
  %v7978 = vpop.f32.mrb[0].mxu0
  %v7979 = vadd.f32 %v7926, %v7978
  %v7980 = vpop.f32.mrb[0].mxu0
  %v7981 = vadd.f32 %v7928, %v7980
  %v7982 = vpop.f32.mrb[0].mxu0
  %v7983 = vadd.f32 %v7930, %v7982
  %v7984 = vpop.f32.mrb[0].mxu0
  %v7985 = vadd.f32 %v7932, %v7984
  %7986 = vdwg.mxu0
  %7987 = vmatprep.subr.bf16.mxu0 %v5215
  %7988 = vmatpush1.bf16.msra.mxu0 %v5214
  %7989 = vmatprep.subr.bf16.mxu0 %v5219
  %7990 = vmatpush1.bf16.msra.mxu0 %v5218
  %7991 = vmatprep.subr.bf16.mxu0 %v5223
  %7992 = vmatpush1.bf16.msra.mxu0 %v5222
  %7993 = vmatprep.subr.bf16.mxu0 %v5227
  %7994 = vmatpush1.bf16.msra.mxu0 %v5226
  %7995 = vmatprep.subr.bf16.mxu0 %v5231
  %7996 = vmatpush1.bf16.msra.mxu0 %v5230
  %7997 = vmatprep.subr.bf16.mxu0 %v5235
  %7998 = vmatpush1.bf16.msra.mxu0 %v5234
  %7999 = vmatprep.subr.bf16.mxu0 %v5239
  %8000 = vmatpush1.bf16.msra.mxu0 %v5238
  %8001 = vmatprep.subr.bf16.mxu0 %v5243
  %8002 = vmatpush1.bf16.msra.mxu0 %v5242
  %8003 = vmatprep.subr.bf16.mxu0 %v5247
  %8004 = vmatpush1.bf16.msra.mxu0 %v5246
  %8005 = vmatprep.subr.bf16.mxu0 %v5251
  %8006 = vmatpush1.bf16.msra.mxu0 %v5250
  %8007 = vmatprep.subr.bf16.mxu0 %v5255
  %8008 = vmatpush1.bf16.msra.mxu0 %v5254
  %8009 = vmatprep.subr.bf16.mxu0 %v5259
  %8010 = vmatpush1.bf16.msra.mxu0 %v5258
  %8011 = vmatprep.subr.bf16.mxu0 %v5263
  %8012 = vmatpush1.bf16.msra.mxu0 %v5262
  %8013 = vmatprep.subr.bf16.mxu0 %v5267
  %8014 = vmatpush1.bf16.msra.mxu0 %v5266
  %8015 = vmatprep.subr.bf16.mxu0 %v5271
  %8016 = vmatpush1.bf16.msra.mxu0 %v5270
  %8017 = vmatprep.subr.bf16.mxu0 %v5275
  %8018 = vmatpush1.bf16.msra.mxu0 %v5274
  %8019 = vmatprep.mubr.bf16.mxu0 %v1331
  %8020 = vmatmul.mubr.bf16.gmra.mrb[0].mxu0 %v1330
  %v8021 = vpop.f32.mrb[0].mxu0
  %v8022 = vadd.f32 %v7969, %v8021
  %v8023 = vpop.f32.mrb[0].mxu0
  %v8024 = vadd.f32 %v7971, %v8023
  %v8025 = vpop.f32.mrb[0].mxu0
  %v8026 = vadd.f32 %v7973, %v8025
  %v8027 = vpop.f32.mrb[0].mxu0
  %v8028 = vadd.f32 %v7975, %v8027
  %8029 = vmatprep.mubr.bf16.mxu0 %v1363
  %8030 = vmatmul.mubr.bf16.gmra.mrb[0].mxu0 %v1362
  %v8031 = vpop.f32.mrb[0].mxu0
  %v8032 = vadd.f32 %v7979, %v8031
  %v8033 = vpop.f32.mrb[0].mxu0
  %v8034 = vadd.f32 %v7981, %v8033
  %v8035 = vpop.f32.mrb[0].mxu0
  %v8036 = vadd.f32 %v7983, %v8035
  %v8037 = vpop.f32.mrb[0].mxu0
  %v8038 = vadd.f32 %v7985, %v8037
  %8039 = vdwg.mxu0
  %8040 = vmatprep.subr.bf16.mxu0 %v5279
  %8041 = vmatpush1.bf16.msra.mxu0 %v5278
  %8042 = vmatprep.subr.bf16.mxu0 %v5283
  %8043 = vmatpush1.bf16.msra.mxu0 %v5282
  %8044 = vmatprep.subr.bf16.mxu0 %v5287
  %8045 = vmatpush1.bf16.msra.mxu0 %v5286
  %8046 = vmatprep.subr.bf16.mxu0 %v5291
  %8047 = vmatpush1.bf16.msra.mxu0 %v5290
  %8048 = vmatprep.subr.bf16.mxu0 %v5295
  %8049 = vmatpush1.bf16.msra.mxu0 %v5294
  %8050 = vmatprep.subr.bf16.mxu0 %v5299
  %8051 = vmatpush1.bf16.msra.mxu0 %v5298
  %8052 = vmatprep.subr.bf16.mxu0 %v5303
  %8053 = vmatpush1.bf16.msra.mxu0 %v5302
  %8054 = vmatprep.subr.bf16.mxu0 %v5307
  %8055 = vmatpush1.bf16.msra.mxu0 %v5306
  %8056 = vmatprep.subr.bf16.mxu0 %v5311
  %8057 = vmatpush1.bf16.msra.mxu0 %v5310
  %8058 = vmatprep.subr.bf16.mxu0 %v5315
  %8059 = vmatpush1.bf16.msra.mxu0 %v5314
  %8060 = vmatprep.subr.bf16.mxu0 %v5319
  %8061 = vmatpush1.bf16.msra.mxu0 %v5318
  %8062 = vmatprep.subr.bf16.mxu0 %v5323
  %8063 = vmatpush1.bf16.msra.mxu0 %v5322
  %8064 = vmatprep.subr.bf16.mxu0 %v5327
  %8065 = vmatpush1.bf16.msra.mxu0 %v5326
  %8066 = vmatprep.subr.bf16.mxu0 %v5331
  %8067 = vmatpush1.bf16.msra.mxu0 %v5330
  %8068 = vmatprep.subr.bf16.mxu0 %v5335
  %8069 = vmatpush1.bf16.msra.mxu0 %v5334
  %8070 = vmatprep.subr.bf16.mxu0 %v5339
  %8071 = vmatpush1.bf16.msra.mxu0 %v5338
  %8072 = vmatprep.mubr.bf16.mxu0 %v1333
  %8073 = vmatmul.mubr.bf16.gmra.mrb[0].mxu0 %v1332
  %v8074 = vpop.f32.mrb[0].mxu0
  %v8075 = vadd.f32 %v8022, %v8074
  %v8076 = vpop.f32.mrb[0].mxu0
  %v8077 = vadd.f32 %v8024, %v8076
  %v8078 = vpop.f32.mrb[0].mxu0
  %v8079 = vadd.f32 %v8026, %v8078
  %v8080 = vpop.f32.mrb[0].mxu0
  %v8081 = vadd.f32 %v8028, %v8080
  %8082 = vmatprep.mubr.bf16.mxu0 %v1365
  %8083 = vmatmul.mubr.bf16.gmra.mrb[0].mxu0 %v1364
  %v8084 = vpop.f32.mrb[0].mxu0
  %v8085 = vadd.f32 %v8032, %v8084
  %v8086 = vpop.f32.mrb[0].mxu0
  %v8087 = vadd.f32 %v8034, %v8086
  %v8088 = vpop.f32.mrb[0].mxu0
  %v8089 = vadd.f32 %v8036, %v8088
  %v8090 = vpop.f32.mrb[0].mxu0
  %v8091 = vadd.f32 %v8038, %v8090
  %8092 = vdwg.mxu0
  %8093 = vmatprep.subr.bf16.mxu0 %v5343
  %8094 = vmatpush1.bf16.msra.mxu0 %v5342
  %8095 = vmatprep.subr.bf16.mxu0 %v5347
  %8096 = vmatpush1.bf16.msra.mxu0 %v5346
  %8097 = vmatprep.subr.bf16.mxu0 %v5351
  %8098 = vmatpush1.bf16.msra.mxu0 %v5350
  %8099 = vmatprep.subr.bf16.mxu0 %v5355
  %8100 = vmatpush1.bf16.msra.mxu0 %v5354
  %8101 = vmatprep.subr.bf16.mxu0 %v5359
  %8102 = vmatpush1.bf16.msra.mxu0 %v5358
  %8103 = vmatprep.subr.bf16.mxu0 %v5363
  %8104 = vmatpush1.bf16.msra.mxu0 %v5362
  %8105 = vmatprep.subr.bf16.mxu0 %v5367
  %8106 = vmatpush1.bf16.msra.mxu0 %v5366
  %8107 = vmatprep.subr.bf16.mxu0 %v5371
  %8108 = vmatpush1.bf16.msra.mxu0 %v5370
  %8109 = vmatprep.subr.bf16.mxu0 %v5375
  %8110 = vmatpush1.bf16.msra.mxu0 %v5374
  %8111 = vmatprep.subr.bf16.mxu0 %v5379
  %8112 = vmatpush1.bf16.msra.mxu0 %v5378
  %8113 = vmatprep.subr.bf16.mxu0 %v5383
  %8114 = vmatpush1.bf16.msra.mxu0 %v5382
  %8115 = vmatprep.subr.bf16.mxu0 %v5387
  %8116 = vmatpush1.bf16.msra.mxu0 %v5386
  %8117 = vmatprep.subr.bf16.mxu0 %v5391
  %8118 = vmatpush1.bf16.msra.mxu0 %v5390
  %8119 = vmatprep.subr.bf16.mxu0 %v5395
  %8120 = vmatpush1.bf16.msra.mxu0 %v5394
  %8121 = vmatprep.subr.bf16.mxu0 %v5399
  %8122 = vmatpush1.bf16.msra.mxu0 %v5398
  %8123 = vmatprep.subr.bf16.mxu0 %v5403
  %8124 = vmatpush1.bf16.msra.mxu0 %v5402
  %8125 = vmatprep.mubr.bf16.mxu0 %v1335
  %8126 = vmatmul.mubr.bf16.gmra.mrb[0].mxu0 %v1334
  %v8127 = vpop.f32.mrb[0].mxu0
  %v8128 = vadd.f32 %v8075, %v8127
  %v8129 = vpop.f32.mrb[0].mxu0
  %v8130 = vadd.f32 %v8077, %v8129
  %v8131 = vpop.f32.mrb[0].mxu0
  %v8132 = vadd.f32 %v8079, %v8131
  %v8133 = vpop.f32.mrb[0].mxu0
  %v8134 = vadd.f32 %v8081, %v8133
  %8135 = vmatprep.mubr.bf16.mxu0 %v1367
  %8136 = vmatmul.mubr.bf16.gmra.mrb[0].mxu0 %v1366
  %v8137 = vpop.f32.mrb[0].mxu0
  %v8138 = vadd.f32 %v8085, %v8137
  %v8139 = vpop.f32.mrb[0].mxu0
  %v8140 = vadd.f32 %v8087, %v8139
  %v8141 = vpop.f32.mrb[0].mxu0
  %v8142 = vadd.f32 %v8089, %v8141
  %v8143 = vpop.f32.mrb[0].mxu0
  %v8144 = vadd.f32 %v8091, %v8143
  %8145 = vdwg.mxu0
  %8146 = vmatprep.subr.bf16.mxu0 %v5407
  %8147 = vmatpush1.bf16.msra.mxu0 %v5406
  %8148 = vmatprep.subr.bf16.mxu0 %v5411
  %8149 = vmatpush1.bf16.msra.mxu0 %v5410
  %8150 = vmatprep.subr.bf16.mxu0 %v5415
  %8151 = vmatpush1.bf16.msra.mxu0 %v5414
  %8152 = vmatprep.subr.bf16.mxu0 %v5419
  %8153 = vmatpush1.bf16.msra.mxu0 %v5418
  %8154 = vmatprep.subr.bf16.mxu0 %v5423
  %8155 = vmatpush1.bf16.msra.mxu0 %v5422
  %8156 = vmatprep.subr.bf16.mxu0 %v5427
  %8157 = vmatpush1.bf16.msra.mxu0 %v5426
  %8158 = vmatprep.subr.bf16.mxu0 %v5431
  %8159 = vmatpush1.bf16.msra.mxu0 %v5430
  %8160 = vmatprep.subr.bf16.mxu0 %v5435
  %8161 = vmatpush1.bf16.msra.mxu0 %v5434
  %8162 = vmatprep.subr.bf16.mxu0 %v5439
  %8163 = vmatpush1.bf16.msra.mxu0 %v5438
  %8164 = vmatprep.subr.bf16.mxu0 %v5443
  %8165 = vmatpush1.bf16.msra.mxu0 %v5442
  %8166 = vmatprep.subr.bf16.mxu0 %v5447
  %8167 = vmatpush1.bf16.msra.mxu0 %v5446
  %8168 = vmatprep.subr.bf16.mxu0 %v5451
  %8169 = vmatpush1.bf16.msra.mxu0 %v5450
  %8170 = vmatprep.subr.bf16.mxu0 %v5455
  %8171 = vmatpush1.bf16.msra.mxu0 %v5454
  %8172 = vmatprep.subr.bf16.mxu0 %v5459
  %8173 = vmatpush1.bf16.msra.mxu0 %v5458
  %8174 = vmatprep.subr.bf16.mxu0 %v5463
  %8175 = vmatpush1.bf16.msra.mxu0 %v5462
  %8176 = vmatprep.subr.bf16.mxu0 %v5467
  %8177 = vmatpush1.bf16.msra.mxu0 %v5466
  %8178 = vmatprep.mubr.bf16.mxu0 %v1337
  %8179 = vmatmul.mubr.bf16.gmra.mrb[0].mxu0 %v1336
  %v8180 = vpop.f32.mrb[0].mxu0
  %v8181 = vadd.f32 %v8128, %v8180
  %v8182 = vpop.f32.mrb[0].mxu0
  %v8183 = vadd.f32 %v8130, %v8182
  %v8184 = vpop.f32.mrb[0].mxu0
  %v8185 = vadd.f32 %v8132, %v8184
  %v8186 = vpop.f32.mrb[0].mxu0
  %v8187 = vadd.f32 %v8134, %v8186
  %8188 = vmatprep.mubr.bf16.mxu0 %v1369
  %8189 = vmatmul.mubr.bf16.gmra.mrb[0].mxu0 %v1368
  %v8190 = vpop.f32.mrb[0].mxu0
  %v8191 = vadd.f32 %v8138, %v8190
  %v8192 = vpop.f32.mrb[0].mxu0
  %v8193 = vadd.f32 %v8140, %v8192
  %v8194 = vpop.f32.mrb[0].mxu0
  %v8195 = vadd.f32 %v8142, %v8194
  %v8196 = vpop.f32.mrb[0].mxu0
  %v8197 = vadd.f32 %v8144, %v8196
  %8198 = vdwg.mxu0
  %8199 = vmatprep.subr.bf16.mxu0 %v5471
  %8200 = vmatpush1.bf16.msra.mxu0 %v5470
  %8201 = vmatprep.subr.bf16.mxu0 %v5475
  %8202 = vmatpush1.bf16.msra.mxu0 %v5474
  %8203 = vmatprep.subr.bf16.mxu0 %v5479
  %8204 = vmatpush1.bf16.msra.mxu0 %v5478
  %8205 = vmatprep.subr.bf16.mxu0 %v5483
  %8206 = vmatpush1.bf16.msra.mxu0 %v5482
  %8207 = vmatprep.subr.bf16.mxu0 %v5487
  %8208 = vmatpush1.bf16.msra.mxu0 %v5486
  %8209 = vmatprep.subr.bf16.mxu0 %v5491
  %8210 = vmatpush1.bf16.msra.mxu0 %v5490
  %8211 = vmatprep.subr.bf16.mxu0 %v5495
  %8212 = vmatpush1.bf16.msra.mxu0 %v5494
  %8213 = vmatprep.subr.bf16.mxu0 %v5499
  %8214 = vmatpush1.bf16.msra.mxu0 %v5498
  %8215 = vmatprep.subr.bf16.mxu0 %v5503
  %8216 = vmatpush1.bf16.msra.mxu0 %v5502
  %8217 = vmatprep.subr.bf16.mxu0 %v5507
  %8218 = vmatpush1.bf16.msra.mxu0 %v5506
  %8219 = vmatprep.subr.bf16.mxu0 %v5511
  %8220 = vmatpush1.bf16.msra.mxu0 %v5510
  %8221 = vmatprep.subr.bf16.mxu0 %v5515
  %8222 = vmatpush1.bf16.msra.mxu0 %v5514
  %8223 = vmatprep.subr.bf16.mxu0 %v5519
  %8224 = vmatpush1.bf16.msra.mxu0 %v5518
  %8225 = vmatprep.subr.bf16.mxu0 %v5523
  %8226 = vmatpush1.bf16.msra.mxu0 %v5522
  %8227 = vmatprep.subr.bf16.mxu0 %v5527
  %8228 = vmatpush1.bf16.msra.mxu0 %v5526
  %8229 = vmatprep.subr.bf16.mxu0 %v5531
  %8230 = vmatpush1.bf16.msra.mxu0 %v5530
  %8231 = vmatprep.mubr.bf16.mxu0 %v1339
  %8232 = vmatmul.mubr.bf16.gmra.mrb[0].mxu0 %v1338
  %v8233 = vpop.f32.mrb[0].mxu0
  %v8234 = vadd.f32 %v8181, %v8233
  %v8235 = vpop.f32.mrb[0].mxu0
  %v8236 = vadd.f32 %v8183, %v8235
  %v8237 = vpop.f32.mrb[0].mxu0
  %v8238 = vadd.f32 %v8185, %v8237
  %v8239 = vpop.f32.mrb[0].mxu0
  %v8240 = vadd.f32 %v8187, %v8239
  %8241 = vmatprep.mubr.bf16.mxu0 %v1371
  %8242 = vmatmul.mubr.bf16.gmra.mrb[0].mxu0 %v1370
  %v8243 = vpop.f32.mrb[0].mxu0
  %v8244 = vadd.f32 %v8191, %v8243
  %v8245 = vpop.f32.mrb[0].mxu0
  %v8246 = vadd.f32 %v8193, %v8245
  %v8247 = vpop.f32.mrb[0].mxu0
  %v8248 = vadd.f32 %v8195, %v8247
  %v8249 = vpop.f32.mrb[0].mxu0
  %v8250 = vadd.f32 %v8197, %v8249
  %8251 = vdwg.mxu0
  %v8252 = vadd.f32 %v7386, %v7390
  %v8253 = vadd.f32 %v8252, %v7396
  %v8254 = vadd.f32 %v8253, %v7400
  %v8255 = vrot.slane %v8254, 4
  %v8256 = vadd.f32 %v8254, %v8255
  %v8257 = vrot.slane %v8256, 2
  %v8258 = vadd.f32 %v8256, %v8257
  %v8259 = vrot.slane %v8258, 1
  %v8260 = vadd.f32 %v8258, %v8259
  %v8261 = vadd.f32 %v7388, %v7392
  %v8262 = vadd.f32 %v8261, %v7398
  %v8263 = vadd.f32 %v8262, %v7402
  %v8264 = vrot.slane %v8263, 4
  %v8265 = vadd.f32 %v8263, %v8264
  %v8266 = vrot.slane %v8265, 2
  %v8267 = vadd.f32 %v8265, %v8266
  %v8268 = vrot.slane %v8267, 1
  %v8269 = vadd.f32 %v8267, %v8268
  %v8270 = vadd.f32 %v8234, %v8238
  %v8271 = vadd.f32 %v8270, %v8244
  %v8272 = vadd.f32 %v8271, %v8248
  %v8273 = vrot.slane %v8272, 4
  %v8274 = vadd.f32 %v8272, %v8273
  %v8275 = vrot.slane %v8274, 2
  %v8276 = vadd.f32 %v8274, %v8275
  %v8277 = vrot.slane %v8276, 1
  %v8278 = vadd.f32 %v8276, %v8277
  %v8279 = vadd.f32 %v8236, %v8240
  %v8280 = vadd.f32 %v8279, %v8246
  %v8281 = vadd.f32 %v8280, %v8250
  %v8282 = vrot.slane %v8281, 4
  %v8283 = vadd.f32 %v8281, %v8282
  %v8284 = vrot.slane %v8283, 2
  %v8285 = vadd.f32 %v8283, %v8284
  %v8286 = vrot.slane %v8285, 1
  %v8287 = vadd.f32 %v8285, %v8286
  %v8288 = vrcp.pop 32.0
  %v8289 = vmul.f32 %v8260, %v8288
  %v8290 = vmul.f32 %v8269, %v8288
  %v8291 = vmul.f32 %v8278, %v8288
  %v8292 = vmul.f32 %v8287, %v8288
  %v8293 = vmul.f32 %v7386, %v7386
  %v8294 = vmul.f32 %v7388, %v7388
  %v8295 = vmul.f32 %v8234, %v8234
  %v8296 = vmul.f32 %v8236, %v8236
  %v8297 = vmul.f32 %v7390, %v7390
  %v8298 = vmul.f32 %v7392, %v7392
  %v8299 = vmul.f32 %v8238, %v8238
  %v8300 = vmul.f32 %v8240, %v8240
  %v8301 = vmul.f32 %v7396, %v7396
  %v8302 = vmul.f32 %v7398, %v7398
  %v8303 = vmul.f32 %v8244, %v8244
  %v8304 = vmul.f32 %v8246, %v8246
  %v8305 = vmul.f32 %v7400, %v7400
  %v8306 = vmul.f32 %v7402, %v7402
  %v8307 = vmul.f32 %v8248, %v8248
  %v8308 = vmul.f32 %v8250, %v8250
  %v8309 = vadd.f32 %v8293, %v8297
  %v8310 = vadd.f32 %v8309, %v8301
  %v8311 = vadd.f32 %v8310, %v8305
  %v8312 = vrot.slane %v8311, 4
  %v8313 = vadd.f32 %v8311, %v8312
  %v8314 = vrot.slane %v8313, 2
  %v8315 = vadd.f32 %v8313, %v8314
  %v8316 = vrot.slane %v8315, 1
  %v8317 = vadd.f32 %v8315, %v8316
  %v8318 = vadd.f32 %v8294, %v8298
  %v8319 = vadd.f32 %v8318, %v8302
  %v8320 = vadd.f32 %v8319, %v8306
  %v8321 = vrot.slane %v8320, 4
  %v8322 = vadd.f32 %v8320, %v8321
  %v8323 = vrot.slane %v8322, 2
  %v8324 = vadd.f32 %v8322, %v8323
  %v8325 = vrot.slane %v8324, 1
  %v8326 = vadd.f32 %v8324, %v8325
  %v8327 = vadd.f32 %v8295, %v8299
  %v8328 = vadd.f32 %v8327, %v8303
  %v8329 = vadd.f32 %v8328, %v8307
  %v8330 = vrot.slane %v8329, 4
  %v8331 = vadd.f32 %v8329, %v8330
  %v8332 = vrot.slane %v8331, 2
  %v8333 = vadd.f32 %v8331, %v8332
  %v8334 = vrot.slane %v8333, 1
  %v8335 = vadd.f32 %v8333, %v8334
  %v8336 = vadd.f32 %v8296, %v8300
  %v8337 = vadd.f32 %v8336, %v8304
  %v8338 = vadd.f32 %v8337, %v8308
  %v8339 = vrot.slane %v8338, 4
  %v8340 = vadd.f32 %v8338, %v8339
  %v8341 = vrot.slane %v8340, 2
  %v8342 = vadd.f32 %v8340, %v8341
  %v8343 = vrot.slane %v8342, 1
  %v8344 = vadd.f32 %v8342, %v8343
  %v8345 = vmul.f32 %v8317, %v8288
  %v8346 = vmul.f32 %v8326, %v8288
  %v8347 = vmul.f32 %v8335, %v8288
  %v8348 = vmul.f32 %v8344, %v8288
  %v8349 = vmul.f32 %v8289, %v8289
  %v8350 = vmul.f32 %v8290, %v8290
  %v8351 = vmul.f32 %v8291, %v8291
  %v8352 = vmul.f32 %v8292, %v8292
  %v8353 = vsub.f32 %v8345, %v8349
  %v8354 = vsub.f32 %v8346, %v8350
  %v8355 = vsub.f32 %v8347, %v8351
  %v8356 = vsub.f32 %v8348, %v8352
  %v8357 = vmax.f32 %v8353, 0.0
  %v8358 = vmax.f32 %v8354, 0.0
  %v8359 = vmax.f32 %v8355, 0.0
  %v8360 = vmax.f32 %v8356, 0.0
  %v8361 = vld [vmem:[%s2] sm:$0xf]
  %v8362 = vadd.f32 %v8357, 1e-05
  %v8363 = vadd.f32 %v8358, 1e-05
  %v8364 = vadd.f32 %v8359, 1e-05
  %v8365 = vadd.f32 %v8360, 1e-05
  %v8366 = vrsqrt.pop %v8362
  %v8367 = vrsqrt.pop %v8363
  %v8368 = vrsqrt.pop %v8364
  %v8369 = vrsqrt.pop %v8365
  %v8374 = vcombine.low %v8366, %v8367
  %v8375 = vcombine.low %v8368, %v8369
  %v8377 = vunpack.c.l.s4 1966171168
  %v8378 = vunpack.c.0.s8 %v8377
  %v8379 = vlaneseq
  %v8380 = vshrl.u32 %v8379, 7
  %v8381 = vsub.s32 %v8378, %v8380
  %v8382 = vrot.slane %v8374, %v8381
  %v8384 = vunpack.c.l.s4 1966171168
  %v8385 = vunpack.c.0.s8 %v8384
  %v8386 = vlaneseq
  %v8387 = vshrl.u32 %v8386, 7
  %v8388 = vsub.s32 %v8385, %v8387
  %v8389 = vrot.slane %v8375, %v8388
  %v8390 = vcombine.low %v8382, %v8389
  %v8392 = vunpack.c.l.s4 1966171168
  %v8393 = vunpack.c.0.s8 %v8392
  %v8394 = vlaneseq
  %v8395 = vshrl.u32 %v8394, 7
  %v8396 = vsub.s32 %v8393, %v8395
  %v8397 = vrot.slane %v8390, %v8396
  %v8399 = vmul.f32 %v8361, %v8397
  %v8400 = vld [vmem:[%s3] sm:$0xf]
  %v8402 = vlaneseq
  %v8403 = vshrl.u32 %v8402, 7
  %v8404 = vsub.s32 0, %v8403
  %v8405 = vrot.slane %v8399, %v8404
  %v8406 = vlaneseq
  %v8407 = vshrl.u32 %v8406, 7
  %v8408 = vsub.s32 1, %v8407
  %v8409 = vrot.slane %v8399, %v8408
  %v8410 = vlaneseq
  %v8411 = vshrl.u32 %v8410, 7
  %v8412 = vsub.s32 2, %v8411
  %v8413 = vrot.slane %v8399, %v8412
  %v8414 = vlaneseq
  %v8415 = vshrl.u32 %v8414, 7
  %v8416 = vsub.s32 3, %v8415
  %v8417 = vrot.slane %v8399, %v8416
  %v8422 = vmul.f32 %v8289, %v8405
  %v8423 = vmul.f32 %v8290, %v8409
  %v8424 = vmul.f32 %v8291, %v8413
  %v8425 = vmul.f32 %v8292, %v8417
  %v8430 = vcombine.low %v8422, %v8423
  %v8431 = vcombine.low %v8424, %v8425
  %v8433 = vunpack.c.l.s4 1966171168
  %v8434 = vunpack.c.0.s8 %v8433
  %v8435 = vlaneseq
  %v8436 = vshrl.u32 %v8435, 7
  %v8437 = vsub.s32 %v8434, %v8436
  %v8438 = vrot.slane %v8430, %v8437
  %v8440 = vunpack.c.l.s4 1966171168
  %v8441 = vunpack.c.0.s8 %v8440
  %v8442 = vlaneseq
  %v8443 = vshrl.u32 %v8442, 7
  %v8444 = vsub.s32 %v8441, %v8443
  %v8445 = vrot.slane %v8431, %v8444
  %v8446 = vcombine.low %v8438, %v8445
  %v8448 = vunpack.c.l.s4 1966171168
  %v8449 = vunpack.c.0.s8 %v8448
  %v8450 = vlaneseq
  %v8451 = vshrl.u32 %v8450, 7
  %v8452 = vsub.s32 %v8449, %v8451
  %v8453 = vrot.slane %v8446, %v8452
  %v8455 = vsub.f32 %v8400, %v8453
  %v8456 = vmul.f32 %v7386, %v8405
  %v8457 = vmul.f32 %v7388, %v8409
  %v8458 = vmul.f32 %v8234, %v8413
  %v8459 = vmul.f32 %v8236, %v8417
  %v8460 = vmul.f32 %v7390, %v8405
  %v8461 = vmul.f32 %v7392, %v8409
  %v8462 = vmul.f32 %v8238, %v8413
  %v8463 = vmul.f32 %v8240, %v8417
  %v8464 = vmul.f32 %v7396, %v8405
  %v8465 = vmul.f32 %v7398, %v8409
  %v8466 = vmul.f32 %v8244, %v8413
  %v8467 = vmul.f32 %v8246, %v8417
  %v8468 = vmul.f32 %v7400, %v8405
  %v8469 = vmul.f32 %v7402, %v8409
  %v8470 = vmul.f32 %v8248, %v8413
  %v8471 = vmul.f32 %v8250, %v8417
  %v8473 = vlaneseq
  %v8474 = vshrl.u32 %v8473, 7
  %v8475 = vsub.s32 0, %v8474
  %v8476 = vrot.slane %v8455, %v8475
  %v8477 = vlaneseq
  %v8478 = vshrl.u32 %v8477, 7
  %v8479 = vsub.s32 1, %v8478
  %v8480 = vrot.slane %v8455, %v8479
  %v8481 = vlaneseq
  %v8482 = vshrl.u32 %v8481, 7
  %v8483 = vsub.s32 2, %v8482
  %v8484 = vrot.slane %v8455, %v8483
  %v8485 = vlaneseq
  %v8486 = vshrl.u32 %v8485, 7
  %v8487 = vsub.s32 3, %v8486
  %v8488 = vrot.slane %v8455, %v8487
  %v8493 = vadd.f32 %v8456, %v8476
  %v8494 = vadd.f32 %v8457, %v8480
  %v8495 = vadd.f32 %v8458, %v8484
  %v8496 = vadd.f32 %v8459, %v8488
  %v8497 = vadd.f32 %v8460, %v8476
  %v8498 = vadd.f32 %v8461, %v8480
  %v8499 = vadd.f32 %v8462, %v8484
  %v8500 = vadd.f32 %v8463, %v8488
  %v8501 = vadd.f32 %v8464, %v8476
  %v8502 = vadd.f32 %v8465, %v8480
  %v8503 = vadd.f32 %v8466, %v8484
  %v8504 = vadd.f32 %v8467, %v8488
  %v8505 = vadd.f32 %v8468, %v8476
  %v8506 = vadd.f32 %v8469, %v8480
  %v8507 = vadd.f32 %v8470, %v8484
  %v8508 = vadd.f32 %v8471, %v8488
  %v8509 = vmax.f32 %v8493, 0.0
  %v8510 = vmax.f32 %v8494, 0.0
  %v8511 = vmax.f32 %v8495, 0.0
  %v8512 = vmax.f32 %v8496, 0.0
  %v8513 = vmax.f32 %v8497, 0.0
  %v8514 = vmax.f32 %v8498, 0.0
  %v8515 = vmax.f32 %v8499, 0.0
  %v8516 = vmax.f32 %v8500, 0.0
  %v8517 = vmax.f32 %v8501, 0.0
  %v8518 = vmax.f32 %v8502, 0.0
  %v8519 = vmax.f32 %v8503, 0.0
  %v8520 = vmax.f32 %v8504, 0.0
  %v8521 = vmax.f32 %v8505, 0.0
  %v8522 = vmax.f32 %v8506, 0.0
  %v8523 = vmax.f32 %v8507, 0.0
  %v8524 = vmax.f32 %v8508, 0.0
  %v8525 = vld [vmem:[%s4] sm:$0xff]
  %v8526 = vld [vmem:[%s4 + $0x8] sm:$0xff]
  %v8527 = vld [vmem:[%s4 + $0x10] sm:$0xff]
  %v8528 = vld [vmem:[%s4 + $0x18] sm:$0xff]
  %v8529 = vld [vmem:[%s4 + $0x20] sm:$0xff]
  %v8530 = vld [vmem:[%s4 + $0x28] sm:$0xff]
  %v8531 = vld [vmem:[%s4 + $0x30] sm:$0xff]
  %v8532 = vld [vmem:[%s4 + $0x38] sm:$0xff]
  %v8533 = vld [vmem:[%s4 + $0x40] sm:$0xff]
  %v8534 = vld [vmem:[%s4 + $0x48] sm:$0xff]
  %v8535 = vld [vmem:[%s4 + $0x50] sm:$0xff]
  %v8536 = vld [vmem:[%s4 + $0x58] sm:$0xff]
  %v8537 = vld [vmem:[%s4 + $0x60] sm:$0xff]
  %v8538 = vld [vmem:[%s4 + $0x68] sm:$0xff]
  %v8539 = vld [vmem:[%s4 + $0x70] sm:$0xff]
  %v8540 = vld [vmem:[%s4 + $0x78] sm:$0xff]
  %v8541 = vmul.f32 %v8509, %v8525
  %v8542 = vmul.f32 %v8510, %v8526
  %v8543 = vmul.f32 %v8511, %v8527
  %v8544 = vmul.f32 %v8512, %v8528
  %v8545 = vmul.f32 %v8513, %v8529
  %v8546 = vmul.f32 %v8514, %v8530
  %v8547 = vmul.f32 %v8515, %v8531
  %v8548 = vmul.f32 %v8516, %v8532
  %v8549 = vmul.f32 %v8517, %v8533
  %v8550 = vmul.f32 %v8518, %v8534
  %v8551 = vmul.f32 %v8519, %v8535
  %v8552 = vmul.f32 %v8520, %v8536
  %v8553 = vmul.f32 %v8521, %v8537
  %v8554 = vmul.f32 %v8522, %v8538
  %v8555 = vmul.f32 %v8523, %v8539
  %v8556 = vmul.f32 %v8524, %v8540
  %v8557 = vld [vmem:[%s5] sm:$0x3]
  %vm8558 = vcmask 261120
  %v8560 = vsel %vm8558, %v8557, 0
  %8562 = vmatprep.subr.mxu0 %v8542
  %8563 = vmatpush1.msra.mxu0 %v8541
  %8564 = vmatprep.subr.mxu0 %v8546
  %8565 = vmatpush1.msra.mxu0 %v8545
  %8566 = vmatprep.subr.mxu0 %v8550
  %8567 = vmatpush1.msra.mxu0 %v8549
  %8568 = vmatprep.subr.mxu0 %v8554
  %8569 = vmatpush1.msra.mxu0 %v8553
  %8570 = vmatprep.subr.mxu0 0.0
  %8571 = vmatpush1.msra.mxu0 0.0
  %8572 = vmatprep.subr.mxu0 0.0
  %8573 = vmatpush1.msra.mxu0 0.0
  %8574 = vmatprep.subr.mxu0 0.0
  %8575 = vmatpush1.msra.mxu0 0.0
  %8576 = vmatprep.subr.mxu0 0.0
  %8577 = vmatpush1.msra.mxu0 0.0
  %8578 = vmatprep.subr.mxu0 0.0
  %8579 = vmatpush1.msra.mxu0 0.0
  %8580 = vmatprep.subr.mxu0 0.0
  %8581 = vmatpush1.msra.mxu0 0.0
  %8582 = vmatprep.subr.mxu0 0.0
  %8583 = vmatpush1.msra.mxu0 0.0
  %8584 = vmatprep.subr.mxu0 0.0
  %8585 = vmatpush1.msra.mxu0 0.0
  %8586 = vmatprep.subr.mxu0 0.0
  %8587 = vmatpush1.msra.mxu0 0.0
  %8588 = vmatprep.subr.mxu0 0.0
  %8589 = vmatpush1.msra.mxu0 0.0
  %8590 = vmatprep.subr.mxu0 0.0
  %8591 = vmatpush1.msra.mxu0 0.0
  %8592 = vmatprep.subr.mxu0 0.0
  %8593 = vmatpush1.msra.mxu0 0.0
  %8594 = vmatprep.subr.mxu0 0.0
  %8595 = vmatpush1.msra.mxu0 0.0
  %8596 = vmatprep.subr.mxu0 0.0
  %8597 = vmatpush1.msra.mxu0 0.0
  %8598 = vmatprep.subr.mxu0 0.0
  %8599 = vmatpush1.msra.mxu0 0.0
  %8600 = vmatprep.subr.mxu0 0.0
  %8601 = vmatpush1.msra.mxu0 0.0
  %8602 = vmatprep.subr.mxu0 0.0
  %8603 = vmatpush1.msra.mxu0 0.0
  %8604 = vmatprep.subr.mxu0 0.0
  %8605 = vmatpush1.msra.mxu0 0.0
  %8606 = vmatprep.subr.mxu0 0.0
  %8607 = vmatpush1.msra.mxu0 0.0
  %8608 = vmatprep.subr.mxu0 0.0
  %8609 = vmatpush1.msra.mxu0 0.0
  %8610 = vmatprep.subr.mxu0 0.0
  %8611 = vmatpush1.msra.mxu0 0.0
  %8612 = vmatprep.subr.mxu0 0.0
  %8613 = vmatpush1.msra.mxu0 0.0
  %8614 = vmatprep.subr.mxu0 0.0
  %8615 = vmatpush1.msra.mxu0 0.0
  %8616 = vmatprep.subr.mxu0 0.0
  %8617 = vmatpush1.msra.mxu0 0.0
  %8618 = vmatprep.subr.mxu0 0.0
  %8619 = vmatpush1.msra.mxu0 0.0
  %8620 = vmatprep.subr.mxu0 0.0
  %8621 = vmatpush1.msra.mxu0 0.0
  %8622 = vmatprep.subr.mxu0 0.0
  %8623 = vmatpush1.msra.mxu0 0.0
  %8624 = vmatprep.subr.mxu0 0.0
  %8625 = vmatpush1.msra.mxu0 0.0
  %8626 = vmatprep.mubr.f32.mxu0 0.0
  %8627 = vmatmul.mubr.f32.gmra.mrb[0].mxu0 %v8560
  %v8628 = vpop.f32.mrb[0].mxu0
  %v8629 = vadd.f32 0.0, %v8628
  %v8630 = vpop.f32.mrb[0].mxu0
  %v8631 = vadd.f32 0.0, %v8630
  %8632 = vdwg.mxu0
  %8633 = vmatprep.subr.mxu0 %v8544
  %8634 = vmatpush1.msra.mxu0 %v8543
  %8635 = vmatprep.subr.mxu0 %v8548
  %8636 = vmatpush1.msra.mxu0 %v8547
  %8637 = vmatprep.subr.mxu0 %v8552
  %8638 = vmatpush1.msra.mxu0 %v8551
  %8639 = vmatprep.subr.mxu0 %v8556
  %8640 = vmatpush1.msra.mxu0 %v8555
  %8641 = vmatprep.subr.mxu0 0.0
  %8642 = vmatpush1.msra.mxu0 0.0
  %8643 = vmatprep.subr.mxu0 0.0
  %8644 = vmatpush1.msra.mxu0 0.0
  %8645 = vmatprep.subr.mxu0 0.0
  %8646 = vmatpush1.msra.mxu0 0.0
  %8647 = vmatprep.subr.mxu0 0.0
  %8648 = vmatpush1.msra.mxu0 0.0
  %8649 = vmatprep.subr.mxu0 0.0
  %8650 = vmatpush1.msra.mxu0 0.0
  %8651 = vmatprep.subr.mxu0 0.0
  %8652 = vmatpush1.msra.mxu0 0.0
  %8653 = vmatprep.subr.mxu0 0.0
  %8654 = vmatpush1.msra.mxu0 0.0
  %8655 = vmatprep.subr.mxu0 0.0
  %8656 = vmatpush1.msra.mxu0 0.0
  %8657 = vmatprep.subr.mxu0 0.0
  %8658 = vmatpush1.msra.mxu0 0.0
  %8659 = vmatprep.subr.mxu0 0.0
  %8660 = vmatpush1.msra.mxu0 0.0
  %8661 = vmatprep.subr.mxu0 0.0
  %8662 = vmatpush1.msra.mxu0 0.0
  %8663 = vmatprep.subr.mxu0 0.0
  %8664 = vmatpush1.msra.mxu0 0.0
  %8665 = vmatprep.subr.mxu0 0.0
  %8666 = vmatpush1.msra.mxu0 0.0
  %8667 = vmatprep.subr.mxu0 0.0
  %8668 = vmatpush1.msra.mxu0 0.0
  %8669 = vmatprep.subr.mxu0 0.0
  %8670 = vmatpush1.msra.mxu0 0.0
  %8671 = vmatprep.subr.mxu0 0.0
  %8672 = vmatpush1.msra.mxu0 0.0
  %8673 = vmatprep.subr.mxu0 0.0
  %8674 = vmatpush1.msra.mxu0 0.0
  %8675 = vmatprep.subr.mxu0 0.0
  %8676 = vmatpush1.msra.mxu0 0.0
  %8677 = vmatprep.subr.mxu0 0.0
  %8678 = vmatpush1.msra.mxu0 0.0
  %8679 = vmatprep.subr.mxu0 0.0
  %8680 = vmatpush1.msra.mxu0 0.0
  %8681 = vmatprep.subr.mxu0 0.0
  %8682 = vmatpush1.msra.mxu0 0.0
  %8683 = vmatprep.subr.mxu0 0.0
  %8684 = vmatpush1.msra.mxu0 0.0
  %8685 = vmatprep.subr.mxu0 0.0
  %8686 = vmatpush1.msra.mxu0 0.0
  %8687 = vmatprep.subr.mxu0 0.0
  %8688 = vmatpush1.msra.mxu0 0.0
  %8689 = vmatprep.subr.mxu0 0.0
  %8690 = vmatpush1.msra.mxu0 0.0
  %8691 = vmatprep.subr.mxu0 0.0
  %8692 = vmatpush1.msra.mxu0 0.0
  %8693 = vmatprep.subr.mxu0 0.0
  %8694 = vmatpush1.msra.mxu0 0.0
  %8695 = vmatprep.subr.mxu0 0.0
  %8696 = vmatpush1.msra.mxu0 0.0
  %8697 = vmatprep.mubr.f32.mxu0 0.0
  %8698 = vmatmul.mubr.f32.gmra.mrb[0].mxu0 %v8560
  %v8699 = vpop.f32.mrb[0].mxu0
  %v8700 = vadd.f32 0.0, %v8699
  %v8701 = vpop.f32.mrb[0].mxu0
  %v8702 = vadd.f32 0.0, %v8701
  %8703 = vdwg.mxu0
  %vm8704 = vcmask 1041408
  %v8705 = vsel %vm8704, %v8629, 0.0
  %v8706 = vsel %vm8704, %v8631, 0.0
  %v8707 = vadd.f32 %v8705, %v8706
  %v8708 = vsel %vm8704, %v8700, 0.0
  %v8709 = vadd.f32 %v8707, %v8708
  %v8710 = vsel %vm8704, %v8702, 0.0
  %v8711 = vadd.f32 %v8709, %v8710
  %8712 = vadd.xlane.f32.xlu0 %v8711
  %v8713 = vpop.xlane.xlu0 %8712
  %v8714 = vld [vmem:[#allocation2] sm:$0x1]
  %v8716 = vlaneseq
  %v8717 = vshrl.u32 %v8716, 7
  %v8718 = vsub.s32 0, %v8717
  %v8719 = vrot.slane %v8714, %v8718
  %v8721 = vadd.f32 %v8713, %v8719
  %vm8722 = vcmask 1024
  %8723 = vst.msk [vmem:[%s7] sm:$0x3] %vm8722, %v8721
  // Predicated region
  $region30: #{discriminator_wgan_32.5} parent=0 // pred_check
    _
  $region31: #{discriminator_wgan_32.5} parent=0 // pred_check_branch
    %8725 = sbr.rel (0) target = $region33
  $region32: #{discriminator_wgan_32.5} parent=0 // pred_region
    _
  $region33: #{discriminator_wgan_32.5} parent=0 // pred_fallthru
    _
  // Predicated region
  $region34: #{discriminator_wgan_32.5} parent=0 // pred_check
    _
  $region35: #{discriminator_wgan_32.5} parent=0 // pred_check_branch
    %8727 = sbr.rel (0) target = $region37
  $region36: #{discriminator_wgan_32.5} parent=0 // pred_region
    _
  $region37: #{discriminator_wgan_32.5} parent=0 // pred_fallthru
    _

</llo_original>
